<compile_context>
chip_gen: v7x
topology: tpu7x:2x2x1
jax: 0.10.0
libtpu: 0.0.40
codegen_flags: <defaults>
</compile_context>

<pallas_src>
import functools

import jax
import jax.numpy as jnp
from jax.experimental import pallas as pl
from jax.experimental.pallas import tpu as pltpu

TILE = 299
CONV_K = 3
CONV_STRIDE = 2
CONV_OUT = 32
OUT_HW = (TILE - CONV_K) // CONV_STRIDE + 1     # 149
P = OUT_HW * OUT_HW                             # 22201 valid conv output pixels
KDIM = CONV_K * CONV_K * 3                      # 27 = taps * in_channels
CHUNK = 1024                                    # lanes processed per MXU pass
P_PAD = ((P + CHUNK - 1) // CHUNK) * CHUNK      # 22528 = 22 * 1024 (128-aligned)


# ----------------------------- Pallas kernel --------------------------------

def conv_pool_head_kernel(p_ref, w_ref, wh_ref, bh_ref, o_ref, *, inv_valid):
    """Conv3x3/s2 (as 27 x P patch matmul) + ReLU + global-avg-pool + head fc."""
    # p_ref : (1, KDIM, P_PAD) bf16  im2col'd patches of one 299x299 tile
    # w_ref : (CONV_OUT, KDIM) bf16  conv weight, k = (ky*3 + kx)*3 + ci
    # wh_ref: (NC, CONV_OUT)   f32   head fc weight (transposed)
    # bh_ref: (NC, 1)          f32   head fc bias
    # o_ref : (1, NC, 1)       f32   per-tile class logits
    w = w_ref[...]
    n_chunks = p_ref.shape[2] // CHUNK
    acc = jnp.zeros((CONV_OUT, 1), jnp.float32)
    # Chunk the padded pixel (lane) axis so the (32, chunk) f32 conv
    # intermediate stays in vregs instead of a ~2.9 MB VMEM tensor.
    for kc in range(n_chunks):                                   # static unroll
        p = p_ref[0, :, kc * CHUNK:(kc + 1) * CHUNK]             # (KDIM, CHUNK) bf16
        y = jnp.dot(w, p, preferred_element_type=jnp.float32)    # (CONV_OUT, CHUNK) f32
        y = jnp.maximum(y, 0.0)                                  # ReLU
        acc = acc + jnp.sum(y, axis=1, keepdims=True)            # (CONV_OUT, 1)
    # Padded columns are zero => ReLU(W @ 0) = 0 => sum is exact; divide by the
    # true pixel count.
    pooled = acc * inv_valid                                     # (CONV_OUT, 1)
    logits = jnp.dot(wh_ref[...], pooled,
                     preferred_element_type=jnp.float32) + bh_ref[...]   # (NC, 1)
    o_ref[...] = logits[None].astype(o_ref.dtype)                # (1, NC, 1)


# ----------------------------- pallas_call wrapper ---------------------------

def conv_relu_gap_head(patches, w_conv, w_head_t, b_head_col):
    """patches:(NB, KDIM, P_PAD) bf16 -> per-tile head-fc logits (NB, NC)."""
    NB, K, Pp = patches.shape
    nc = w_head_t.shape[0]
    out = pl.pallas_call(
        functools.partial(conv_pool_head_kernel, inv_valid=1.0 / float(P)),
        out_shape=jax.ShapeDtypeStruct((NB, nc, 1), jnp.float32),
        grid=(NB,),
        in_specs=[
            pl.BlockSpec((1, K, Pp), lambda i: (i, 0, 0)),
            pl.BlockSpec((CONV_OUT, K), lambda i: (0, 0)),
            pl.BlockSpec((nc, CONV_OUT), lambda i: (0, 0)),
            pl.BlockSpec((nc, 1), lambda i: (0, 0)),
        ],
        out_specs=pl.BlockSpec((1, nc, 1), lambda i: (i, 0, 0)),
        compiler_params=pltpu.CompilerParams(
            dimension_semantics=("parallel",)),     # shards tiles over v7x's 2 TCs
    )(patches, w_conv, w_head_t, b_head_col)
    return out[:, :, 0]                             # (NB, NC)


# ----------------------------- model glue ------------------------------------

def init_params(num_classes, key):
    k1, k2, k3, k4, k5 = jax.random.split(key, 5)
    # conv weight in (ky, kx, ci, co) order -> (co, KDIM); k = (ky*3 + kx)*3 + ci
    w_conv = jax.random.normal(k1, (CONV_K, CONV_K, 3, CONV_OUT), jnp.float32) * 0.1
    w_conv = w_conv.reshape(KDIM, CONV_OUT).T
    w_head = jax.random.normal(k2, (CONV_OUT, num_classes), jnp.float32) * 0.1
    b_head = jax.random.normal(k3, (num_classes,), jnp.float32) * 0.01
    w_fc = jax.random.normal(k4, (9 * num_classes, num_classes), jnp.float32) * 0.1
    b_fc = jax.random.normal(k5, (num_classes,), jnp.float32) * 0.01
    return dict(w_conv=w_conv, w_head=w_head, b_head=b_head, w_fc=w_fc, b_fc=b_fc)


def im2col_nchw(tiles_nchw_bf16):
    """(NB, 3, 299, 299) bf16 -> (NB, 27, P_PAD) bf16 patches, built directly in
    (tap, channel)-major / pixel-minor order: no NHWC transpose and no
    HBM-level transpose of the patch tensor (perf-review item 1)."""
    NB = tiles_nchw_bf16.shape[0]
    last = 1 + CONV_STRIDE * (OUT_HW - 1)               # 297
    taps = []
    for ky in range(CONV_K):
        for kx in range(CONV_K):
            taps.append(tiles_nchw_bf16[:, :, ky:ky + last:CONV_STRIDE,
                                        kx:kx + last:CONV_STRIDE])   # (NB,3,149,149)
    patches = jnp.concatenate(taps, axis=1)             # (NB, 27, 149, 149)
    patches = patches.reshape(NB, KDIM, P)              # contiguous pixel merge
    # Zero-pad the pixel axis to a 128-multiple (lane-dense blocks).
    return jnp.pad(patches, ((0, 0), (0, 0), (0, P_PAD - P)))


def inception_xs(tiles_nchw, params):
    """Stand-in Inception3XS applied to a batch of 299x299 NCHW tiles."""
    t = tiles_nchw.astype(jnp.bfloat16)                 # bf16 feed, f32 accumulate
    patches = im2col_nchw(t)                            # (NB, 27, P_PAD) bf16
    return conv_relu_gap_head(
        patches,
        params["w_conv"].astype(jnp.bfloat16),          # (32, 27) bf16
        jnp.transpose(params["w_head"]),                # (nc, 32) f32
        params["b_head"].reshape(-1, 1),                # (nc, 1) f32
    )                                                   # (NB, nc)


@functools.partial(jax.jit, static_argnames=("num_classes",))
def enneaception_forward(x, params, num_classes):
    # x: (B, 3, 897, 897) NCHW — same slicing order as the PyTorch forward:
    # img0=(:299,:299), img1=(299:598,:299), img2=(598:,:299), img3=(:299,299:598), ...
    B = x.shape[0]
    xb = x.astype(jnp.bfloat16)      # cast once: halves all downstream HBM traffic
    tiles = []
    for c0 in (0, TILE, 2 * TILE):
        for r0 in (0, TILE, 2 * TILE):
            tiles.append(xb[:, :, r0:r0 + TILE, c0:c0 + TILE])
    t = jnp.stack(tiles, axis=0).reshape(9 * B, 3, TILE, TILE)
    logits9 = inception_xs(t, params)                           # (9B, nc)
    # torch.cat([img0,...,img8], dim=1): out[b, t*nc:(t+1)*nc] = img_t[b]
    cat = jnp.transpose(
        logits9.reshape(9, B, num_classes), (1, 0, 2)).reshape(B, 9 * num_classes)
    # Final 9*nc -> nc fc: (B, 9nc)@(9nc, nc) is tiny; a dedicated pallas_call is
    # pure launch overhead (perf review), so use a plain dot.
    return jnp.dot(cat, params["w_fc"]) + params["b_fc"]        # (B, nc)


if __name__ == "__main__":
    num_classes = 16          # small stand-in for the default 1000
    batch = 2
    key = jax.random.PRNGKey(0)
    kx, kp = jax.random.split(key)
    x = jax.random.normal(kx, (batch, 3, 3 * TILE, 3 * TILE), jnp.float32)
    params = init_params(num_classes, kp)

    out = enneaception_forward(x, params, num_classes)
    jax.block_until_ready(out)
    assert out.shape == (batch, num_classes), out.shape
    assert bool(jnp.all(jnp.isfinite(out)))
    print("KERNEL_OK")
</pallas_src>

<mosaic_0001>
module attributes {stable_mosaic.version = 11 : i64} {
  func.func @conv_pool_head_kernel(%arg0: i32, %arg1: memref<1x27x22528xbf16, #tpu.memory_space<vmem>>, %arg2: memref<32x27xbf16, #tpu.memory_space<vmem>>, %arg3: memref<16x32xf32, #tpu.memory_space<vmem>>, %arg4: memref<16x1xf32, #tpu.memory_space<vmem>>, %arg5: memref<1x16x1xf32, #tpu.memory_space<vmem>>) attributes {dimension_semantics = [#tpu.dimension_semantics<parallel>], iteration_bounds = array<i64: 18>, scalar_prefetch = 0 : i64, scratch_operands = 0 : i64, tpu.core_type = #tpu.core_type<tc>, window_params = [{transform_indices = @transform_0, window_bounds = array<i64: 1, 27, 22528>}, {pipeline_mode = #tpu.pipeline_mode<synchronous>, transform_indices = @transform_1, window_bounds = array<i64: 32, 27>}, {pipeline_mode = #tpu.pipeline_mode<synchronous>, transform_indices = @transform_2, window_bounds = array<i64: 16, 32>}, {pipeline_mode = #tpu.pipeline_mode<synchronous>, transform_indices = @transform_3, window_bounds = array<i64: 16, 1>}, {transform_indices = @transform_4, window_bounds = array<i64: 1, 16, 1>}]} {
    %c0 = arith.constant 0 : index
    %c0_0 = arith.constant 0 : index
    %0 = vector.load %arg2[%c0, %c0_0] : memref<32x27xbf16, #tpu.memory_space<vmem>>, vector<32x27xbf16>
    %cst = arith.constant 0.000000e+00 : f32
    %1 = vector.broadcast %cst : f32 to vector<32x1xf32>
    %c0_1 = arith.constant 0 : index
    %c0_2 = arith.constant 0 : index
    %c0_3 = arith.constant 0 : index
    %2 = vector.load %arg1[%c0_1, %c0_2, %c0_3] : memref<1x27x22528xbf16, #tpu.memory_space<vmem>>, vector<1x27x1024xbf16>
    %3 = vector.shape_cast %2 : vector<1x27x1024xbf16> to vector<27x1024xbf16>
    %cst_4 = arith.constant dense<0.000000e+00> : vector<32x1024xf32>
    %4 = tpu.matmul %0, %3, %cst_4 {dimension_numbers = #tpu.dot_dimension_numbers<[1], [0], [0], [1], [0, 0, 1, 1], [], []>} : vector<32x27xbf16>, vector<27x1024xbf16>, vector<32x1024xf32> -> vector<32x1024xf32>
    %cst_5 = arith.constant 0.000000e+00 : f32
    %5 = vector.broadcast %cst_5 : f32 to vector<32x1024xf32>
    %6 = arith.maximumf %4, %5 : vector<32x1024xf32>
    %cst_6 = arith.constant dense<0.000000e+00> : vector<32xf32>
    %7 = vector.multi_reduction <add>, %6, %cst_6 [1] : vector<32x1024xf32> to vector<32xf32>
    %8 = vector.shape_cast %7 : vector<32xf32> to vector<32x1xf32>
    %9 = arith.addf %1, %8 : vector<32x1xf32>
    %c0_7 = arith.constant 0 : index
    %c0_8 = arith.constant 0 : index
    %c1024 = arith.constant 1024 : index
    %10 = vector.load %arg1[%c0_7, %c0_8, %c1024] : memref<1x27x22528xbf16, #tpu.memory_space<vmem>>, vector<1x27x1024xbf16>
    %11 = vector.shape_cast %10 : vector<1x27x1024xbf16> to vector<27x1024xbf16>
    %cst_9 = arith.constant dense<0.000000e+00> : vector<32x1024xf32>
    %12 = tpu.matmul %0, %11, %cst_9 {dimension_numbers = #tpu.dot_dimension_numbers<[1], [0], [0], [1], [0, 0, 1, 1], [], []>} : vector<32x27xbf16>, vector<27x1024xbf16>, vector<32x1024xf32> -> vector<32x1024xf32>
    %cst_10 = arith.constant 0.000000e+00 : f32
    %13 = vector.broadcast %cst_10 : f32 to vector<32x1024xf32>
    %14 = arith.maximumf %12, %13 : vector<32x1024xf32>
    %cst_11 = arith.constant dense<0.000000e+00> : vector<32xf32>
    %15 = vector.multi_reduction <add>, %14, %cst_11 [1] : vector<32x1024xf32> to vector<32xf32>
    %16 = vector.shape_cast %15 : vector<32xf32> to vector<32x1xf32>
    %17 = arith.addf %9, %16 : vector<32x1xf32>
    %c0_12 = arith.constant 0 : index
    %c0_13 = arith.constant 0 : index
    %c2048 = arith.constant 2048 : index
    %18 = vector.load %arg1[%c0_12, %c0_13, %c2048] : memref<1x27x22528xbf16, #tpu.memory_space<vmem>>, vector<1x27x1024xbf16>
    %19 = vector.shape_cast %18 : vector<1x27x1024xbf16> to vector<27x1024xbf16>
    %cst_14 = arith.constant dense<0.000000e+00> : vector<32x1024xf32>
    %20 = tpu.matmul %0, %19, %cst_14 {dimension_numbers = #tpu.dot_dimension_numbers<[1], [0], [0], [1], [0, 0, 1, 1], [], []>} : vector<32x27xbf16>, vector<27x1024xbf16>, vector<32x1024xf32> -> vector<32x1024xf32>
    %cst_15 = arith.constant 0.000000e+00 : f32
    %21 = vector.broadcast %cst_15 : f32 to vector<32x1024xf32>
    %22 = arith.maximumf %20, %21 : vector<32x1024xf32>
    %cst_16 = arith.constant dense<0.000000e+00> : vector<32xf32>
    %23 = vector.multi_reduction <add>, %22, %cst_16 [1] : vector<32x1024xf32> to vector<32xf32>
    %24 = vector.shape_cast %23 : vector<32xf32> to vector<32x1xf32>
    %25 = arith.addf %17, %24 : vector<32x1xf32>
    %c0_17 = arith.constant 0 : index
    %c0_18 = arith.constant 0 : index
    %c3072 = arith.constant 3072 : index
    %26 = vector.load %arg1[%c0_17, %c0_18, %c3072] : memref<1x27x22528xbf16, #tpu.memory_space<vmem>>, vector<1x27x1024xbf16>
    %27 = vector.shape_cast %26 : vector<1x27x1024xbf16> to vector<27x1024xbf16>
    %cst_19 = arith.constant dense<0.000000e+00> : vector<32x1024xf32>
    %28 = tpu.matmul %0, %27, %cst_19 {dimension_numbers = #tpu.dot_dimension_numbers<[1], [0], [0], [1], [0, 0, 1, 1], [], []>} : vector<32x27xbf16>, vector<27x1024xbf16>, vector<32x1024xf32> -> vector<32x1024xf32>
    %cst_20 = arith.constant 0.000000e+00 : f32
    %29 = vector.broadcast %cst_20 : f32 to vector<32x1024xf32>
    %30 = arith.maximumf %28, %29 : vector<32x1024xf32>
    %cst_21 = arith.constant dense<0.000000e+00> : vector<32xf32>
    %31 = vector.multi_reduction <add>, %30, %cst_21 [1] : vector<32x1024xf32> to vector<32xf32>
    %32 = vector.shape_cast %31 : vector<32xf32> to vector<32x1xf32>
    %33 = arith.addf %25, %32 : vector<32x1xf32>
    %c0_22 = arith.constant 0 : index
    %c0_23 = arith.constant 0 : index
    %c4096 = arith.constant 4096 : index
    %34 = vector.load %arg1[%c0_22, %c0_23, %c4096] : memref<1x27x22528xbf16, #tpu.memory_space<vmem>>, vector<1x27x1024xbf16>
    %35 = vector.shape_cast %34 : vector<1x27x1024xbf16> to vector<27x1024xbf16>
    %cst_24 = arith.constant dense<0.000000e+00> : vector<32x1024xf32>
    %36 = tpu.matmul %0, %35, %cst_24 {dimension_numbers = #tpu.dot_dimension_numbers<[1], [0], [0], [1], [0, 0, 1, 1], [], []>} : vector<32x27xbf16>, vector<27x1024xbf16>, vector<32x1024xf32> -> vector<32x1024xf32>
    %cst_25 = arith.constant 0.000000e+00 : f32
    %37 = vector.broadcast %cst_25 : f32 to vector<32x1024xf32>
    %38 = arith.maximumf %36, %37 : vector<32x1024xf32>
    %cst_26 = arith.constant dense<0.000000e+00> : vector<32xf32>
    %39 = vector.multi_reduction <add>, %38, %cst_26 [1] : vector<32x1024xf32> to vector<32xf32>
    %40 = vector.shape_cast %39 : vector<32xf32> to vector<32x1xf32>
    %41 = arith.addf %33, %40 : vector<32x1xf32>
    %c0_27 = arith.constant 0 : index
    %c0_28 = arith.constant 0 : index
    %c5120 = arith.constant 5120 : index
    %42 = vector.load %arg1[%c0_27, %c0_28, %c5120] : memref<1x27x22528xbf16, #tpu.memory_space<vmem>>, vector<1x27x1024xbf16>
    %43 = vector.shape_cast %42 : vector<1x27x1024xbf16> to vector<27x1024xbf16>
    %cst_29 = arith.constant dense<0.000000e+00> : vector<32x1024xf32>
    %44 = tpu.matmul %0, %43, %cst_29 {dimension_numbers = #tpu.dot_dimension_numbers<[1], [0], [0], [1], [0, 0, 1, 1], [], []>} : vector<32x27xbf16>, vector<27x1024xbf16>, vector<32x1024xf32> -> vector<32x1024xf32>
    %cst_30 = arith.constant 0.000000e+00 : f32
    %45 = vector.broadcast %cst_30 : f32 to vector<32x1024xf32>
    %46 = arith.maximumf %44, %45 : vector<32x1024xf32>
    %cst_31 = arith.constant dense<0.000000e+00> : vector<32xf32>
    %47 = vector.multi_reduction <add>, %46, %cst_31 [1] : vector<32x1024xf32> to vector<32xf32>
    %48 = vector.shape_cast %47 : vector<32xf32> to vector<32x1xf32>
    %49 = arith.addf %41, %48 : vector<32x1xf32>
    %c0_32 = arith.constant 0 : index
    %c0_33 = arith.constant 0 : index
    %c6144 = arith.constant 6144 : index
    %50 = vector.load %arg1[%c0_32, %c0_33, %c6144] : memref<1x27x22528xbf16, #tpu.memory_space<vmem>>, vector<1x27x1024xbf16>
    %51 = vector.shape_cast %50 : vector<1x27x1024xbf16> to vector<27x1024xbf16>
    %cst_34 = arith.constant dense<0.000000e+00> : vector<32x1024xf32>
    %52 = tpu.matmul %0, %51, %cst_34 {dimension_numbers = #tpu.dot_dimension_numbers<[1], [0], [0], [1], [0, 0, 1, 1], [], []>} : vector<32x27xbf16>, vector<27x1024xbf16>, vector<32x1024xf32> -> vector<32x1024xf32>
    %cst_35 = arith.constant 0.000000e+00 : f32
    %53 = vector.broadcast %cst_35 : f32 to vector<32x1024xf32>
    %54 = arith.maximumf %52, %53 : vector<32x1024xf32>
    %cst_36 = arith.constant dense<0.000000e+00> : vector<32xf32>
    %55 = vector.multi_reduction <add>, %54, %cst_36 [1] : vector<32x1024xf32> to vector<32xf32>
    %56 = vector.shape_cast %55 : vector<32xf32> to vector<32x1xf32>
    %57 = arith.addf %49, %56 : vector<32x1xf32>
    %c0_37 = arith.constant 0 : index
    %c0_38 = arith.constant 0 : index
    %c7168 = arith.constant 7168 : index
    %58 = vector.load %arg1[%c0_37, %c0_38, %c7168] : memref<1x27x22528xbf16, #tpu.memory_space<vmem>>, vector<1x27x1024xbf16>
    %59 = vector.shape_cast %58 : vector<1x27x1024xbf16> to vector<27x1024xbf16>
    %cst_39 = arith.constant dense<0.000000e+00> : vector<32x1024xf32>
    %60 = tpu.matmul %0, %59, %cst_39 {dimension_numbers = #tpu.dot_dimension_numbers<[1], [0], [0], [1], [0, 0, 1, 1], [], []>} : vector<32x27xbf16>, vector<27x1024xbf16>, vector<32x1024xf32> -> vector<32x1024xf32>
    %cst_40 = arith.constant 0.000000e+00 : f32
    %61 = vector.broadcast %cst_40 : f32 to vector<32x1024xf32>
    %62 = arith.maximumf %60, %61 : vector<32x1024xf32>
    %cst_41 = arith.constant dense<0.000000e+00> : vector<32xf32>
    %63 = vector.multi_reduction <add>, %62, %cst_41 [1] : vector<32x1024xf32> to vector<32xf32>
    %64 = vector.shape_cast %63 : vector<32xf32> to vector<32x1xf32>
    %65 = arith.addf %57, %64 : vector<32x1xf32>
    %c0_42 = arith.constant 0 : index
    %c0_43 = arith.constant 0 : index
    %c8192 = arith.constant 8192 : index
    %66 = vector.load %arg1[%c0_42, %c0_43, %c8192] : memref<1x27x22528xbf16, #tpu.memory_space<vmem>>, vector<1x27x1024xbf16>
    %67 = vector.shape_cast %66 : vector<1x27x1024xbf16> to vector<27x1024xbf16>
    %cst_44 = arith.constant dense<0.000000e+00> : vector<32x1024xf32>
    %68 = tpu.matmul %0, %67, %cst_44 {dimension_numbers = #tpu.dot_dimension_numbers<[1], [0], [0], [1], [0, 0, 1, 1], [], []>} : vector<32x27xbf16>, vector<27x1024xbf16>, vector<32x1024xf32> -> vector<32x1024xf32>
    %cst_45 = arith.constant 0.000000e+00 : f32
    %69 = vector.broadcast %cst_45 : f32 to vector<32x1024xf32>
    %70 = arith.maximumf %68, %69 : vector<32x1024xf32>
    %cst_46 = arith.constant dense<0.000000e+00> : vector<32xf32>
    %71 = vector.multi_reduction <add>, %70, %cst_46 [1] : vector<32x1024xf32> to vector<32xf32>
    %72 = vector.shape_cast %71 : vector<32xf32> to vector<32x1xf32>
    %73 = arith.addf %65, %72 : vector<32x1xf32>
    %c0_47 = arith.constant 0 : index
    %c0_48 = arith.constant 0 : index
    %c9216 = arith.constant 9216 : index
    %74 = vector.load %arg1[%c0_47, %c0_48, %c9216] : memref<1x27x22528xbf16, #tpu.memory_space<vmem>>, vector<1x27x1024xbf16>
    %75 = vector.shape_cast %74 : vector<1x27x1024xbf16> to vector<27x1024xbf16>
    %cst_49 = arith.constant dense<0.000000e+00> : vector<32x1024xf32>
    %76 = tpu.matmul %0, %75, %cst_49 {dimension_numbers = #tpu.dot_dimension_numbers<[1], [0], [0], [1], [0, 0, 1, 1], [], []>} : vector<32x27xbf16>, vector<27x1024xbf16>, vector<32x1024xf32> -> vector<32x1024xf32>
    %cst_50 = arith.constant 0.000000e+00 : f32
    %77 = vector.broadcast %cst_50 : f32 to vector<32x1024xf32>
    %78 = arith.maximumf %76, %77 : vector<32x1024xf32>
    %cst_51 = arith.constant dense<0.000000e+00> : vector<32xf32>
    %79 = vector.multi_reduction <add>, %78, %cst_51 [1] : vector<32x1024xf32> to vector<32xf32>
    %80 = vector.shape_cast %79 : vector<32xf32> to vector<32x1xf32>
    %81 = arith.addf %73, %80 : vector<32x1xf32>
    %c0_52 = arith.constant 0 : index
    %c0_53 = arith.constant 0 : index
    %c10240 = arith.constant 10240 : index
    %82 = vector.load %arg1[%c0_52, %c0_53, %c10240] : memref<1x27x22528xbf16, #tpu.memory_space<vmem>>, vector<1x27x1024xbf16>
    %83 = vector.shape_cast %82 : vector<1x27x1024xbf16> to vector<27x1024xbf16>
    %cst_54 = arith.constant dense<0.000000e+00> : vector<32x1024xf32>
    %84 = tpu.matmul %0, %83, %cst_54 {dimension_numbers = #tpu.dot_dimension_numbers<[1], [0], [0], [1], [0, 0, 1, 1], [], []>} : vector<32x27xbf16>, vector<27x1024xbf16>, vector<32x1024xf32> -> vector<32x1024xf32>
    %cst_55 = arith.constant 0.000000e+00 : f32
    %85 = vector.broadcast %cst_55 : f32 to vector<32x1024xf32>
    %86 = arith.maximumf %84, %85 : vector<32x1024xf32>
    %cst_56 = arith.constant dense<0.000000e+00> : vector<32xf32>
    %87 = vector.multi_reduction <add>, %86, %cst_56 [1] : vector<32x1024xf32> to vector<32xf32>
    %88 = vector.shape_cast %87 : vector<32xf32> to vector<32x1xf32>
    %89 = arith.addf %81, %88 : vector<32x1xf32>
    %c0_57 = arith.constant 0 : index
    %c0_58 = arith.constant 0 : index
    %c11264 = arith.constant 11264 : index
    %90 = vector.load %arg1[%c0_57, %c0_58, %c11264] : memref<1x27x22528xbf16, #tpu.memory_space<vmem>>, vector<1x27x1024xbf16>
    %91 = vector.shape_cast %90 : vector<1x27x1024xbf16> to vector<27x1024xbf16>
    %cst_59 = arith.constant dense<0.000000e+00> : vector<32x1024xf32>
    %92 = tpu.matmul %0, %91, %cst_59 {dimension_numbers = #tpu.dot_dimension_numbers<[1], [0], [0], [1], [0, 0, 1, 1], [], []>} : vector<32x27xbf16>, vector<27x1024xbf16>, vector<32x1024xf32> -> vector<32x1024xf32>
    %cst_60 = arith.constant 0.000000e+00 : f32
    %93 = vector.broadcast %cst_60 : f32 to vector<32x1024xf32>
    %94 = arith.maximumf %92, %93 : vector<32x1024xf32>
    %cst_61 = arith.constant dense<0.000000e+00> : vector<32xf32>
    %95 = vector.multi_reduction <add>, %94, %cst_61 [1] : vector<32x1024xf32> to vector<32xf32>
    %96 = vector.shape_cast %95 : vector<32xf32> to vector<32x1xf32>
    %97 = arith.addf %89, %96 : vector<32x1xf32>
    %c0_62 = arith.constant 0 : index
    %c0_63 = arith.constant 0 : index
    %c12288 = arith.constant 12288 : index
    %98 = vector.load %arg1[%c0_62, %c0_63, %c12288] : memref<1x27x22528xbf16, #tpu.memory_space<vmem>>, vector<1x27x1024xbf16>
    %99 = vector.shape_cast %98 : vector<1x27x1024xbf16> to vector<27x1024xbf16>
    %cst_64 = arith.constant dense<0.000000e+00> : vector<32x1024xf32>
    %100 = tpu.matmul %0, %99, %cst_64 {dimension_numbers = #tpu.dot_dimension_numbers<[1], [0], [0], [1], [0, 0, 1, 1], [], []>} : vector<32x27xbf16>, vector<27x1024xbf16>, vector<32x1024xf32> -> vector<32x1024xf32>
    %cst_65 = arith.constant 0.000000e+00 : f32
    %101 = vector.broadcast %cst_65 : f32 to vector<32x1024xf32>
    %102 = arith.maximumf %100, %101 : vector<32x1024xf32>
    %cst_66 = arith.constant dense<0.000000e+00> : vector<32xf32>
    %103 = vector.multi_reduction <add>, %102, %cst_66 [1] : vector<32x1024xf32> to vector<32xf32>
    %104 = vector.shape_cast %103 : vector<32xf32> to vector<32x1xf32>
    %105 = arith.addf %97, %104 : vector<32x1xf32>
    %c0_67 = arith.constant 0 : index
    %c0_68 = arith.constant 0 : index
    %c13312 = arith.constant 13312 : index
    %106 = vector.load %arg1[%c0_67, %c0_68, %c13312] : memref<1x27x22528xbf16, #tpu.memory_space<vmem>>, vector<1x27x1024xbf16>
    %107 = vector.shape_cast %106 : vector<1x27x1024xbf16> to vector<27x1024xbf16>
    %cst_69 = arith.constant dense<0.000000e+00> : vector<32x1024xf32>
    %108 = tpu.matmul %0, %107, %cst_69 {dimension_numbers = #tpu.dot_dimension_numbers<[1], [0], [0], [1], [0, 0, 1, 1], [], []>} : vector<32x27xbf16>, vector<27x1024xbf16>, vector<32x1024xf32> -> vector<32x1024xf32>
    %cst_70 = arith.constant 0.000000e+00 : f32
    %109 = vector.broadcast %cst_70 : f32 to vector<32x1024xf32>
    %110 = arith.maximumf %108, %109 : vector<32x1024xf32>
    %cst_71 = arith.constant dense<0.000000e+00> : vector<32xf32>
    %111 = vector.multi_reduction <add>, %110, %cst_71 [1] : vector<32x1024xf32> to vector<32xf32>
    %112 = vector.shape_cast %111 : vector<32xf32> to vector<32x1xf32>
    %113 = arith.addf %105, %112 : vector<32x1xf32>
    %c0_72 = arith.constant 0 : index
    %c0_73 = arith.constant 0 : index
    %c14336 = arith.constant 14336 : index
    %114 = vector.load %arg1[%c0_72, %c0_73, %c14336] : memref<1x27x22528xbf16, #tpu.memory_space<vmem>>, vector<1x27x1024xbf16>
    %115 = vector.shape_cast %114 : vector<1x27x1024xbf16> to vector<27x1024xbf16>
    %cst_74 = arith.constant dense<0.000000e+00> : vector<32x1024xf32>
    %116 = tpu.matmul %0, %115, %cst_74 {dimension_numbers = #tpu.dot_dimension_numbers<[1], [0], [0], [1], [0, 0, 1, 1], [], []>} : vector<32x27xbf16>, vector<27x1024xbf16>, vector<32x1024xf32> -> vector<32x1024xf32>
    %cst_75 = arith.constant 0.000000e+00 : f32
    %117 = vector.broadcast %cst_75 : f32 to vector<32x1024xf32>
    %118 = arith.maximumf %116, %117 : vector<32x1024xf32>
    %cst_76 = arith.constant dense<0.000000e+00> : vector<32xf32>
    %119 = vector.multi_reduction <add>, %118, %cst_76 [1] : vector<32x1024xf32> to vector<32xf32>
    %120 = vector.shape_cast %119 : vector<32xf32> to vector<32x1xf32>
    %121 = arith.addf %113, %120 : vector<32x1xf32>
    %c0_77 = arith.constant 0 : index
    %c0_78 = arith.constant 0 : index
    %c15360 = arith.constant 15360 : index
    %122 = vector.load %arg1[%c0_77, %c0_78, %c15360] : memref<1x27x22528xbf16, #tpu.memory_space<vmem>>, vector<1x27x1024xbf16>
    %123 = vector.shape_cast %122 : vector<1x27x1024xbf16> to vector<27x1024xbf16>
    %cst_79 = arith.constant dense<0.000000e+00> : vector<32x1024xf32>
    %124 = tpu.matmul %0, %123, %cst_79 {dimension_numbers = #tpu.dot_dimension_numbers<[1], [0], [0], [1], [0, 0, 1, 1], [], []>} : vector<32x27xbf16>, vector<27x1024xbf16>, vector<32x1024xf32> -> vector<32x1024xf32>
    %cst_80 = arith.constant 0.000000e+00 : f32
    %125 = vector.broadcast %cst_80 : f32 to vector<32x1024xf32>
    %126 = arith.maximumf %124, %125 : vector<32x1024xf32>
    %cst_81 = arith.constant dense<0.000000e+00> : vector<32xf32>
    %127 = vector.multi_reduction <add>, %126, %cst_81 [1] : vector<32x1024xf32> to vector<32xf32>
    %128 = vector.shape_cast %127 : vector<32xf32> to vector<32x1xf32>
    %129 = arith.addf %121, %128 : vector<32x1xf32>
    %c0_82 = arith.constant 0 : index
    %c0_83 = arith.constant 0 : index
    %c16384 = arith.constant 16384 : index
    %130 = vector.load %arg1[%c0_82, %c0_83, %c16384] : memref<1x27x22528xbf16, #tpu.memory_space<vmem>>, vector<1x27x1024xbf16>
    %131 = vector.shape_cast %130 : vector<1x27x1024xbf16> to vector<27x1024xbf16>
    %cst_84 = arith.constant dense<0.000000e+00> : vector<32x1024xf32>
    %132 = tpu.matmul %0, %131, %cst_84 {dimension_numbers = #tpu.dot_dimension_numbers<[1], [0], [0], [1], [0, 0, 1, 1], [], []>} : vector<32x27xbf16>, vector<27x1024xbf16>, vector<32x1024xf32> -> vector<32x1024xf32>
    %cst_85 = arith.constant 0.000000e+00 : f32
    %133 = vector.broadcast %cst_85 : f32 to vector<32x1024xf32>
    %134 = arith.maximumf %132, %133 : vector<32x1024xf32>
    %cst_86 = arith.constant dense<0.000000e+00> : vector<32xf32>
    %135 = vector.multi_reduction <add>, %134, %cst_86 [1] : vector<32x1024xf32> to vector<32xf32>
    %136 = vector.shape_cast %135 : vector<32xf32> to vector<32x1xf32>
    %137 = arith.addf %129, %136 : vector<32x1xf32>
    %c0_87 = arith.constant 0 : index
    %c0_88 = arith.constant 0 : index
    %c17408 = arith.constant 17408 : index
    %138 = vector.load %arg1[%c0_87, %c0_88, %c17408] : memref<1x27x22528xbf16, #tpu.memory_space<vmem>>, vector<1x27x1024xbf16>
    %139 = vector.shape_cast %138 : vector<1x27x1024xbf16> to vector<27x1024xbf16>
    %cst_89 = arith.constant dense<0.000000e+00> : vector<32x1024xf32>
    %140 = tpu.matmul %0, %139, %cst_89 {dimension_numbers = #tpu.dot_dimension_numbers<[1], [0], [0], [1], [0, 0, 1, 1], [], []>} : vector<32x27xbf16>, vector<27x1024xbf16>, vector<32x1024xf32> -> vector<32x1024xf32>
    %cst_90 = arith.constant 0.000000e+00 : f32
    %141 = vector.broadcast %cst_90 : f32 to vector<32x1024xf32>
    %142 = arith.maximumf %140, %141 : vector<32x1024xf32>
    %cst_91 = arith.constant dense<0.000000e+00> : vector<32xf32>
    %143 = vector.multi_reduction <add>, %142, %cst_91 [1] : vector<32x1024xf32> to vector<32xf32>
    %144 = vector.shape_cast %143 : vector<32xf32> to vector<32x1xf32>
    %145 = arith.addf %137, %144 : vector<32x1xf32>
    %c0_92 = arith.constant 0 : index
    %c0_93 = arith.constant 0 : index
    %c18432 = arith.constant 18432 : index
    %146 = vector.load %arg1[%c0_92, %c0_93, %c18432] : memref<1x27x22528xbf16, #tpu.memory_space<vmem>>, vector<1x27x1024xbf16>
    %147 = vector.shape_cast %146 : vector<1x27x1024xbf16> to vector<27x1024xbf16>
    %cst_94 = arith.constant dense<0.000000e+00> : vector<32x1024xf32>
    %148 = tpu.matmul %0, %147, %cst_94 {dimension_numbers = #tpu.dot_dimension_numbers<[1], [0], [0], [1], [0, 0, 1, 1], [], []>} : vector<32x27xbf16>, vector<27x1024xbf16>, vector<32x1024xf32> -> vector<32x1024xf32>
    %cst_95 = arith.constant 0.000000e+00 : f32
    %149 = vector.broadcast %cst_95 : f32 to vector<32x1024xf32>
    %150 = arith.maximumf %148, %149 : vector<32x1024xf32>
    %cst_96 = arith.constant dense<0.000000e+00> : vector<32xf32>
    %151 = vector.multi_reduction <add>, %150, %cst_96 [1] : vector<32x1024xf32> to vector<32xf32>
    %152 = vector.shape_cast %151 : vector<32xf32> to vector<32x1xf32>
    %153 = arith.addf %145, %152 : vector<32x1xf32>
    %c0_97 = arith.constant 0 : index
    %c0_98 = arith.constant 0 : index
    %c19456 = arith.constant 19456 : index
    %154 = vector.load %arg1[%c0_97, %c0_98, %c19456] : memref<1x27x22528xbf16, #tpu.memory_space<vmem>>, vector<1x27x1024xbf16>
    %155 = vector.shape_cast %154 : vector<1x27x1024xbf16> to vector<27x1024xbf16>
    %cst_99 = arith.constant dense<0.000000e+00> : vector<32x1024xf32>
    %156 = tpu.matmul %0, %155, %cst_99 {dimension_numbers = #tpu.dot_dimension_numbers<[1], [0], [0], [1], [0, 0, 1, 1], [], []>} : vector<32x27xbf16>, vector<27x1024xbf16>, vector<32x1024xf32> -> vector<32x1024xf32>
    %cst_100 = arith.constant 0.000000e+00 : f32
    %157 = vector.broadcast %cst_100 : f32 to vector<32x1024xf32>
    %158 = arith.maximumf %156, %157 : vector<32x1024xf32>
    %cst_101 = arith.constant dense<0.000000e+00> : vector<32xf32>
    %159 = vector.multi_reduction <add>, %158, %cst_101 [1] : vector<32x1024xf32> to vector<32xf32>
    %160 = vector.shape_cast %159 : vector<32xf32> to vector<32x1xf32>
    %161 = arith.addf %153, %160 : vector<32x1xf32>
    %c0_102 = arith.constant 0 : index
    %c0_103 = arith.constant 0 : index
    %c20480 = arith.constant 20480 : index
    %162 = vector.load %arg1[%c0_102, %c0_103, %c20480] : memref<1x27x22528xbf16, #tpu.memory_space<vmem>>, vector<1x27x1024xbf16>
    %163 = vector.shape_cast %162 : vector<1x27x1024xbf16> to vector<27x1024xbf16>
    %cst_104 = arith.constant dense<0.000000e+00> : vector<32x1024xf32>
    %164 = tpu.matmul %0, %163, %cst_104 {dimension_numbers = #tpu.dot_dimension_numbers<[1], [0], [0], [1], [0, 0, 1, 1], [], []>} : vector<32x27xbf16>, vector<27x1024xbf16>, vector<32x1024xf32> -> vector<32x1024xf32>
    %cst_105 = arith.constant 0.000000e+00 : f32
    %165 = vector.broadcast %cst_105 : f32 to vector<32x1024xf32>
    %166 = arith.maximumf %164, %165 : vector<32x1024xf32>
    %cst_106 = arith.constant dense<0.000000e+00> : vector<32xf32>
    %167 = vector.multi_reduction <add>, %166, %cst_106 [1] : vector<32x1024xf32> to vector<32xf32>
    %168 = vector.shape_cast %167 : vector<32xf32> to vector<32x1xf32>
    %169 = arith.addf %161, %168 : vector<32x1xf32>
    %c0_107 = arith.constant 0 : index
    %c0_108 = arith.constant 0 : index
    %c21504 = arith.constant 21504 : index
    %170 = vector.load %arg1[%c0_107, %c0_108, %c21504] : memref<1x27x22528xbf16, #tpu.memory_space<vmem>>, vector<1x27x1024xbf16>
    %171 = vector.shape_cast %170 : vector<1x27x1024xbf16> to vector<27x1024xbf16>
    %cst_109 = arith.constant dense<0.000000e+00> : vector<32x1024xf32>
    %172 = tpu.matmul %0, %171, %cst_109 {dimension_numbers = #tpu.dot_dimension_numbers<[1], [0], [0], [1], [0, 0, 1, 1], [], []>} : vector<32x27xbf16>, vector<27x1024xbf16>, vector<32x1024xf32> -> vector<32x1024xf32>
    %cst_110 = arith.constant 0.000000e+00 : f32
    %173 = vector.broadcast %cst_110 : f32 to vector<32x1024xf32>
    %174 = arith.maximumf %172, %173 : vector<32x1024xf32>
    %cst_111 = arith.constant dense<0.000000e+00> : vector<32xf32>
    %175 = vector.multi_reduction <add>, %174, %cst_111 [1] : vector<32x1024xf32> to vector<32xf32>
    %176 = vector.shape_cast %175 : vector<32xf32> to vector<32x1xf32>
    %177 = arith.addf %169, %176 : vector<32x1xf32>
    %cst_112 = arith.constant 4.50430161E-5 : f32
    %178 = vector.broadcast %cst_112 : f32 to vector<32x1xf32>
    %179 = arith.mulf %177, %178 : vector<32x1xf32>
    %c0_113 = arith.constant 0 : index
    %c0_114 = arith.constant 0 : index
    %180 = vector.load %arg3[%c0_113, %c0_114] : memref<16x32xf32, #tpu.memory_space<vmem>>, vector<16x32xf32>
    %cst_115 = arith.constant dense<0.000000e+00> : vector<16x1xf32>
    %181 = tpu.matmul %180, %179, %cst_115 {dimension_numbers = #tpu.dot_dimension_numbers<[1], [0], [0], [1], [0, 0, 1, 1], [], []>} : vector<16x32xf32>, vector<32x1xf32>, vector<16x1xf32> -> vector<16x1xf32>
    %c0_116 = arith.constant 0 : index
    %c0_117 = arith.constant 0 : index
    %182 = vector.load %arg4[%c0_116, %c0_117] : memref<16x1xf32, #tpu.memory_space<vmem>>, vector<16x1xf32>
    %183 = arith.addf %181, %182 : vector<16x1xf32>
    %184 = vector.shape_cast %183 : vector<16x1xf32> to vector<1x16x1xf32>
    %c0_118 = arith.constant 0 : index
    %c0_119 = arith.constant 0 : index
    %c0_120 = arith.constant 0 : index
    %185 = vector.load %arg5[%c0_118, %c0_119, %c0_120] : memref<1x16x1xf32, #tpu.memory_space<vmem>>, vector<1x16x1xf32>
    tpu.vector_store %arg5[%c0_118, %c0_119, %c0_120], %184 {strides = array<i32>} : memref<1x16x1xf32, #tpu.memory_space<vmem>>, vector<1x16x1xf32>,
    return
  }
  func.func @transform_0(%arg0: i32) -> (i32, i32, i32) {
    %c0_i32 = arith.constant 0 : i32
    %c0_i32_0 = arith.constant 0 : i32
    %c0_i32_1 = arith.constant 0 : i32
    return %arg0, %c0_i32, %c0_i32_0 : i32, i32, i32
  }
  func.func @transform_1(%arg0: i32) -> (i32, i32) {
    %c0_i32 = arith.constant 0 : i32
    %c0_i32_0 = arith.constant 0 : i32
    %c0_i32_1 = arith.constant 0 : i32
    return %c0_i32, %c0_i32_0 : i32, i32
  }
  func.func @transform_2(%arg0: i32) -> (i32, i32) {
    %c0_i32 = arith.constant 0 : i32
    %c0_i32_0 = arith.constant 0 : i32
    %c0_i32_1 = arith.constant 0 : i32
    return %c0_i32, %c0_i32_0 : i32, i32
  }
  func.func @transform_3(%arg0: i32) -> (i32, i32) {
    %c0_i32 = arith.constant 0 : i32
    %c0_i32_0 = arith.constant 0 : i32
    %c0_i32_1 = arith.constant 0 : i32
    return %c0_i32, %c0_i32_0 : i32, i32
  }
  func.func @transform_4(%arg0: i32) -> (i32, i32, i32) {
    %c0_i32 = arith.constant 0 : i32
    %c0_i32_0 = arith.constant 0 : i32
    %c0_i32_1 = arith.constant 0 : i32
    return %arg0, %c0_i32, %c0_i32_0 : i32, i32, i32
  }
}

</mosaic_0001>

<llo_original>
// kernel: enneaception_forward.1
$region0: #{enneaception_forward.1}
  #allocation0 [shape = 'u32[]', space=smem, size = 0x4, offset = 0x4, fixed_abs, tag = 'smem constant byte address 0x4 - core index']
  #allocation1 [shape = 'u32[144,128]{1,0:T(1,128)}', space=vmem, size = 0x12000, scoped, tag = 'internal scratch']
  %s0 = inlined_call_operand.vmem [shape: bf16[18,27,22528], index: 0, kind: input, shape index: {}]
  %s1 = inlined_call_operand.vmem [shape: bf16[32,27], index: 1, kind: input, shape index: {}]
  %s2 = inlined_call_operand.vmem [shape: f32[16,32], index: 2, kind: input, shape index: {}]
  %s3 = inlined_call_operand.vmem [shape: f32[16,1], index: 3, kind: input, shape index: {}]
  %s4 = inlined_call_operand.vmem [shape: f32[18,16,1], index: 4, kind: output, shape index: {}]
  %s5 = sld [smem:[#allocation0]]
  $region49: #{enneaception_forward.1} parent=0
    _
  %s7 = ssub.s32 1, %s5
  %s8 = scalar_select 0, %s7, %s5
  loop: start=0, step=1, limit=20
  $region2: #{enneaception_forward.1} parent=0 // loop_pre_header
    _
  $region3: #{enneaception_forward.1} parent=0 // loop_header
    %s10 = sphi 0, %s14
    %p11 = scmp.ge.s32.totalorder %s10, 20
    %s20 = sphi 0, %s22
    %s23 = sphi 0, %s20
    %s24 = sphi 0, %s23
    %s40 = sphi 0, %s24
    %s44 = sphi 0, %s44
    %s46 = sphi 0, %s44
    %s47 = sphi 0, %s46
    %s61 = sphi 0, %s47
    %s65 = sphi 0, %s65
    %s67 = sphi 0, %s65
    %s68 = sphi 0, %s67
    %s82 = sphi 0, %s68
    %s86 = sphi 0, %s86
    %s88 = sphi 0, %s86
    %s89 = sphi 0, %s88
    %s103 = sphi 0, %s89
    %s109 = sphi 0, %s111
    %s112 = sphi 0, %s109
    %s113 = sphi 0, %s112
    %s129 = sphi 0, %s113
  $region4: #{enneaception_forward.1} parent=0 // loop_header_branch
    %13 = sbr.rel (%p11) target = $region8
  $region5: #{enneaception_forward.1} parent=0 // loop_body
    %s15 = ssub.s32 %s10, 1
    %s16 = ssub.s32 %s10, 2
    %s17 = sadd.s32 %s10, 1
    %s18 = ssub.s32 %s10, %s17
    %p19 = scmp.eq.s32.totalorder %s18, 0
    %s21 = sadd.s32 %s20, 1
    %s22 = scalar_select %p19, %s20, %s21
    %p25 = pneg %p19
    %p26 = scmp.eq.s32.totalorder %s10, 17
    %p27 = por %p25, %p26
    %p28 = scmp.ne.s32.totalorder %s20, %s23
    %p29 = scmp.eq.s32.totalorder %s10, 0
    %p30 = por %p28, %p29
    %p31 = scmp.ne.s32.totalorder %s20, %s23
    %p32 = scmp.eq.s32.totalorder %s15, 17
    %p33 = por %p31, %p32
    %p34 = scmp.ne.s32.totalorder %s23, %s24
    %p35 = scmp.eq.s32.totalorder %s15, 0
    %p36 = por %p34, %p35
    %p37 = scmp.ne.s32.totalorder %s23, %s24
    %p38 = scmp.eq.s32.totalorder %s16, 17
    %p39 = por %p37, %p38
    %p41 = scmp.ne.s32.totalorder %s24, %s40
    %p42 = scmp.eq.s32.totalorder %s16, 0
    %p43 = por %p41, %p42
    %s45 = sadd.s32 %s44, 1
    %p48 = scmp.eq.s32.totalorder %s10, 17
    %p49 = scmp.ne.s32.totalorder %s44, %s46
    %p50 = scmp.eq.s32.totalorder %s10, 0
    %p51 = por %p49, %p50
    %p52 = scmp.ne.s32.totalorder %s44, %s46
    %p53 = scmp.eq.s32.totalorder %s15, 17
    %p54 = por %p52, %p53
    %p55 = scmp.ne.s32.totalorder %s46, %s47
    %p56 = scmp.eq.s32.totalorder %s15, 0
    %p57 = por %p55, %p56
    %p58 = scmp.ne.s32.totalorder %s46, %s47
    %p59 = scmp.eq.s32.totalorder %s16, 17
    %p60 = por %p58, %p59
    %p62 = scmp.ne.s32.totalorder %s47, %s61
    %p63 = scmp.eq.s32.totalorder %s16, 0
    %p64 = por %p62, %p63
    %s66 = sadd.s32 %s65, 1
    %p69 = scmp.eq.s32.totalorder %s10, 17
    %p70 = scmp.ne.s32.totalorder %s65, %s67
    %p71 = scmp.eq.s32.totalorder %s10, 0
    %p72 = por %p70, %p71
    %p73 = scmp.ne.s32.totalorder %s65, %s67
    %p74 = scmp.eq.s32.totalorder %s15, 17
    %p75 = por %p73, %p74
    %p76 = scmp.ne.s32.totalorder %s67, %s68
    %p77 = scmp.eq.s32.totalorder %s15, 0
    %p78 = por %p76, %p77
    %p79 = scmp.ne.s32.totalorder %s67, %s68
    %p80 = scmp.eq.s32.totalorder %s16, 17
    %p81 = por %p79, %p80
    %p83 = scmp.ne.s32.totalorder %s68, %s82
    %p84 = scmp.eq.s32.totalorder %s16, 0
    %p85 = por %p83, %p84
    %s87 = sadd.s32 %s86, 1
    %p90 = scmp.eq.s32.totalorder %s10, 17
    %p91 = scmp.ne.s32.totalorder %s86, %s88
    %p92 = scmp.eq.s32.totalorder %s10, 0
    %p93 = por %p91, %p92
    %p94 = scmp.ne.s32.totalorder %s86, %s88
    %p95 = scmp.eq.s32.totalorder %s15, 17
    %p96 = por %p94, %p95
    %p97 = scmp.ne.s32.totalorder %s88, %s89
    %p98 = scmp.eq.s32.totalorder %s15, 0
    %p99 = por %p97, %p98
    %p100 = scmp.ne.s32.totalorder %s88, %s89
    %p101 = scmp.eq.s32.totalorder %s16, 17
    %p102 = por %p100, %p101
    %p104 = scmp.ne.s32.totalorder %s89, %s103
    %p105 = scmp.eq.s32.totalorder %s16, 0
    %p106 = por %p104, %p105
    %s107 = ssub.s32 %s10, %s17
    %p108 = scmp.eq.s32.totalorder %s107, 0
    %s110 = sadd.s32 %s109, 1
    %s111 = scalar_select %p108, %s109, %s110
    %p114 = pneg %p108
    %p115 = scmp.eq.s32.totalorder %s10, 17
    %p116 = por %p114, %p115
    %p117 = scmp.ne.s32.totalorder %s109, %s112
    %p118 = scmp.eq.s32.totalorder %s10, 0
    %p119 = por %p117, %p118
    %p120 = scmp.ne.s32.totalorder %s109, %s112
    %p121 = scmp.eq.s32.totalorder %s15, 17
    %p122 = por %p120, %p121
    %p123 = scmp.ne.s32.totalorder %s112, %s113
    %p124 = scmp.eq.s32.totalorder %s15, 0
    %p125 = por %p123, %p124
    %p126 = scmp.ne.s32.totalorder %s112, %s113
    %p127 = scmp.eq.s32.totalorder %s16, 17
    %p128 = por %p126, %p127
    %p130 = scmp.ne.s32.totalorder %s113, %s129
    %p131 = scmp.eq.s32.totalorder %s16, 0
    %p132 = por %p130, %p131
    %p133 = scmp.le.s32.totalorder 1, %s10
    %p134 = scmp.lt.s32.totalorder %s10, 19
    %p135 = pnand %p133, %p134
    %p136 = pneg %p135
    // Predicated region
    $region9: #{enneaception_forward.1} parent=5 // pred_check
      _
    $region10: #{enneaception_forward.1} parent=5 // pred_check_branch
      %138 = sbr.rel (%p135) target = $region12
    $region11: #{enneaception_forward.1} parent=5 // pred_region
      %s139 = ssub.s32 %s10, 1
      // Predicated region
      $region13: #{enneaception_forward.1} parent=11 // pred_check
        %p140 = pneg %p57
      $region14: #{enneaception_forward.1} parent=11 // pred_check_branch
        %142 = sbr.rel (%p140) target = $region16
      $region15: #{enneaception_forward.1} parent=11 // pred_region
        _
      $region16: #{enneaception_forward.1} parent=11 // pred_fallthru
        _
      // Predicated region
      $region17: #{enneaception_forward.1} parent=11 // pred_check
        %p143 = pneg %p78
      $region18: #{enneaception_forward.1} parent=11 // pred_check_branch
        %145 = sbr.rel (%p143) target = $region20
      $region19: #{enneaception_forward.1} parent=11 // pred_region
        _
      $region20: #{enneaception_forward.1} parent=11 // pred_fallthru
        _
      // Predicated region
      $region21: #{enneaception_forward.1} parent=11 // pred_check
        %p146 = pneg %p99
      $region22: #{enneaception_forward.1} parent=11 // pred_check_branch
        %148 = sbr.rel (%p146) target = $region24
      $region23: #{enneaception_forward.1} parent=11 // pred_region
        _
      $region24: #{enneaception_forward.1} parent=11 // pred_fallthru
        _
    $region12: #{enneaception_forward.1} parent=5 // pred_fallthru
      _
    %p149 = scmp.lt.s32.totalorder %s10, 18
    // Predicated region
    $region25: #{enneaception_forward.1} parent=5 // pred_check
      %p150 = pneg %p149
    $region26: #{enneaception_forward.1} parent=5 // pred_check_branch
      %152 = sbr.rel (%p150) target = $region28
    $region27: #{enneaception_forward.1} parent=5 // pred_region
      // Predicated region
      $region29: #{enneaception_forward.1} parent=27 // pred_check
        %p153 = pneg %p30
      $region30: #{enneaception_forward.1} parent=27 // pred_check_branch
        %155 = sbr.rel (%p153) target = $region32
      $region31: #{enneaception_forward.1} parent=27 // pred_region
        %p156 = scmp.lt.s32.totalorder %s10, 17
        %s157 = scalar_select %p156, %s10, 17
        %s158 = smul.addr %s157, 704
        %s159 = smul.addr %s158, 4
        %s160 = scalar_lea.vmem %s0, %s159
      $region32: #{enneaception_forward.1} parent=27 // pred_fallthru
        _
    $region28: #{enneaception_forward.1} parent=5 // pred_fallthru
      _
    %p161 = scmp.le.s32.totalorder 1, %s10
    %p162 = scmp.lt.s32.totalorder %s10, 19
    %p163 = pnand %p161, %p162
    %p164 = pneg %p163
    // Predicated region
    $region33: #{enneaception_forward.1} parent=5 // pred_check
      _
    $region34: #{enneaception_forward.1} parent=5 // pred_check_branch
      %166 = sbr.rel (%p163) target = $region36
    $region35: #{enneaception_forward.1} parent=5 // pred_region
      %s167 = ssub.s32 %s10, 1
      %p168 = scmp.lt.s32.totalorder %s15, 17
      %s169 = scalar_select %p168, %s15, 17
      %s170 = smul.addr %s169, 704
      %s171 = smul.addr %s170, 4
      %s172 = scalar_lea.vmem %s0, %s171
      %p173 = pneg %p36
      %p174 = pneg %p33
      %p175 = pneg %p57
      %p176 = pneg %p54
      %p177 = pneg %p78
      %p178 = pneg %p75
      %p179 = pneg %p99
      %p180 = pneg %p96
      %p181 = pneg %p125
      %p182 = pneg %p122
      %p183 = scmp.lt.s32.totalorder %s15, 17
      %s184 = scalar_select %p183, %s15, 17
      %s185 = smul.addr %s184, 2
      %s186 = smul.addr %s185, 8
      %s187 = scalar_lea.vmem %s4, %s186
      %p188 = scmp.lt.s32.totalorder %s15, 17
      %s189 = scalar_select %p188, %s15, 17
      %s190 = smul.addr %s189, 704
      %s191 = smul.addr %s190, 4
      %s192 = scalar_lea.vmem %s0, %s191
      %p193 = scmp.lt.s32.totalorder %s15, 17
      %s194 = scalar_select %p193, %s15, 17
      %s195 = smul.addr %s194, 2
      %s196 = smul.addr %s195, 8
      %s197 = scalar_lea.vmem %s4, %s196
      %v199 = vld [vmem:[%s1] sm:$0xf]
      %v200 = vld [vmem:[%s1 + $0x4] sm:$0xf]
      %v201 = vld [vmem:[%s1 + $0x8] sm:$0xf]
      %v202 = vld [vmem:[%s1 + $0xc] sm:$0xf]
      %v203 = vld [vmem:[%s192] sm:$0xff]
      %v204 = vld [vmem:[%s192 + $0x8] sm:$0xff]
      %v205 = vld [vmem:[%s192 + $0x10] sm:$0xff]
      %v206 = vld [vmem:[%s192 + $0x18] sm:$0xff]
      %v207 = vld [vmem:[%s192 + $0x2c0] sm:$0xff]
      %v208 = vld [vmem:[%s192 + $0x2c8] sm:$0xff]
      %v209 = vld [vmem:[%s192 + $0x2d0] sm:$0xff]
      %v210 = vld [vmem:[%s192 + $0x2d8] sm:$0xff]
      %v211 = vld [vmem:[%s192 + $0x580] sm:$0xff]
      %v212 = vld [vmem:[%s192 + $0x588] sm:$0xff]
      %v213 = vld [vmem:[%s192 + $0x590] sm:$0xff]
      %v214 = vld [vmem:[%s192 + $0x598] sm:$0xff]
      %v215 = vld [vmem:[%s192 + $0x840] sm:$0x33]
      %v216 = vld [vmem:[%s192 + $0x848] sm:$0x33]
      %v217 = vld [vmem:[%s192 + $0x850] sm:$0x33]
      %v218 = vld [vmem:[%s192 + $0x858] sm:$0x33]
      %v223 = vunpack.c.l.b16 %v199
      %v224 = vunpack.c.l.b16 %v200
      %v225 = vunpack.c.l.b16 %v201
      %v226 = vunpack.c.l.b16 %v202
      %v227 = vpack.c.b16 %v224, %v223
      %v228 = vpack.c.b16 %v226, %v225
      %v245 = vunpack.c.l.b16 %v203
      %v246 = vunpack.c.h.b16 %v203
      %v247 = vunpack.c.l.b16 %v204
      %v248 = vunpack.c.h.b16 %v204
      %v249 = vunpack.c.l.b16 %v205
      %v250 = vunpack.c.h.b16 %v205
      %v251 = vunpack.c.l.b16 %v206
      %v252 = vunpack.c.h.b16 %v206
      %v253 = vunpack.c.l.b16 %v207
      %v254 = vunpack.c.h.b16 %v207
      %v255 = vunpack.c.l.b16 %v208
      %v256 = vunpack.c.h.b16 %v208
      %v257 = vunpack.c.l.b16 %v209
      %v258 = vunpack.c.h.b16 %v209
      %v259 = vunpack.c.l.b16 %v210
      %v260 = vunpack.c.h.b16 %v210
      %v261 = vunpack.c.l.b16 %v211
      %v262 = vunpack.c.h.b16 %v211
      %v263 = vunpack.c.l.b16 %v212
      %v264 = vunpack.c.h.b16 %v212
      %v265 = vunpack.c.l.b16 %v213
      %v266 = vunpack.c.h.b16 %v213
      %v267 = vunpack.c.l.b16 %v214
      %v268 = vunpack.c.h.b16 %v214
      %v269 = vunpack.c.l.b16 %v215
      %v270 = vunpack.c.h.b16 %v215
      %v271 = vunpack.c.l.b16 %v216
      %v272 = vunpack.c.h.b16 %v216
      %v273 = vunpack.c.l.b16 %v217
      %v274 = vunpack.c.h.b16 %v217
      %v275 = vunpack.c.l.b16 %v218
      %v276 = vunpack.c.h.b16 %v218
      %v277 = vpack.c.b16 %v253, %v245
      %v278 = vpack.c.b16 %v254, %v246
      %v279 = vpack.c.b16 %v255, %v247
      %v280 = vpack.c.b16 %v256, %v248
      %v281 = vpack.c.b16 %v257, %v249
      %v282 = vpack.c.b16 %v258, %v250
      %v283 = vpack.c.b16 %v259, %v251
      %v284 = vpack.c.b16 %v260, %v252
      %v285 = vpack.c.b16 %v269, %v261
      %v286 = vpack.c.b16 %v270, %v262
      %v287 = vpack.c.b16 %v271, %v263
      %v288 = vpack.c.b16 %v272, %v264
      %v289 = vpack.c.b16 %v273, %v265
      %v290 = vpack.c.b16 %v274, %v266
      %v291 = vpack.c.b16 %v275, %v267
      %v292 = vpack.c.b16 %v276, %v268
      %vm301 = vcmask 220160
      %v303 = vsel %vm301, %v227, 0
      %v306 = vsel %vm301, %v228, 0
      %vm308 = vcmask 1044480
      %vm309 = vcmask 1045504
      %v310 = vsel %vm308, 4294967295, 65535
      %v311 = vsel %vm309, %v310, 0
      %v313 = vand.u32 %v285, %v311
      %v316 = vand.u32 %v286, %v311
      %v319 = vand.u32 %v287, %v311
      %v322 = vand.u32 %v288, %v311
      %v325 = vand.u32 %v289, %v311
      %v328 = vand.u32 %v290, %v311
      %v331 = vand.u32 %v291, %v311
      %v334 = vand.u32 %v292, %v311
      %336 = vmatprep.subr.bf16.mxu0 %v278
      %337 = vmatpush1.bf16.msra.mxu0 %v277
      %338 = vmatprep.subr.bf16.mxu0 %v316
      %339 = vmatpush1.bf16.msra.mxu0 %v313
      %340 = vmatprep.subr.bf16.mxu0 0
      %341 = vmatpush1.bf16.msra.mxu0 0
      %342 = vmatprep.subr.bf16.mxu0 0
      %343 = vmatpush1.bf16.msra.mxu0 0
      %344 = vmatprep.subr.bf16.mxu0 0
      %345 = vmatpush1.bf16.msra.mxu0 0
      %346 = vmatprep.subr.bf16.mxu0 0
      %347 = vmatpush1.bf16.msra.mxu0 0
      %348 = vmatprep.subr.bf16.mxu0 0
      %349 = vmatpush1.bf16.msra.mxu0 0
      %350 = vmatprep.subr.bf16.mxu0 0
      %351 = vmatpush1.bf16.msra.mxu0 0
      %352 = vmatprep.subr.bf16.mxu0 0
      %353 = vmatpush1.bf16.msra.mxu0 0
      %354 = vmatprep.subr.bf16.mxu0 0
      %355 = vmatpush1.bf16.msra.mxu0 0
      %356 = vmatprep.subr.bf16.mxu0 0
      %357 = vmatpush1.bf16.msra.mxu0 0
      %358 = vmatprep.subr.bf16.mxu0 0
      %359 = vmatpush1.bf16.msra.mxu0 0
      %360 = vmatprep.subr.bf16.mxu0 0
      %361 = vmatpush1.bf16.msra.mxu0 0
      %362 = vmatprep.subr.bf16.mxu0 0
      %363 = vmatpush1.bf16.msra.mxu0 0
      %364 = vmatprep.subr.bf16.mxu0 0
      %365 = vmatpush1.bf16.msra.mxu0 0
      %366 = vmatprep.subr.bf16.mxu0 0
      %367 = vmatpush1.bf16.msra.mxu0 0
      %368 = vmatprep.mubr.bf16.mxu0 0
      %369 = vmatmul.mubr.bf16.gmra.mrb[0].mxu0 %v303
      %v370 = vpop.f32.mrb[0].mxu0
      %v371 = vadd.f32 0.0, %v370
      %v372 = vpop.f32.mrb[0].mxu0
      %v373 = vadd.f32 0.0, %v372
      %v374 = vpop.f32.mrb[0].mxu0
      %v375 = vadd.f32 0.0, %v374
      %v376 = vpop.f32.mrb[0].mxu0
      %v377 = vadd.f32 0.0, %v376
      %378 = vmatprep.mubr.bf16.mxu0 0
      %379 = vmatmul.mubr.bf16.gmra.mrb[0].mxu0 %v306
      %v380 = vpop.f32.mrb[0].mxu0
      %v381 = vadd.f32 0.0, %v380
      %v382 = vpop.f32.mrb[0].mxu0
      %v383 = vadd.f32 0.0, %v382
      %v384 = vpop.f32.mrb[0].mxu0
      %v385 = vadd.f32 0.0, %v384
      %v386 = vpop.f32.mrb[0].mxu0
      %v387 = vadd.f32 0.0, %v386
      %388 = vdwg.mxu0
      %389 = vmatprep.subr.bf16.mxu0 %v280
      %390 = vmatpush1.bf16.msra.mxu0 %v279
      %391 = vmatprep.subr.bf16.mxu0 %v322
      %392 = vmatpush1.bf16.msra.mxu0 %v319
      %393 = vmatprep.subr.bf16.mxu0 0
      %394 = vmatpush1.bf16.msra.mxu0 0
      %395 = vmatprep.subr.bf16.mxu0 0
      %396 = vmatpush1.bf16.msra.mxu0 0
      %397 = vmatprep.subr.bf16.mxu0 0
      %398 = vmatpush1.bf16.msra.mxu0 0
      %399 = vmatprep.subr.bf16.mxu0 0
      %400 = vmatpush1.bf16.msra.mxu0 0
      %401 = vmatprep.subr.bf16.mxu0 0
      %402 = vmatpush1.bf16.msra.mxu0 0
      %403 = vmatprep.subr.bf16.mxu0 0
      %404 = vmatpush1.bf16.msra.mxu0 0
      %405 = vmatprep.subr.bf16.mxu0 0
      %406 = vmatpush1.bf16.msra.mxu0 0
      %407 = vmatprep.subr.bf16.mxu0 0
      %408 = vmatpush1.bf16.msra.mxu0 0
      %409 = vmatprep.subr.bf16.mxu0 0
      %410 = vmatpush1.bf16.msra.mxu0 0
      %411 = vmatprep.subr.bf16.mxu0 0
      %412 = vmatpush1.bf16.msra.mxu0 0
      %413 = vmatprep.subr.bf16.mxu0 0
      %414 = vmatpush1.bf16.msra.mxu0 0
      %415 = vmatprep.subr.bf16.mxu0 0
      %416 = vmatpush1.bf16.msra.mxu0 0
      %417 = vmatprep.subr.bf16.mxu0 0
      %418 = vmatpush1.bf16.msra.mxu0 0
      %419 = vmatprep.subr.bf16.mxu0 0
      %420 = vmatpush1.bf16.msra.mxu0 0
      %421 = vmatprep.mubr.bf16.mxu0 0
      %422 = vmatmul.mubr.bf16.gmra.mrb[0].mxu0 %v303
      %v423 = vpop.f32.mrb[0].mxu0
      %v424 = vadd.f32 0.0, %v423
      %v425 = vpop.f32.mrb[0].mxu0
      %v426 = vadd.f32 0.0, %v425
      %v427 = vpop.f32.mrb[0].mxu0
      %v428 = vadd.f32 0.0, %v427
      %v429 = vpop.f32.mrb[0].mxu0
      %v430 = vadd.f32 0.0, %v429
      %431 = vmatprep.mubr.bf16.mxu0 0
      %432 = vmatmul.mubr.bf16.gmra.mrb[0].mxu0 %v306
      %v433 = vpop.f32.mrb[0].mxu0
      %v434 = vadd.f32 0.0, %v433
      %v435 = vpop.f32.mrb[0].mxu0
      %v436 = vadd.f32 0.0, %v435
      %v437 = vpop.f32.mrb[0].mxu0
      %v438 = vadd.f32 0.0, %v437
      %v439 = vpop.f32.mrb[0].mxu0
      %v440 = vadd.f32 0.0, %v439
      %441 = vdwg.mxu0
      %442 = vmatprep.subr.bf16.mxu0 %v282
      %443 = vmatpush1.bf16.msra.mxu0 %v281
      %444 = vmatprep.subr.bf16.mxu0 %v328
      %445 = vmatpush1.bf16.msra.mxu0 %v325
      %446 = vmatprep.subr.bf16.mxu0 0
      %447 = vmatpush1.bf16.msra.mxu0 0
      %448 = vmatprep.subr.bf16.mxu0 0
      %449 = vmatpush1.bf16.msra.mxu0 0
      %450 = vmatprep.subr.bf16.mxu0 0
      %451 = vmatpush1.bf16.msra.mxu0 0
      %452 = vmatprep.subr.bf16.mxu0 0
      %453 = vmatpush1.bf16.msra.mxu0 0
      %454 = vmatprep.subr.bf16.mxu0 0
      %455 = vmatpush1.bf16.msra.mxu0 0
      %456 = vmatprep.subr.bf16.mxu0 0
      %457 = vmatpush1.bf16.msra.mxu0 0
      %458 = vmatprep.subr.bf16.mxu0 0
      %459 = vmatpush1.bf16.msra.mxu0 0
      %460 = vmatprep.subr.bf16.mxu0 0
      %461 = vmatpush1.bf16.msra.mxu0 0
      %462 = vmatprep.subr.bf16.mxu0 0
      %463 = vmatpush1.bf16.msra.mxu0 0
      %464 = vmatprep.subr.bf16.mxu0 0
      %465 = vmatpush1.bf16.msra.mxu0 0
      %466 = vmatprep.subr.bf16.mxu0 0
      %467 = vmatpush1.bf16.msra.mxu0 0
      %468 = vmatprep.subr.bf16.mxu0 0
      %469 = vmatpush1.bf16.msra.mxu0 0
      %470 = vmatprep.subr.bf16.mxu0 0
      %471 = vmatpush1.bf16.msra.mxu0 0
      %472 = vmatprep.subr.bf16.mxu0 0
      %473 = vmatpush1.bf16.msra.mxu0 0
      %474 = vmatprep.mubr.bf16.mxu0 0
      %475 = vmatmul.mubr.bf16.gmra.mrb[0].mxu0 %v303
      %v476 = vpop.f32.mrb[0].mxu0
      %v477 = vadd.f32 0.0, %v476
      %v478 = vpop.f32.mrb[0].mxu0
      %v479 = vadd.f32 0.0, %v478
      %v480 = vpop.f32.mrb[0].mxu0
      %v481 = vadd.f32 0.0, %v480
      %v482 = vpop.f32.mrb[0].mxu0
      %v483 = vadd.f32 0.0, %v482
      %484 = vmatprep.mubr.bf16.mxu0 0
      %485 = vmatmul.mubr.bf16.gmra.mrb[0].mxu0 %v306
      %v486 = vpop.f32.mrb[0].mxu0
      %v487 = vadd.f32 0.0, %v486
      %v488 = vpop.f32.mrb[0].mxu0
      %v489 = vadd.f32 0.0, %v488
      %v490 = vpop.f32.mrb[0].mxu0
      %v491 = vadd.f32 0.0, %v490
      %v492 = vpop.f32.mrb[0].mxu0
      %v493 = vadd.f32 0.0, %v492
      %494 = vdwg.mxu0
      %495 = vmatprep.subr.bf16.mxu0 %v284
      %496 = vmatpush1.bf16.msra.mxu0 %v283
      %497 = vmatprep.subr.bf16.mxu0 %v334
      %498 = vmatpush1.bf16.msra.mxu0 %v331
      %499 = vmatprep.subr.bf16.mxu0 0
      %500 = vmatpush1.bf16.msra.mxu0 0
      %501 = vmatprep.subr.bf16.mxu0 0
      %502 = vmatpush1.bf16.msra.mxu0 0
      %503 = vmatprep.subr.bf16.mxu0 0
      %504 = vmatpush1.bf16.msra.mxu0 0
      %505 = vmatprep.subr.bf16.mxu0 0
      %506 = vmatpush1.bf16.msra.mxu0 0
      %507 = vmatprep.subr.bf16.mxu0 0
      %508 = vmatpush1.bf16.msra.mxu0 0
      %509 = vmatprep.subr.bf16.mxu0 0
      %510 = vmatpush1.bf16.msra.mxu0 0
      %511 = vmatprep.subr.bf16.mxu0 0
      %512 = vmatpush1.bf16.msra.mxu0 0
      %513 = vmatprep.subr.bf16.mxu0 0
      %514 = vmatpush1.bf16.msra.mxu0 0
      %515 = vmatprep.subr.bf16.mxu0 0
      %516 = vmatpush1.bf16.msra.mxu0 0
      %517 = vmatprep.subr.bf16.mxu0 0
      %518 = vmatpush1.bf16.msra.mxu0 0
      %519 = vmatprep.subr.bf16.mxu0 0
      %520 = vmatpush1.bf16.msra.mxu0 0
      %521 = vmatprep.subr.bf16.mxu0 0
      %522 = vmatpush1.bf16.msra.mxu0 0
      %523 = vmatprep.subr.bf16.mxu0 0
      %524 = vmatpush1.bf16.msra.mxu0 0
      %525 = vmatprep.subr.bf16.mxu0 0
      %526 = vmatpush1.bf16.msra.mxu0 0
      %527 = vmatprep.mubr.bf16.mxu0 0
      %528 = vmatmul.mubr.bf16.gmra.mrb[0].mxu0 %v303
      %v529 = vpop.f32.mrb[0].mxu0
      %v530 = vadd.f32 0.0, %v529
      %v531 = vpop.f32.mrb[0].mxu0
      %v532 = vadd.f32 0.0, %v531
      %v533 = vpop.f32.mrb[0].mxu0
      %v534 = vadd.f32 0.0, %v533
      %v535 = vpop.f32.mrb[0].mxu0
      %v536 = vadd.f32 0.0, %v535
      %537 = vmatprep.mubr.bf16.mxu0 0
      %538 = vmatmul.mubr.bf16.gmra.mrb[0].mxu0 %v306
      %v539 = vpop.f32.mrb[0].mxu0
      %v540 = vadd.f32 0.0, %v539
      %v541 = vpop.f32.mrb[0].mxu0
      %v542 = vadd.f32 0.0, %v541
      %v543 = vpop.f32.mrb[0].mxu0
      %v544 = vadd.f32 0.0, %v543
      %v545 = vpop.f32.mrb[0].mxu0
      %v546 = vadd.f32 0.0, %v545
      %547 = vdwg.mxu0
      %v548 = vmax.f32 %v371, 0.0
      %v549 = vmax.f32 %v373, 0.0
      %v550 = vmax.f32 %v424, 0.0
      %v551 = vmax.f32 %v426, 0.0
      %v552 = vmax.f32 %v477, 0.0
      %v553 = vmax.f32 %v479, 0.0
      %v554 = vmax.f32 %v530, 0.0
      %v555 = vmax.f32 %v532, 0.0
      %v556 = vmax.f32 %v375, 0.0
      %v557 = vmax.f32 %v377, 0.0
      %v558 = vmax.f32 %v428, 0.0
      %v559 = vmax.f32 %v430, 0.0
      %v560 = vmax.f32 %v481, 0.0
      %v561 = vmax.f32 %v483, 0.0
      %v562 = vmax.f32 %v534, 0.0
      %v563 = vmax.f32 %v536, 0.0
      %v564 = vmax.f32 %v381, 0.0
      %v565 = vmax.f32 %v383, 0.0
      %v566 = vmax.f32 %v434, 0.0
      %v567 = vmax.f32 %v436, 0.0
      %v568 = vmax.f32 %v487, 0.0
      %v569 = vmax.f32 %v489, 0.0
      %v570 = vmax.f32 %v540, 0.0
      %v571 = vmax.f32 %v542, 0.0
      %v572 = vmax.f32 %v385, 0.0
      %v573 = vmax.f32 %v387, 0.0
      %v574 = vmax.f32 %v438, 0.0
      %v575 = vmax.f32 %v440, 0.0
      %v576 = vmax.f32 %v491, 0.0
      %v577 = vmax.f32 %v493, 0.0
      %v578 = vmax.f32 %v544, 0.0
      %v579 = vmax.f32 %v546, 0.0
      %v580 = vadd.f32 %v548, %v549
      %v581 = vadd.f32 %v580, %v550
      %v582 = vadd.f32 %v581, %v551
      %v583 = vadd.f32 %v582, %v552
      %v584 = vadd.f32 %v583, %v553
      %v585 = vadd.f32 %v584, %v554
      %v586 = vadd.f32 %v585, %v555
      %587 = vadd.xlane.f32.xlu0 %v586
      %v588 = vpop.xlane.xlu0 %587
      %v589 = vadd.f32 %v556, %v557
      %v590 = vadd.f32 %v589, %v558
      %v591 = vadd.f32 %v590, %v559
      %v592 = vadd.f32 %v591, %v560
      %v593 = vadd.f32 %v592, %v561
      %v594 = vadd.f32 %v593, %v562
      %v595 = vadd.f32 %v594, %v563
      %596 = vadd.xlane.f32.xlu0 %v595
      %v597 = vpop.xlane.xlu0 %596
      %v598 = vadd.f32 %v564, %v565
      %v599 = vadd.f32 %v598, %v566
      %v600 = vadd.f32 %v599, %v567
      %v601 = vadd.f32 %v600, %v568
      %v602 = vadd.f32 %v601, %v569
      %v603 = vadd.f32 %v602, %v570
      %v604 = vadd.f32 %v603, %v571
      %605 = vadd.xlane.f32.xlu0 %v604
      %v606 = vpop.xlane.xlu0 %605
      %v607 = vadd.f32 %v572, %v573
      %v608 = vadd.f32 %v607, %v574
      %v609 = vadd.f32 %v608, %v575
      %v610 = vadd.f32 %v609, %v576
      %v611 = vadd.f32 %v610, %v577
      %v612 = vadd.f32 %v611, %v578
      %v613 = vadd.f32 %v612, %v579
      %614 = vadd.xlane.f32.xlu0 %v613
      %v615 = vpop.xlane.xlu0 %614
      %v616 = vadd.f32 %v588, 0.0
      %v617 = vadd.f32 %v597, 0.0
      %v618 = vadd.f32 %v606, 0.0
      %v619 = vadd.f32 %v615, 0.0
      %v620 = vld [vmem:[%s192 + $0x20] sm:$0xff]
      %v621 = vld [vmem:[%s192 + $0x28] sm:$0xff]
      %v622 = vld [vmem:[%s192 + $0x30] sm:$0xff]
      %v623 = vld [vmem:[%s192 + $0x38] sm:$0xff]
      %v624 = vld [vmem:[%s192 + $0x2e0] sm:$0xff]
      %v625 = vld [vmem:[%s192 + $0x2e8] sm:$0xff]
      %v626 = vld [vmem:[%s192 + $0x2f0] sm:$0xff]
      %v627 = vld [vmem:[%s192 + $0x2f8] sm:$0xff]
      %v628 = vld [vmem:[%s192 + $0x5a0] sm:$0xff]
      %v629 = vld [vmem:[%s192 + $0x5a8] sm:$0xff]
      %v630 = vld [vmem:[%s192 + $0x5b0] sm:$0xff]
      %v631 = vld [vmem:[%s192 + $0x5b8] sm:$0xff]
      %v632 = vld [vmem:[%s192 + $0x860] sm:$0x33]
      %v633 = vld [vmem:[%s192 + $0x868] sm:$0x33]
      %v634 = vld [vmem:[%s192 + $0x870] sm:$0x33]
      %v635 = vld [vmem:[%s192 + $0x878] sm:$0x33]
      %v652 = vunpack.c.l.b16 %v620
      %v653 = vunpack.c.h.b16 %v620
      %v654 = vunpack.c.l.b16 %v621
      %v655 = vunpack.c.h.b16 %v621
      %v656 = vunpack.c.l.b16 %v622
      %v657 = vunpack.c.h.b16 %v622
      %v658 = vunpack.c.l.b16 %v623
      %v659 = vunpack.c.h.b16 %v623
      %v660 = vunpack.c.l.b16 %v624
      %v661 = vunpack.c.h.b16 %v624
      %v662 = vunpack.c.l.b16 %v625
      %v663 = vunpack.c.h.b16 %v625
      %v664 = vunpack.c.l.b16 %v626
      %v665 = vunpack.c.h.b16 %v626
      %v666 = vunpack.c.l.b16 %v627
      %v667 = vunpack.c.h.b16 %v627
      %v668 = vunpack.c.l.b16 %v628
      %v669 = vunpack.c.h.b16 %v628
      %v670 = vunpack.c.l.b16 %v629
      %v671 = vunpack.c.h.b16 %v629
      %v672 = vunpack.c.l.b16 %v630
      %v673 = vunpack.c.h.b16 %v630
      %v674 = vunpack.c.l.b16 %v631
      %v675 = vunpack.c.h.b16 %v631
      %v676 = vunpack.c.l.b16 %v632
      %v677 = vunpack.c.h.b16 %v632
      %v678 = vunpack.c.l.b16 %v633
      %v679 = vunpack.c.h.b16 %v633
      %v680 = vunpack.c.l.b16 %v634
      %v681 = vunpack.c.h.b16 %v634
      %v682 = vunpack.c.l.b16 %v635
      %v683 = vunpack.c.h.b16 %v635
      %v684 = vpack.c.b16 %v660, %v652
      %v685 = vpack.c.b16 %v661, %v653
      %v686 = vpack.c.b16 %v662, %v654
      %v687 = vpack.c.b16 %v663, %v655
      %v688 = vpack.c.b16 %v664, %v656
      %v689 = vpack.c.b16 %v665, %v657
      %v690 = vpack.c.b16 %v666, %v658
      %v691 = vpack.c.b16 %v667, %v659
      %v692 = vpack.c.b16 %v676, %v668
      %v693 = vpack.c.b16 %v677, %v669
      %v694 = vpack.c.b16 %v678, %v670
      %v695 = vpack.c.b16 %v679, %v671
      %v696 = vpack.c.b16 %v680, %v672
      %v697 = vpack.c.b16 %v681, %v673
      %v698 = vpack.c.b16 %v682, %v674
      %v699 = vpack.c.b16 %v683, %v675
      %v709 = vand.u32 %v692, %v311
      %v712 = vand.u32 %v693, %v311
      %v715 = vand.u32 %v694, %v311
      %v718 = vand.u32 %v695, %v311
      %v721 = vand.u32 %v696, %v311
      %v724 = vand.u32 %v697, %v311
      %v727 = vand.u32 %v698, %v311
      %v730 = vand.u32 %v699, %v311
      %732 = vmatprep.subr.bf16.mxu0 %v685
      %733 = vmatpush1.bf16.msra.mxu0 %v684
      %734 = vmatprep.subr.bf16.mxu0 %v712
      %735 = vmatpush1.bf16.msra.mxu0 %v709
      %736 = vmatprep.subr.bf16.mxu0 0
      %737 = vmatpush1.bf16.msra.mxu0 0
      %738 = vmatprep.subr.bf16.mxu0 0
      %739 = vmatpush1.bf16.msra.mxu0 0
      %740 = vmatprep.subr.bf16.mxu0 0
      %741 = vmatpush1.bf16.msra.mxu0 0
      %742 = vmatprep.subr.bf16.mxu0 0
      %743 = vmatpush1.bf16.msra.mxu0 0
      %744 = vmatprep.subr.bf16.mxu0 0
      %745 = vmatpush1.bf16.msra.mxu0 0
      %746 = vmatprep.subr.bf16.mxu0 0
      %747 = vmatpush1.bf16.msra.mxu0 0
      %748 = vmatprep.subr.bf16.mxu0 0
      %749 = vmatpush1.bf16.msra.mxu0 0
      %750 = vmatprep.subr.bf16.mxu0 0
      %751 = vmatpush1.bf16.msra.mxu0 0
      %752 = vmatprep.subr.bf16.mxu0 0
      %753 = vmatpush1.bf16.msra.mxu0 0
      %754 = vmatprep.subr.bf16.mxu0 0
      %755 = vmatpush1.bf16.msra.mxu0 0
      %756 = vmatprep.subr.bf16.mxu0 0
      %757 = vmatpush1.bf16.msra.mxu0 0
      %758 = vmatprep.subr.bf16.mxu0 0
      %759 = vmatpush1.bf16.msra.mxu0 0
      %760 = vmatprep.subr.bf16.mxu0 0
      %761 = vmatpush1.bf16.msra.mxu0 0
      %762 = vmatprep.subr.bf16.mxu0 0
      %763 = vmatpush1.bf16.msra.mxu0 0
      %764 = vmatprep.mubr.bf16.mxu0 0
      %765 = vmatmul.mubr.bf16.gmra.mrb[0].mxu0 %v303
      %v766 = vpop.f32.mrb[0].mxu0
      %v767 = vadd.f32 0.0, %v766
      %v768 = vpop.f32.mrb[0].mxu0
      %v769 = vadd.f32 0.0, %v768
      %v770 = vpop.f32.mrb[0].mxu0
      %v771 = vadd.f32 0.0, %v770
      %v772 = vpop.f32.mrb[0].mxu0
      %v773 = vadd.f32 0.0, %v772
      %774 = vmatprep.mubr.bf16.mxu0 0
      %775 = vmatmul.mubr.bf16.gmra.mrb[0].mxu0 %v306
      %v776 = vpop.f32.mrb[0].mxu0
      %v777 = vadd.f32 0.0, %v776
      %v778 = vpop.f32.mrb[0].mxu0
      %v779 = vadd.f32 0.0, %v778
      %v780 = vpop.f32.mrb[0].mxu0
      %v781 = vadd.f32 0.0, %v780
      %v782 = vpop.f32.mrb[0].mxu0
      %v783 = vadd.f32 0.0, %v782
      %784 = vdwg.mxu0
      %785 = vmatprep.subr.bf16.mxu0 %v687
      %786 = vmatpush1.bf16.msra.mxu0 %v686
      %787 = vmatprep.subr.bf16.mxu0 %v718
      %788 = vmatpush1.bf16.msra.mxu0 %v715
      %789 = vmatprep.subr.bf16.mxu0 0
      %790 = vmatpush1.bf16.msra.mxu0 0
      %791 = vmatprep.subr.bf16.mxu0 0
      %792 = vmatpush1.bf16.msra.mxu0 0
      %793 = vmatprep.subr.bf16.mxu0 0
      %794 = vmatpush1.bf16.msra.mxu0 0
      %795 = vmatprep.subr.bf16.mxu0 0
      %796 = vmatpush1.bf16.msra.mxu0 0
      %797 = vmatprep.subr.bf16.mxu0 0
      %798 = vmatpush1.bf16.msra.mxu0 0
      %799 = vmatprep.subr.bf16.mxu0 0
      %800 = vmatpush1.bf16.msra.mxu0 0
      %801 = vmatprep.subr.bf16.mxu0 0
      %802 = vmatpush1.bf16.msra.mxu0 0
      %803 = vmatprep.subr.bf16.mxu0 0
      %804 = vmatpush1.bf16.msra.mxu0 0
      %805 = vmatprep.subr.bf16.mxu0 0
      %806 = vmatpush1.bf16.msra.mxu0 0
      %807 = vmatprep.subr.bf16.mxu0 0
      %808 = vmatpush1.bf16.msra.mxu0 0
      %809 = vmatprep.subr.bf16.mxu0 0
      %810 = vmatpush1.bf16.msra.mxu0 0
      %811 = vmatprep.subr.bf16.mxu0 0
      %812 = vmatpush1.bf16.msra.mxu0 0
      %813 = vmatprep.subr.bf16.mxu0 0
      %814 = vmatpush1.bf16.msra.mxu0 0
      %815 = vmatprep.subr.bf16.mxu0 0
      %816 = vmatpush1.bf16.msra.mxu0 0
      %817 = vmatprep.mubr.bf16.mxu0 0
      %818 = vmatmul.mubr.bf16.gmra.mrb[0].mxu0 %v303
      %v819 = vpop.f32.mrb[0].mxu0
      %v820 = vadd.f32 0.0, %v819
      %v821 = vpop.f32.mrb[0].mxu0
      %v822 = vadd.f32 0.0, %v821
      %v823 = vpop.f32.mrb[0].mxu0
      %v824 = vadd.f32 0.0, %v823
      %v825 = vpop.f32.mrb[0].mxu0
      %v826 = vadd.f32 0.0, %v825
      %827 = vmatprep.mubr.bf16.mxu0 0
      %828 = vmatmul.mubr.bf16.gmra.mrb[0].mxu0 %v306
      %v829 = vpop.f32.mrb[0].mxu0
      %v830 = vadd.f32 0.0, %v829
      %v831 = vpop.f32.mrb[0].mxu0
      %v832 = vadd.f32 0.0, %v831
      %v833 = vpop.f32.mrb[0].mxu0
      %v834 = vadd.f32 0.0, %v833
      %v835 = vpop.f32.mrb[0].mxu0
      %v836 = vadd.f32 0.0, %v835
      %837 = vdwg.mxu0
      %838 = vmatprep.subr.bf16.mxu0 %v689
      %839 = vmatpush1.bf16.msra.mxu0 %v688
      %840 = vmatprep.subr.bf16.mxu0 %v724
      %841 = vmatpush1.bf16.msra.mxu0 %v721
      %842 = vmatprep.subr.bf16.mxu0 0
      %843 = vmatpush1.bf16.msra.mxu0 0
      %844 = vmatprep.subr.bf16.mxu0 0
      %845 = vmatpush1.bf16.msra.mxu0 0
      %846 = vmatprep.subr.bf16.mxu0 0
      %847 = vmatpush1.bf16.msra.mxu0 0
      %848 = vmatprep.subr.bf16.mxu0 0
      %849 = vmatpush1.bf16.msra.mxu0 0
      %850 = vmatprep.subr.bf16.mxu0 0
      %851 = vmatpush1.bf16.msra.mxu0 0
      %852 = vmatprep.subr.bf16.mxu0 0
      %853 = vmatpush1.bf16.msra.mxu0 0
      %854 = vmatprep.subr.bf16.mxu0 0
      %855 = vmatpush1.bf16.msra.mxu0 0
      %856 = vmatprep.subr.bf16.mxu0 0
      %857 = vmatpush1.bf16.msra.mxu0 0
      %858 = vmatprep.subr.bf16.mxu0 0
      %859 = vmatpush1.bf16.msra.mxu0 0
      %860 = vmatprep.subr.bf16.mxu0 0
      %861 = vmatpush1.bf16.msra.mxu0 0
      %862 = vmatprep.subr.bf16.mxu0 0
      %863 = vmatpush1.bf16.msra.mxu0 0
      %864 = vmatprep.subr.bf16.mxu0 0
      %865 = vmatpush1.bf16.msra.mxu0 0
      %866 = vmatprep.subr.bf16.mxu0 0
      %867 = vmatpush1.bf16.msra.mxu0 0
      %868 = vmatprep.subr.bf16.mxu0 0
      %869 = vmatpush1.bf16.msra.mxu0 0
      %870 = vmatprep.mubr.bf16.mxu0 0
      %871 = vmatmul.mubr.bf16.gmra.mrb[0].mxu0 %v303
      %v872 = vpop.f32.mrb[0].mxu0
      %v873 = vadd.f32 0.0, %v872
      %v874 = vpop.f32.mrb[0].mxu0
      %v875 = vadd.f32 0.0, %v874
      %v876 = vpop.f32.mrb[0].mxu0
      %v877 = vadd.f32 0.0, %v876
      %v878 = vpop.f32.mrb[0].mxu0
      %v879 = vadd.f32 0.0, %v878
      %880 = vmatprep.mubr.bf16.mxu0 0
      %881 = vmatmul.mubr.bf16.gmra.mrb[0].mxu0 %v306
      %v882 = vpop.f32.mrb[0].mxu0
      %v883 = vadd.f32 0.0, %v882
      %v884 = vpop.f32.mrb[0].mxu0
      %v885 = vadd.f32 0.0, %v884
      %v886 = vpop.f32.mrb[0].mxu0
      %v887 = vadd.f32 0.0, %v886
      %v888 = vpop.f32.mrb[0].mxu0
      %v889 = vadd.f32 0.0, %v888
      %890 = vdwg.mxu0
      %891 = vmatprep.subr.bf16.mxu0 %v691
      %892 = vmatpush1.bf16.msra.mxu0 %v690
      %893 = vmatprep.subr.bf16.mxu0 %v730
      %894 = vmatpush1.bf16.msra.mxu0 %v727
      %895 = vmatprep.subr.bf16.mxu0 0
      %896 = vmatpush1.bf16.msra.mxu0 0
      %897 = vmatprep.subr.bf16.mxu0 0
      %898 = vmatpush1.bf16.msra.mxu0 0
      %899 = vmatprep.subr.bf16.mxu0 0
      %900 = vmatpush1.bf16.msra.mxu0 0
      %901 = vmatprep.subr.bf16.mxu0 0
      %902 = vmatpush1.bf16.msra.mxu0 0
      %903 = vmatprep.subr.bf16.mxu0 0
      %904 = vmatpush1.bf16.msra.mxu0 0
      %905 = vmatprep.subr.bf16.mxu0 0
      %906 = vmatpush1.bf16.msra.mxu0 0
      %907 = vmatprep.subr.bf16.mxu0 0
      %908 = vmatpush1.bf16.msra.mxu0 0
      %909 = vmatprep.subr.bf16.mxu0 0
      %910 = vmatpush1.bf16.msra.mxu0 0
      %911 = vmatprep.subr.bf16.mxu0 0
      %912 = vmatpush1.bf16.msra.mxu0 0
      %913 = vmatprep.subr.bf16.mxu0 0
      %914 = vmatpush1.bf16.msra.mxu0 0
      %915 = vmatprep.subr.bf16.mxu0 0
      %916 = vmatpush1.bf16.msra.mxu0 0
      %917 = vmatprep.subr.bf16.mxu0 0
      %918 = vmatpush1.bf16.msra.mxu0 0
      %919 = vmatprep.subr.bf16.mxu0 0
      %920 = vmatpush1.bf16.msra.mxu0 0
      %921 = vmatprep.subr.bf16.mxu0 0
      %922 = vmatpush1.bf16.msra.mxu0 0
      %923 = vmatprep.mubr.bf16.mxu0 0
      %924 = vmatmul.mubr.bf16.gmra.mrb[0].mxu0 %v303
      %v925 = vpop.f32.mrb[0].mxu0
      %v926 = vadd.f32 0.0, %v925
      %v927 = vpop.f32.mrb[0].mxu0
      %v928 = vadd.f32 0.0, %v927
      %v929 = vpop.f32.mrb[0].mxu0
      %v930 = vadd.f32 0.0, %v929
      %v931 = vpop.f32.mrb[0].mxu0
      %v932 = vadd.f32 0.0, %v931
      %933 = vmatprep.mubr.bf16.mxu0 0
      %934 = vmatmul.mubr.bf16.gmra.mrb[0].mxu0 %v306
      %v935 = vpop.f32.mrb[0].mxu0
      %v936 = vadd.f32 0.0, %v935
      %v937 = vpop.f32.mrb[0].mxu0
      %v938 = vadd.f32 0.0, %v937
      %v939 = vpop.f32.mrb[0].mxu0
      %v940 = vadd.f32 0.0, %v939
      %v941 = vpop.f32.mrb[0].mxu0
      %v942 = vadd.f32 0.0, %v941
      %943 = vdwg.mxu0
      %v944 = vmax.f32 %v767, 0.0
      %v945 = vmax.f32 %v769, 0.0
      %v946 = vmax.f32 %v820, 0.0
      %v947 = vmax.f32 %v822, 0.0
      %v948 = vmax.f32 %v873, 0.0
      %v949 = vmax.f32 %v875, 0.0
      %v950 = vmax.f32 %v926, 0.0
      %v951 = vmax.f32 %v928, 0.0
      %v952 = vmax.f32 %v771, 0.0
      %v953 = vmax.f32 %v773, 0.0
      %v954 = vmax.f32 %v824, 0.0
      %v955 = vmax.f32 %v826, 0.0
      %v956 = vmax.f32 %v877, 0.0
      %v957 = vmax.f32 %v879, 0.0
      %v958 = vmax.f32 %v930, 0.0
      %v959 = vmax.f32 %v932, 0.0
      %v960 = vmax.f32 %v777, 0.0
      %v961 = vmax.f32 %v779, 0.0
      %v962 = vmax.f32 %v830, 0.0
      %v963 = vmax.f32 %v832, 0.0
      %v964 = vmax.f32 %v883, 0.0
      %v965 = vmax.f32 %v885, 0.0
      %v966 = vmax.f32 %v936, 0.0
      %v967 = vmax.f32 %v938, 0.0
      %v968 = vmax.f32 %v781, 0.0
      %v969 = vmax.f32 %v783, 0.0
      %v970 = vmax.f32 %v834, 0.0
      %v971 = vmax.f32 %v836, 0.0
      %v972 = vmax.f32 %v887, 0.0
      %v973 = vmax.f32 %v889, 0.0
      %v974 = vmax.f32 %v940, 0.0
      %v975 = vmax.f32 %v942, 0.0
      %v976 = vadd.f32 %v944, %v945
      %v977 = vadd.f32 %v976, %v946
      %v978 = vadd.f32 %v977, %v947
      %v979 = vadd.f32 %v978, %v948
      %v980 = vadd.f32 %v979, %v949
      %v981 = vadd.f32 %v980, %v950
      %v982 = vadd.f32 %v981, %v951
      %983 = vadd.xlane.f32.xlu0 %v982
      %v984 = vpop.xlane.xlu0 %983
      %v985 = vadd.f32 %v952, %v953
      %v986 = vadd.f32 %v985, %v954
      %v987 = vadd.f32 %v986, %v955
      %v988 = vadd.f32 %v987, %v956
      %v989 = vadd.f32 %v988, %v957
      %v990 = vadd.f32 %v989, %v958
      %v991 = vadd.f32 %v990, %v959
      %992 = vadd.xlane.f32.xlu0 %v991
      %v993 = vpop.xlane.xlu0 %992
      %v994 = vadd.f32 %v960, %v961
      %v995 = vadd.f32 %v994, %v962
      %v996 = vadd.f32 %v995, %v963
      %v997 = vadd.f32 %v996, %v964
      %v998 = vadd.f32 %v997, %v965
      %v999 = vadd.f32 %v998, %v966
      %v1000 = vadd.f32 %v999, %v967
      %1001 = vadd.xlane.f32.xlu0 %v1000
      %v1002 = vpop.xlane.xlu0 %1001
      %v1003 = vadd.f32 %v968, %v969
      %v1004 = vadd.f32 %v1003, %v970
      %v1005 = vadd.f32 %v1004, %v971
      %v1006 = vadd.f32 %v1005, %v972
      %v1007 = vadd.f32 %v1006, %v973
      %v1008 = vadd.f32 %v1007, %v974
      %v1009 = vadd.f32 %v1008, %v975
      %1010 = vadd.xlane.f32.xlu0 %v1009
      %v1011 = vpop.xlane.xlu0 %1010
      %v1012 = vadd.f32 %v616, %v984
      %v1013 = vadd.f32 %v617, %v993
      %v1014 = vadd.f32 %v618, %v1002
      %v1015 = vadd.f32 %v619, %v1011
      %v1016 = vld [vmem:[%s192 + $0x40] sm:$0xff]
      %v1017 = vld [vmem:[%s192 + $0x48] sm:$0xff]
      %v1018 = vld [vmem:[%s192 + $0x50] sm:$0xff]
      %v1019 = vld [vmem:[%s192 + $0x58] sm:$0xff]
      %v1020 = vld [vmem:[%s192 + $0x300] sm:$0xff]
      %v1021 = vld [vmem:[%s192 + $0x308] sm:$0xff]
      %v1022 = vld [vmem:[%s192 + $0x310] sm:$0xff]
      %v1023 = vld [vmem:[%s192 + $0x318] sm:$0xff]
      %v1024 = vld [vmem:[%s192 + $0x5c0] sm:$0xff]
      %v1025 = vld [vmem:[%s192 + $0x5c8] sm:$0xff]
      %v1026 = vld [vmem:[%s192 + $0x5d0] sm:$0xff]
      %v1027 = vld [vmem:[%s192 + $0x5d8] sm:$0xff]
      %v1028 = vld [vmem:[%s192 + $0x880] sm:$0x33]
      %v1029 = vld [vmem:[%s192 + $0x888] sm:$0x33]
      %v1030 = vld [vmem:[%s192 + $0x890] sm:$0x33]
      %v1031 = vld [vmem:[%s192 + $0x898] sm:$0x33]
      %v1048 = vunpack.c.l.b16 %v1016
      %v1049 = vunpack.c.h.b16 %v1016
      %v1050 = vunpack.c.l.b16 %v1017
      %v1051 = vunpack.c.h.b16 %v1017
      %v1052 = vunpack.c.l.b16 %v1018
      %v1053 = vunpack.c.h.b16 %v1018
      %v1054 = vunpack.c.l.b16 %v1019
      %v1055 = vunpack.c.h.b16 %v1019
      %v1056 = vunpack.c.l.b16 %v1020
      %v1057 = vunpack.c.h.b16 %v1020
      %v1058 = vunpack.c.l.b16 %v1021
      %v1059 = vunpack.c.h.b16 %v1021
      %v1060 = vunpack.c.l.b16 %v1022
      %v1061 = vunpack.c.h.b16 %v1022
      %v1062 = vunpack.c.l.b16 %v1023
      %v1063 = vunpack.c.h.b16 %v1023
      %v1064 = vunpack.c.l.b16 %v1024
      %v1065 = vunpack.c.h.b16 %v1024
      %v1066 = vunpack.c.l.b16 %v1025
      %v1067 = vunpack.c.h.b16 %v1025
      %v1068 = vunpack.c.l.b16 %v1026
      %v1069 = vunpack.c.h.b16 %v1026
      %v1070 = vunpack.c.l.b16 %v1027
      %v1071 = vunpack.c.h.b16 %v1027
      %v1072 = vunpack.c.l.b16 %v1028
      %v1073 = vunpack.c.h.b16 %v1028
      %v1074 = vunpack.c.l.b16 %v1029
      %v1075 = vunpack.c.h.b16 %v1029
      %v1076 = vunpack.c.l.b16 %v1030
      %v1077 = vunpack.c.h.b16 %v1030
      %v1078 = vunpack.c.l.b16 %v1031
      %v1079 = vunpack.c.h.b16 %v1031
      %v1080 = vpack.c.b16 %v1056, %v1048
      %v1081 = vpack.c.b16 %v1057, %v1049
      %v1082 = vpack.c.b16 %v1058, %v1050
      %v1083 = vpack.c.b16 %v1059, %v1051
      %v1084 = vpack.c.b16 %v1060, %v1052
      %v1085 = vpack.c.b16 %v1061, %v1053
      %v1086 = vpack.c.b16 %v1062, %v1054
      %v1087 = vpack.c.b16 %v1063, %v1055
      %v1088 = vpack.c.b16 %v1072, %v1064
      %v1089 = vpack.c.b16 %v1073, %v1065
      %v1090 = vpack.c.b16 %v1074, %v1066
      %v1091 = vpack.c.b16 %v1075, %v1067
      %v1092 = vpack.c.b16 %v1076, %v1068
      %v1093 = vpack.c.b16 %v1077, %v1069
      %v1094 = vpack.c.b16 %v1078, %v1070
      %v1095 = vpack.c.b16 %v1079, %v1071
      %v1105 = vand.u32 %v1088, %v311
      %v1108 = vand.u32 %v1089, %v311
      %v1111 = vand.u32 %v1090, %v311
      %v1114 = vand.u32 %v1091, %v311
      %v1117 = vand.u32 %v1092, %v311
      %v1120 = vand.u32 %v1093, %v311
      %v1123 = vand.u32 %v1094, %v311
      %v1126 = vand.u32 %v1095, %v311
      %1128 = vmatprep.subr.bf16.mxu0 %v1081
      %1129 = vmatpush1.bf16.msra.mxu0 %v1080
      %1130 = vmatprep.subr.bf16.mxu0 %v1108
      %1131 = vmatpush1.bf16.msra.mxu0 %v1105
      %1132 = vmatprep.subr.bf16.mxu0 0
      %1133 = vmatpush1.bf16.msra.mxu0 0
      %1134 = vmatprep.subr.bf16.mxu0 0
      %1135 = vmatpush1.bf16.msra.mxu0 0
      %1136 = vmatprep.subr.bf16.mxu0 0
      %1137 = vmatpush1.bf16.msra.mxu0 0
      %1138 = vmatprep.subr.bf16.mxu0 0
      %1139 = vmatpush1.bf16.msra.mxu0 0
      %1140 = vmatprep.subr.bf16.mxu0 0
      %1141 = vmatpush1.bf16.msra.mxu0 0
      %1142 = vmatprep.subr.bf16.mxu0 0
      %1143 = vmatpush1.bf16.msra.mxu0 0
      %1144 = vmatprep.subr.bf16.mxu0 0
      %1145 = vmatpush1.bf16.msra.mxu0 0
      %1146 = vmatprep.subr.bf16.mxu0 0
      %1147 = vmatpush1.bf16.msra.mxu0 0
      %1148 = vmatprep.subr.bf16.mxu0 0
      %1149 = vmatpush1.bf16.msra.mxu0 0
      %1150 = vmatprep.subr.bf16.mxu0 0
      %1151 = vmatpush1.bf16.msra.mxu0 0
      %1152 = vmatprep.subr.bf16.mxu0 0
      %1153 = vmatpush1.bf16.msra.mxu0 0
      %1154 = vmatprep.subr.bf16.mxu0 0
      %1155 = vmatpush1.bf16.msra.mxu0 0
      %1156 = vmatprep.subr.bf16.mxu0 0
      %1157 = vmatpush1.bf16.msra.mxu0 0
      %1158 = vmatprep.subr.bf16.mxu0 0
      %1159 = vmatpush1.bf16.msra.mxu0 0
      %1160 = vmatprep.mubr.bf16.mxu0 0
      %1161 = vmatmul.mubr.bf16.gmra.mrb[0].mxu0 %v303
      %v1162 = vpop.f32.mrb[0].mxu0
      %v1163 = vadd.f32 0.0, %v1162
      %v1164 = vpop.f32.mrb[0].mxu0
      %v1165 = vadd.f32 0.0, %v1164
      %v1166 = vpop.f32.mrb[0].mxu0
      %v1167 = vadd.f32 0.0, %v1166
      %v1168 = vpop.f32.mrb[0].mxu0
      %v1169 = vadd.f32 0.0, %v1168
      %1170 = vmatprep.mubr.bf16.mxu0 0
      %1171 = vmatmul.mubr.bf16.gmra.mrb[0].mxu0 %v306
      %v1172 = vpop.f32.mrb[0].mxu0
      %v1173 = vadd.f32 0.0, %v1172
      %v1174 = vpop.f32.mrb[0].mxu0
      %v1175 = vadd.f32 0.0, %v1174
      %v1176 = vpop.f32.mrb[0].mxu0
      %v1177 = vadd.f32 0.0, %v1176
      %v1178 = vpop.f32.mrb[0].mxu0
      %v1179 = vadd.f32 0.0, %v1178
      %1180 = vdwg.mxu0
      %1181 = vmatprep.subr.bf16.mxu0 %v1083
      %1182 = vmatpush1.bf16.msra.mxu0 %v1082
      %1183 = vmatprep.subr.bf16.mxu0 %v1114
      %1184 = vmatpush1.bf16.msra.mxu0 %v1111
      %1185 = vmatprep.subr.bf16.mxu0 0
      %1186 = vmatpush1.bf16.msra.mxu0 0
      %1187 = vmatprep.subr.bf16.mxu0 0
      %1188 = vmatpush1.bf16.msra.mxu0 0
      %1189 = vmatprep.subr.bf16.mxu0 0
      %1190 = vmatpush1.bf16.msra.mxu0 0
      %1191 = vmatprep.subr.bf16.mxu0 0
      %1192 = vmatpush1.bf16.msra.mxu0 0
      %1193 = vmatprep.subr.bf16.mxu0 0
      %1194 = vmatpush1.bf16.msra.mxu0 0
      %1195 = vmatprep.subr.bf16.mxu0 0
      %1196 = vmatpush1.bf16.msra.mxu0 0
      %1197 = vmatprep.subr.bf16.mxu0 0
      %1198 = vmatpush1.bf16.msra.mxu0 0
      %1199 = vmatprep.subr.bf16.mxu0 0
      %1200 = vmatpush1.bf16.msra.mxu0 0
      %1201 = vmatprep.subr.bf16.mxu0 0
      %1202 = vmatpush1.bf16.msra.mxu0 0
      %1203 = vmatprep.subr.bf16.mxu0 0
      %1204 = vmatpush1.bf16.msra.mxu0 0
      %1205 = vmatprep.subr.bf16.mxu0 0
      %1206 = vmatpush1.bf16.msra.mxu0 0
      %1207 = vmatprep.subr.bf16.mxu0 0
      %1208 = vmatpush1.bf16.msra.mxu0 0
      %1209 = vmatprep.subr.bf16.mxu0 0
      %1210 = vmatpush1.bf16.msra.mxu0 0
      %1211 = vmatprep.subr.bf16.mxu0 0
      %1212 = vmatpush1.bf16.msra.mxu0 0
      %1213 = vmatprep.mubr.bf16.mxu0 0
      %1214 = vmatmul.mubr.bf16.gmra.mrb[0].mxu0 %v303
      %v1215 = vpop.f32.mrb[0].mxu0
      %v1216 = vadd.f32 0.0, %v1215
      %v1217 = vpop.f32.mrb[0].mxu0
      %v1218 = vadd.f32 0.0, %v1217
      %v1219 = vpop.f32.mrb[0].mxu0
      %v1220 = vadd.f32 0.0, %v1219
      %v1221 = vpop.f32.mrb[0].mxu0
      %v1222 = vadd.f32 0.0, %v1221
      %1223 = vmatprep.mubr.bf16.mxu0 0
      %1224 = vmatmul.mubr.bf16.gmra.mrb[0].mxu0 %v306
      %v1225 = vpop.f32.mrb[0].mxu0
      %v1226 = vadd.f32 0.0, %v1225
      %v1227 = vpop.f32.mrb[0].mxu0
      %v1228 = vadd.f32 0.0, %v1227
      %v1229 = vpop.f32.mrb[0].mxu0
      %v1230 = vadd.f32 0.0, %v1229
      %v1231 = vpop.f32.mrb[0].mxu0
      %v1232 = vadd.f32 0.0, %v1231
      %1233 = vdwg.mxu0
      %1234 = vmatprep.subr.bf16.mxu0 %v1085
      %1235 = vmatpush1.bf16.msra.mxu0 %v1084
      %1236 = vmatprep.subr.bf16.mxu0 %v1120
      %1237 = vmatpush1.bf16.msra.mxu0 %v1117
      %1238 = vmatprep.subr.bf16.mxu0 0
      %1239 = vmatpush1.bf16.msra.mxu0 0
      %1240 = vmatprep.subr.bf16.mxu0 0
      %1241 = vmatpush1.bf16.msra.mxu0 0
      %1242 = vmatprep.subr.bf16.mxu0 0
      %1243 = vmatpush1.bf16.msra.mxu0 0
      %1244 = vmatprep.subr.bf16.mxu0 0
      %1245 = vmatpush1.bf16.msra.mxu0 0
      %1246 = vmatprep.subr.bf16.mxu0 0
      %1247 = vmatpush1.bf16.msra.mxu0 0
      %1248 = vmatprep.subr.bf16.mxu0 0
      %1249 = vmatpush1.bf16.msra.mxu0 0
      %1250 = vmatprep.subr.bf16.mxu0 0
      %1251 = vmatpush1.bf16.msra.mxu0 0
      %1252 = vmatprep.subr.bf16.mxu0 0
      %1253 = vmatpush1.bf16.msra.mxu0 0
      %1254 = vmatprep.subr.bf16.mxu0 0
      %1255 = vmatpush1.bf16.msra.mxu0 0
      %1256 = vmatprep.subr.bf16.mxu0 0
      %1257 = vmatpush1.bf16.msra.mxu0 0
      %1258 = vmatprep.subr.bf16.mxu0 0
      %1259 = vmatpush1.bf16.msra.mxu0 0
      %1260 = vmatprep.subr.bf16.mxu0 0
      %1261 = vmatpush1.bf16.msra.mxu0 0
      %1262 = vmatprep.subr.bf16.mxu0 0
      %1263 = vmatpush1.bf16.msra.mxu0 0
      %1264 = vmatprep.subr.bf16.mxu0 0
      %1265 = vmatpush1.bf16.msra.mxu0 0
      %1266 = vmatprep.mubr.bf16.mxu0 0
      %1267 = vmatmul.mubr.bf16.gmra.mrb[0].mxu0 %v303
      %v1268 = vpop.f32.mrb[0].mxu0
      %v1269 = vadd.f32 0.0, %v1268
      %v1270 = vpop.f32.mrb[0].mxu0
      %v1271 = vadd.f32 0.0, %v1270
      %v1272 = vpop.f32.mrb[0].mxu0
      %v1273 = vadd.f32 0.0, %v1272
      %v1274 = vpop.f32.mrb[0].mxu0
      %v1275 = vadd.f32 0.0, %v1274
      %1276 = vmatprep.mubr.bf16.mxu0 0
      %1277 = vmatmul.mubr.bf16.gmra.mrb[0].mxu0 %v306
      %v1278 = vpop.f32.mrb[0].mxu0
      %v1279 = vadd.f32 0.0, %v1278
      %v1280 = vpop.f32.mrb[0].mxu0
      %v1281 = vadd.f32 0.0, %v1280
      %v1282 = vpop.f32.mrb[0].mxu0
      %v1283 = vadd.f32 0.0, %v1282
      %v1284 = vpop.f32.mrb[0].mxu0
      %v1285 = vadd.f32 0.0, %v1284
      %1286 = vdwg.mxu0
      %1287 = vmatprep.subr.bf16.mxu0 %v1087
      %1288 = vmatpush1.bf16.msra.mxu0 %v1086
      %1289 = vmatprep.subr.bf16.mxu0 %v1126
      %1290 = vmatpush1.bf16.msra.mxu0 %v1123
      %1291 = vmatprep.subr.bf16.mxu0 0
      %1292 = vmatpush1.bf16.msra.mxu0 0
      %1293 = vmatprep.subr.bf16.mxu0 0
      %1294 = vmatpush1.bf16.msra.mxu0 0
      %1295 = vmatprep.subr.bf16.mxu0 0
      %1296 = vmatpush1.bf16.msra.mxu0 0
      %1297 = vmatprep.subr.bf16.mxu0 0
      %1298 = vmatpush1.bf16.msra.mxu0 0
      %1299 = vmatprep.subr.bf16.mxu0 0
      %1300 = vmatpush1.bf16.msra.mxu0 0
      %1301 = vmatprep.subr.bf16.mxu0 0
      %1302 = vmatpush1.bf16.msra.mxu0 0
      %1303 = vmatprep.subr.bf16.mxu0 0
      %1304 = vmatpush1.bf16.msra.mxu0 0
      %1305 = vmatprep.subr.bf16.mxu0 0
      %1306 = vmatpush1.bf16.msra.mxu0 0
      %1307 = vmatprep.subr.bf16.mxu0 0
      %1308 = vmatpush1.bf16.msra.mxu0 0
      %1309 = vmatprep.subr.bf16.mxu0 0
      %1310 = vmatpush1.bf16.msra.mxu0 0
      %1311 = vmatprep.subr.bf16.mxu0 0
      %1312 = vmatpush1.bf16.msra.mxu0 0
      %1313 = vmatprep.subr.bf16.mxu0 0
      %1314 = vmatpush1.bf16.msra.mxu0 0
      %1315 = vmatprep.subr.bf16.mxu0 0
      %1316 = vmatpush1.bf16.msra.mxu0 0
      %1317 = vmatprep.subr.bf16.mxu0 0
      %1318 = vmatpush1.bf16.msra.mxu0 0
      %1319 = vmatprep.mubr.bf16.mxu0 0
      %1320 = vmatmul.mubr.bf16.gmra.mrb[0].mxu0 %v303
      %v1321 = vpop.f32.mrb[0].mxu0
      %v1322 = vadd.f32 0.0, %v1321
      %v1323 = vpop.f32.mrb[0].mxu0
      %v1324 = vadd.f32 0.0, %v1323
      %v1325 = vpop.f32.mrb[0].mxu0
      %v1326 = vadd.f32 0.0, %v1325
      %v1327 = vpop.f32.mrb[0].mxu0
      %v1328 = vadd.f32 0.0, %v1327
      %1329 = vmatprep.mubr.bf16.mxu0 0
      %1330 = vmatmul.mubr.bf16.gmra.mrb[0].mxu0 %v306
      %v1331 = vpop.f32.mrb[0].mxu0
      %v1332 = vadd.f32 0.0, %v1331
      %v1333 = vpop.f32.mrb[0].mxu0
      %v1334 = vadd.f32 0.0, %v1333
      %v1335 = vpop.f32.mrb[0].mxu0
      %v1336 = vadd.f32 0.0, %v1335
      %v1337 = vpop.f32.mrb[0].mxu0
      %v1338 = vadd.f32 0.0, %v1337
      %1339 = vdwg.mxu0
      %v1340 = vmax.f32 %v1163, 0.0
      %v1341 = vmax.f32 %v1165, 0.0
      %v1342 = vmax.f32 %v1216, 0.0
      %v1343 = vmax.f32 %v1218, 0.0
      %v1344 = vmax.f32 %v1269, 0.0
      %v1345 = vmax.f32 %v1271, 0.0
      %v1346 = vmax.f32 %v1322, 0.0
      %v1347 = vmax.f32 %v1324, 0.0
      %v1348 = vmax.f32 %v1167, 0.0
      %v1349 = vmax.f32 %v1169, 0.0
      %v1350 = vmax.f32 %v1220, 0.0
      %v1351 = vmax.f32 %v1222, 0.0
      %v1352 = vmax.f32 %v1273, 0.0
      %v1353 = vmax.f32 %v1275, 0.0
      %v1354 = vmax.f32 %v1326, 0.0
      %v1355 = vmax.f32 %v1328, 0.0
      %v1356 = vmax.f32 %v1173, 0.0
      %v1357 = vmax.f32 %v1175, 0.0
      %v1358 = vmax.f32 %v1226, 0.0
      %v1359 = vmax.f32 %v1228, 0.0
      %v1360 = vmax.f32 %v1279, 0.0
      %v1361 = vmax.f32 %v1281, 0.0
      %v1362 = vmax.f32 %v1332, 0.0
      %v1363 = vmax.f32 %v1334, 0.0
      %v1364 = vmax.f32 %v1177, 0.0
      %v1365 = vmax.f32 %v1179, 0.0
      %v1366 = vmax.f32 %v1230, 0.0
      %v1367 = vmax.f32 %v1232, 0.0
      %v1368 = vmax.f32 %v1283, 0.0
      %v1369 = vmax.f32 %v1285, 0.0
      %v1370 = vmax.f32 %v1336, 0.0
      %v1371 = vmax.f32 %v1338, 0.0
      %v1372 = vadd.f32 %v1340, %v1341
      %v1373 = vadd.f32 %v1372, %v1342
      %v1374 = vadd.f32 %v1373, %v1343
      %v1375 = vadd.f32 %v1374, %v1344
      %v1376 = vadd.f32 %v1375, %v1345
      %v1377 = vadd.f32 %v1376, %v1346
      %v1378 = vadd.f32 %v1377, %v1347
      %1379 = vadd.xlane.f32.xlu0 %v1378
      %v1380 = vpop.xlane.xlu0 %1379
      %v1381 = vadd.f32 %v1348, %v1349
      %v1382 = vadd.f32 %v1381, %v1350
      %v1383 = vadd.f32 %v1382, %v1351
      %v1384 = vadd.f32 %v1383, %v1352
      %v1385 = vadd.f32 %v1384, %v1353
      %v1386 = vadd.f32 %v1385, %v1354
      %v1387 = vadd.f32 %v1386, %v1355
      %1388 = vadd.xlane.f32.xlu0 %v1387
      %v1389 = vpop.xlane.xlu0 %1388
      %v1390 = vadd.f32 %v1356, %v1357
      %v1391 = vadd.f32 %v1390, %v1358
      %v1392 = vadd.f32 %v1391, %v1359
      %v1393 = vadd.f32 %v1392, %v1360
      %v1394 = vadd.f32 %v1393, %v1361
      %v1395 = vadd.f32 %v1394, %v1362
      %v1396 = vadd.f32 %v1395, %v1363
      %1397 = vadd.xlane.f32.xlu0 %v1396
      %v1398 = vpop.xlane.xlu0 %1397
      %v1399 = vadd.f32 %v1364, %v1365
      %v1400 = vadd.f32 %v1399, %v1366
      %v1401 = vadd.f32 %v1400, %v1367
      %v1402 = vadd.f32 %v1401, %v1368
      %v1403 = vadd.f32 %v1402, %v1369
      %v1404 = vadd.f32 %v1403, %v1370
      %v1405 = vadd.f32 %v1404, %v1371
      %1406 = vadd.xlane.f32.xlu0 %v1405
      %v1407 = vpop.xlane.xlu0 %1406
      %v1408 = vadd.f32 %v1012, %v1380
      %v1409 = vadd.f32 %v1013, %v1389
      %v1410 = vadd.f32 %v1014, %v1398
      %v1411 = vadd.f32 %v1015, %v1407
      %v1412 = vld [vmem:[%s192 + $0x60] sm:$0xff]
      %v1413 = vld [vmem:[%s192 + $0x68] sm:$0xff]
      %v1414 = vld [vmem:[%s192 + $0x70] sm:$0xff]
      %v1415 = vld [vmem:[%s192 + $0x78] sm:$0xff]
      %v1416 = vld [vmem:[%s192 + $0x320] sm:$0xff]
      %v1417 = vld [vmem:[%s192 + $0x328] sm:$0xff]
      %v1418 = vld [vmem:[%s192 + $0x330] sm:$0xff]
      %v1419 = vld [vmem:[%s192 + $0x338] sm:$0xff]
      %v1420 = vld [vmem:[%s192 + $0x5e0] sm:$0xff]
      %v1421 = vld [vmem:[%s192 + $0x5e8] sm:$0xff]
      %v1422 = vld [vmem:[%s192 + $0x5f0] sm:$0xff]
      %v1423 = vld [vmem:[%s192 + $0x5f8] sm:$0xff]
      %v1424 = vld [vmem:[%s192 + $0x8a0] sm:$0x33]
      %v1425 = vld [vmem:[%s192 + $0x8a8] sm:$0x33]
      %v1426 = vld [vmem:[%s192 + $0x8b0] sm:$0x33]
      %v1427 = vld [vmem:[%s192 + $0x8b8] sm:$0x33]
      %v1444 = vunpack.c.l.b16 %v1412
      %v1445 = vunpack.c.h.b16 %v1412
      %v1446 = vunpack.c.l.b16 %v1413
      %v1447 = vunpack.c.h.b16 %v1413
      %v1448 = vunpack.c.l.b16 %v1414
      %v1449 = vunpack.c.h.b16 %v1414
      %v1450 = vunpack.c.l.b16 %v1415
      %v1451 = vunpack.c.h.b16 %v1415
      %v1452 = vunpack.c.l.b16 %v1416
      %v1453 = vunpack.c.h.b16 %v1416
      %v1454 = vunpack.c.l.b16 %v1417
      %v1455 = vunpack.c.h.b16 %v1417
      %v1456 = vunpack.c.l.b16 %v1418
      %v1457 = vunpack.c.h.b16 %v1418
      %v1458 = vunpack.c.l.b16 %v1419
      %v1459 = vunpack.c.h.b16 %v1419
      %v1460 = vunpack.c.l.b16 %v1420
      %v1461 = vunpack.c.h.b16 %v1420
      %v1462 = vunpack.c.l.b16 %v1421
      %v1463 = vunpack.c.h.b16 %v1421
      %v1464 = vunpack.c.l.b16 %v1422
      %v1465 = vunpack.c.h.b16 %v1422
      %v1466 = vunpack.c.l.b16 %v1423
      %v1467 = vunpack.c.h.b16 %v1423
      %v1468 = vunpack.c.l.b16 %v1424
      %v1469 = vunpack.c.h.b16 %v1424
      %v1470 = vunpack.c.l.b16 %v1425
      %v1471 = vunpack.c.h.b16 %v1425
      %v1472 = vunpack.c.l.b16 %v1426
      %v1473 = vunpack.c.h.b16 %v1426
      %v1474 = vunpack.c.l.b16 %v1427
      %v1475 = vunpack.c.h.b16 %v1427
      %v1476 = vpack.c.b16 %v1452, %v1444
      %v1477 = vpack.c.b16 %v1453, %v1445
      %v1478 = vpack.c.b16 %v1454, %v1446
      %v1479 = vpack.c.b16 %v1455, %v1447
      %v1480 = vpack.c.b16 %v1456, %v1448
      %v1481 = vpack.c.b16 %v1457, %v1449
      %v1482 = vpack.c.b16 %v1458, %v1450
      %v1483 = vpack.c.b16 %v1459, %v1451
      %v1484 = vpack.c.b16 %v1468, %v1460
      %v1485 = vpack.c.b16 %v1469, %v1461
      %v1486 = vpack.c.b16 %v1470, %v1462
      %v1487 = vpack.c.b16 %v1471, %v1463
      %v1488 = vpack.c.b16 %v1472, %v1464
      %v1489 = vpack.c.b16 %v1473, %v1465
      %v1490 = vpack.c.b16 %v1474, %v1466
      %v1491 = vpack.c.b16 %v1475, %v1467
      %v1501 = vand.u32 %v1484, %v311
      %v1504 = vand.u32 %v1485, %v311
      %v1507 = vand.u32 %v1486, %v311
      %v1510 = vand.u32 %v1487, %v311
      %v1513 = vand.u32 %v1488, %v311
      %v1516 = vand.u32 %v1489, %v311
      %v1519 = vand.u32 %v1490, %v311
      %v1522 = vand.u32 %v1491, %v311
      %1524 = vmatprep.subr.bf16.mxu0 %v1477
      %1525 = vmatpush1.bf16.msra.mxu0 %v1476
      %1526 = vmatprep.subr.bf16.mxu0 %v1504
      %1527 = vmatpush1.bf16.msra.mxu0 %v1501
      %1528 = vmatprep.subr.bf16.mxu0 0
      %1529 = vmatpush1.bf16.msra.mxu0 0
      %1530 = vmatprep.subr.bf16.mxu0 0
      %1531 = vmatpush1.bf16.msra.mxu0 0
      %1532 = vmatprep.subr.bf16.mxu0 0
      %1533 = vmatpush1.bf16.msra.mxu0 0
      %1534 = vmatprep.subr.bf16.mxu0 0
      %1535 = vmatpush1.bf16.msra.mxu0 0
      %1536 = vmatprep.subr.bf16.mxu0 0
      %1537 = vmatpush1.bf16.msra.mxu0 0
      %1538 = vmatprep.subr.bf16.mxu0 0
      %1539 = vmatpush1.bf16.msra.mxu0 0
      %1540 = vmatprep.subr.bf16.mxu0 0
      %1541 = vmatpush1.bf16.msra.mxu0 0
      %1542 = vmatprep.subr.bf16.mxu0 0
      %1543 = vmatpush1.bf16.msra.mxu0 0
      %1544 = vmatprep.subr.bf16.mxu0 0
      %1545 = vmatpush1.bf16.msra.mxu0 0
      %1546 = vmatprep.subr.bf16.mxu0 0
      %1547 = vmatpush1.bf16.msra.mxu0 0
      %1548 = vmatprep.subr.bf16.mxu0 0
      %1549 = vmatpush1.bf16.msra.mxu0 0
      %1550 = vmatprep.subr.bf16.mxu0 0
      %1551 = vmatpush1.bf16.msra.mxu0 0
      %1552 = vmatprep.subr.bf16.mxu0 0
      %1553 = vmatpush1.bf16.msra.mxu0 0
      %1554 = vmatprep.subr.bf16.mxu0 0
      %1555 = vmatpush1.bf16.msra.mxu0 0
      %1556 = vmatprep.mubr.bf16.mxu0 0
      %1557 = vmatmul.mubr.bf16.gmra.mrb[0].mxu0 %v303
      %v1558 = vpop.f32.mrb[0].mxu0
      %v1559 = vadd.f32 0.0, %v1558
      %v1560 = vpop.f32.mrb[0].mxu0
      %v1561 = vadd.f32 0.0, %v1560
      %v1562 = vpop.f32.mrb[0].mxu0
      %v1563 = vadd.f32 0.0, %v1562
      %v1564 = vpop.f32.mrb[0].mxu0
      %v1565 = vadd.f32 0.0, %v1564
      %1566 = vmatprep.mubr.bf16.mxu0 0
      %1567 = vmatmul.mubr.bf16.gmra.mrb[0].mxu0 %v306
      %v1568 = vpop.f32.mrb[0].mxu0
      %v1569 = vadd.f32 0.0, %v1568
      %v1570 = vpop.f32.mrb[0].mxu0
      %v1571 = vadd.f32 0.0, %v1570
      %v1572 = vpop.f32.mrb[0].mxu0
      %v1573 = vadd.f32 0.0, %v1572
      %v1574 = vpop.f32.mrb[0].mxu0
      %v1575 = vadd.f32 0.0, %v1574
      %1576 = vdwg.mxu0
      %1577 = vmatprep.subr.bf16.mxu0 %v1479
      %1578 = vmatpush1.bf16.msra.mxu0 %v1478
      %1579 = vmatprep.subr.bf16.mxu0 %v1510
      %1580 = vmatpush1.bf16.msra.mxu0 %v1507
      %1581 = vmatprep.subr.bf16.mxu0 0
      %1582 = vmatpush1.bf16.msra.mxu0 0
      %1583 = vmatprep.subr.bf16.mxu0 0
      %1584 = vmatpush1.bf16.msra.mxu0 0
      %1585 = vmatprep.subr.bf16.mxu0 0
      %1586 = vmatpush1.bf16.msra.mxu0 0
      %1587 = vmatprep.subr.bf16.mxu0 0
      %1588 = vmatpush1.bf16.msra.mxu0 0
      %1589 = vmatprep.subr.bf16.mxu0 0
      %1590 = vmatpush1.bf16.msra.mxu0 0
      %1591 = vmatprep.subr.bf16.mxu0 0
      %1592 = vmatpush1.bf16.msra.mxu0 0
      %1593 = vmatprep.subr.bf16.mxu0 0
      %1594 = vmatpush1.bf16.msra.mxu0 0
      %1595 = vmatprep.subr.bf16.mxu0 0
      %1596 = vmatpush1.bf16.msra.mxu0 0
      %1597 = vmatprep.subr.bf16.mxu0 0
      %1598 = vmatpush1.bf16.msra.mxu0 0
      %1599 = vmatprep.subr.bf16.mxu0 0
      %1600 = vmatpush1.bf16.msra.mxu0 0
      %1601 = vmatprep.subr.bf16.mxu0 0
      %1602 = vmatpush1.bf16.msra.mxu0 0
      %1603 = vmatprep.subr.bf16.mxu0 0
      %1604 = vmatpush1.bf16.msra.mxu0 0
      %1605 = vmatprep.subr.bf16.mxu0 0
      %1606 = vmatpush1.bf16.msra.mxu0 0
      %1607 = vmatprep.subr.bf16.mxu0 0
      %1608 = vmatpush1.bf16.msra.mxu0 0
      %1609 = vmatprep.mubr.bf16.mxu0 0
      %1610 = vmatmul.mubr.bf16.gmra.mrb[0].mxu0 %v303
      %v1611 = vpop.f32.mrb[0].mxu0
      %v1612 = vadd.f32 0.0, %v1611
      %v1613 = vpop.f32.mrb[0].mxu0
      %v1614 = vadd.f32 0.0, %v1613
      %v1615 = vpop.f32.mrb[0].mxu0
      %v1616 = vadd.f32 0.0, %v1615
      %v1617 = vpop.f32.mrb[0].mxu0
      %v1618 = vadd.f32 0.0, %v1617
      %1619 = vmatprep.mubr.bf16.mxu0 0
      %1620 = vmatmul.mubr.bf16.gmra.mrb[0].mxu0 %v306
      %v1621 = vpop.f32.mrb[0].mxu0
      %v1622 = vadd.f32 0.0, %v1621
      %v1623 = vpop.f32.mrb[0].mxu0
      %v1624 = vadd.f32 0.0, %v1623
      %v1625 = vpop.f32.mrb[0].mxu0
      %v1626 = vadd.f32 0.0, %v1625
      %v1627 = vpop.f32.mrb[0].mxu0
      %v1628 = vadd.f32 0.0, %v1627
      %1629 = vdwg.mxu0
      %1630 = vmatprep.subr.bf16.mxu0 %v1481
      %1631 = vmatpush1.bf16.msra.mxu0 %v1480
      %1632 = vmatprep.subr.bf16.mxu0 %v1516
      %1633 = vmatpush1.bf16.msra.mxu0 %v1513
      %1634 = vmatprep.subr.bf16.mxu0 0
      %1635 = vmatpush1.bf16.msra.mxu0 0
      %1636 = vmatprep.subr.bf16.mxu0 0
      %1637 = vmatpush1.bf16.msra.mxu0 0
      %1638 = vmatprep.subr.bf16.mxu0 0
      %1639 = vmatpush1.bf16.msra.mxu0 0
      %1640 = vmatprep.subr.bf16.mxu0 0
      %1641 = vmatpush1.bf16.msra.mxu0 0
      %1642 = vmatprep.subr.bf16.mxu0 0
      %1643 = vmatpush1.bf16.msra.mxu0 0
      %1644 = vmatprep.subr.bf16.mxu0 0
      %1645 = vmatpush1.bf16.msra.mxu0 0
      %1646 = vmatprep.subr.bf16.mxu0 0
      %1647 = vmatpush1.bf16.msra.mxu0 0
      %1648 = vmatprep.subr.bf16.mxu0 0
      %1649 = vmatpush1.bf16.msra.mxu0 0
      %1650 = vmatprep.subr.bf16.mxu0 0
      %1651 = vmatpush1.bf16.msra.mxu0 0
      %1652 = vmatprep.subr.bf16.mxu0 0
      %1653 = vmatpush1.bf16.msra.mxu0 0
      %1654 = vmatprep.subr.bf16.mxu0 0
      %1655 = vmatpush1.bf16.msra.mxu0 0
      %1656 = vmatprep.subr.bf16.mxu0 0
      %1657 = vmatpush1.bf16.msra.mxu0 0
      %1658 = vmatprep.subr.bf16.mxu0 0
      %1659 = vmatpush1.bf16.msra.mxu0 0
      %1660 = vmatprep.subr.bf16.mxu0 0
      %1661 = vmatpush1.bf16.msra.mxu0 0
      %1662 = vmatprep.mubr.bf16.mxu0 0
      %1663 = vmatmul.mubr.bf16.gmra.mrb[0].mxu0 %v303
      %v1664 = vpop.f32.mrb[0].mxu0
      %v1665 = vadd.f32 0.0, %v1664
      %v1666 = vpop.f32.mrb[0].mxu0
      %v1667 = vadd.f32 0.0, %v1666
      %v1668 = vpop.f32.mrb[0].mxu0
      %v1669 = vadd.f32 0.0, %v1668
      %v1670 = vpop.f32.mrb[0].mxu0
      %v1671 = vadd.f32 0.0, %v1670
      %1672 = vmatprep.mubr.bf16.mxu0 0
      %1673 = vmatmul.mubr.bf16.gmra.mrb[0].mxu0 %v306
      %v1674 = vpop.f32.mrb[0].mxu0
      %v1675 = vadd.f32 0.0, %v1674
      %v1676 = vpop.f32.mrb[0].mxu0
      %v1677 = vadd.f32 0.0, %v1676
      %v1678 = vpop.f32.mrb[0].mxu0
      %v1679 = vadd.f32 0.0, %v1678
      %v1680 = vpop.f32.mrb[0].mxu0
      %v1681 = vadd.f32 0.0, %v1680
      %1682 = vdwg.mxu0
      %1683 = vmatprep.subr.bf16.mxu0 %v1483
      %1684 = vmatpush1.bf16.msra.mxu0 %v1482
      %1685 = vmatprep.subr.bf16.mxu0 %v1522
      %1686 = vmatpush1.bf16.msra.mxu0 %v1519
      %1687 = vmatprep.subr.bf16.mxu0 0
      %1688 = vmatpush1.bf16.msra.mxu0 0
      %1689 = vmatprep.subr.bf16.mxu0 0
      %1690 = vmatpush1.bf16.msra.mxu0 0
      %1691 = vmatprep.subr.bf16.mxu0 0
      %1692 = vmatpush1.bf16.msra.mxu0 0
      %1693 = vmatprep.subr.bf16.mxu0 0
      %1694 = vmatpush1.bf16.msra.mxu0 0
      %1695 = vmatprep.subr.bf16.mxu0 0
      %1696 = vmatpush1.bf16.msra.mxu0 0
      %1697 = vmatprep.subr.bf16.mxu0 0
      %1698 = vmatpush1.bf16.msra.mxu0 0
      %1699 = vmatprep.subr.bf16.mxu0 0
      %1700 = vmatpush1.bf16.msra.mxu0 0
      %1701 = vmatprep.subr.bf16.mxu0 0
      %1702 = vmatpush1.bf16.msra.mxu0 0
      %1703 = vmatprep.subr.bf16.mxu0 0
      %1704 = vmatpush1.bf16.msra.mxu0 0
      %1705 = vmatprep.subr.bf16.mxu0 0
      %1706 = vmatpush1.bf16.msra.mxu0 0
      %1707 = vmatprep.subr.bf16.mxu0 0
      %1708 = vmatpush1.bf16.msra.mxu0 0
      %1709 = vmatprep.subr.bf16.mxu0 0
      %1710 = vmatpush1.bf16.msra.mxu0 0
      %1711 = vmatprep.subr.bf16.mxu0 0
      %1712 = vmatpush1.bf16.msra.mxu0 0
      %1713 = vmatprep.subr.bf16.mxu0 0
      %1714 = vmatpush1.bf16.msra.mxu0 0
      %1715 = vmatprep.mubr.bf16.mxu0 0
      %1716 = vmatmul.mubr.bf16.gmra.mrb[0].mxu0 %v303
      %v1717 = vpop.f32.mrb[0].mxu0
      %v1718 = vadd.f32 0.0, %v1717
      %v1719 = vpop.f32.mrb[0].mxu0
      %v1720 = vadd.f32 0.0, %v1719
      %v1721 = vpop.f32.mrb[0].mxu0
      %v1722 = vadd.f32 0.0, %v1721
      %v1723 = vpop.f32.mrb[0].mxu0
      %v1724 = vadd.f32 0.0, %v1723
      %1725 = vmatprep.mubr.bf16.mxu0 0
      %1726 = vmatmul.mubr.bf16.gmra.mrb[0].mxu0 %v306
      %v1727 = vpop.f32.mrb[0].mxu0
      %v1728 = vadd.f32 0.0, %v1727
      %v1729 = vpop.f32.mrb[0].mxu0
      %v1730 = vadd.f32 0.0, %v1729
      %v1731 = vpop.f32.mrb[0].mxu0
      %v1732 = vadd.f32 0.0, %v1731
      %v1733 = vpop.f32.mrb[0].mxu0
      %v1734 = vadd.f32 0.0, %v1733
      %1735 = vdwg.mxu0
      %v1736 = vmax.f32 %v1559, 0.0
      %v1737 = vmax.f32 %v1561, 0.0
      %v1738 = vmax.f32 %v1612, 0.0
      %v1739 = vmax.f32 %v1614, 0.0
      %v1740 = vmax.f32 %v1665, 0.0
      %v1741 = vmax.f32 %v1667, 0.0
      %v1742 = vmax.f32 %v1718, 0.0
      %v1743 = vmax.f32 %v1720, 0.0
      %v1744 = vmax.f32 %v1563, 0.0
      %v1745 = vmax.f32 %v1565, 0.0
      %v1746 = vmax.f32 %v1616, 0.0
      %v1747 = vmax.f32 %v1618, 0.0
      %v1748 = vmax.f32 %v1669, 0.0
      %v1749 = vmax.f32 %v1671, 0.0
      %v1750 = vmax.f32 %v1722, 0.0
      %v1751 = vmax.f32 %v1724, 0.0
      %v1752 = vmax.f32 %v1569, 0.0
      %v1753 = vmax.f32 %v1571, 0.0
      %v1754 = vmax.f32 %v1622, 0.0
      %v1755 = vmax.f32 %v1624, 0.0
      %v1756 = vmax.f32 %v1675, 0.0
      %v1757 = vmax.f32 %v1677, 0.0
      %v1758 = vmax.f32 %v1728, 0.0
      %v1759 = vmax.f32 %v1730, 0.0
      %v1760 = vmax.f32 %v1573, 0.0
      %v1761 = vmax.f32 %v1575, 0.0
      %v1762 = vmax.f32 %v1626, 0.0
      %v1763 = vmax.f32 %v1628, 0.0
      %v1764 = vmax.f32 %v1679, 0.0
      %v1765 = vmax.f32 %v1681, 0.0
      %v1766 = vmax.f32 %v1732, 0.0
      %v1767 = vmax.f32 %v1734, 0.0
      %v1768 = vadd.f32 %v1736, %v1737
      %v1769 = vadd.f32 %v1768, %v1738
      %v1770 = vadd.f32 %v1769, %v1739
      %v1771 = vadd.f32 %v1770, %v1740
      %v1772 = vadd.f32 %v1771, %v1741
      %v1773 = vadd.f32 %v1772, %v1742
      %v1774 = vadd.f32 %v1773, %v1743
      %1775 = vadd.xlane.f32.xlu0 %v1774
      %v1776 = vpop.xlane.xlu0 %1775
      %v1777 = vadd.f32 %v1744, %v1745
      %v1778 = vadd.f32 %v1777, %v1746
      %v1779 = vadd.f32 %v1778, %v1747
      %v1780 = vadd.f32 %v1779, %v1748
      %v1781 = vadd.f32 %v1780, %v1749
      %v1782 = vadd.f32 %v1781, %v1750
      %v1783 = vadd.f32 %v1782, %v1751
      %1784 = vadd.xlane.f32.xlu0 %v1783
      %v1785 = vpop.xlane.xlu0 %1784
      %v1786 = vadd.f32 %v1752, %v1753
      %v1787 = vadd.f32 %v1786, %v1754
      %v1788 = vadd.f32 %v1787, %v1755
      %v1789 = vadd.f32 %v1788, %v1756
      %v1790 = vadd.f32 %v1789, %v1757
      %v1791 = vadd.f32 %v1790, %v1758
      %v1792 = vadd.f32 %v1791, %v1759
      %1793 = vadd.xlane.f32.xlu0 %v1792
      %v1794 = vpop.xlane.xlu0 %1793
      %v1795 = vadd.f32 %v1760, %v1761
      %v1796 = vadd.f32 %v1795, %v1762
      %v1797 = vadd.f32 %v1796, %v1763
      %v1798 = vadd.f32 %v1797, %v1764
      %v1799 = vadd.f32 %v1798, %v1765
      %v1800 = vadd.f32 %v1799, %v1766
      %v1801 = vadd.f32 %v1800, %v1767
      %1802 = vadd.xlane.f32.xlu0 %v1801
      %v1803 = vpop.xlane.xlu0 %1802
      %v1804 = vadd.f32 %v1408, %v1776
      %v1805 = vadd.f32 %v1409, %v1785
      %v1806 = vadd.f32 %v1410, %v1794
      %v1807 = vadd.f32 %v1411, %v1803
      %v1808 = vld [vmem:[%s192 + $0x80] sm:$0xff]
      %v1809 = vld [vmem:[%s192 + $0x88] sm:$0xff]
      %v1810 = vld [vmem:[%s192 + $0x90] sm:$0xff]
      %v1811 = vld [vmem:[%s192 + $0x98] sm:$0xff]
      %v1812 = vld [vmem:[%s192 + $0x340] sm:$0xff]
      %v1813 = vld [vmem:[%s192 + $0x348] sm:$0xff]
      %v1814 = vld [vmem:[%s192 + $0x350] sm:$0xff]
      %v1815 = vld [vmem:[%s192 + $0x358] sm:$0xff]
      %v1816 = vld [vmem:[%s192 + $0x600] sm:$0xff]
      %v1817 = vld [vmem:[%s192 + $0x608] sm:$0xff]
      %v1818 = vld [vmem:[%s192 + $0x610] sm:$0xff]
      %v1819 = vld [vmem:[%s192 + $0x618] sm:$0xff]
      %v1820 = vld [vmem:[%s192 + $0x8c0] sm:$0x33]
      %v1821 = vld [vmem:[%s192 + $0x8c8] sm:$0x33]
      %v1822 = vld [vmem:[%s192 + $0x8d0] sm:$0x33]
      %v1823 = vld [vmem:[%s192 + $0x8d8] sm:$0x33]
      %v1840 = vunpack.c.l.b16 %v1808
      %v1841 = vunpack.c.h.b16 %v1808
      %v1842 = vunpack.c.l.b16 %v1809
      %v1843 = vunpack.c.h.b16 %v1809
      %v1844 = vunpack.c.l.b16 %v1810
      %v1845 = vunpack.c.h.b16 %v1810
      %v1846 = vunpack.c.l.b16 %v1811
      %v1847 = vunpack.c.h.b16 %v1811
      %v1848 = vunpack.c.l.b16 %v1812
      %v1849 = vunpack.c.h.b16 %v1812
      %v1850 = vunpack.c.l.b16 %v1813
      %v1851 = vunpack.c.h.b16 %v1813
      %v1852 = vunpack.c.l.b16 %v1814
      %v1853 = vunpack.c.h.b16 %v1814
      %v1854 = vunpack.c.l.b16 %v1815
      %v1855 = vunpack.c.h.b16 %v1815
      %v1856 = vunpack.c.l.b16 %v1816
      %v1857 = vunpack.c.h.b16 %v1816
      %v1858 = vunpack.c.l.b16 %v1817
      %v1859 = vunpack.c.h.b16 %v1817
      %v1860 = vunpack.c.l.b16 %v1818
      %v1861 = vunpack.c.h.b16 %v1818
      %v1862 = vunpack.c.l.b16 %v1819
      %v1863 = vunpack.c.h.b16 %v1819
      %v1864 = vunpack.c.l.b16 %v1820
      %v1865 = vunpack.c.h.b16 %v1820
      %v1866 = vunpack.c.l.b16 %v1821
      %v1867 = vunpack.c.h.b16 %v1821
      %v1868 = vunpack.c.l.b16 %v1822
      %v1869 = vunpack.c.h.b16 %v1822
      %v1870 = vunpack.c.l.b16 %v1823
      %v1871 = vunpack.c.h.b16 %v1823
      %v1872 = vpack.c.b16 %v1848, %v1840
      %v1873 = vpack.c.b16 %v1849, %v1841
      %v1874 = vpack.c.b16 %v1850, %v1842
      %v1875 = vpack.c.b16 %v1851, %v1843
      %v1876 = vpack.c.b16 %v1852, %v1844
      %v1877 = vpack.c.b16 %v1853, %v1845
      %v1878 = vpack.c.b16 %v1854, %v1846
      %v1879 = vpack.c.b16 %v1855, %v1847
      %v1880 = vpack.c.b16 %v1864, %v1856
      %v1881 = vpack.c.b16 %v1865, %v1857
      %v1882 = vpack.c.b16 %v1866, %v1858
      %v1883 = vpack.c.b16 %v1867, %v1859
      %v1884 = vpack.c.b16 %v1868, %v1860
      %v1885 = vpack.c.b16 %v1869, %v1861
      %v1886 = vpack.c.b16 %v1870, %v1862
      %v1887 = vpack.c.b16 %v1871, %v1863
      %v1897 = vand.u32 %v1880, %v311
      %v1900 = vand.u32 %v1881, %v311
      %v1903 = vand.u32 %v1882, %v311
      %v1906 = vand.u32 %v1883, %v311
      %v1909 = vand.u32 %v1884, %v311
      %v1912 = vand.u32 %v1885, %v311
      %v1915 = vand.u32 %v1886, %v311
      %v1918 = vand.u32 %v1887, %v311
      %1920 = vmatprep.subr.bf16.mxu0 %v1873
      %1921 = vmatpush1.bf16.msra.mxu0 %v1872
      %1922 = vmatprep.subr.bf16.mxu0 %v1900
      %1923 = vmatpush1.bf16.msra.mxu0 %v1897
      %1924 = vmatprep.subr.bf16.mxu0 0
      %1925 = vmatpush1.bf16.msra.mxu0 0
      %1926 = vmatprep.subr.bf16.mxu0 0
      %1927 = vmatpush1.bf16.msra.mxu0 0
      %1928 = vmatprep.subr.bf16.mxu0 0
      %1929 = vmatpush1.bf16.msra.mxu0 0
      %1930 = vmatprep.subr.bf16.mxu0 0
      %1931 = vmatpush1.bf16.msra.mxu0 0
      %1932 = vmatprep.subr.bf16.mxu0 0
      %1933 = vmatpush1.bf16.msra.mxu0 0
      %1934 = vmatprep.subr.bf16.mxu0 0
      %1935 = vmatpush1.bf16.msra.mxu0 0
      %1936 = vmatprep.subr.bf16.mxu0 0
      %1937 = vmatpush1.bf16.msra.mxu0 0
      %1938 = vmatprep.subr.bf16.mxu0 0
      %1939 = vmatpush1.bf16.msra.mxu0 0
      %1940 = vmatprep.subr.bf16.mxu0 0
      %1941 = vmatpush1.bf16.msra.mxu0 0
      %1942 = vmatprep.subr.bf16.mxu0 0
      %1943 = vmatpush1.bf16.msra.mxu0 0
      %1944 = vmatprep.subr.bf16.mxu0 0
      %1945 = vmatpush1.bf16.msra.mxu0 0
      %1946 = vmatprep.subr.bf16.mxu0 0
      %1947 = vmatpush1.bf16.msra.mxu0 0
      %1948 = vmatprep.subr.bf16.mxu0 0
      %1949 = vmatpush1.bf16.msra.mxu0 0
      %1950 = vmatprep.subr.bf16.mxu0 0
      %1951 = vmatpush1.bf16.msra.mxu0 0
      %1952 = vmatprep.mubr.bf16.mxu0 0
      %1953 = vmatmul.mubr.bf16.gmra.mrb[0].mxu0 %v303
      %v1954 = vpop.f32.mrb[0].mxu0
      %v1955 = vadd.f32 0.0, %v1954
      %v1956 = vpop.f32.mrb[0].mxu0
      %v1957 = vadd.f32 0.0, %v1956
      %v1958 = vpop.f32.mrb[0].mxu0
      %v1959 = vadd.f32 0.0, %v1958
      %v1960 = vpop.f32.mrb[0].mxu0
      %v1961 = vadd.f32 0.0, %v1960
      %1962 = vmatprep.mubr.bf16.mxu0 0
      %1963 = vmatmul.mubr.bf16.gmra.mrb[0].mxu0 %v306
      %v1964 = vpop.f32.mrb[0].mxu0
      %v1965 = vadd.f32 0.0, %v1964
      %v1966 = vpop.f32.mrb[0].mxu0
      %v1967 = vadd.f32 0.0, %v1966
      %v1968 = vpop.f32.mrb[0].mxu0
      %v1969 = vadd.f32 0.0, %v1968
      %v1970 = vpop.f32.mrb[0].mxu0
      %v1971 = vadd.f32 0.0, %v1970
      %1972 = vdwg.mxu0
      %1973 = vmatprep.subr.bf16.mxu0 %v1875
      %1974 = vmatpush1.bf16.msra.mxu0 %v1874
      %1975 = vmatprep.subr.bf16.mxu0 %v1906
      %1976 = vmatpush1.bf16.msra.mxu0 %v1903
      %1977 = vmatprep.subr.bf16.mxu0 0
      %1978 = vmatpush1.bf16.msra.mxu0 0
      %1979 = vmatprep.subr.bf16.mxu0 0
      %1980 = vmatpush1.bf16.msra.mxu0 0
      %1981 = vmatprep.subr.bf16.mxu0 0
      %1982 = vmatpush1.bf16.msra.mxu0 0
      %1983 = vmatprep.subr.bf16.mxu0 0
      %1984 = vmatpush1.bf16.msra.mxu0 0
      %1985 = vmatprep.subr.bf16.mxu0 0
      %1986 = vmatpush1.bf16.msra.mxu0 0
      %1987 = vmatprep.subr.bf16.mxu0 0
      %1988 = vmatpush1.bf16.msra.mxu0 0
      %1989 = vmatprep.subr.bf16.mxu0 0
      %1990 = vmatpush1.bf16.msra.mxu0 0
      %1991 = vmatprep.subr.bf16.mxu0 0
      %1992 = vmatpush1.bf16.msra.mxu0 0
      %1993 = vmatprep.subr.bf16.mxu0 0
      %1994 = vmatpush1.bf16.msra.mxu0 0
      %1995 = vmatprep.subr.bf16.mxu0 0
      %1996 = vmatpush1.bf16.msra.mxu0 0
      %1997 = vmatprep.subr.bf16.mxu0 0
      %1998 = vmatpush1.bf16.msra.mxu0 0
      %1999 = vmatprep.subr.bf16.mxu0 0
      %2000 = vmatpush1.bf16.msra.mxu0 0
      %2001 = vmatprep.subr.bf16.mxu0 0
      %2002 = vmatpush1.bf16.msra.mxu0 0
      %2003 = vmatprep.subr.bf16.mxu0 0
      %2004 = vmatpush1.bf16.msra.mxu0 0
      %2005 = vmatprep.mubr.bf16.mxu0 0
      %2006 = vmatmul.mubr.bf16.gmra.mrb[0].mxu0 %v303
      %v2007 = vpop.f32.mrb[0].mxu0
      %v2008 = vadd.f32 0.0, %v2007
      %v2009 = vpop.f32.mrb[0].mxu0
      %v2010 = vadd.f32 0.0, %v2009
      %v2011 = vpop.f32.mrb[0].mxu0
      %v2012 = vadd.f32 0.0, %v2011
      %v2013 = vpop.f32.mrb[0].mxu0
      %v2014 = vadd.f32 0.0, %v2013
      %2015 = vmatprep.mubr.bf16.mxu0 0
      %2016 = vmatmul.mubr.bf16.gmra.mrb[0].mxu0 %v306
      %v2017 = vpop.f32.mrb[0].mxu0
      %v2018 = vadd.f32 0.0, %v2017
      %v2019 = vpop.f32.mrb[0].mxu0
      %v2020 = vadd.f32 0.0, %v2019
      %v2021 = vpop.f32.mrb[0].mxu0
      %v2022 = vadd.f32 0.0, %v2021
      %v2023 = vpop.f32.mrb[0].mxu0
      %v2024 = vadd.f32 0.0, %v2023
      %2025 = vdwg.mxu0
      %2026 = vmatprep.subr.bf16.mxu0 %v1877
      %2027 = vmatpush1.bf16.msra.mxu0 %v1876
      %2028 = vmatprep.subr.bf16.mxu0 %v1912
      %2029 = vmatpush1.bf16.msra.mxu0 %v1909
      %2030 = vmatprep.subr.bf16.mxu0 0
      %2031 = vmatpush1.bf16.msra.mxu0 0
      %2032 = vmatprep.subr.bf16.mxu0 0
      %2033 = vmatpush1.bf16.msra.mxu0 0
      %2034 = vmatprep.subr.bf16.mxu0 0
      %2035 = vmatpush1.bf16.msra.mxu0 0
      %2036 = vmatprep.subr.bf16.mxu0 0
      %2037 = vmatpush1.bf16.msra.mxu0 0
      %2038 = vmatprep.subr.bf16.mxu0 0
      %2039 = vmatpush1.bf16.msra.mxu0 0
      %2040 = vmatprep.subr.bf16.mxu0 0
      %2041 = vmatpush1.bf16.msra.mxu0 0
      %2042 = vmatprep.subr.bf16.mxu0 0
      %2043 = vmatpush1.bf16.msra.mxu0 0
      %2044 = vmatprep.subr.bf16.mxu0 0
      %2045 = vmatpush1.bf16.msra.mxu0 0
      %2046 = vmatprep.subr.bf16.mxu0 0
      %2047 = vmatpush1.bf16.msra.mxu0 0
      %2048 = vmatprep.subr.bf16.mxu0 0
      %2049 = vmatpush1.bf16.msra.mxu0 0
      %2050 = vmatprep.subr.bf16.mxu0 0
      %2051 = vmatpush1.bf16.msra.mxu0 0
      %2052 = vmatprep.subr.bf16.mxu0 0
      %2053 = vmatpush1.bf16.msra.mxu0 0
      %2054 = vmatprep.subr.bf16.mxu0 0
      %2055 = vmatpush1.bf16.msra.mxu0 0
      %2056 = vmatprep.subr.bf16.mxu0 0
      %2057 = vmatpush1.bf16.msra.mxu0 0
      %2058 = vmatprep.mubr.bf16.mxu0 0
      %2059 = vmatmul.mubr.bf16.gmra.mrb[0].mxu0 %v303
      %v2060 = vpop.f32.mrb[0].mxu0
      %v2061 = vadd.f32 0.0, %v2060
      %v2062 = vpop.f32.mrb[0].mxu0
      %v2063 = vadd.f32 0.0, %v2062
      %v2064 = vpop.f32.mrb[0].mxu0
      %v2065 = vadd.f32 0.0, %v2064
      %v2066 = vpop.f32.mrb[0].mxu0
      %v2067 = vadd.f32 0.0, %v2066
      %2068 = vmatprep.mubr.bf16.mxu0 0
      %2069 = vmatmul.mubr.bf16.gmra.mrb[0].mxu0 %v306
      %v2070 = vpop.f32.mrb[0].mxu0
      %v2071 = vadd.f32 0.0, %v2070
      %v2072 = vpop.f32.mrb[0].mxu0
      %v2073 = vadd.f32 0.0, %v2072
      %v2074 = vpop.f32.mrb[0].mxu0
      %v2075 = vadd.f32 0.0, %v2074
      %v2076 = vpop.f32.mrb[0].mxu0
      %v2077 = vadd.f32 0.0, %v2076
      %2078 = vdwg.mxu0
      %2079 = vmatprep.subr.bf16.mxu0 %v1879
      %2080 = vmatpush1.bf16.msra.mxu0 %v1878
      %2081 = vmatprep.subr.bf16.mxu0 %v1918
      %2082 = vmatpush1.bf16.msra.mxu0 %v1915
      %2083 = vmatprep.subr.bf16.mxu0 0
      %2084 = vmatpush1.bf16.msra.mxu0 0
      %2085 = vmatprep.subr.bf16.mxu0 0
      %2086 = vmatpush1.bf16.msra.mxu0 0
      %2087 = vmatprep.subr.bf16.mxu0 0
      %2088 = vmatpush1.bf16.msra.mxu0 0
      %2089 = vmatprep.subr.bf16.mxu0 0
      %2090 = vmatpush1.bf16.msra.mxu0 0
      %2091 = vmatprep.subr.bf16.mxu0 0
      %2092 = vmatpush1.bf16.msra.mxu0 0
      %2093 = vmatprep.subr.bf16.mxu0 0
      %2094 = vmatpush1.bf16.msra.mxu0 0
      %2095 = vmatprep.subr.bf16.mxu0 0
      %2096 = vmatpush1.bf16.msra.mxu0 0
      %2097 = vmatprep.subr.bf16.mxu0 0
      %2098 = vmatpush1.bf16.msra.mxu0 0
      %2099 = vmatprep.subr.bf16.mxu0 0
      %2100 = vmatpush1.bf16.msra.mxu0 0
      %2101 = vmatprep.subr.bf16.mxu0 0
      %2102 = vmatpush1.bf16.msra.mxu0 0
      %2103 = vmatprep.subr.bf16.mxu0 0
      %2104 = vmatpush1.bf16.msra.mxu0 0
      %2105 = vmatprep.subr.bf16.mxu0 0
      %2106 = vmatpush1.bf16.msra.mxu0 0
      %2107 = vmatprep.subr.bf16.mxu0 0
      %2108 = vmatpush1.bf16.msra.mxu0 0
      %2109 = vmatprep.subr.bf16.mxu0 0
      %2110 = vmatpush1.bf16.msra.mxu0 0
      %2111 = vmatprep.mubr.bf16.mxu0 0
      %2112 = vmatmul.mubr.bf16.gmra.mrb[0].mxu0 %v303
      %v2113 = vpop.f32.mrb[0].mxu0
      %v2114 = vadd.f32 0.0, %v2113
      %v2115 = vpop.f32.mrb[0].mxu0
      %v2116 = vadd.f32 0.0, %v2115
      %v2117 = vpop.f32.mrb[0].mxu0
      %v2118 = vadd.f32 0.0, %v2117
      %v2119 = vpop.f32.mrb[0].mxu0
      %v2120 = vadd.f32 0.0, %v2119
      %2121 = vmatprep.mubr.bf16.mxu0 0
      %2122 = vmatmul.mubr.bf16.gmra.mrb[0].mxu0 %v306
      %v2123 = vpop.f32.mrb[0].mxu0
      %v2124 = vadd.f32 0.0, %v2123
      %v2125 = vpop.f32.mrb[0].mxu0
      %v2126 = vadd.f32 0.0, %v2125
      %v2127 = vpop.f32.mrb[0].mxu0
      %v2128 = vadd.f32 0.0, %v2127
      %v2129 = vpop.f32.mrb[0].mxu0
      %v2130 = vadd.f32 0.0, %v2129
      %2131 = vdwg.mxu0
      %v2132 = vmax.f32 %v1955, 0.0
      %v2133 = vmax.f32 %v1957, 0.0
      %v2134 = vmax.f32 %v2008, 0.0
      %v2135 = vmax.f32 %v2010, 0.0
      %v2136 = vmax.f32 %v2061, 0.0
      %v2137 = vmax.f32 %v2063, 0.0
      %v2138 = vmax.f32 %v2114, 0.0
      %v2139 = vmax.f32 %v2116, 0.0
      %v2140 = vmax.f32 %v1959, 0.0
      %v2141 = vmax.f32 %v1961, 0.0
      %v2142 = vmax.f32 %v2012, 0.0
      %v2143 = vmax.f32 %v2014, 0.0
      %v2144 = vmax.f32 %v2065, 0.0
      %v2145 = vmax.f32 %v2067, 0.0
      %v2146 = vmax.f32 %v2118, 0.0
      %v2147 = vmax.f32 %v2120, 0.0
      %v2148 = vmax.f32 %v1965, 0.0
      %v2149 = vmax.f32 %v1967, 0.0
      %v2150 = vmax.f32 %v2018, 0.0
      %v2151 = vmax.f32 %v2020, 0.0
      %v2152 = vmax.f32 %v2071, 0.0
      %v2153 = vmax.f32 %v2073, 0.0
      %v2154 = vmax.f32 %v2124, 0.0
      %v2155 = vmax.f32 %v2126, 0.0
      %v2156 = vmax.f32 %v1969, 0.0
      %v2157 = vmax.f32 %v1971, 0.0
      %v2158 = vmax.f32 %v2022, 0.0
      %v2159 = vmax.f32 %v2024, 0.0
      %v2160 = vmax.f32 %v2075, 0.0
      %v2161 = vmax.f32 %v2077, 0.0
      %v2162 = vmax.f32 %v2128, 0.0
      %v2163 = vmax.f32 %v2130, 0.0
      %v2164 = vadd.f32 %v2132, %v2133
      %v2165 = vadd.f32 %v2164, %v2134
      %v2166 = vadd.f32 %v2165, %v2135
      %v2167 = vadd.f32 %v2166, %v2136
      %v2168 = vadd.f32 %v2167, %v2137
      %v2169 = vadd.f32 %v2168, %v2138
      %v2170 = vadd.f32 %v2169, %v2139
      %2171 = vadd.xlane.f32.xlu0 %v2170
      %v2172 = vpop.xlane.xlu0 %2171
      %v2173 = vadd.f32 %v2140, %v2141
      %v2174 = vadd.f32 %v2173, %v2142
      %v2175 = vadd.f32 %v2174, %v2143
      %v2176 = vadd.f32 %v2175, %v2144
      %v2177 = vadd.f32 %v2176, %v2145
      %v2178 = vadd.f32 %v2177, %v2146
      %v2179 = vadd.f32 %v2178, %v2147
      %2180 = vadd.xlane.f32.xlu0 %v2179
      %v2181 = vpop.xlane.xlu0 %2180
      %v2182 = vadd.f32 %v2148, %v2149
      %v2183 = vadd.f32 %v2182, %v2150
      %v2184 = vadd.f32 %v2183, %v2151
      %v2185 = vadd.f32 %v2184, %v2152
      %v2186 = vadd.f32 %v2185, %v2153
      %v2187 = vadd.f32 %v2186, %v2154
      %v2188 = vadd.f32 %v2187, %v2155
      %2189 = vadd.xlane.f32.xlu0 %v2188
      %v2190 = vpop.xlane.xlu0 %2189
      %v2191 = vadd.f32 %v2156, %v2157
      %v2192 = vadd.f32 %v2191, %v2158
      %v2193 = vadd.f32 %v2192, %v2159
      %v2194 = vadd.f32 %v2193, %v2160
      %v2195 = vadd.f32 %v2194, %v2161
      %v2196 = vadd.f32 %v2195, %v2162
      %v2197 = vadd.f32 %v2196, %v2163
      %2198 = vadd.xlane.f32.xlu0 %v2197
      %v2199 = vpop.xlane.xlu0 %2198
      %v2200 = vadd.f32 %v1804, %v2172
      %v2201 = vadd.f32 %v1805, %v2181
      %v2202 = vadd.f32 %v1806, %v2190
      %v2203 = vadd.f32 %v1807, %v2199
      %v2204 = vld [vmem:[%s192 + $0xa0] sm:$0xff]
      %v2205 = vld [vmem:[%s192 + $0xa8] sm:$0xff]
      %v2206 = vld [vmem:[%s192 + $0xb0] sm:$0xff]
      %v2207 = vld [vmem:[%s192 + $0xb8] sm:$0xff]
      %v2208 = vld [vmem:[%s192 + $0x360] sm:$0xff]
      %v2209 = vld [vmem:[%s192 + $0x368] sm:$0xff]
      %v2210 = vld [vmem:[%s192 + $0x370] sm:$0xff]
      %v2211 = vld [vmem:[%s192 + $0x378] sm:$0xff]
      %v2212 = vld [vmem:[%s192 + $0x620] sm:$0xff]
      %v2213 = vld [vmem:[%s192 + $0x628] sm:$0xff]
      %v2214 = vld [vmem:[%s192 + $0x630] sm:$0xff]
      %v2215 = vld [vmem:[%s192 + $0x638] sm:$0xff]
      %v2216 = vld [vmem:[%s192 + $0x8e0] sm:$0x33]
      %v2217 = vld [vmem:[%s192 + $0x8e8] sm:$0x33]
      %v2218 = vld [vmem:[%s192 + $0x8f0] sm:$0x33]
      %v2219 = vld [vmem:[%s192 + $0x8f8] sm:$0x33]
      %v2236 = vunpack.c.l.b16 %v2204
      %v2237 = vunpack.c.h.b16 %v2204
      %v2238 = vunpack.c.l.b16 %v2205
      %v2239 = vunpack.c.h.b16 %v2205
      %v2240 = vunpack.c.l.b16 %v2206
      %v2241 = vunpack.c.h.b16 %v2206
      %v2242 = vunpack.c.l.b16 %v2207
      %v2243 = vunpack.c.h.b16 %v2207
      %v2244 = vunpack.c.l.b16 %v2208
      %v2245 = vunpack.c.h.b16 %v2208
      %v2246 = vunpack.c.l.b16 %v2209
      %v2247 = vunpack.c.h.b16 %v2209
      %v2248 = vunpack.c.l.b16 %v2210
      %v2249 = vunpack.c.h.b16 %v2210
      %v2250 = vunpack.c.l.b16 %v2211
      %v2251 = vunpack.c.h.b16 %v2211
      %v2252 = vunpack.c.l.b16 %v2212
      %v2253 = vunpack.c.h.b16 %v2212
      %v2254 = vunpack.c.l.b16 %v2213
      %v2255 = vunpack.c.h.b16 %v2213
      %v2256 = vunpack.c.l.b16 %v2214
      %v2257 = vunpack.c.h.b16 %v2214
      %v2258 = vunpack.c.l.b16 %v2215
      %v2259 = vunpack.c.h.b16 %v2215
      %v2260 = vunpack.c.l.b16 %v2216
      %v2261 = vunpack.c.h.b16 %v2216
      %v2262 = vunpack.c.l.b16 %v2217
      %v2263 = vunpack.c.h.b16 %v2217
      %v2264 = vunpack.c.l.b16 %v2218
      %v2265 = vunpack.c.h.b16 %v2218
      %v2266 = vunpack.c.l.b16 %v2219
      %v2267 = vunpack.c.h.b16 %v2219
      %v2268 = vpack.c.b16 %v2244, %v2236
      %v2269 = vpack.c.b16 %v2245, %v2237
      %v2270 = vpack.c.b16 %v2246, %v2238
      %v2271 = vpack.c.b16 %v2247, %v2239
      %v2272 = vpack.c.b16 %v2248, %v2240
      %v2273 = vpack.c.b16 %v2249, %v2241
      %v2274 = vpack.c.b16 %v2250, %v2242
      %v2275 = vpack.c.b16 %v2251, %v2243
      %v2276 = vpack.c.b16 %v2260, %v2252
      %v2277 = vpack.c.b16 %v2261, %v2253
      %v2278 = vpack.c.b16 %v2262, %v2254
      %v2279 = vpack.c.b16 %v2263, %v2255
      %v2280 = vpack.c.b16 %v2264, %v2256
      %v2281 = vpack.c.b16 %v2265, %v2257
      %v2282 = vpack.c.b16 %v2266, %v2258
      %v2283 = vpack.c.b16 %v2267, %v2259
      %v2293 = vand.u32 %v2276, %v311
      %v2296 = vand.u32 %v2277, %v311
      %v2299 = vand.u32 %v2278, %v311
      %v2302 = vand.u32 %v2279, %v311
      %v2305 = vand.u32 %v2280, %v311
      %v2308 = vand.u32 %v2281, %v311
      %v2311 = vand.u32 %v2282, %v311
      %v2314 = vand.u32 %v2283, %v311
      %2316 = vmatprep.subr.bf16.mxu0 %v2269
      %2317 = vmatpush1.bf16.msra.mxu0 %v2268
      %2318 = vmatprep.subr.bf16.mxu0 %v2296
      %2319 = vmatpush1.bf16.msra.mxu0 %v2293
      %2320 = vmatprep.subr.bf16.mxu0 0
      %2321 = vmatpush1.bf16.msra.mxu0 0
      %2322 = vmatprep.subr.bf16.mxu0 0
      %2323 = vmatpush1.bf16.msra.mxu0 0
      %2324 = vmatprep.subr.bf16.mxu0 0
      %2325 = vmatpush1.bf16.msra.mxu0 0
      %2326 = vmatprep.subr.bf16.mxu0 0
      %2327 = vmatpush1.bf16.msra.mxu0 0
      %2328 = vmatprep.subr.bf16.mxu0 0
      %2329 = vmatpush1.bf16.msra.mxu0 0
      %2330 = vmatprep.subr.bf16.mxu0 0
      %2331 = vmatpush1.bf16.msra.mxu0 0
      %2332 = vmatprep.subr.bf16.mxu0 0
      %2333 = vmatpush1.bf16.msra.mxu0 0
      %2334 = vmatprep.subr.bf16.mxu0 0
      %2335 = vmatpush1.bf16.msra.mxu0 0
      %2336 = vmatprep.subr.bf16.mxu0 0
      %2337 = vmatpush1.bf16.msra.mxu0 0
      %2338 = vmatprep.subr.bf16.mxu0 0
      %2339 = vmatpush1.bf16.msra.mxu0 0
      %2340 = vmatprep.subr.bf16.mxu0 0
      %2341 = vmatpush1.bf16.msra.mxu0 0
      %2342 = vmatprep.subr.bf16.mxu0 0
      %2343 = vmatpush1.bf16.msra.mxu0 0
      %2344 = vmatprep.subr.bf16.mxu0 0
      %2345 = vmatpush1.bf16.msra.mxu0 0
      %2346 = vmatprep.subr.bf16.mxu0 0
      %2347 = vmatpush1.bf16.msra.mxu0 0
      %2348 = vmatprep.mubr.bf16.mxu0 0
      %2349 = vmatmul.mubr.bf16.gmra.mrb[0].mxu0 %v303
      %v2350 = vpop.f32.mrb[0].mxu0
      %v2351 = vadd.f32 0.0, %v2350
      %v2352 = vpop.f32.mrb[0].mxu0
      %v2353 = vadd.f32 0.0, %v2352
      %v2354 = vpop.f32.mrb[0].mxu0
      %v2355 = vadd.f32 0.0, %v2354
      %v2356 = vpop.f32.mrb[0].mxu0
      %v2357 = vadd.f32 0.0, %v2356
      %2358 = vmatprep.mubr.bf16.mxu0 0
      %2359 = vmatmul.mubr.bf16.gmra.mrb[0].mxu0 %v306
      %v2360 = vpop.f32.mrb[0].mxu0
      %v2361 = vadd.f32 0.0, %v2360
      %v2362 = vpop.f32.mrb[0].mxu0
      %v2363 = vadd.f32 0.0, %v2362
      %v2364 = vpop.f32.mrb[0].mxu0
      %v2365 = vadd.f32 0.0, %v2364
      %v2366 = vpop.f32.mrb[0].mxu0
      %v2367 = vadd.f32 0.0, %v2366
      %2368 = vdwg.mxu0
      %2369 = vmatprep.subr.bf16.mxu0 %v2271
      %2370 = vmatpush1.bf16.msra.mxu0 %v2270
      %2371 = vmatprep.subr.bf16.mxu0 %v2302
      %2372 = vmatpush1.bf16.msra.mxu0 %v2299
      %2373 = vmatprep.subr.bf16.mxu0 0
      %2374 = vmatpush1.bf16.msra.mxu0 0
      %2375 = vmatprep.subr.bf16.mxu0 0
      %2376 = vmatpush1.bf16.msra.mxu0 0
      %2377 = vmatprep.subr.bf16.mxu0 0
      %2378 = vmatpush1.bf16.msra.mxu0 0
      %2379 = vmatprep.subr.bf16.mxu0 0
      %2380 = vmatpush1.bf16.msra.mxu0 0
      %2381 = vmatprep.subr.bf16.mxu0 0
      %2382 = vmatpush1.bf16.msra.mxu0 0
      %2383 = vmatprep.subr.bf16.mxu0 0
      %2384 = vmatpush1.bf16.msra.mxu0 0
      %2385 = vmatprep.subr.bf16.mxu0 0
      %2386 = vmatpush1.bf16.msra.mxu0 0
      %2387 = vmatprep.subr.bf16.mxu0 0
      %2388 = vmatpush1.bf16.msra.mxu0 0
      %2389 = vmatprep.subr.bf16.mxu0 0
      %2390 = vmatpush1.bf16.msra.mxu0 0
      %2391 = vmatprep.subr.bf16.mxu0 0
      %2392 = vmatpush1.bf16.msra.mxu0 0
      %2393 = vmatprep.subr.bf16.mxu0 0
      %2394 = vmatpush1.bf16.msra.mxu0 0
      %2395 = vmatprep.subr.bf16.mxu0 0
      %2396 = vmatpush1.bf16.msra.mxu0 0
      %2397 = vmatprep.subr.bf16.mxu0 0
      %2398 = vmatpush1.bf16.msra.mxu0 0
      %2399 = vmatprep.subr.bf16.mxu0 0
      %2400 = vmatpush1.bf16.msra.mxu0 0
      %2401 = vmatprep.mubr.bf16.mxu0 0
      %2402 = vmatmul.mubr.bf16.gmra.mrb[0].mxu0 %v303
      %v2403 = vpop.f32.mrb[0].mxu0
      %v2404 = vadd.f32 0.0, %v2403
      %v2405 = vpop.f32.mrb[0].mxu0
      %v2406 = vadd.f32 0.0, %v2405
      %v2407 = vpop.f32.mrb[0].mxu0
      %v2408 = vadd.f32 0.0, %v2407
      %v2409 = vpop.f32.mrb[0].mxu0
      %v2410 = vadd.f32 0.0, %v2409
      %2411 = vmatprep.mubr.bf16.mxu0 0
      %2412 = vmatmul.mubr.bf16.gmra.mrb[0].mxu0 %v306
      %v2413 = vpop.f32.mrb[0].mxu0
      %v2414 = vadd.f32 0.0, %v2413
      %v2415 = vpop.f32.mrb[0].mxu0
      %v2416 = vadd.f32 0.0, %v2415
      %v2417 = vpop.f32.mrb[0].mxu0
      %v2418 = vadd.f32 0.0, %v2417
      %v2419 = vpop.f32.mrb[0].mxu0
      %v2420 = vadd.f32 0.0, %v2419
      %2421 = vdwg.mxu0
      %2422 = vmatprep.subr.bf16.mxu0 %v2273
      %2423 = vmatpush1.bf16.msra.mxu0 %v2272
      %2424 = vmatprep.subr.bf16.mxu0 %v2308
      %2425 = vmatpush1.bf16.msra.mxu0 %v2305
      %2426 = vmatprep.subr.bf16.mxu0 0
      %2427 = vmatpush1.bf16.msra.mxu0 0
      %2428 = vmatprep.subr.bf16.mxu0 0
      %2429 = vmatpush1.bf16.msra.mxu0 0
      %2430 = vmatprep.subr.bf16.mxu0 0
      %2431 = vmatpush1.bf16.msra.mxu0 0
      %2432 = vmatprep.subr.bf16.mxu0 0
      %2433 = vmatpush1.bf16.msra.mxu0 0
      %2434 = vmatprep.subr.bf16.mxu0 0
      %2435 = vmatpush1.bf16.msra.mxu0 0
      %2436 = vmatprep.subr.bf16.mxu0 0
      %2437 = vmatpush1.bf16.msra.mxu0 0
      %2438 = vmatprep.subr.bf16.mxu0 0
      %2439 = vmatpush1.bf16.msra.mxu0 0
      %2440 = vmatprep.subr.bf16.mxu0 0
      %2441 = vmatpush1.bf16.msra.mxu0 0
      %2442 = vmatprep.subr.bf16.mxu0 0
      %2443 = vmatpush1.bf16.msra.mxu0 0
      %2444 = vmatprep.subr.bf16.mxu0 0
      %2445 = vmatpush1.bf16.msra.mxu0 0
      %2446 = vmatprep.subr.bf16.mxu0 0
      %2447 = vmatpush1.bf16.msra.mxu0 0
      %2448 = vmatprep.subr.bf16.mxu0 0
      %2449 = vmatpush1.bf16.msra.mxu0 0
      %2450 = vmatprep.subr.bf16.mxu0 0
      %2451 = vmatpush1.bf16.msra.mxu0 0
      %2452 = vmatprep.subr.bf16.mxu0 0
      %2453 = vmatpush1.bf16.msra.mxu0 0
      %2454 = vmatprep.mubr.bf16.mxu0 0
      %2455 = vmatmul.mubr.bf16.gmra.mrb[0].mxu0 %v303
      %v2456 = vpop.f32.mrb[0].mxu0
      %v2457 = vadd.f32 0.0, %v2456
      %v2458 = vpop.f32.mrb[0].mxu0
      %v2459 = vadd.f32 0.0, %v2458
      %v2460 = vpop.f32.mrb[0].mxu0
      %v2461 = vadd.f32 0.0, %v2460
      %v2462 = vpop.f32.mrb[0].mxu0
      %v2463 = vadd.f32 0.0, %v2462
      %2464 = vmatprep.mubr.bf16.mxu0 0
      %2465 = vmatmul.mubr.bf16.gmra.mrb[0].mxu0 %v306
      %v2466 = vpop.f32.mrb[0].mxu0
      %v2467 = vadd.f32 0.0, %v2466
      %v2468 = vpop.f32.mrb[0].mxu0
      %v2469 = vadd.f32 0.0, %v2468
      %v2470 = vpop.f32.mrb[0].mxu0
      %v2471 = vadd.f32 0.0, %v2470
      %v2472 = vpop.f32.mrb[0].mxu0
      %v2473 = vadd.f32 0.0, %v2472
      %2474 = vdwg.mxu0
      %2475 = vmatprep.subr.bf16.mxu0 %v2275
      %2476 = vmatpush1.bf16.msra.mxu0 %v2274
      %2477 = vmatprep.subr.bf16.mxu0 %v2314
      %2478 = vmatpush1.bf16.msra.mxu0 %v2311
      %2479 = vmatprep.subr.bf16.mxu0 0
      %2480 = vmatpush1.bf16.msra.mxu0 0
      %2481 = vmatprep.subr.bf16.mxu0 0
      %2482 = vmatpush1.bf16.msra.mxu0 0
      %2483 = vmatprep.subr.bf16.mxu0 0
      %2484 = vmatpush1.bf16.msra.mxu0 0
      %2485 = vmatprep.subr.bf16.mxu0 0
      %2486 = vmatpush1.bf16.msra.mxu0 0
      %2487 = vmatprep.subr.bf16.mxu0 0
      %2488 = vmatpush1.bf16.msra.mxu0 0
      %2489 = vmatprep.subr.bf16.mxu0 0
      %2490 = vmatpush1.bf16.msra.mxu0 0
      %2491 = vmatprep.subr.bf16.mxu0 0
      %2492 = vmatpush1.bf16.msra.mxu0 0
      %2493 = vmatprep.subr.bf16.mxu0 0
      %2494 = vmatpush1.bf16.msra.mxu0 0
      %2495 = vmatprep.subr.bf16.mxu0 0
      %2496 = vmatpush1.bf16.msra.mxu0 0
      %2497 = vmatprep.subr.bf16.mxu0 0
      %2498 = vmatpush1.bf16.msra.mxu0 0
      %2499 = vmatprep.subr.bf16.mxu0 0
      %2500 = vmatpush1.bf16.msra.mxu0 0
      %2501 = vmatprep.subr.bf16.mxu0 0
      %2502 = vmatpush1.bf16.msra.mxu0 0
      %2503 = vmatprep.subr.bf16.mxu0 0
      %2504 = vmatpush1.bf16.msra.mxu0 0
      %2505 = vmatprep.subr.bf16.mxu0 0
      %2506 = vmatpush1.bf16.msra.mxu0 0
      %2507 = vmatprep.mubr.bf16.mxu0 0
      %2508 = vmatmul.mubr.bf16.gmra.mrb[0].mxu0 %v303
      %v2509 = vpop.f32.mrb[0].mxu0
      %v2510 = vadd.f32 0.0, %v2509
      %v2511 = vpop.f32.mrb[0].mxu0
      %v2512 = vadd.f32 0.0, %v2511
      %v2513 = vpop.f32.mrb[0].mxu0
      %v2514 = vadd.f32 0.0, %v2513
      %v2515 = vpop.f32.mrb[0].mxu0
      %v2516 = vadd.f32 0.0, %v2515
      %2517 = vmatprep.mubr.bf16.mxu0 0
      %2518 = vmatmul.mubr.bf16.gmra.mrb[0].mxu0 %v306
      %v2519 = vpop.f32.mrb[0].mxu0
      %v2520 = vadd.f32 0.0, %v2519
      %v2521 = vpop.f32.mrb[0].mxu0
      %v2522 = vadd.f32 0.0, %v2521
      %v2523 = vpop.f32.mrb[0].mxu0
      %v2524 = vadd.f32 0.0, %v2523
      %v2525 = vpop.f32.mrb[0].mxu0
      %v2526 = vadd.f32 0.0, %v2525
      %2527 = vdwg.mxu0
      %v2528 = vmax.f32 %v2351, 0.0
      %v2529 = vmax.f32 %v2353, 0.0
      %v2530 = vmax.f32 %v2404, 0.0
      %v2531 = vmax.f32 %v2406, 0.0
      %v2532 = vmax.f32 %v2457, 0.0
      %v2533 = vmax.f32 %v2459, 0.0
      %v2534 = vmax.f32 %v2510, 0.0
      %v2535 = vmax.f32 %v2512, 0.0
      %v2536 = vmax.f32 %v2355, 0.0
      %v2537 = vmax.f32 %v2357, 0.0
      %v2538 = vmax.f32 %v2408, 0.0
      %v2539 = vmax.f32 %v2410, 0.0
      %v2540 = vmax.f32 %v2461, 0.0
      %v2541 = vmax.f32 %v2463, 0.0
      %v2542 = vmax.f32 %v2514, 0.0
      %v2543 = vmax.f32 %v2516, 0.0
      %v2544 = vmax.f32 %v2361, 0.0
      %v2545 = vmax.f32 %v2363, 0.0
      %v2546 = vmax.f32 %v2414, 0.0
      %v2547 = vmax.f32 %v2416, 0.0
      %v2548 = vmax.f32 %v2467, 0.0
      %v2549 = vmax.f32 %v2469, 0.0
      %v2550 = vmax.f32 %v2520, 0.0
      %v2551 = vmax.f32 %v2522, 0.0
      %v2552 = vmax.f32 %v2365, 0.0
      %v2553 = vmax.f32 %v2367, 0.0
      %v2554 = vmax.f32 %v2418, 0.0
      %v2555 = vmax.f32 %v2420, 0.0
      %v2556 = vmax.f32 %v2471, 0.0
      %v2557 = vmax.f32 %v2473, 0.0
      %v2558 = vmax.f32 %v2524, 0.0
      %v2559 = vmax.f32 %v2526, 0.0
      %v2560 = vadd.f32 %v2528, %v2529
      %v2561 = vadd.f32 %v2560, %v2530
      %v2562 = vadd.f32 %v2561, %v2531
      %v2563 = vadd.f32 %v2562, %v2532
      %v2564 = vadd.f32 %v2563, %v2533
      %v2565 = vadd.f32 %v2564, %v2534
      %v2566 = vadd.f32 %v2565, %v2535
      %2567 = vadd.xlane.f32.xlu0 %v2566
      %v2568 = vpop.xlane.xlu0 %2567
      %v2569 = vadd.f32 %v2536, %v2537
      %v2570 = vadd.f32 %v2569, %v2538
      %v2571 = vadd.f32 %v2570, %v2539
      %v2572 = vadd.f32 %v2571, %v2540
      %v2573 = vadd.f32 %v2572, %v2541
      %v2574 = vadd.f32 %v2573, %v2542
      %v2575 = vadd.f32 %v2574, %v2543
      %2576 = vadd.xlane.f32.xlu0 %v2575
      %v2577 = vpop.xlane.xlu0 %2576
      %v2578 = vadd.f32 %v2544, %v2545
      %v2579 = vadd.f32 %v2578, %v2546
      %v2580 = vadd.f32 %v2579, %v2547
      %v2581 = vadd.f32 %v2580, %v2548
      %v2582 = vadd.f32 %v2581, %v2549
      %v2583 = vadd.f32 %v2582, %v2550
      %v2584 = vadd.f32 %v2583, %v2551
      %2585 = vadd.xlane.f32.xlu0 %v2584
      %v2586 = vpop.xlane.xlu0 %2585
      %v2587 = vadd.f32 %v2552, %v2553
      %v2588 = vadd.f32 %v2587, %v2554
      %v2589 = vadd.f32 %v2588, %v2555
      %v2590 = vadd.f32 %v2589, %v2556
      %v2591 = vadd.f32 %v2590, %v2557
      %v2592 = vadd.f32 %v2591, %v2558
      %v2593 = vadd.f32 %v2592, %v2559
      %2594 = vadd.xlane.f32.xlu0 %v2593
      %v2595 = vpop.xlane.xlu0 %2594
      %v2596 = vadd.f32 %v2200, %v2568
      %v2597 = vadd.f32 %v2201, %v2577
      %v2598 = vadd.f32 %v2202, %v2586
      %v2599 = vadd.f32 %v2203, %v2595
      %v2600 = vld [vmem:[%s192 + $0xc0] sm:$0xff]
      %v2601 = vld [vmem:[%s192 + $0xc8] sm:$0xff]
      %v2602 = vld [vmem:[%s192 + $0xd0] sm:$0xff]
      %v2603 = vld [vmem:[%s192 + $0xd8] sm:$0xff]
      %v2604 = vld [vmem:[%s192 + $0x380] sm:$0xff]
      %v2605 = vld [vmem:[%s192 + $0x388] sm:$0xff]
      %v2606 = vld [vmem:[%s192 + $0x390] sm:$0xff]
      %v2607 = vld [vmem:[%s192 + $0x398] sm:$0xff]
      %v2608 = vld [vmem:[%s192 + $0x640] sm:$0xff]
      %v2609 = vld [vmem:[%s192 + $0x648] sm:$0xff]
      %v2610 = vld [vmem:[%s192 + $0x650] sm:$0xff]
      %v2611 = vld [vmem:[%s192 + $0x658] sm:$0xff]
      %v2612 = vld [vmem:[%s192 + $0x900] sm:$0x33]
      %v2613 = vld [vmem:[%s192 + $0x908] sm:$0x33]
      %v2614 = vld [vmem:[%s192 + $0x910] sm:$0x33]
      %v2615 = vld [vmem:[%s192 + $0x918] sm:$0x33]
      %v2632 = vunpack.c.l.b16 %v2600
      %v2633 = vunpack.c.h.b16 %v2600
      %v2634 = vunpack.c.l.b16 %v2601
      %v2635 = vunpack.c.h.b16 %v2601
      %v2636 = vunpack.c.l.b16 %v2602
      %v2637 = vunpack.c.h.b16 %v2602
      %v2638 = vunpack.c.l.b16 %v2603
      %v2639 = vunpack.c.h.b16 %v2603
      %v2640 = vunpack.c.l.b16 %v2604
      %v2641 = vunpack.c.h.b16 %v2604
      %v2642 = vunpack.c.l.b16 %v2605
      %v2643 = vunpack.c.h.b16 %v2605
      %v2644 = vunpack.c.l.b16 %v2606
      %v2645 = vunpack.c.h.b16 %v2606
      %v2646 = vunpack.c.l.b16 %v2607
      %v2647 = vunpack.c.h.b16 %v2607
      %v2648 = vunpack.c.l.b16 %v2608
      %v2649 = vunpack.c.h.b16 %v2608
      %v2650 = vunpack.c.l.b16 %v2609
      %v2651 = vunpack.c.h.b16 %v2609
      %v2652 = vunpack.c.l.b16 %v2610
      %v2653 = vunpack.c.h.b16 %v2610
      %v2654 = vunpack.c.l.b16 %v2611
      %v2655 = vunpack.c.h.b16 %v2611
      %v2656 = vunpack.c.l.b16 %v2612
      %v2657 = vunpack.c.h.b16 %v2612
      %v2658 = vunpack.c.l.b16 %v2613
      %v2659 = vunpack.c.h.b16 %v2613
      %v2660 = vunpack.c.l.b16 %v2614
      %v2661 = vunpack.c.h.b16 %v2614
      %v2662 = vunpack.c.l.b16 %v2615
      %v2663 = vunpack.c.h.b16 %v2615
      %v2664 = vpack.c.b16 %v2640, %v2632
      %v2665 = vpack.c.b16 %v2641, %v2633
      %v2666 = vpack.c.b16 %v2642, %v2634
      %v2667 = vpack.c.b16 %v2643, %v2635
      %v2668 = vpack.c.b16 %v2644, %v2636
      %v2669 = vpack.c.b16 %v2645, %v2637
      %v2670 = vpack.c.b16 %v2646, %v2638
      %v2671 = vpack.c.b16 %v2647, %v2639
      %v2672 = vpack.c.b16 %v2656, %v2648
      %v2673 = vpack.c.b16 %v2657, %v2649
      %v2674 = vpack.c.b16 %v2658, %v2650
      %v2675 = vpack.c.b16 %v2659, %v2651
      %v2676 = vpack.c.b16 %v2660, %v2652
      %v2677 = vpack.c.b16 %v2661, %v2653
      %v2678 = vpack.c.b16 %v2662, %v2654
      %v2679 = vpack.c.b16 %v2663, %v2655
      %v2689 = vand.u32 %v2672, %v311
      %v2692 = vand.u32 %v2673, %v311
      %v2695 = vand.u32 %v2674, %v311
      %v2698 = vand.u32 %v2675, %v311
      %v2701 = vand.u32 %v2676, %v311
      %v2704 = vand.u32 %v2677, %v311
      %v2707 = vand.u32 %v2678, %v311
      %v2710 = vand.u32 %v2679, %v311
      %2712 = vmatprep.subr.bf16.mxu0 %v2665
      %2713 = vmatpush1.bf16.msra.mxu0 %v2664
      %2714 = vmatprep.subr.bf16.mxu0 %v2692
      %2715 = vmatpush1.bf16.msra.mxu0 %v2689
      %2716 = vmatprep.subr.bf16.mxu0 0
      %2717 = vmatpush1.bf16.msra.mxu0 0
      %2718 = vmatprep.subr.bf16.mxu0 0
      %2719 = vmatpush1.bf16.msra.mxu0 0
      %2720 = vmatprep.subr.bf16.mxu0 0
      %2721 = vmatpush1.bf16.msra.mxu0 0
      %2722 = vmatprep.subr.bf16.mxu0 0
      %2723 = vmatpush1.bf16.msra.mxu0 0
      %2724 = vmatprep.subr.bf16.mxu0 0
      %2725 = vmatpush1.bf16.msra.mxu0 0
      %2726 = vmatprep.subr.bf16.mxu0 0
      %2727 = vmatpush1.bf16.msra.mxu0 0
      %2728 = vmatprep.subr.bf16.mxu0 0
      %2729 = vmatpush1.bf16.msra.mxu0 0
      %2730 = vmatprep.subr.bf16.mxu0 0
      %2731 = vmatpush1.bf16.msra.mxu0 0
      %2732 = vmatprep.subr.bf16.mxu0 0
      %2733 = vmatpush1.bf16.msra.mxu0 0
      %2734 = vmatprep.subr.bf16.mxu0 0
      %2735 = vmatpush1.bf16.msra.mxu0 0
      %2736 = vmatprep.subr.bf16.mxu0 0
      %2737 = vmatpush1.bf16.msra.mxu0 0
      %2738 = vmatprep.subr.bf16.mxu0 0
      %2739 = vmatpush1.bf16.msra.mxu0 0
      %2740 = vmatprep.subr.bf16.mxu0 0
      %2741 = vmatpush1.bf16.msra.mxu0 0
      %2742 = vmatprep.subr.bf16.mxu0 0
      %2743 = vmatpush1.bf16.msra.mxu0 0
      %2744 = vmatprep.mubr.bf16.mxu0 0
      %2745 = vmatmul.mubr.bf16.gmra.mrb[0].mxu0 %v303
      %v2746 = vpop.f32.mrb[0].mxu0
      %v2747 = vadd.f32 0.0, %v2746
      %v2748 = vpop.f32.mrb[0].mxu0
      %v2749 = vadd.f32 0.0, %v2748
      %v2750 = vpop.f32.mrb[0].mxu0
      %v2751 = vadd.f32 0.0, %v2750
      %v2752 = vpop.f32.mrb[0].mxu0
      %v2753 = vadd.f32 0.0, %v2752
      %2754 = vmatprep.mubr.bf16.mxu0 0
      %2755 = vmatmul.mubr.bf16.gmra.mrb[0].mxu0 %v306
      %v2756 = vpop.f32.mrb[0].mxu0
      %v2757 = vadd.f32 0.0, %v2756
      %v2758 = vpop.f32.mrb[0].mxu0
      %v2759 = vadd.f32 0.0, %v2758
      %v2760 = vpop.f32.mrb[0].mxu0
      %v2761 = vadd.f32 0.0, %v2760
      %v2762 = vpop.f32.mrb[0].mxu0
      %v2763 = vadd.f32 0.0, %v2762
      %2764 = vdwg.mxu0
      %2765 = vmatprep.subr.bf16.mxu0 %v2667
      %2766 = vmatpush1.bf16.msra.mxu0 %v2666
      %2767 = vmatprep.subr.bf16.mxu0 %v2698
      %2768 = vmatpush1.bf16.msra.mxu0 %v2695
      %2769 = vmatprep.subr.bf16.mxu0 0
      %2770 = vmatpush1.bf16.msra.mxu0 0
      %2771 = vmatprep.subr.bf16.mxu0 0
      %2772 = vmatpush1.bf16.msra.mxu0 0
      %2773 = vmatprep.subr.bf16.mxu0 0
      %2774 = vmatpush1.bf16.msra.mxu0 0
      %2775 = vmatprep.subr.bf16.mxu0 0
      %2776 = vmatpush1.bf16.msra.mxu0 0
      %2777 = vmatprep.subr.bf16.mxu0 0
      %2778 = vmatpush1.bf16.msra.mxu0 0
      %2779 = vmatprep.subr.bf16.mxu0 0
      %2780 = vmatpush1.bf16.msra.mxu0 0
      %2781 = vmatprep.subr.bf16.mxu0 0
      %2782 = vmatpush1.bf16.msra.mxu0 0
      %2783 = vmatprep.subr.bf16.mxu0 0
      %2784 = vmatpush1.bf16.msra.mxu0 0
      %2785 = vmatprep.subr.bf16.mxu0 0
      %2786 = vmatpush1.bf16.msra.mxu0 0
      %2787 = vmatprep.subr.bf16.mxu0 0
      %2788 = vmatpush1.bf16.msra.mxu0 0
      %2789 = vmatprep.subr.bf16.mxu0 0
      %2790 = vmatpush1.bf16.msra.mxu0 0
      %2791 = vmatprep.subr.bf16.mxu0 0
      %2792 = vmatpush1.bf16.msra.mxu0 0
      %2793 = vmatprep.subr.bf16.mxu0 0
      %2794 = vmatpush1.bf16.msra.mxu0 0
      %2795 = vmatprep.subr.bf16.mxu0 0
      %2796 = vmatpush1.bf16.msra.mxu0 0
      %2797 = vmatprep.mubr.bf16.mxu0 0
      %2798 = vmatmul.mubr.bf16.gmra.mrb[0].mxu0 %v303
      %v2799 = vpop.f32.mrb[0].mxu0
      %v2800 = vadd.f32 0.0, %v2799
      %v2801 = vpop.f32.mrb[0].mxu0
      %v2802 = vadd.f32 0.0, %v2801
      %v2803 = vpop.f32.mrb[0].mxu0
      %v2804 = vadd.f32 0.0, %v2803
      %v2805 = vpop.f32.mrb[0].mxu0
      %v2806 = vadd.f32 0.0, %v2805
      %2807 = vmatprep.mubr.bf16.mxu0 0
      %2808 = vmatmul.mubr.bf16.gmra.mrb[0].mxu0 %v306
      %v2809 = vpop.f32.mrb[0].mxu0
      %v2810 = vadd.f32 0.0, %v2809
      %v2811 = vpop.f32.mrb[0].mxu0
      %v2812 = vadd.f32 0.0, %v2811
      %v2813 = vpop.f32.mrb[0].mxu0
      %v2814 = vadd.f32 0.0, %v2813
      %v2815 = vpop.f32.mrb[0].mxu0
      %v2816 = vadd.f32 0.0, %v2815
      %2817 = vdwg.mxu0
      %2818 = vmatprep.subr.bf16.mxu0 %v2669
      %2819 = vmatpush1.bf16.msra.mxu0 %v2668
      %2820 = vmatprep.subr.bf16.mxu0 %v2704
      %2821 = vmatpush1.bf16.msra.mxu0 %v2701
      %2822 = vmatprep.subr.bf16.mxu0 0
      %2823 = vmatpush1.bf16.msra.mxu0 0
      %2824 = vmatprep.subr.bf16.mxu0 0
      %2825 = vmatpush1.bf16.msra.mxu0 0
      %2826 = vmatprep.subr.bf16.mxu0 0
      %2827 = vmatpush1.bf16.msra.mxu0 0
      %2828 = vmatprep.subr.bf16.mxu0 0
      %2829 = vmatpush1.bf16.msra.mxu0 0
      %2830 = vmatprep.subr.bf16.mxu0 0
      %2831 = vmatpush1.bf16.msra.mxu0 0
      %2832 = vmatprep.subr.bf16.mxu0 0
      %2833 = vmatpush1.bf16.msra.mxu0 0
      %2834 = vmatprep.subr.bf16.mxu0 0
      %2835 = vmatpush1.bf16.msra.mxu0 0
      %2836 = vmatprep.subr.bf16.mxu0 0
      %2837 = vmatpush1.bf16.msra.mxu0 0
      %2838 = vmatprep.subr.bf16.mxu0 0
      %2839 = vmatpush1.bf16.msra.mxu0 0
      %2840 = vmatprep.subr.bf16.mxu0 0
      %2841 = vmatpush1.bf16.msra.mxu0 0
      %2842 = vmatprep.subr.bf16.mxu0 0
      %2843 = vmatpush1.bf16.msra.mxu0 0
      %2844 = vmatprep.subr.bf16.mxu0 0
      %2845 = vmatpush1.bf16.msra.mxu0 0
      %2846 = vmatprep.subr.bf16.mxu0 0
      %2847 = vmatpush1.bf16.msra.mxu0 0
      %2848 = vmatprep.subr.bf16.mxu0 0
      %2849 = vmatpush1.bf16.msra.mxu0 0
      %2850 = vmatprep.mubr.bf16.mxu0 0
      %2851 = vmatmul.mubr.bf16.gmra.mrb[0].mxu0 %v303
      %v2852 = vpop.f32.mrb[0].mxu0
      %v2853 = vadd.f32 0.0, %v2852
      %v2854 = vpop.f32.mrb[0].mxu0
      %v2855 = vadd.f32 0.0, %v2854
      %v2856 = vpop.f32.mrb[0].mxu0
      %v2857 = vadd.f32 0.0, %v2856
      %v2858 = vpop.f32.mrb[0].mxu0
      %v2859 = vadd.f32 0.0, %v2858
      %2860 = vmatprep.mubr.bf16.mxu0 0
      %2861 = vmatmul.mubr.bf16.gmra.mrb[0].mxu0 %v306
      %v2862 = vpop.f32.mrb[0].mxu0
      %v2863 = vadd.f32 0.0, %v2862
      %v2864 = vpop.f32.mrb[0].mxu0
      %v2865 = vadd.f32 0.0, %v2864
      %v2866 = vpop.f32.mrb[0].mxu0
      %v2867 = vadd.f32 0.0, %v2866
      %v2868 = vpop.f32.mrb[0].mxu0
      %v2869 = vadd.f32 0.0, %v2868
      %2870 = vdwg.mxu0
      %2871 = vmatprep.subr.bf16.mxu0 %v2671
      %2872 = vmatpush1.bf16.msra.mxu0 %v2670
      %2873 = vmatprep.subr.bf16.mxu0 %v2710
      %2874 = vmatpush1.bf16.msra.mxu0 %v2707
      %2875 = vmatprep.subr.bf16.mxu0 0
      %2876 = vmatpush1.bf16.msra.mxu0 0
      %2877 = vmatprep.subr.bf16.mxu0 0
      %2878 = vmatpush1.bf16.msra.mxu0 0
      %2879 = vmatprep.subr.bf16.mxu0 0
      %2880 = vmatpush1.bf16.msra.mxu0 0
      %2881 = vmatprep.subr.bf16.mxu0 0
      %2882 = vmatpush1.bf16.msra.mxu0 0
      %2883 = vmatprep.subr.bf16.mxu0 0
      %2884 = vmatpush1.bf16.msra.mxu0 0
      %2885 = vmatprep.subr.bf16.mxu0 0
      %2886 = vmatpush1.bf16.msra.mxu0 0
      %2887 = vmatprep.subr.bf16.mxu0 0
      %2888 = vmatpush1.bf16.msra.mxu0 0
      %2889 = vmatprep.subr.bf16.mxu0 0
      %2890 = vmatpush1.bf16.msra.mxu0 0
      %2891 = vmatprep.subr.bf16.mxu0 0
      %2892 = vmatpush1.bf16.msra.mxu0 0
      %2893 = vmatprep.subr.bf16.mxu0 0
      %2894 = vmatpush1.bf16.msra.mxu0 0
      %2895 = vmatprep.subr.bf16.mxu0 0
      %2896 = vmatpush1.bf16.msra.mxu0 0
      %2897 = vmatprep.subr.bf16.mxu0 0
      %2898 = vmatpush1.bf16.msra.mxu0 0
      %2899 = vmatprep.subr.bf16.mxu0 0
      %2900 = vmatpush1.bf16.msra.mxu0 0
      %2901 = vmatprep.subr.bf16.mxu0 0
      %2902 = vmatpush1.bf16.msra.mxu0 0
      %2903 = vmatprep.mubr.bf16.mxu0 0
      %2904 = vmatmul.mubr.bf16.gmra.mrb[0].mxu0 %v303
      %v2905 = vpop.f32.mrb[0].mxu0
      %v2906 = vadd.f32 0.0, %v2905
      %v2907 = vpop.f32.mrb[0].mxu0
      %v2908 = vadd.f32 0.0, %v2907
      %v2909 = vpop.f32.mrb[0].mxu0
      %v2910 = vadd.f32 0.0, %v2909
      %v2911 = vpop.f32.mrb[0].mxu0
      %v2912 = vadd.f32 0.0, %v2911
      %2913 = vmatprep.mubr.bf16.mxu0 0
      %2914 = vmatmul.mubr.bf16.gmra.mrb[0].mxu0 %v306
      %v2915 = vpop.f32.mrb[0].mxu0
      %v2916 = vadd.f32 0.0, %v2915
      %v2917 = vpop.f32.mrb[0].mxu0
      %v2918 = vadd.f32 0.0, %v2917
      %v2919 = vpop.f32.mrb[0].mxu0
      %v2920 = vadd.f32 0.0, %v2919
      %v2921 = vpop.f32.mrb[0].mxu0
      %v2922 = vadd.f32 0.0, %v2921
      %2923 = vdwg.mxu0
      %v2924 = vmax.f32 %v2747, 0.0
      %v2925 = vmax.f32 %v2749, 0.0
      %v2926 = vmax.f32 %v2800, 0.0
      %v2927 = vmax.f32 %v2802, 0.0
      %v2928 = vmax.f32 %v2853, 0.0
      %v2929 = vmax.f32 %v2855, 0.0
      %v2930 = vmax.f32 %v2906, 0.0
      %v2931 = vmax.f32 %v2908, 0.0
      %v2932 = vmax.f32 %v2751, 0.0
      %v2933 = vmax.f32 %v2753, 0.0
      %v2934 = vmax.f32 %v2804, 0.0
      %v2935 = vmax.f32 %v2806, 0.0
      %v2936 = vmax.f32 %v2857, 0.0
      %v2937 = vmax.f32 %v2859, 0.0
      %v2938 = vmax.f32 %v2910, 0.0
      %v2939 = vmax.f32 %v2912, 0.0
      %v2940 = vmax.f32 %v2757, 0.0
      %v2941 = vmax.f32 %v2759, 0.0
      %v2942 = vmax.f32 %v2810, 0.0
      %v2943 = vmax.f32 %v2812, 0.0
      %v2944 = vmax.f32 %v2863, 0.0
      %v2945 = vmax.f32 %v2865, 0.0
      %v2946 = vmax.f32 %v2916, 0.0
      %v2947 = vmax.f32 %v2918, 0.0
      %v2948 = vmax.f32 %v2761, 0.0
      %v2949 = vmax.f32 %v2763, 0.0
      %v2950 = vmax.f32 %v2814, 0.0
      %v2951 = vmax.f32 %v2816, 0.0
      %v2952 = vmax.f32 %v2867, 0.0
      %v2953 = vmax.f32 %v2869, 0.0
      %v2954 = vmax.f32 %v2920, 0.0
      %v2955 = vmax.f32 %v2922, 0.0
      %v2956 = vadd.f32 %v2924, %v2925
      %v2957 = vadd.f32 %v2956, %v2926
      %v2958 = vadd.f32 %v2957, %v2927
      %v2959 = vadd.f32 %v2958, %v2928
      %v2960 = vadd.f32 %v2959, %v2929
      %v2961 = vadd.f32 %v2960, %v2930
      %v2962 = vadd.f32 %v2961, %v2931
      %2963 = vadd.xlane.f32.xlu0 %v2962
      %v2964 = vpop.xlane.xlu0 %2963
      %v2965 = vadd.f32 %v2932, %v2933
      %v2966 = vadd.f32 %v2965, %v2934
      %v2967 = vadd.f32 %v2966, %v2935
      %v2968 = vadd.f32 %v2967, %v2936
      %v2969 = vadd.f32 %v2968, %v2937
      %v2970 = vadd.f32 %v2969, %v2938
      %v2971 = vadd.f32 %v2970, %v2939
      %2972 = vadd.xlane.f32.xlu0 %v2971
      %v2973 = vpop.xlane.xlu0 %2972
      %v2974 = vadd.f32 %v2940, %v2941
      %v2975 = vadd.f32 %v2974, %v2942
      %v2976 = vadd.f32 %v2975, %v2943
      %v2977 = vadd.f32 %v2976, %v2944
      %v2978 = vadd.f32 %v2977, %v2945
      %v2979 = vadd.f32 %v2978, %v2946
      %v2980 = vadd.f32 %v2979, %v2947
      %2981 = vadd.xlane.f32.xlu0 %v2980
      %v2982 = vpop.xlane.xlu0 %2981
      %v2983 = vadd.f32 %v2948, %v2949
      %v2984 = vadd.f32 %v2983, %v2950
      %v2985 = vadd.f32 %v2984, %v2951
      %v2986 = vadd.f32 %v2985, %v2952
      %v2987 = vadd.f32 %v2986, %v2953
      %v2988 = vadd.f32 %v2987, %v2954
      %v2989 = vadd.f32 %v2988, %v2955
      %2990 = vadd.xlane.f32.xlu0 %v2989
      %v2991 = vpop.xlane.xlu0 %2990
      %v2992 = vadd.f32 %v2596, %v2964
      %v2993 = vadd.f32 %v2597, %v2973
      %v2994 = vadd.f32 %v2598, %v2982
      %v2995 = vadd.f32 %v2599, %v2991
      %v2996 = vld [vmem:[%s192 + $0xe0] sm:$0xff]
      %v2997 = vld [vmem:[%s192 + $0xe8] sm:$0xff]
      %v2998 = vld [vmem:[%s192 + $0xf0] sm:$0xff]
      %v2999 = vld [vmem:[%s192 + $0xf8] sm:$0xff]
      %v3000 = vld [vmem:[%s192 + $0x3a0] sm:$0xff]
      %v3001 = vld [vmem:[%s192 + $0x3a8] sm:$0xff]
      %v3002 = vld [vmem:[%s192 + $0x3b0] sm:$0xff]
      %v3003 = vld [vmem:[%s192 + $0x3b8] sm:$0xff]
      %v3004 = vld [vmem:[%s192 + $0x660] sm:$0xff]
      %v3005 = vld [vmem:[%s192 + $0x668] sm:$0xff]
      %v3006 = vld [vmem:[%s192 + $0x670] sm:$0xff]
      %v3007 = vld [vmem:[%s192 + $0x678] sm:$0xff]
      %v3008 = vld [vmem:[%s192 + $0x920] sm:$0x33]
      %v3009 = vld [vmem:[%s192 + $0x928] sm:$0x33]
      %v3010 = vld [vmem:[%s192 + $0x930] sm:$0x33]
      %v3011 = vld [vmem:[%s192 + $0x938] sm:$0x33]
      %v3028 = vunpack.c.l.b16 %v2996
      %v3029 = vunpack.c.h.b16 %v2996
      %v3030 = vunpack.c.l.b16 %v2997
      %v3031 = vunpack.c.h.b16 %v2997
      %v3032 = vunpack.c.l.b16 %v2998
      %v3033 = vunpack.c.h.b16 %v2998
      %v3034 = vunpack.c.l.b16 %v2999
      %v3035 = vunpack.c.h.b16 %v2999
      %v3036 = vunpack.c.l.b16 %v3000
      %v3037 = vunpack.c.h.b16 %v3000
      %v3038 = vunpack.c.l.b16 %v3001
      %v3039 = vunpack.c.h.b16 %v3001
      %v3040 = vunpack.c.l.b16 %v3002
      %v3041 = vunpack.c.h.b16 %v3002
      %v3042 = vunpack.c.l.b16 %v3003
      %v3043 = vunpack.c.h.b16 %v3003
      %v3044 = vunpack.c.l.b16 %v3004
      %v3045 = vunpack.c.h.b16 %v3004
      %v3046 = vunpack.c.l.b16 %v3005
      %v3047 = vunpack.c.h.b16 %v3005
      %v3048 = vunpack.c.l.b16 %v3006
      %v3049 = vunpack.c.h.b16 %v3006
      %v3050 = vunpack.c.l.b16 %v3007
      %v3051 = vunpack.c.h.b16 %v3007
      %v3052 = vunpack.c.l.b16 %v3008
      %v3053 = vunpack.c.h.b16 %v3008
      %v3054 = vunpack.c.l.b16 %v3009
      %v3055 = vunpack.c.h.b16 %v3009
      %v3056 = vunpack.c.l.b16 %v3010
      %v3057 = vunpack.c.h.b16 %v3010
      %v3058 = vunpack.c.l.b16 %v3011
      %v3059 = vunpack.c.h.b16 %v3011
      %v3060 = vpack.c.b16 %v3036, %v3028
      %v3061 = vpack.c.b16 %v3037, %v3029
      %v3062 = vpack.c.b16 %v3038, %v3030
      %v3063 = vpack.c.b16 %v3039, %v3031
      %v3064 = vpack.c.b16 %v3040, %v3032
      %v3065 = vpack.c.b16 %v3041, %v3033
      %v3066 = vpack.c.b16 %v3042, %v3034
      %v3067 = vpack.c.b16 %v3043, %v3035
      %v3068 = vpack.c.b16 %v3052, %v3044
      %v3069 = vpack.c.b16 %v3053, %v3045
      %v3070 = vpack.c.b16 %v3054, %v3046
      %v3071 = vpack.c.b16 %v3055, %v3047
      %v3072 = vpack.c.b16 %v3056, %v3048
      %v3073 = vpack.c.b16 %v3057, %v3049
      %v3074 = vpack.c.b16 %v3058, %v3050
      %v3075 = vpack.c.b16 %v3059, %v3051
      %v3085 = vand.u32 %v3068, %v311
      %v3088 = vand.u32 %v3069, %v311
      %v3091 = vand.u32 %v3070, %v311
      %v3094 = vand.u32 %v3071, %v311
      %v3097 = vand.u32 %v3072, %v311
      %v3100 = vand.u32 %v3073, %v311
      %v3103 = vand.u32 %v3074, %v311
      %v3106 = vand.u32 %v3075, %v311
      %3108 = vmatprep.subr.bf16.mxu0 %v3061
      %3109 = vmatpush1.bf16.msra.mxu0 %v3060
      %3110 = vmatprep.subr.bf16.mxu0 %v3088
      %3111 = vmatpush1.bf16.msra.mxu0 %v3085
      %3112 = vmatprep.subr.bf16.mxu0 0
      %3113 = vmatpush1.bf16.msra.mxu0 0
      %3114 = vmatprep.subr.bf16.mxu0 0
      %3115 = vmatpush1.bf16.msra.mxu0 0
      %3116 = vmatprep.subr.bf16.mxu0 0
      %3117 = vmatpush1.bf16.msra.mxu0 0
      %3118 = vmatprep.subr.bf16.mxu0 0
      %3119 = vmatpush1.bf16.msra.mxu0 0
      %3120 = vmatprep.subr.bf16.mxu0 0
      %3121 = vmatpush1.bf16.msra.mxu0 0
      %3122 = vmatprep.subr.bf16.mxu0 0
      %3123 = vmatpush1.bf16.msra.mxu0 0
      %3124 = vmatprep.subr.bf16.mxu0 0
      %3125 = vmatpush1.bf16.msra.mxu0 0
      %3126 = vmatprep.subr.bf16.mxu0 0
      %3127 = vmatpush1.bf16.msra.mxu0 0
      %3128 = vmatprep.subr.bf16.mxu0 0
      %3129 = vmatpush1.bf16.msra.mxu0 0
      %3130 = vmatprep.subr.bf16.mxu0 0
      %3131 = vmatpush1.bf16.msra.mxu0 0
      %3132 = vmatprep.subr.bf16.mxu0 0
      %3133 = vmatpush1.bf16.msra.mxu0 0
      %3134 = vmatprep.subr.bf16.mxu0 0
      %3135 = vmatpush1.bf16.msra.mxu0 0
      %3136 = vmatprep.subr.bf16.mxu0 0
      %3137 = vmatpush1.bf16.msra.mxu0 0
      %3138 = vmatprep.subr.bf16.mxu0 0
      %3139 = vmatpush1.bf16.msra.mxu0 0
      %3140 = vmatprep.mubr.bf16.mxu0 0
      %3141 = vmatmul.mubr.bf16.gmra.mrb[0].mxu0 %v303
      %v3142 = vpop.f32.mrb[0].mxu0
      %v3143 = vadd.f32 0.0, %v3142
      %v3144 = vpop.f32.mrb[0].mxu0
      %v3145 = vadd.f32 0.0, %v3144
      %v3146 = vpop.f32.mrb[0].mxu0
      %v3147 = vadd.f32 0.0, %v3146
      %v3148 = vpop.f32.mrb[0].mxu0
      %v3149 = vadd.f32 0.0, %v3148
      %3150 = vmatprep.mubr.bf16.mxu0 0
      %3151 = vmatmul.mubr.bf16.gmra.mrb[0].mxu0 %v306
      %v3152 = vpop.f32.mrb[0].mxu0
      %v3153 = vadd.f32 0.0, %v3152
      %v3154 = vpop.f32.mrb[0].mxu0
      %v3155 = vadd.f32 0.0, %v3154
      %v3156 = vpop.f32.mrb[0].mxu0
      %v3157 = vadd.f32 0.0, %v3156
      %v3158 = vpop.f32.mrb[0].mxu0
      %v3159 = vadd.f32 0.0, %v3158
      %3160 = vdwg.mxu0
      %3161 = vmatprep.subr.bf16.mxu0 %v3063
      %3162 = vmatpush1.bf16.msra.mxu0 %v3062
      %3163 = vmatprep.subr.bf16.mxu0 %v3094
      %3164 = vmatpush1.bf16.msra.mxu0 %v3091
      %3165 = vmatprep.subr.bf16.mxu0 0
      %3166 = vmatpush1.bf16.msra.mxu0 0
      %3167 = vmatprep.subr.bf16.mxu0 0
      %3168 = vmatpush1.bf16.msra.mxu0 0
      %3169 = vmatprep.subr.bf16.mxu0 0
      %3170 = vmatpush1.bf16.msra.mxu0 0
      %3171 = vmatprep.subr.bf16.mxu0 0
      %3172 = vmatpush1.bf16.msra.mxu0 0
      %3173 = vmatprep.subr.bf16.mxu0 0
      %3174 = vmatpush1.bf16.msra.mxu0 0
      %3175 = vmatprep.subr.bf16.mxu0 0
      %3176 = vmatpush1.bf16.msra.mxu0 0
      %3177 = vmatprep.subr.bf16.mxu0 0
      %3178 = vmatpush1.bf16.msra.mxu0 0
      %3179 = vmatprep.subr.bf16.mxu0 0
      %3180 = vmatpush1.bf16.msra.mxu0 0
      %3181 = vmatprep.subr.bf16.mxu0 0
      %3182 = vmatpush1.bf16.msra.mxu0 0
      %3183 = vmatprep.subr.bf16.mxu0 0
      %3184 = vmatpush1.bf16.msra.mxu0 0
      %3185 = vmatprep.subr.bf16.mxu0 0
      %3186 = vmatpush1.bf16.msra.mxu0 0
      %3187 = vmatprep.subr.bf16.mxu0 0
      %3188 = vmatpush1.bf16.msra.mxu0 0
      %3189 = vmatprep.subr.bf16.mxu0 0
      %3190 = vmatpush1.bf16.msra.mxu0 0
      %3191 = vmatprep.subr.bf16.mxu0 0
      %3192 = vmatpush1.bf16.msra.mxu0 0
      %3193 = vmatprep.mubr.bf16.mxu0 0
      %3194 = vmatmul.mubr.bf16.gmra.mrb[0].mxu0 %v303
      %v3195 = vpop.f32.mrb[0].mxu0
      %v3196 = vadd.f32 0.0, %v3195
      %v3197 = vpop.f32.mrb[0].mxu0
      %v3198 = vadd.f32 0.0, %v3197
      %v3199 = vpop.f32.mrb[0].mxu0
      %v3200 = vadd.f32 0.0, %v3199
      %v3201 = vpop.f32.mrb[0].mxu0
      %v3202 = vadd.f32 0.0, %v3201
      %3203 = vmatprep.mubr.bf16.mxu0 0
      %3204 = vmatmul.mubr.bf16.gmra.mrb[0].mxu0 %v306
      %v3205 = vpop.f32.mrb[0].mxu0
      %v3206 = vadd.f32 0.0, %v3205
      %v3207 = vpop.f32.mrb[0].mxu0
      %v3208 = vadd.f32 0.0, %v3207
      %v3209 = vpop.f32.mrb[0].mxu0
      %v3210 = vadd.f32 0.0, %v3209
      %v3211 = vpop.f32.mrb[0].mxu0
      %v3212 = vadd.f32 0.0, %v3211
      %3213 = vdwg.mxu0
      %3214 = vmatprep.subr.bf16.mxu0 %v3065
      %3215 = vmatpush1.bf16.msra.mxu0 %v3064
      %3216 = vmatprep.subr.bf16.mxu0 %v3100
      %3217 = vmatpush1.bf16.msra.mxu0 %v3097
      %3218 = vmatprep.subr.bf16.mxu0 0
      %3219 = vmatpush1.bf16.msra.mxu0 0
      %3220 = vmatprep.subr.bf16.mxu0 0
      %3221 = vmatpush1.bf16.msra.mxu0 0
      %3222 = vmatprep.subr.bf16.mxu0 0
      %3223 = vmatpush1.bf16.msra.mxu0 0
      %3224 = vmatprep.subr.bf16.mxu0 0
      %3225 = vmatpush1.bf16.msra.mxu0 0
      %3226 = vmatprep.subr.bf16.mxu0 0
      %3227 = vmatpush1.bf16.msra.mxu0 0
      %3228 = vmatprep.subr.bf16.mxu0 0
      %3229 = vmatpush1.bf16.msra.mxu0 0
      %3230 = vmatprep.subr.bf16.mxu0 0
      %3231 = vmatpush1.bf16.msra.mxu0 0
      %3232 = vmatprep.subr.bf16.mxu0 0
      %3233 = vmatpush1.bf16.msra.mxu0 0
      %3234 = vmatprep.subr.bf16.mxu0 0
      %3235 = vmatpush1.bf16.msra.mxu0 0
      %3236 = vmatprep.subr.bf16.mxu0 0
      %3237 = vmatpush1.bf16.msra.mxu0 0
      %3238 = vmatprep.subr.bf16.mxu0 0
      %3239 = vmatpush1.bf16.msra.mxu0 0
      %3240 = vmatprep.subr.bf16.mxu0 0
      %3241 = vmatpush1.bf16.msra.mxu0 0
      %3242 = vmatprep.subr.bf16.mxu0 0
      %3243 = vmatpush1.bf16.msra.mxu0 0
      %3244 = vmatprep.subr.bf16.mxu0 0
      %3245 = vmatpush1.bf16.msra.mxu0 0
      %3246 = vmatprep.mubr.bf16.mxu0 0
      %3247 = vmatmul.mubr.bf16.gmra.mrb[0].mxu0 %v303
      %v3248 = vpop.f32.mrb[0].mxu0
      %v3249 = vadd.f32 0.0, %v3248
      %v3250 = vpop.f32.mrb[0].mxu0
      %v3251 = vadd.f32 0.0, %v3250
      %v3252 = vpop.f32.mrb[0].mxu0
      %v3253 = vadd.f32 0.0, %v3252
      %v3254 = vpop.f32.mrb[0].mxu0
      %v3255 = vadd.f32 0.0, %v3254
      %3256 = vmatprep.mubr.bf16.mxu0 0
      %3257 = vmatmul.mubr.bf16.gmra.mrb[0].mxu0 %v306
      %v3258 = vpop.f32.mrb[0].mxu0
      %v3259 = vadd.f32 0.0, %v3258
      %v3260 = vpop.f32.mrb[0].mxu0
      %v3261 = vadd.f32 0.0, %v3260
      %v3262 = vpop.f32.mrb[0].mxu0
      %v3263 = vadd.f32 0.0, %v3262
      %v3264 = vpop.f32.mrb[0].mxu0
      %v3265 = vadd.f32 0.0, %v3264
      %3266 = vdwg.mxu0
      %3267 = vmatprep.subr.bf16.mxu0 %v3067
      %3268 = vmatpush1.bf16.msra.mxu0 %v3066
      %3269 = vmatprep.subr.bf16.mxu0 %v3106
      %3270 = vmatpush1.bf16.msra.mxu0 %v3103
      %3271 = vmatprep.subr.bf16.mxu0 0
      %3272 = vmatpush1.bf16.msra.mxu0 0
      %3273 = vmatprep.subr.bf16.mxu0 0
      %3274 = vmatpush1.bf16.msra.mxu0 0
      %3275 = vmatprep.subr.bf16.mxu0 0
      %3276 = vmatpush1.bf16.msra.mxu0 0
      %3277 = vmatprep.subr.bf16.mxu0 0
      %3278 = vmatpush1.bf16.msra.mxu0 0
      %3279 = vmatprep.subr.bf16.mxu0 0
      %3280 = vmatpush1.bf16.msra.mxu0 0
      %3281 = vmatprep.subr.bf16.mxu0 0
      %3282 = vmatpush1.bf16.msra.mxu0 0
      %3283 = vmatprep.subr.bf16.mxu0 0
      %3284 = vmatpush1.bf16.msra.mxu0 0
      %3285 = vmatprep.subr.bf16.mxu0 0
      %3286 = vmatpush1.bf16.msra.mxu0 0
      %3287 = vmatprep.subr.bf16.mxu0 0
      %3288 = vmatpush1.bf16.msra.mxu0 0
      %3289 = vmatprep.subr.bf16.mxu0 0
      %3290 = vmatpush1.bf16.msra.mxu0 0
      %3291 = vmatprep.subr.bf16.mxu0 0
      %3292 = vmatpush1.bf16.msra.mxu0 0
      %3293 = vmatprep.subr.bf16.mxu0 0
      %3294 = vmatpush1.bf16.msra.mxu0 0
      %3295 = vmatprep.subr.bf16.mxu0 0
      %3296 = vmatpush1.bf16.msra.mxu0 0
      %3297 = vmatprep.subr.bf16.mxu0 0
      %3298 = vmatpush1.bf16.msra.mxu0 0
      %3299 = vmatprep.mubr.bf16.mxu0 0
      %3300 = vmatmul.mubr.bf16.gmra.mrb[0].mxu0 %v303
      %v3301 = vpop.f32.mrb[0].mxu0
      %v3302 = vadd.f32 0.0, %v3301
      %v3303 = vpop.f32.mrb[0].mxu0
      %v3304 = vadd.f32 0.0, %v3303
      %v3305 = vpop.f32.mrb[0].mxu0
      %v3306 = vadd.f32 0.0, %v3305
      %v3307 = vpop.f32.mrb[0].mxu0
      %v3308 = vadd.f32 0.0, %v3307
      %3309 = vmatprep.mubr.bf16.mxu0 0
      %3310 = vmatmul.mubr.bf16.gmra.mrb[0].mxu0 %v306
      %v3311 = vpop.f32.mrb[0].mxu0
      %v3312 = vadd.f32 0.0, %v3311
      %v3313 = vpop.f32.mrb[0].mxu0
      %v3314 = vadd.f32 0.0, %v3313
      %v3315 = vpop.f32.mrb[0].mxu0
      %v3316 = vadd.f32 0.0, %v3315
      %v3317 = vpop.f32.mrb[0].mxu0
      %v3318 = vadd.f32 0.0, %v3317
      %3319 = vdwg.mxu0
      %v3320 = vmax.f32 %v3143, 0.0
      %v3321 = vmax.f32 %v3145, 0.0
      %v3322 = vmax.f32 %v3196, 0.0
      %v3323 = vmax.f32 %v3198, 0.0
      %v3324 = vmax.f32 %v3249, 0.0
      %v3325 = vmax.f32 %v3251, 0.0
      %v3326 = vmax.f32 %v3302, 0.0
      %v3327 = vmax.f32 %v3304, 0.0
      %v3328 = vmax.f32 %v3147, 0.0
      %v3329 = vmax.f32 %v3149, 0.0
      %v3330 = vmax.f32 %v3200, 0.0
      %v3331 = vmax.f32 %v3202, 0.0
      %v3332 = vmax.f32 %v3253, 0.0
      %v3333 = vmax.f32 %v3255, 0.0
      %v3334 = vmax.f32 %v3306, 0.0
      %v3335 = vmax.f32 %v3308, 0.0
      %v3336 = vmax.f32 %v3153, 0.0
      %v3337 = vmax.f32 %v3155, 0.0
      %v3338 = vmax.f32 %v3206, 0.0
      %v3339 = vmax.f32 %v3208, 0.0
      %v3340 = vmax.f32 %v3259, 0.0
      %v3341 = vmax.f32 %v3261, 0.0
      %v3342 = vmax.f32 %v3312, 0.0
      %v3343 = vmax.f32 %v3314, 0.0
      %v3344 = vmax.f32 %v3157, 0.0
      %v3345 = vmax.f32 %v3159, 0.0
      %v3346 = vmax.f32 %v3210, 0.0
      %v3347 = vmax.f32 %v3212, 0.0
      %v3348 = vmax.f32 %v3263, 0.0
      %v3349 = vmax.f32 %v3265, 0.0
      %v3350 = vmax.f32 %v3316, 0.0
      %v3351 = vmax.f32 %v3318, 0.0
      %v3352 = vadd.f32 %v3320, %v3321
      %v3353 = vadd.f32 %v3352, %v3322
      %v3354 = vadd.f32 %v3353, %v3323
      %v3355 = vadd.f32 %v3354, %v3324
      %v3356 = vadd.f32 %v3355, %v3325
      %v3357 = vadd.f32 %v3356, %v3326
      %v3358 = vadd.f32 %v3357, %v3327
      %3359 = vadd.xlane.f32.xlu0 %v3358
      %v3360 = vpop.xlane.xlu0 %3359
      %v3361 = vadd.f32 %v3328, %v3329
      %v3362 = vadd.f32 %v3361, %v3330
      %v3363 = vadd.f32 %v3362, %v3331
      %v3364 = vadd.f32 %v3363, %v3332
      %v3365 = vadd.f32 %v3364, %v3333
      %v3366 = vadd.f32 %v3365, %v3334
      %v3367 = vadd.f32 %v3366, %v3335
      %3368 = vadd.xlane.f32.xlu0 %v3367
      %v3369 = vpop.xlane.xlu0 %3368
      %v3370 = vadd.f32 %v3336, %v3337
      %v3371 = vadd.f32 %v3370, %v3338
      %v3372 = vadd.f32 %v3371, %v3339
      %v3373 = vadd.f32 %v3372, %v3340
      %v3374 = vadd.f32 %v3373, %v3341
      %v3375 = vadd.f32 %v3374, %v3342
      %v3376 = vadd.f32 %v3375, %v3343
      %3377 = vadd.xlane.f32.xlu0 %v3376
      %v3378 = vpop.xlane.xlu0 %3377
      %v3379 = vadd.f32 %v3344, %v3345
      %v3380 = vadd.f32 %v3379, %v3346
      %v3381 = vadd.f32 %v3380, %v3347
      %v3382 = vadd.f32 %v3381, %v3348
      %v3383 = vadd.f32 %v3382, %v3349
      %v3384 = vadd.f32 %v3383, %v3350
      %v3385 = vadd.f32 %v3384, %v3351
      %3386 = vadd.xlane.f32.xlu0 %v3385
      %v3387 = vpop.xlane.xlu0 %3386
      %v3388 = vadd.f32 %v2992, %v3360
      %v3389 = vadd.f32 %v2993, %v3369
      %v3390 = vadd.f32 %v2994, %v3378
      %v3391 = vadd.f32 %v2995, %v3387
      %v3392 = vld [vmem:[%s192 + $0x100] sm:$0xff]
      %v3393 = vld [vmem:[%s192 + $0x108] sm:$0xff]
      %v3394 = vld [vmem:[%s192 + $0x110] sm:$0xff]
      %v3395 = vld [vmem:[%s192 + $0x118] sm:$0xff]
      %v3396 = vld [vmem:[%s192 + $0x3c0] sm:$0xff]
      %v3397 = vld [vmem:[%s192 + $0x3c8] sm:$0xff]
      %v3398 = vld [vmem:[%s192 + $0x3d0] sm:$0xff]
      %v3399 = vld [vmem:[%s192 + $0x3d8] sm:$0xff]
      %v3400 = vld [vmem:[%s192 + $0x680] sm:$0xff]
      %v3401 = vld [vmem:[%s192 + $0x688] sm:$0xff]
      %v3402 = vld [vmem:[%s192 + $0x690] sm:$0xff]
      %v3403 = vld [vmem:[%s192 + $0x698] sm:$0xff]
      %v3404 = vld [vmem:[%s192 + $0x940] sm:$0x33]
      %v3405 = vld [vmem:[%s192 + $0x948] sm:$0x33]
      %v3406 = vld [vmem:[%s192 + $0x950] sm:$0x33]
      %v3407 = vld [vmem:[%s192 + $0x958] sm:$0x33]
      %v3424 = vunpack.c.l.b16 %v3392
      %v3425 = vunpack.c.h.b16 %v3392
      %v3426 = vunpack.c.l.b16 %v3393
      %v3427 = vunpack.c.h.b16 %v3393
      %v3428 = vunpack.c.l.b16 %v3394
      %v3429 = vunpack.c.h.b16 %v3394
      %v3430 = vunpack.c.l.b16 %v3395
      %v3431 = vunpack.c.h.b16 %v3395
      %v3432 = vunpack.c.l.b16 %v3396
      %v3433 = vunpack.c.h.b16 %v3396
      %v3434 = vunpack.c.l.b16 %v3397
      %v3435 = vunpack.c.h.b16 %v3397
      %v3436 = vunpack.c.l.b16 %v3398
      %v3437 = vunpack.c.h.b16 %v3398
      %v3438 = vunpack.c.l.b16 %v3399
      %v3439 = vunpack.c.h.b16 %v3399
      %v3440 = vunpack.c.l.b16 %v3400
      %v3441 = vunpack.c.h.b16 %v3400
      %v3442 = vunpack.c.l.b16 %v3401
      %v3443 = vunpack.c.h.b16 %v3401
      %v3444 = vunpack.c.l.b16 %v3402
      %v3445 = vunpack.c.h.b16 %v3402
      %v3446 = vunpack.c.l.b16 %v3403
      %v3447 = vunpack.c.h.b16 %v3403
      %v3448 = vunpack.c.l.b16 %v3404
      %v3449 = vunpack.c.h.b16 %v3404
      %v3450 = vunpack.c.l.b16 %v3405
      %v3451 = vunpack.c.h.b16 %v3405
      %v3452 = vunpack.c.l.b16 %v3406
      %v3453 = vunpack.c.h.b16 %v3406
      %v3454 = vunpack.c.l.b16 %v3407
      %v3455 = vunpack.c.h.b16 %v3407
      %v3456 = vpack.c.b16 %v3432, %v3424
      %v3457 = vpack.c.b16 %v3433, %v3425
      %v3458 = vpack.c.b16 %v3434, %v3426
      %v3459 = vpack.c.b16 %v3435, %v3427
      %v3460 = vpack.c.b16 %v3436, %v3428
      %v3461 = vpack.c.b16 %v3437, %v3429
      %v3462 = vpack.c.b16 %v3438, %v3430
      %v3463 = vpack.c.b16 %v3439, %v3431
      %v3464 = vpack.c.b16 %v3448, %v3440
      %v3465 = vpack.c.b16 %v3449, %v3441
      %v3466 = vpack.c.b16 %v3450, %v3442
      %v3467 = vpack.c.b16 %v3451, %v3443
      %v3468 = vpack.c.b16 %v3452, %v3444
      %v3469 = vpack.c.b16 %v3453, %v3445
      %v3470 = vpack.c.b16 %v3454, %v3446
      %v3471 = vpack.c.b16 %v3455, %v3447
      %v3481 = vand.u32 %v3464, %v311
      %v3484 = vand.u32 %v3465, %v311
      %v3487 = vand.u32 %v3466, %v311
      %v3490 = vand.u32 %v3467, %v311
      %v3493 = vand.u32 %v3468, %v311
      %v3496 = vand.u32 %v3469, %v311
      %v3499 = vand.u32 %v3470, %v311
      %v3502 = vand.u32 %v3471, %v311
      %3504 = vmatprep.subr.bf16.mxu0 %v3457
      %3505 = vmatpush1.bf16.msra.mxu0 %v3456
      %3506 = vmatprep.subr.bf16.mxu0 %v3484
      %3507 = vmatpush1.bf16.msra.mxu0 %v3481
      %3508 = vmatprep.subr.bf16.mxu0 0
      %3509 = vmatpush1.bf16.msra.mxu0 0
      %3510 = vmatprep.subr.bf16.mxu0 0
      %3511 = vmatpush1.bf16.msra.mxu0 0
      %3512 = vmatprep.subr.bf16.mxu0 0
      %3513 = vmatpush1.bf16.msra.mxu0 0
      %3514 = vmatprep.subr.bf16.mxu0 0
      %3515 = vmatpush1.bf16.msra.mxu0 0
      %3516 = vmatprep.subr.bf16.mxu0 0
      %3517 = vmatpush1.bf16.msra.mxu0 0
      %3518 = vmatprep.subr.bf16.mxu0 0
      %3519 = vmatpush1.bf16.msra.mxu0 0
      %3520 = vmatprep.subr.bf16.mxu0 0
      %3521 = vmatpush1.bf16.msra.mxu0 0
      %3522 = vmatprep.subr.bf16.mxu0 0
      %3523 = vmatpush1.bf16.msra.mxu0 0
      %3524 = vmatprep.subr.bf16.mxu0 0
      %3525 = vmatpush1.bf16.msra.mxu0 0
      %3526 = vmatprep.subr.bf16.mxu0 0
      %3527 = vmatpush1.bf16.msra.mxu0 0
      %3528 = vmatprep.subr.bf16.mxu0 0
      %3529 = vmatpush1.bf16.msra.mxu0 0
      %3530 = vmatprep.subr.bf16.mxu0 0
      %3531 = vmatpush1.bf16.msra.mxu0 0
      %3532 = vmatprep.subr.bf16.mxu0 0
      %3533 = vmatpush1.bf16.msra.mxu0 0
      %3534 = vmatprep.subr.bf16.mxu0 0
      %3535 = vmatpush1.bf16.msra.mxu0 0
      %3536 = vmatprep.mubr.bf16.mxu0 0
      %3537 = vmatmul.mubr.bf16.gmra.mrb[0].mxu0 %v303
      %v3538 = vpop.f32.mrb[0].mxu0
      %v3539 = vadd.f32 0.0, %v3538
      %v3540 = vpop.f32.mrb[0].mxu0
      %v3541 = vadd.f32 0.0, %v3540
      %v3542 = vpop.f32.mrb[0].mxu0
      %v3543 = vadd.f32 0.0, %v3542
      %v3544 = vpop.f32.mrb[0].mxu0
      %v3545 = vadd.f32 0.0, %v3544
      %3546 = vmatprep.mubr.bf16.mxu0 0
      %3547 = vmatmul.mubr.bf16.gmra.mrb[0].mxu0 %v306
      %v3548 = vpop.f32.mrb[0].mxu0
      %v3549 = vadd.f32 0.0, %v3548
      %v3550 = vpop.f32.mrb[0].mxu0
      %v3551 = vadd.f32 0.0, %v3550
      %v3552 = vpop.f32.mrb[0].mxu0
      %v3553 = vadd.f32 0.0, %v3552
      %v3554 = vpop.f32.mrb[0].mxu0
      %v3555 = vadd.f32 0.0, %v3554
      %3556 = vdwg.mxu0
      %3557 = vmatprep.subr.bf16.mxu0 %v3459
      %3558 = vmatpush1.bf16.msra.mxu0 %v3458
      %3559 = vmatprep.subr.bf16.mxu0 %v3490
      %3560 = vmatpush1.bf16.msra.mxu0 %v3487
      %3561 = vmatprep.subr.bf16.mxu0 0
      %3562 = vmatpush1.bf16.msra.mxu0 0
      %3563 = vmatprep.subr.bf16.mxu0 0
      %3564 = vmatpush1.bf16.msra.mxu0 0
      %3565 = vmatprep.subr.bf16.mxu0 0
      %3566 = vmatpush1.bf16.msra.mxu0 0
      %3567 = vmatprep.subr.bf16.mxu0 0
      %3568 = vmatpush1.bf16.msra.mxu0 0
      %3569 = vmatprep.subr.bf16.mxu0 0
      %3570 = vmatpush1.bf16.msra.mxu0 0
      %3571 = vmatprep.subr.bf16.mxu0 0
      %3572 = vmatpush1.bf16.msra.mxu0 0
      %3573 = vmatprep.subr.bf16.mxu0 0
      %3574 = vmatpush1.bf16.msra.mxu0 0
      %3575 = vmatprep.subr.bf16.mxu0 0
      %3576 = vmatpush1.bf16.msra.mxu0 0
      %3577 = vmatprep.subr.bf16.mxu0 0
      %3578 = vmatpush1.bf16.msra.mxu0 0
      %3579 = vmatprep.subr.bf16.mxu0 0
      %3580 = vmatpush1.bf16.msra.mxu0 0
      %3581 = vmatprep.subr.bf16.mxu0 0
      %3582 = vmatpush1.bf16.msra.mxu0 0
      %3583 = vmatprep.subr.bf16.mxu0 0
      %3584 = vmatpush1.bf16.msra.mxu0 0
      %3585 = vmatprep.subr.bf16.mxu0 0
      %3586 = vmatpush1.bf16.msra.mxu0 0
      %3587 = vmatprep.subr.bf16.mxu0 0
      %3588 = vmatpush1.bf16.msra.mxu0 0
      %3589 = vmatprep.mubr.bf16.mxu0 0
      %3590 = vmatmul.mubr.bf16.gmra.mrb[0].mxu0 %v303
      %v3591 = vpop.f32.mrb[0].mxu0
      %v3592 = vadd.f32 0.0, %v3591
      %v3593 = vpop.f32.mrb[0].mxu0
      %v3594 = vadd.f32 0.0, %v3593
      %v3595 = vpop.f32.mrb[0].mxu0
      %v3596 = vadd.f32 0.0, %v3595
      %v3597 = vpop.f32.mrb[0].mxu0
      %v3598 = vadd.f32 0.0, %v3597
      %3599 = vmatprep.mubr.bf16.mxu0 0
      %3600 = vmatmul.mubr.bf16.gmra.mrb[0].mxu0 %v306
      %v3601 = vpop.f32.mrb[0].mxu0
      %v3602 = vadd.f32 0.0, %v3601
      %v3603 = vpop.f32.mrb[0].mxu0
      %v3604 = vadd.f32 0.0, %v3603
      %v3605 = vpop.f32.mrb[0].mxu0
      %v3606 = vadd.f32 0.0, %v3605
      %v3607 = vpop.f32.mrb[0].mxu0
      %v3608 = vadd.f32 0.0, %v3607
      %3609 = vdwg.mxu0
      %3610 = vmatprep.subr.bf16.mxu0 %v3461
      %3611 = vmatpush1.bf16.msra.mxu0 %v3460
      %3612 = vmatprep.subr.bf16.mxu0 %v3496
      %3613 = vmatpush1.bf16.msra.mxu0 %v3493
      %3614 = vmatprep.subr.bf16.mxu0 0
      %3615 = vmatpush1.bf16.msra.mxu0 0
      %3616 = vmatprep.subr.bf16.mxu0 0
      %3617 = vmatpush1.bf16.msra.mxu0 0
      %3618 = vmatprep.subr.bf16.mxu0 0
      %3619 = vmatpush1.bf16.msra.mxu0 0
      %3620 = vmatprep.subr.bf16.mxu0 0
      %3621 = vmatpush1.bf16.msra.mxu0 0
      %3622 = vmatprep.subr.bf16.mxu0 0
      %3623 = vmatpush1.bf16.msra.mxu0 0
      %3624 = vmatprep.subr.bf16.mxu0 0
      %3625 = vmatpush1.bf16.msra.mxu0 0
      %3626 = vmatprep.subr.bf16.mxu0 0
      %3627 = vmatpush1.bf16.msra.mxu0 0
      %3628 = vmatprep.subr.bf16.mxu0 0
      %3629 = vmatpush1.bf16.msra.mxu0 0
      %3630 = vmatprep.subr.bf16.mxu0 0
      %3631 = vmatpush1.bf16.msra.mxu0 0
      %3632 = vmatprep.subr.bf16.mxu0 0
      %3633 = vmatpush1.bf16.msra.mxu0 0
      %3634 = vmatprep.subr.bf16.mxu0 0
      %3635 = vmatpush1.bf16.msra.mxu0 0
      %3636 = vmatprep.subr.bf16.mxu0 0
      %3637 = vmatpush1.bf16.msra.mxu0 0
      %3638 = vmatprep.subr.bf16.mxu0 0
      %3639 = vmatpush1.bf16.msra.mxu0 0
      %3640 = vmatprep.subr.bf16.mxu0 0
      %3641 = vmatpush1.bf16.msra.mxu0 0
      %3642 = vmatprep.mubr.bf16.mxu0 0
      %3643 = vmatmul.mubr.bf16.gmra.mrb[0].mxu0 %v303
      %v3644 = vpop.f32.mrb[0].mxu0
      %v3645 = vadd.f32 0.0, %v3644
      %v3646 = vpop.f32.mrb[0].mxu0
      %v3647 = vadd.f32 0.0, %v3646
      %v3648 = vpop.f32.mrb[0].mxu0
      %v3649 = vadd.f32 0.0, %v3648
      %v3650 = vpop.f32.mrb[0].mxu0
      %v3651 = vadd.f32 0.0, %v3650
      %3652 = vmatprep.mubr.bf16.mxu0 0
      %3653 = vmatmul.mubr.bf16.gmra.mrb[0].mxu0 %v306
      %v3654 = vpop.f32.mrb[0].mxu0
      %v3655 = vadd.f32 0.0, %v3654
      %v3656 = vpop.f32.mrb[0].mxu0
      %v3657 = vadd.f32 0.0, %v3656
      %v3658 = vpop.f32.mrb[0].mxu0
      %v3659 = vadd.f32 0.0, %v3658
      %v3660 = vpop.f32.mrb[0].mxu0
      %v3661 = vadd.f32 0.0, %v3660
      %3662 = vdwg.mxu0
      %3663 = vmatprep.subr.bf16.mxu0 %v3463
      %3664 = vmatpush1.bf16.msra.mxu0 %v3462
      %3665 = vmatprep.subr.bf16.mxu0 %v3502
      %3666 = vmatpush1.bf16.msra.mxu0 %v3499
      %3667 = vmatprep.subr.bf16.mxu0 0
      %3668 = vmatpush1.bf16.msra.mxu0 0
      %3669 = vmatprep.subr.bf16.mxu0 0
      %3670 = vmatpush1.bf16.msra.mxu0 0
      %3671 = vmatprep.subr.bf16.mxu0 0
      %3672 = vmatpush1.bf16.msra.mxu0 0
      %3673 = vmatprep.subr.bf16.mxu0 0
      %3674 = vmatpush1.bf16.msra.mxu0 0
      %3675 = vmatprep.subr.bf16.mxu0 0
      %3676 = vmatpush1.bf16.msra.mxu0 0
      %3677 = vmatprep.subr.bf16.mxu0 0
      %3678 = vmatpush1.bf16.msra.mxu0 0
      %3679 = vmatprep.subr.bf16.mxu0 0
      %3680 = vmatpush1.bf16.msra.mxu0 0
      %3681 = vmatprep.subr.bf16.mxu0 0
      %3682 = vmatpush1.bf16.msra.mxu0 0
      %3683 = vmatprep.subr.bf16.mxu0 0
      %3684 = vmatpush1.bf16.msra.mxu0 0
      %3685 = vmatprep.subr.bf16.mxu0 0
      %3686 = vmatpush1.bf16.msra.mxu0 0
      %3687 = vmatprep.subr.bf16.mxu0 0
      %3688 = vmatpush1.bf16.msra.mxu0 0
      %3689 = vmatprep.subr.bf16.mxu0 0
      %3690 = vmatpush1.bf16.msra.mxu0 0
      %3691 = vmatprep.subr.bf16.mxu0 0
      %3692 = vmatpush1.bf16.msra.mxu0 0
      %3693 = vmatprep.subr.bf16.mxu0 0
      %3694 = vmatpush1.bf16.msra.mxu0 0
      %3695 = vmatprep.mubr.bf16.mxu0 0
      %3696 = vmatmul.mubr.bf16.gmra.mrb[0].mxu0 %v303
      %v3697 = vpop.f32.mrb[0].mxu0
      %v3698 = vadd.f32 0.0, %v3697
      %v3699 = vpop.f32.mrb[0].mxu0
      %v3700 = vadd.f32 0.0, %v3699
      %v3701 = vpop.f32.mrb[0].mxu0
      %v3702 = vadd.f32 0.0, %v3701
      %v3703 = vpop.f32.mrb[0].mxu0
      %v3704 = vadd.f32 0.0, %v3703
      %3705 = vmatprep.mubr.bf16.mxu0 0
      %3706 = vmatmul.mubr.bf16.gmra.mrb[0].mxu0 %v306
      %v3707 = vpop.f32.mrb[0].mxu0
      %v3708 = vadd.f32 0.0, %v3707
      %v3709 = vpop.f32.mrb[0].mxu0
      %v3710 = vadd.f32 0.0, %v3709
      %v3711 = vpop.f32.mrb[0].mxu0
      %v3712 = vadd.f32 0.0, %v3711
      %v3713 = vpop.f32.mrb[0].mxu0
      %v3714 = vadd.f32 0.0, %v3713
      %3715 = vdwg.mxu0
      %v3716 = vmax.f32 %v3539, 0.0
      %v3717 = vmax.f32 %v3541, 0.0
      %v3718 = vmax.f32 %v3592, 0.0
      %v3719 = vmax.f32 %v3594, 0.0
      %v3720 = vmax.f32 %v3645, 0.0
      %v3721 = vmax.f32 %v3647, 0.0
      %v3722 = vmax.f32 %v3698, 0.0
      %v3723 = vmax.f32 %v3700, 0.0
      %v3724 = vmax.f32 %v3543, 0.0
      %v3725 = vmax.f32 %v3545, 0.0
      %v3726 = vmax.f32 %v3596, 0.0
      %v3727 = vmax.f32 %v3598, 0.0
      %v3728 = vmax.f32 %v3649, 0.0
      %v3729 = vmax.f32 %v3651, 0.0
      %v3730 = vmax.f32 %v3702, 0.0
      %v3731 = vmax.f32 %v3704, 0.0
      %v3732 = vmax.f32 %v3549, 0.0
      %v3733 = vmax.f32 %v3551, 0.0
      %v3734 = vmax.f32 %v3602, 0.0
      %v3735 = vmax.f32 %v3604, 0.0
      %v3736 = vmax.f32 %v3655, 0.0
      %v3737 = vmax.f32 %v3657, 0.0
      %v3738 = vmax.f32 %v3708, 0.0
      %v3739 = vmax.f32 %v3710, 0.0
      %v3740 = vmax.f32 %v3553, 0.0
      %v3741 = vmax.f32 %v3555, 0.0
      %v3742 = vmax.f32 %v3606, 0.0
      %v3743 = vmax.f32 %v3608, 0.0
      %v3744 = vmax.f32 %v3659, 0.0
      %v3745 = vmax.f32 %v3661, 0.0
      %v3746 = vmax.f32 %v3712, 0.0
      %v3747 = vmax.f32 %v3714, 0.0
      %v3748 = vadd.f32 %v3716, %v3717
      %v3749 = vadd.f32 %v3748, %v3718
      %v3750 = vadd.f32 %v3749, %v3719
      %v3751 = vadd.f32 %v3750, %v3720
      %v3752 = vadd.f32 %v3751, %v3721
      %v3753 = vadd.f32 %v3752, %v3722
      %v3754 = vadd.f32 %v3753, %v3723
      %3755 = vadd.xlane.f32.xlu0 %v3754
      %v3756 = vpop.xlane.xlu0 %3755
      %v3757 = vadd.f32 %v3724, %v3725
      %v3758 = vadd.f32 %v3757, %v3726
      %v3759 = vadd.f32 %v3758, %v3727
      %v3760 = vadd.f32 %v3759, %v3728
      %v3761 = vadd.f32 %v3760, %v3729
      %v3762 = vadd.f32 %v3761, %v3730
      %v3763 = vadd.f32 %v3762, %v3731
      %3764 = vadd.xlane.f32.xlu0 %v3763
      %v3765 = vpop.xlane.xlu0 %3764
      %v3766 = vadd.f32 %v3732, %v3733
      %v3767 = vadd.f32 %v3766, %v3734
      %v3768 = vadd.f32 %v3767, %v3735
      %v3769 = vadd.f32 %v3768, %v3736
      %v3770 = vadd.f32 %v3769, %v3737
      %v3771 = vadd.f32 %v3770, %v3738
      %v3772 = vadd.f32 %v3771, %v3739
      %3773 = vadd.xlane.f32.xlu0 %v3772
      %v3774 = vpop.xlane.xlu0 %3773
      %v3775 = vadd.f32 %v3740, %v3741
      %v3776 = vadd.f32 %v3775, %v3742
      %v3777 = vadd.f32 %v3776, %v3743
      %v3778 = vadd.f32 %v3777, %v3744
      %v3779 = vadd.f32 %v3778, %v3745
      %v3780 = vadd.f32 %v3779, %v3746
      %v3781 = vadd.f32 %v3780, %v3747
      %3782 = vadd.xlane.f32.xlu0 %v3781
      %v3783 = vpop.xlane.xlu0 %3782
      %v3784 = vadd.f32 %v3388, %v3756
      %v3785 = vadd.f32 %v3389, %v3765
      %v3786 = vadd.f32 %v3390, %v3774
      %v3787 = vadd.f32 %v3391, %v3783
      %v3788 = vld [vmem:[%s192 + $0x120] sm:$0xff]
      %v3789 = vld [vmem:[%s192 + $0x128] sm:$0xff]
      %v3790 = vld [vmem:[%s192 + $0x130] sm:$0xff]
      %v3791 = vld [vmem:[%s192 + $0x138] sm:$0xff]
      %v3792 = vld [vmem:[%s192 + $0x3e0] sm:$0xff]
      %v3793 = vld [vmem:[%s192 + $0x3e8] sm:$0xff]
      %v3794 = vld [vmem:[%s192 + $0x3f0] sm:$0xff]
      %v3795 = vld [vmem:[%s192 + $0x3f8] sm:$0xff]
      %v3796 = vld [vmem:[%s192 + $0x6a0] sm:$0xff]
      %v3797 = vld [vmem:[%s192 + $0x6a8] sm:$0xff]
      %v3798 = vld [vmem:[%s192 + $0x6b0] sm:$0xff]
      %v3799 = vld [vmem:[%s192 + $0x6b8] sm:$0xff]
      %v3800 = vld [vmem:[%s192 + $0x960] sm:$0x33]
      %v3801 = vld [vmem:[%s192 + $0x968] sm:$0x33]
      %v3802 = vld [vmem:[%s192 + $0x970] sm:$0x33]
      %v3803 = vld [vmem:[%s192 + $0x978] sm:$0x33]
      %v3820 = vunpack.c.l.b16 %v3788
      %v3821 = vunpack.c.h.b16 %v3788
      %v3822 = vunpack.c.l.b16 %v3789
      %v3823 = vunpack.c.h.b16 %v3789
      %v3824 = vunpack.c.l.b16 %v3790
      %v3825 = vunpack.c.h.b16 %v3790
      %v3826 = vunpack.c.l.b16 %v3791
      %v3827 = vunpack.c.h.b16 %v3791
      %v3828 = vunpack.c.l.b16 %v3792
      %v3829 = vunpack.c.h.b16 %v3792
      %v3830 = vunpack.c.l.b16 %v3793
      %v3831 = vunpack.c.h.b16 %v3793
      %v3832 = vunpack.c.l.b16 %v3794
      %v3833 = vunpack.c.h.b16 %v3794
      %v3834 = vunpack.c.l.b16 %v3795
      %v3835 = vunpack.c.h.b16 %v3795
      %v3836 = vunpack.c.l.b16 %v3796
      %v3837 = vunpack.c.h.b16 %v3796
      %v3838 = vunpack.c.l.b16 %v3797
      %v3839 = vunpack.c.h.b16 %v3797
      %v3840 = vunpack.c.l.b16 %v3798
      %v3841 = vunpack.c.h.b16 %v3798
      %v3842 = vunpack.c.l.b16 %v3799
      %v3843 = vunpack.c.h.b16 %v3799
      %v3844 = vunpack.c.l.b16 %v3800
      %v3845 = vunpack.c.h.b16 %v3800
      %v3846 = vunpack.c.l.b16 %v3801
      %v3847 = vunpack.c.h.b16 %v3801
      %v3848 = vunpack.c.l.b16 %v3802
      %v3849 = vunpack.c.h.b16 %v3802
      %v3850 = vunpack.c.l.b16 %v3803
      %v3851 = vunpack.c.h.b16 %v3803
      %v3852 = vpack.c.b16 %v3828, %v3820
      %v3853 = vpack.c.b16 %v3829, %v3821
      %v3854 = vpack.c.b16 %v3830, %v3822
      %v3855 = vpack.c.b16 %v3831, %v3823
      %v3856 = vpack.c.b16 %v3832, %v3824
      %v3857 = vpack.c.b16 %v3833, %v3825
      %v3858 = vpack.c.b16 %v3834, %v3826
      %v3859 = vpack.c.b16 %v3835, %v3827
      %v3860 = vpack.c.b16 %v3844, %v3836
      %v3861 = vpack.c.b16 %v3845, %v3837
      %v3862 = vpack.c.b16 %v3846, %v3838
      %v3863 = vpack.c.b16 %v3847, %v3839
      %v3864 = vpack.c.b16 %v3848, %v3840
      %v3865 = vpack.c.b16 %v3849, %v3841
      %v3866 = vpack.c.b16 %v3850, %v3842
      %v3867 = vpack.c.b16 %v3851, %v3843
      %v3877 = vand.u32 %v3860, %v311
      %v3880 = vand.u32 %v3861, %v311
      %v3883 = vand.u32 %v3862, %v311
      %v3886 = vand.u32 %v3863, %v311
      %v3889 = vand.u32 %v3864, %v311
      %v3892 = vand.u32 %v3865, %v311
      %v3895 = vand.u32 %v3866, %v311
      %v3898 = vand.u32 %v3867, %v311
      %3900 = vmatprep.subr.bf16.mxu0 %v3853
      %3901 = vmatpush1.bf16.msra.mxu0 %v3852
      %3902 = vmatprep.subr.bf16.mxu0 %v3880
      %3903 = vmatpush1.bf16.msra.mxu0 %v3877
      %3904 = vmatprep.subr.bf16.mxu0 0
      %3905 = vmatpush1.bf16.msra.mxu0 0
      %3906 = vmatprep.subr.bf16.mxu0 0
      %3907 = vmatpush1.bf16.msra.mxu0 0
      %3908 = vmatprep.subr.bf16.mxu0 0
      %3909 = vmatpush1.bf16.msra.mxu0 0
      %3910 = vmatprep.subr.bf16.mxu0 0
      %3911 = vmatpush1.bf16.msra.mxu0 0
      %3912 = vmatprep.subr.bf16.mxu0 0
      %3913 = vmatpush1.bf16.msra.mxu0 0
      %3914 = vmatprep.subr.bf16.mxu0 0
      %3915 = vmatpush1.bf16.msra.mxu0 0
      %3916 = vmatprep.subr.bf16.mxu0 0
      %3917 = vmatpush1.bf16.msra.mxu0 0
      %3918 = vmatprep.subr.bf16.mxu0 0
      %3919 = vmatpush1.bf16.msra.mxu0 0
      %3920 = vmatprep.subr.bf16.mxu0 0
      %3921 = vmatpush1.bf16.msra.mxu0 0
      %3922 = vmatprep.subr.bf16.mxu0 0
      %3923 = vmatpush1.bf16.msra.mxu0 0
      %3924 = vmatprep.subr.bf16.mxu0 0
      %3925 = vmatpush1.bf16.msra.mxu0 0
      %3926 = vmatprep.subr.bf16.mxu0 0
      %3927 = vmatpush1.bf16.msra.mxu0 0
      %3928 = vmatprep.subr.bf16.mxu0 0
      %3929 = vmatpush1.bf16.msra.mxu0 0
      %3930 = vmatprep.subr.bf16.mxu0 0
      %3931 = vmatpush1.bf16.msra.mxu0 0
      %3932 = vmatprep.mubr.bf16.mxu0 0
      %3933 = vmatmul.mubr.bf16.gmra.mrb[0].mxu0 %v303
      %v3934 = vpop.f32.mrb[0].mxu0
      %v3935 = vadd.f32 0.0, %v3934
      %v3936 = vpop.f32.mrb[0].mxu0
      %v3937 = vadd.f32 0.0, %v3936
      %v3938 = vpop.f32.mrb[0].mxu0
      %v3939 = vadd.f32 0.0, %v3938
      %v3940 = vpop.f32.mrb[0].mxu0
      %v3941 = vadd.f32 0.0, %v3940
      %3942 = vmatprep.mubr.bf16.mxu0 0
      %3943 = vmatmul.mubr.bf16.gmra.mrb[0].mxu0 %v306
      %v3944 = vpop.f32.mrb[0].mxu0
      %v3945 = vadd.f32 0.0, %v3944
      %v3946 = vpop.f32.mrb[0].mxu0
      %v3947 = vadd.f32 0.0, %v3946
      %v3948 = vpop.f32.mrb[0].mxu0
      %v3949 = vadd.f32 0.0, %v3948
      %v3950 = vpop.f32.mrb[0].mxu0
      %v3951 = vadd.f32 0.0, %v3950
      %3952 = vdwg.mxu0
      %3953 = vmatprep.subr.bf16.mxu0 %v3855
      %3954 = vmatpush1.bf16.msra.mxu0 %v3854
      %3955 = vmatprep.subr.bf16.mxu0 %v3886
      %3956 = vmatpush1.bf16.msra.mxu0 %v3883
      %3957 = vmatprep.subr.bf16.mxu0 0
      %3958 = vmatpush1.bf16.msra.mxu0 0
      %3959 = vmatprep.subr.bf16.mxu0 0
      %3960 = vmatpush1.bf16.msra.mxu0 0
      %3961 = vmatprep.subr.bf16.mxu0 0
      %3962 = vmatpush1.bf16.msra.mxu0 0
      %3963 = vmatprep.subr.bf16.mxu0 0
      %3964 = vmatpush1.bf16.msra.mxu0 0
      %3965 = vmatprep.subr.bf16.mxu0 0
      %3966 = vmatpush1.bf16.msra.mxu0 0
      %3967 = vmatprep.subr.bf16.mxu0 0
      %3968 = vmatpush1.bf16.msra.mxu0 0
      %3969 = vmatprep.subr.bf16.mxu0 0
      %3970 = vmatpush1.bf16.msra.mxu0 0
      %3971 = vmatprep.subr.bf16.mxu0 0
      %3972 = vmatpush1.bf16.msra.mxu0 0
      %3973 = vmatprep.subr.bf16.mxu0 0
      %3974 = vmatpush1.bf16.msra.mxu0 0
      %3975 = vmatprep.subr.bf16.mxu0 0
      %3976 = vmatpush1.bf16.msra.mxu0 0
      %3977 = vmatprep.subr.bf16.mxu0 0
      %3978 = vmatpush1.bf16.msra.mxu0 0
      %3979 = vmatprep.subr.bf16.mxu0 0
      %3980 = vmatpush1.bf16.msra.mxu0 0
      %3981 = vmatprep.subr.bf16.mxu0 0
      %3982 = vmatpush1.bf16.msra.mxu0 0
      %3983 = vmatprep.subr.bf16.mxu0 0
      %3984 = vmatpush1.bf16.msra.mxu0 0
      %3985 = vmatprep.mubr.bf16.mxu0 0
      %3986 = vmatmul.mubr.bf16.gmra.mrb[0].mxu0 %v303
      %v3987 = vpop.f32.mrb[0].mxu0
      %v3988 = vadd.f32 0.0, %v3987
      %v3989 = vpop.f32.mrb[0].mxu0
      %v3990 = vadd.f32 0.0, %v3989
      %v3991 = vpop.f32.mrb[0].mxu0
      %v3992 = vadd.f32 0.0, %v3991
      %v3993 = vpop.f32.mrb[0].mxu0
      %v3994 = vadd.f32 0.0, %v3993
      %3995 = vmatprep.mubr.bf16.mxu0 0
      %3996 = vmatmul.mubr.bf16.gmra.mrb[0].mxu0 %v306
      %v3997 = vpop.f32.mrb[0].mxu0
      %v3998 = vadd.f32 0.0, %v3997
      %v3999 = vpop.f32.mrb[0].mxu0
      %v4000 = vadd.f32 0.0, %v3999
      %v4001 = vpop.f32.mrb[0].mxu0
      %v4002 = vadd.f32 0.0, %v4001
      %v4003 = vpop.f32.mrb[0].mxu0
      %v4004 = vadd.f32 0.0, %v4003
      %4005 = vdwg.mxu0
      %4006 = vmatprep.subr.bf16.mxu0 %v3857
      %4007 = vmatpush1.bf16.msra.mxu0 %v3856
      %4008 = vmatprep.subr.bf16.mxu0 %v3892
      %4009 = vmatpush1.bf16.msra.mxu0 %v3889
      %4010 = vmatprep.subr.bf16.mxu0 0
      %4011 = vmatpush1.bf16.msra.mxu0 0
      %4012 = vmatprep.subr.bf16.mxu0 0
      %4013 = vmatpush1.bf16.msra.mxu0 0
      %4014 = vmatprep.subr.bf16.mxu0 0
      %4015 = vmatpush1.bf16.msra.mxu0 0
      %4016 = vmatprep.subr.bf16.mxu0 0
      %4017 = vmatpush1.bf16.msra.mxu0 0
      %4018 = vmatprep.subr.bf16.mxu0 0
      %4019 = vmatpush1.bf16.msra.mxu0 0
      %4020 = vmatprep.subr.bf16.mxu0 0
      %4021 = vmatpush1.bf16.msra.mxu0 0
      %4022 = vmatprep.subr.bf16.mxu0 0
      %4023 = vmatpush1.bf16.msra.mxu0 0
      %4024 = vmatprep.subr.bf16.mxu0 0
      %4025 = vmatpush1.bf16.msra.mxu0 0
      %4026 = vmatprep.subr.bf16.mxu0 0
      %4027 = vmatpush1.bf16.msra.mxu0 0
      %4028 = vmatprep.subr.bf16.mxu0 0
      %4029 = vmatpush1.bf16.msra.mxu0 0
      %4030 = vmatprep.subr.bf16.mxu0 0
      %4031 = vmatpush1.bf16.msra.mxu0 0
      %4032 = vmatprep.subr.bf16.mxu0 0
      %4033 = vmatpush1.bf16.msra.mxu0 0
      %4034 = vmatprep.subr.bf16.mxu0 0
      %4035 = vmatpush1.bf16.msra.mxu0 0
      %4036 = vmatprep.subr.bf16.mxu0 0
      %4037 = vmatpush1.bf16.msra.mxu0 0
      %4038 = vmatprep.mubr.bf16.mxu0 0
      %4039 = vmatmul.mubr.bf16.gmra.mrb[0].mxu0 %v303
      %v4040 = vpop.f32.mrb[0].mxu0
      %v4041 = vadd.f32 0.0, %v4040
      %v4042 = vpop.f32.mrb[0].mxu0
      %v4043 = vadd.f32 0.0, %v4042
      %v4044 = vpop.f32.mrb[0].mxu0
      %v4045 = vadd.f32 0.0, %v4044
      %v4046 = vpop.f32.mrb[0].mxu0
      %v4047 = vadd.f32 0.0, %v4046
      %4048 = vmatprep.mubr.bf16.mxu0 0
      %4049 = vmatmul.mubr.bf16.gmra.mrb[0].mxu0 %v306
      %v4050 = vpop.f32.mrb[0].mxu0
      %v4051 = vadd.f32 0.0, %v4050
      %v4052 = vpop.f32.mrb[0].mxu0
      %v4053 = vadd.f32 0.0, %v4052
      %v4054 = vpop.f32.mrb[0].mxu0
      %v4055 = vadd.f32 0.0, %v4054
      %v4056 = vpop.f32.mrb[0].mxu0
      %v4057 = vadd.f32 0.0, %v4056
      %4058 = vdwg.mxu0
      %4059 = vmatprep.subr.bf16.mxu0 %v3859
      %4060 = vmatpush1.bf16.msra.mxu0 %v3858
      %4061 = vmatprep.subr.bf16.mxu0 %v3898
      %4062 = vmatpush1.bf16.msra.mxu0 %v3895
      %4063 = vmatprep.subr.bf16.mxu0 0
      %4064 = vmatpush1.bf16.msra.mxu0 0
      %4065 = vmatprep.subr.bf16.mxu0 0
      %4066 = vmatpush1.bf16.msra.mxu0 0
      %4067 = vmatprep.subr.bf16.mxu0 0
      %4068 = vmatpush1.bf16.msra.mxu0 0
      %4069 = vmatprep.subr.bf16.mxu0 0
      %4070 = vmatpush1.bf16.msra.mxu0 0
      %4071 = vmatprep.subr.bf16.mxu0 0
      %4072 = vmatpush1.bf16.msra.mxu0 0
      %4073 = vmatprep.subr.bf16.mxu0 0
      %4074 = vmatpush1.bf16.msra.mxu0 0
      %4075 = vmatprep.subr.bf16.mxu0 0
      %4076 = vmatpush1.bf16.msra.mxu0 0
      %4077 = vmatprep.subr.bf16.mxu0 0
      %4078 = vmatpush1.bf16.msra.mxu0 0
      %4079 = vmatprep.subr.bf16.mxu0 0
      %4080 = vmatpush1.bf16.msra.mxu0 0
      %4081 = vmatprep.subr.bf16.mxu0 0
      %4082 = vmatpush1.bf16.msra.mxu0 0
      %4083 = vmatprep.subr.bf16.mxu0 0
      %4084 = vmatpush1.bf16.msra.mxu0 0
      %4085 = vmatprep.subr.bf16.mxu0 0
      %4086 = vmatpush1.bf16.msra.mxu0 0
      %4087 = vmatprep.subr.bf16.mxu0 0
      %4088 = vmatpush1.bf16.msra.mxu0 0
      %4089 = vmatprep.subr.bf16.mxu0 0
      %4090 = vmatpush1.bf16.msra.mxu0 0
      %4091 = vmatprep.mubr.bf16.mxu0 0
      %4092 = vmatmul.mubr.bf16.gmra.mrb[0].mxu0 %v303
      %v4093 = vpop.f32.mrb[0].mxu0
      %v4094 = vadd.f32 0.0, %v4093
      %v4095 = vpop.f32.mrb[0].mxu0
      %v4096 = vadd.f32 0.0, %v4095
      %v4097 = vpop.f32.mrb[0].mxu0
      %v4098 = vadd.f32 0.0, %v4097
      %v4099 = vpop.f32.mrb[0].mxu0
      %v4100 = vadd.f32 0.0, %v4099
      %4101 = vmatprep.mubr.bf16.mxu0 0
      %4102 = vmatmul.mubr.bf16.gmra.mrb[0].mxu0 %v306
      %v4103 = vpop.f32.mrb[0].mxu0
      %v4104 = vadd.f32 0.0, %v4103
      %v4105 = vpop.f32.mrb[0].mxu0
      %v4106 = vadd.f32 0.0, %v4105
      %v4107 = vpop.f32.mrb[0].mxu0
      %v4108 = vadd.f32 0.0, %v4107
      %v4109 = vpop.f32.mrb[0].mxu0
      %v4110 = vadd.f32 0.0, %v4109
      %4111 = vdwg.mxu0
      %v4112 = vmax.f32 %v3935, 0.0
      %v4113 = vmax.f32 %v3937, 0.0
      %v4114 = vmax.f32 %v3988, 0.0
      %v4115 = vmax.f32 %v3990, 0.0
      %v4116 = vmax.f32 %v4041, 0.0
      %v4117 = vmax.f32 %v4043, 0.0
      %v4118 = vmax.f32 %v4094, 0.0
      %v4119 = vmax.f32 %v4096, 0.0
      %v4120 = vmax.f32 %v3939, 0.0
      %v4121 = vmax.f32 %v3941, 0.0
      %v4122 = vmax.f32 %v3992, 0.0
      %v4123 = vmax.f32 %v3994, 0.0
      %v4124 = vmax.f32 %v4045, 0.0
      %v4125 = vmax.f32 %v4047, 0.0
      %v4126 = vmax.f32 %v4098, 0.0
      %v4127 = vmax.f32 %v4100, 0.0
      %v4128 = vmax.f32 %v3945, 0.0
      %v4129 = vmax.f32 %v3947, 0.0
      %v4130 = vmax.f32 %v3998, 0.0
      %v4131 = vmax.f32 %v4000, 0.0
      %v4132 = vmax.f32 %v4051, 0.0
      %v4133 = vmax.f32 %v4053, 0.0
      %v4134 = vmax.f32 %v4104, 0.0
      %v4135 = vmax.f32 %v4106, 0.0
      %v4136 = vmax.f32 %v3949, 0.0
      %v4137 = vmax.f32 %v3951, 0.0
      %v4138 = vmax.f32 %v4002, 0.0
      %v4139 = vmax.f32 %v4004, 0.0
      %v4140 = vmax.f32 %v4055, 0.0
      %v4141 = vmax.f32 %v4057, 0.0
      %v4142 = vmax.f32 %v4108, 0.0
      %v4143 = vmax.f32 %v4110, 0.0
      %v4144 = vadd.f32 %v4112, %v4113
      %v4145 = vadd.f32 %v4144, %v4114
      %v4146 = vadd.f32 %v4145, %v4115
      %v4147 = vadd.f32 %v4146, %v4116
      %v4148 = vadd.f32 %v4147, %v4117
      %v4149 = vadd.f32 %v4148, %v4118
      %v4150 = vadd.f32 %v4149, %v4119
      %4151 = vadd.xlane.f32.xlu0 %v4150
      %v4152 = vpop.xlane.xlu0 %4151
      %v4153 = vadd.f32 %v4120, %v4121
      %v4154 = vadd.f32 %v4153, %v4122
      %v4155 = vadd.f32 %v4154, %v4123
      %v4156 = vadd.f32 %v4155, %v4124
      %v4157 = vadd.f32 %v4156, %v4125
      %v4158 = vadd.f32 %v4157, %v4126
      %v4159 = vadd.f32 %v4158, %v4127
      %4160 = vadd.xlane.f32.xlu0 %v4159
      %v4161 = vpop.xlane.xlu0 %4160
      %v4162 = vadd.f32 %v4128, %v4129
      %v4163 = vadd.f32 %v4162, %v4130
      %v4164 = vadd.f32 %v4163, %v4131
      %v4165 = vadd.f32 %v4164, %v4132
      %v4166 = vadd.f32 %v4165, %v4133
      %v4167 = vadd.f32 %v4166, %v4134
      %v4168 = vadd.f32 %v4167, %v4135
      %4169 = vadd.xlane.f32.xlu0 %v4168
      %v4170 = vpop.xlane.xlu0 %4169
      %v4171 = vadd.f32 %v4136, %v4137
      %v4172 = vadd.f32 %v4171, %v4138
      %v4173 = vadd.f32 %v4172, %v4139
      %v4174 = vadd.f32 %v4173, %v4140
      %v4175 = vadd.f32 %v4174, %v4141
      %v4176 = vadd.f32 %v4175, %v4142
      %v4177 = vadd.f32 %v4176, %v4143
      %4178 = vadd.xlane.f32.xlu0 %v4177
      %v4179 = vpop.xlane.xlu0 %4178
      %v4180 = vadd.f32 %v3784, %v4152
      %v4181 = vadd.f32 %v3785, %v4161
      %v4182 = vadd.f32 %v3786, %v4170
      %v4183 = vadd.f32 %v3787, %v4179
      %v4184 = vld [vmem:[%s192 + $0x140] sm:$0xff]
      %v4185 = vld [vmem:[%s192 + $0x148] sm:$0xff]
      %v4186 = vld [vmem:[%s192 + $0x150] sm:$0xff]
      %v4187 = vld [vmem:[%s192 + $0x158] sm:$0xff]
      %v4188 = vld [vmem:[%s192 + $0x400] sm:$0xff]
      %v4189 = vld [vmem:[%s192 + $0x408] sm:$0xff]
      %v4190 = vld [vmem:[%s192 + $0x410] sm:$0xff]
      %v4191 = vld [vmem:[%s192 + $0x418] sm:$0xff]
      %v4192 = vld [vmem:[%s192 + $0x6c0] sm:$0xff]
      %v4193 = vld [vmem:[%s192 + $0x6c8] sm:$0xff]
      %v4194 = vld [vmem:[%s192 + $0x6d0] sm:$0xff]
      %v4195 = vld [vmem:[%s192 + $0x6d8] sm:$0xff]
      %v4196 = vld [vmem:[%s192 + $0x980] sm:$0x33]
      %v4197 = vld [vmem:[%s192 + $0x988] sm:$0x33]
      %v4198 = vld [vmem:[%s192 + $0x990] sm:$0x33]
      %v4199 = vld [vmem:[%s192 + $0x998] sm:$0x33]
      %v4216 = vunpack.c.l.b16 %v4184
      %v4217 = vunpack.c.h.b16 %v4184
      %v4218 = vunpack.c.l.b16 %v4185
      %v4219 = vunpack.c.h.b16 %v4185
      %v4220 = vunpack.c.l.b16 %v4186
      %v4221 = vunpack.c.h.b16 %v4186
      %v4222 = vunpack.c.l.b16 %v4187
      %v4223 = vunpack.c.h.b16 %v4187
      %v4224 = vunpack.c.l.b16 %v4188
      %v4225 = vunpack.c.h.b16 %v4188
      %v4226 = vunpack.c.l.b16 %v4189
      %v4227 = vunpack.c.h.b16 %v4189
      %v4228 = vunpack.c.l.b16 %v4190
      %v4229 = vunpack.c.h.b16 %v4190
      %v4230 = vunpack.c.l.b16 %v4191
      %v4231 = vunpack.c.h.b16 %v4191
      %v4232 = vunpack.c.l.b16 %v4192
      %v4233 = vunpack.c.h.b16 %v4192
      %v4234 = vunpack.c.l.b16 %v4193
      %v4235 = vunpack.c.h.b16 %v4193
      %v4236 = vunpack.c.l.b16 %v4194
      %v4237 = vunpack.c.h.b16 %v4194
      %v4238 = vunpack.c.l.b16 %v4195
      %v4239 = vunpack.c.h.b16 %v4195
      %v4240 = vunpack.c.l.b16 %v4196
      %v4241 = vunpack.c.h.b16 %v4196
      %v4242 = vunpack.c.l.b16 %v4197
      %v4243 = vunpack.c.h.b16 %v4197
      %v4244 = vunpack.c.l.b16 %v4198
      %v4245 = vunpack.c.h.b16 %v4198
      %v4246 = vunpack.c.l.b16 %v4199
      %v4247 = vunpack.c.h.b16 %v4199
      %v4248 = vpack.c.b16 %v4224, %v4216
      %v4249 = vpack.c.b16 %v4225, %v4217
      %v4250 = vpack.c.b16 %v4226, %v4218
      %v4251 = vpack.c.b16 %v4227, %v4219
      %v4252 = vpack.c.b16 %v4228, %v4220
      %v4253 = vpack.c.b16 %v4229, %v4221
      %v4254 = vpack.c.b16 %v4230, %v4222
      %v4255 = vpack.c.b16 %v4231, %v4223
      %v4256 = vpack.c.b16 %v4240, %v4232
      %v4257 = vpack.c.b16 %v4241, %v4233
      %v4258 = vpack.c.b16 %v4242, %v4234
      %v4259 = vpack.c.b16 %v4243, %v4235
      %v4260 = vpack.c.b16 %v4244, %v4236
      %v4261 = vpack.c.b16 %v4245, %v4237
      %v4262 = vpack.c.b16 %v4246, %v4238
      %v4263 = vpack.c.b16 %v4247, %v4239
      %v4273 = vand.u32 %v4256, %v311
      %v4276 = vand.u32 %v4257, %v311
      %v4279 = vand.u32 %v4258, %v311
      %v4282 = vand.u32 %v4259, %v311
      %v4285 = vand.u32 %v4260, %v311
      %v4288 = vand.u32 %v4261, %v311
      %v4291 = vand.u32 %v4262, %v311
      %v4294 = vand.u32 %v4263, %v311
      %4296 = vmatprep.subr.bf16.mxu0 %v4249
      %4297 = vmatpush1.bf16.msra.mxu0 %v4248
      %4298 = vmatprep.subr.bf16.mxu0 %v4276
      %4299 = vmatpush1.bf16.msra.mxu0 %v4273
      %4300 = vmatprep.subr.bf16.mxu0 0
      %4301 = vmatpush1.bf16.msra.mxu0 0
      %4302 = vmatprep.subr.bf16.mxu0 0
      %4303 = vmatpush1.bf16.msra.mxu0 0
      %4304 = vmatprep.subr.bf16.mxu0 0
      %4305 = vmatpush1.bf16.msra.mxu0 0
      %4306 = vmatprep.subr.bf16.mxu0 0
      %4307 = vmatpush1.bf16.msra.mxu0 0
      %4308 = vmatprep.subr.bf16.mxu0 0
      %4309 = vmatpush1.bf16.msra.mxu0 0
      %4310 = vmatprep.subr.bf16.mxu0 0
      %4311 = vmatpush1.bf16.msra.mxu0 0
      %4312 = vmatprep.subr.bf16.mxu0 0
      %4313 = vmatpush1.bf16.msra.mxu0 0
      %4314 = vmatprep.subr.bf16.mxu0 0
      %4315 = vmatpush1.bf16.msra.mxu0 0
      %4316 = vmatprep.subr.bf16.mxu0 0
      %4317 = vmatpush1.bf16.msra.mxu0 0
      %4318 = vmatprep.subr.bf16.mxu0 0
      %4319 = vmatpush1.bf16.msra.mxu0 0
      %4320 = vmatprep.subr.bf16.mxu0 0
      %4321 = vmatpush1.bf16.msra.mxu0 0
      %4322 = vmatprep.subr.bf16.mxu0 0
      %4323 = vmatpush1.bf16.msra.mxu0 0
      %4324 = vmatprep.subr.bf16.mxu0 0
      %4325 = vmatpush1.bf16.msra.mxu0 0
      %4326 = vmatprep.subr.bf16.mxu0 0
      %4327 = vmatpush1.bf16.msra.mxu0 0
      %4328 = vmatprep.mubr.bf16.mxu0 0
      %4329 = vmatmul.mubr.bf16.gmra.mrb[0].mxu0 %v303
      %v4330 = vpop.f32.mrb[0].mxu0
      %v4331 = vadd.f32 0.0, %v4330
      %v4332 = vpop.f32.mrb[0].mxu0
      %v4333 = vadd.f32 0.0, %v4332
      %v4334 = vpop.f32.mrb[0].mxu0
      %v4335 = vadd.f32 0.0, %v4334
      %v4336 = vpop.f32.mrb[0].mxu0
      %v4337 = vadd.f32 0.0, %v4336
      %4338 = vmatprep.mubr.bf16.mxu0 0
      %4339 = vmatmul.mubr.bf16.gmra.mrb[0].mxu0 %v306
      %v4340 = vpop.f32.mrb[0].mxu0
      %v4341 = vadd.f32 0.0, %v4340
      %v4342 = vpop.f32.mrb[0].mxu0
      %v4343 = vadd.f32 0.0, %v4342
      %v4344 = vpop.f32.mrb[0].mxu0
      %v4345 = vadd.f32 0.0, %v4344
      %v4346 = vpop.f32.mrb[0].mxu0
      %v4347 = vadd.f32 0.0, %v4346
      %4348 = vdwg.mxu0
      %4349 = vmatprep.subr.bf16.mxu0 %v4251
      %4350 = vmatpush1.bf16.msra.mxu0 %v4250
      %4351 = vmatprep.subr.bf16.mxu0 %v4282
      %4352 = vmatpush1.bf16.msra.mxu0 %v4279
      %4353 = vmatprep.subr.bf16.mxu0 0
      %4354 = vmatpush1.bf16.msra.mxu0 0
      %4355 = vmatprep.subr.bf16.mxu0 0
      %4356 = vmatpush1.bf16.msra.mxu0 0
      %4357 = vmatprep.subr.bf16.mxu0 0
      %4358 = vmatpush1.bf16.msra.mxu0 0
      %4359 = vmatprep.subr.bf16.mxu0 0
      %4360 = vmatpush1.bf16.msra.mxu0 0
      %4361 = vmatprep.subr.bf16.mxu0 0
      %4362 = vmatpush1.bf16.msra.mxu0 0
      %4363 = vmatprep.subr.bf16.mxu0 0
      %4364 = vmatpush1.bf16.msra.mxu0 0
      %4365 = vmatprep.subr.bf16.mxu0 0
      %4366 = vmatpush1.bf16.msra.mxu0 0
      %4367 = vmatprep.subr.bf16.mxu0 0
      %4368 = vmatpush1.bf16.msra.mxu0 0
      %4369 = vmatprep.subr.bf16.mxu0 0
      %4370 = vmatpush1.bf16.msra.mxu0 0
      %4371 = vmatprep.subr.bf16.mxu0 0
      %4372 = vmatpush1.bf16.msra.mxu0 0
      %4373 = vmatprep.subr.bf16.mxu0 0
      %4374 = vmatpush1.bf16.msra.mxu0 0
      %4375 = vmatprep.subr.bf16.mxu0 0
      %4376 = vmatpush1.bf16.msra.mxu0 0
      %4377 = vmatprep.subr.bf16.mxu0 0
      %4378 = vmatpush1.bf16.msra.mxu0 0
      %4379 = vmatprep.subr.bf16.mxu0 0
      %4380 = vmatpush1.bf16.msra.mxu0 0
      %4381 = vmatprep.mubr.bf16.mxu0 0
      %4382 = vmatmul.mubr.bf16.gmra.mrb[0].mxu0 %v303
      %v4383 = vpop.f32.mrb[0].mxu0
      %v4384 = vadd.f32 0.0, %v4383
      %v4385 = vpop.f32.mrb[0].mxu0
      %v4386 = vadd.f32 0.0, %v4385
      %v4387 = vpop.f32.mrb[0].mxu0
      %v4388 = vadd.f32 0.0, %v4387
      %v4389 = vpop.f32.mrb[0].mxu0
      %v4390 = vadd.f32 0.0, %v4389
      %4391 = vmatprep.mubr.bf16.mxu0 0
      %4392 = vmatmul.mubr.bf16.gmra.mrb[0].mxu0 %v306
      %v4393 = vpop.f32.mrb[0].mxu0
      %v4394 = vadd.f32 0.0, %v4393
      %v4395 = vpop.f32.mrb[0].mxu0
      %v4396 = vadd.f32 0.0, %v4395
      %v4397 = vpop.f32.mrb[0].mxu0
      %v4398 = vadd.f32 0.0, %v4397
      %v4399 = vpop.f32.mrb[0].mxu0
      %v4400 = vadd.f32 0.0, %v4399
      %4401 = vdwg.mxu0
      %4402 = vmatprep.subr.bf16.mxu0 %v4253
      %4403 = vmatpush1.bf16.msra.mxu0 %v4252
      %4404 = vmatprep.subr.bf16.mxu0 %v4288
      %4405 = vmatpush1.bf16.msra.mxu0 %v4285
      %4406 = vmatprep.subr.bf16.mxu0 0
      %4407 = vmatpush1.bf16.msra.mxu0 0
      %4408 = vmatprep.subr.bf16.mxu0 0
      %4409 = vmatpush1.bf16.msra.mxu0 0
      %4410 = vmatprep.subr.bf16.mxu0 0
      %4411 = vmatpush1.bf16.msra.mxu0 0
      %4412 = vmatprep.subr.bf16.mxu0 0
      %4413 = vmatpush1.bf16.msra.mxu0 0
      %4414 = vmatprep.subr.bf16.mxu0 0
      %4415 = vmatpush1.bf16.msra.mxu0 0
      %4416 = vmatprep.subr.bf16.mxu0 0
      %4417 = vmatpush1.bf16.msra.mxu0 0
      %4418 = vmatprep.subr.bf16.mxu0 0
      %4419 = vmatpush1.bf16.msra.mxu0 0
      %4420 = vmatprep.subr.bf16.mxu0 0
      %4421 = vmatpush1.bf16.msra.mxu0 0
      %4422 = vmatprep.subr.bf16.mxu0 0
      %4423 = vmatpush1.bf16.msra.mxu0 0
      %4424 = vmatprep.subr.bf16.mxu0 0
      %4425 = vmatpush1.bf16.msra.mxu0 0
      %4426 = vmatprep.subr.bf16.mxu0 0
      %4427 = vmatpush1.bf16.msra.mxu0 0
      %4428 = vmatprep.subr.bf16.mxu0 0
      %4429 = vmatpush1.bf16.msra.mxu0 0
      %4430 = vmatprep.subr.bf16.mxu0 0
      %4431 = vmatpush1.bf16.msra.mxu0 0
      %4432 = vmatprep.subr.bf16.mxu0 0
      %4433 = vmatpush1.bf16.msra.mxu0 0
      %4434 = vmatprep.mubr.bf16.mxu0 0
      %4435 = vmatmul.mubr.bf16.gmra.mrb[0].mxu0 %v303
      %v4436 = vpop.f32.mrb[0].mxu0
      %v4437 = vadd.f32 0.0, %v4436
      %v4438 = vpop.f32.mrb[0].mxu0
      %v4439 = vadd.f32 0.0, %v4438
      %v4440 = vpop.f32.mrb[0].mxu0
      %v4441 = vadd.f32 0.0, %v4440
      %v4442 = vpop.f32.mrb[0].mxu0
      %v4443 = vadd.f32 0.0, %v4442
      %4444 = vmatprep.mubr.bf16.mxu0 0
      %4445 = vmatmul.mubr.bf16.gmra.mrb[0].mxu0 %v306
      %v4446 = vpop.f32.mrb[0].mxu0
      %v4447 = vadd.f32 0.0, %v4446
      %v4448 = vpop.f32.mrb[0].mxu0
      %v4449 = vadd.f32 0.0, %v4448
      %v4450 = vpop.f32.mrb[0].mxu0
      %v4451 = vadd.f32 0.0, %v4450
      %v4452 = vpop.f32.mrb[0].mxu0
      %v4453 = vadd.f32 0.0, %v4452
      %4454 = vdwg.mxu0
      %4455 = vmatprep.subr.bf16.mxu0 %v4255
      %4456 = vmatpush1.bf16.msra.mxu0 %v4254
      %4457 = vmatprep.subr.bf16.mxu0 %v4294
      %4458 = vmatpush1.bf16.msra.mxu0 %v4291
      %4459 = vmatprep.subr.bf16.mxu0 0
      %4460 = vmatpush1.bf16.msra.mxu0 0
      %4461 = vmatprep.subr.bf16.mxu0 0
      %4462 = vmatpush1.bf16.msra.mxu0 0
      %4463 = vmatprep.subr.bf16.mxu0 0
      %4464 = vmatpush1.bf16.msra.mxu0 0
      %4465 = vmatprep.subr.bf16.mxu0 0
      %4466 = vmatpush1.bf16.msra.mxu0 0
      %4467 = vmatprep.subr.bf16.mxu0 0
      %4468 = vmatpush1.bf16.msra.mxu0 0
      %4469 = vmatprep.subr.bf16.mxu0 0
      %4470 = vmatpush1.bf16.msra.mxu0 0
      %4471 = vmatprep.subr.bf16.mxu0 0
      %4472 = vmatpush1.bf16.msra.mxu0 0
      %4473 = vmatprep.subr.bf16.mxu0 0
      %4474 = vmatpush1.bf16.msra.mxu0 0
      %4475 = vmatprep.subr.bf16.mxu0 0
      %4476 = vmatpush1.bf16.msra.mxu0 0
      %4477 = vmatprep.subr.bf16.mxu0 0
      %4478 = vmatpush1.bf16.msra.mxu0 0
      %4479 = vmatprep.subr.bf16.mxu0 0
      %4480 = vmatpush1.bf16.msra.mxu0 0
      %4481 = vmatprep.subr.bf16.mxu0 0
      %4482 = vmatpush1.bf16.msra.mxu0 0
      %4483 = vmatprep.subr.bf16.mxu0 0
      %4484 = vmatpush1.bf16.msra.mxu0 0
      %4485 = vmatprep.subr.bf16.mxu0 0
      %4486 = vmatpush1.bf16.msra.mxu0 0
      %4487 = vmatprep.mubr.bf16.mxu0 0
      %4488 = vmatmul.mubr.bf16.gmra.mrb[0].mxu0 %v303
      %v4489 = vpop.f32.mrb[0].mxu0
      %v4490 = vadd.f32 0.0, %v4489
      %v4491 = vpop.f32.mrb[0].mxu0
      %v4492 = vadd.f32 0.0, %v4491
      %v4493 = vpop.f32.mrb[0].mxu0
      %v4494 = vadd.f32 0.0, %v4493
      %v4495 = vpop.f32.mrb[0].mxu0
      %v4496 = vadd.f32 0.0, %v4495
      %4497 = vmatprep.mubr.bf16.mxu0 0
      %4498 = vmatmul.mubr.bf16.gmra.mrb[0].mxu0 %v306
      %v4499 = vpop.f32.mrb[0].mxu0
      %v4500 = vadd.f32 0.0, %v4499
      %v4501 = vpop.f32.mrb[0].mxu0
      %v4502 = vadd.f32 0.0, %v4501
      %v4503 = vpop.f32.mrb[0].mxu0
      %v4504 = vadd.f32 0.0, %v4503
      %v4505 = vpop.f32.mrb[0].mxu0
      %v4506 = vadd.f32 0.0, %v4505
      %4507 = vdwg.mxu0
      %v4508 = vmax.f32 %v4331, 0.0
      %v4509 = vmax.f32 %v4333, 0.0
      %v4510 = vmax.f32 %v4384, 0.0
      %v4511 = vmax.f32 %v4386, 0.0
      %v4512 = vmax.f32 %v4437, 0.0
      %v4513 = vmax.f32 %v4439, 0.0
      %v4514 = vmax.f32 %v4490, 0.0
      %v4515 = vmax.f32 %v4492, 0.0
      %v4516 = vmax.f32 %v4335, 0.0
      %v4517 = vmax.f32 %v4337, 0.0
      %v4518 = vmax.f32 %v4388, 0.0
      %v4519 = vmax.f32 %v4390, 0.0
      %v4520 = vmax.f32 %v4441, 0.0
      %v4521 = vmax.f32 %v4443, 0.0
      %v4522 = vmax.f32 %v4494, 0.0
      %v4523 = vmax.f32 %v4496, 0.0
      %v4524 = vmax.f32 %v4341, 0.0
      %v4525 = vmax.f32 %v4343, 0.0
      %v4526 = vmax.f32 %v4394, 0.0
      %v4527 = vmax.f32 %v4396, 0.0
      %v4528 = vmax.f32 %v4447, 0.0
      %v4529 = vmax.f32 %v4449, 0.0
      %v4530 = vmax.f32 %v4500, 0.0
      %v4531 = vmax.f32 %v4502, 0.0
      %v4532 = vmax.f32 %v4345, 0.0
      %v4533 = vmax.f32 %v4347, 0.0
      %v4534 = vmax.f32 %v4398, 0.0
      %v4535 = vmax.f32 %v4400, 0.0
      %v4536 = vmax.f32 %v4451, 0.0
      %v4537 = vmax.f32 %v4453, 0.0
      %v4538 = vmax.f32 %v4504, 0.0
      %v4539 = vmax.f32 %v4506, 0.0
      %v4540 = vadd.f32 %v4508, %v4509
      %v4541 = vadd.f32 %v4540, %v4510
      %v4542 = vadd.f32 %v4541, %v4511
      %v4543 = vadd.f32 %v4542, %v4512
      %v4544 = vadd.f32 %v4543, %v4513
      %v4545 = vadd.f32 %v4544, %v4514
      %v4546 = vadd.f32 %v4545, %v4515
      %4547 = vadd.xlane.f32.xlu0 %v4546
      %v4548 = vpop.xlane.xlu0 %4547
      %v4549 = vadd.f32 %v4516, %v4517
      %v4550 = vadd.f32 %v4549, %v4518
      %v4551 = vadd.f32 %v4550, %v4519
      %v4552 = vadd.f32 %v4551, %v4520
      %v4553 = vadd.f32 %v4552, %v4521
      %v4554 = vadd.f32 %v4553, %v4522
      %v4555 = vadd.f32 %v4554, %v4523
      %4556 = vadd.xlane.f32.xlu0 %v4555
      %v4557 = vpop.xlane.xlu0 %4556
      %v4558 = vadd.f32 %v4524, %v4525
      %v4559 = vadd.f32 %v4558, %v4526
      %v4560 = vadd.f32 %v4559, %v4527
      %v4561 = vadd.f32 %v4560, %v4528
      %v4562 = vadd.f32 %v4561, %v4529
      %v4563 = vadd.f32 %v4562, %v4530
      %v4564 = vadd.f32 %v4563, %v4531
      %4565 = vadd.xlane.f32.xlu0 %v4564
      %v4566 = vpop.xlane.xlu0 %4565
      %v4567 = vadd.f32 %v4532, %v4533
      %v4568 = vadd.f32 %v4567, %v4534
      %v4569 = vadd.f32 %v4568, %v4535
      %v4570 = vadd.f32 %v4569, %v4536
      %v4571 = vadd.f32 %v4570, %v4537
      %v4572 = vadd.f32 %v4571, %v4538
      %v4573 = vadd.f32 %v4572, %v4539
      %4574 = vadd.xlane.f32.xlu0 %v4573
      %v4575 = vpop.xlane.xlu0 %4574
      %v4576 = vadd.f32 %v4180, %v4548
      %v4577 = vadd.f32 %v4181, %v4557
      %v4578 = vadd.f32 %v4182, %v4566
      %v4579 = vadd.f32 %v4183, %v4575
      %v4580 = vld [vmem:[%s192 + $0x160] sm:$0xff]
      %v4581 = vld [vmem:[%s192 + $0x168] sm:$0xff]
      %v4582 = vld [vmem:[%s192 + $0x170] sm:$0xff]
      %v4583 = vld [vmem:[%s192 + $0x178] sm:$0xff]
      %v4584 = vld [vmem:[%s192 + $0x420] sm:$0xff]
      %v4585 = vld [vmem:[%s192 + $0x428] sm:$0xff]
      %v4586 = vld [vmem:[%s192 + $0x430] sm:$0xff]
      %v4587 = vld [vmem:[%s192 + $0x438] sm:$0xff]
      %v4588 = vld [vmem:[%s192 + $0x6e0] sm:$0xff]
      %v4589 = vld [vmem:[%s192 + $0x6e8] sm:$0xff]
      %v4590 = vld [vmem:[%s192 + $0x6f0] sm:$0xff]
      %v4591 = vld [vmem:[%s192 + $0x6f8] sm:$0xff]
      %v4592 = vld [vmem:[%s192 + $0x9a0] sm:$0x33]
      %v4593 = vld [vmem:[%s192 + $0x9a8] sm:$0x33]
      %v4594 = vld [vmem:[%s192 + $0x9b0] sm:$0x33]
      %v4595 = vld [vmem:[%s192 + $0x9b8] sm:$0x33]
      %v4612 = vunpack.c.l.b16 %v4580
      %v4613 = vunpack.c.h.b16 %v4580
      %v4614 = vunpack.c.l.b16 %v4581
      %v4615 = vunpack.c.h.b16 %v4581
      %v4616 = vunpack.c.l.b16 %v4582
      %v4617 = vunpack.c.h.b16 %v4582
      %v4618 = vunpack.c.l.b16 %v4583
      %v4619 = vunpack.c.h.b16 %v4583
      %v4620 = vunpack.c.l.b16 %v4584
      %v4621 = vunpack.c.h.b16 %v4584
      %v4622 = vunpack.c.l.b16 %v4585
      %v4623 = vunpack.c.h.b16 %v4585
      %v4624 = vunpack.c.l.b16 %v4586
      %v4625 = vunpack.c.h.b16 %v4586
      %v4626 = vunpack.c.l.b16 %v4587
      %v4627 = vunpack.c.h.b16 %v4587
      %v4628 = vunpack.c.l.b16 %v4588
      %v4629 = vunpack.c.h.b16 %v4588
      %v4630 = vunpack.c.l.b16 %v4589
      %v4631 = vunpack.c.h.b16 %v4589
      %v4632 = vunpack.c.l.b16 %v4590
      %v4633 = vunpack.c.h.b16 %v4590
      %v4634 = vunpack.c.l.b16 %v4591
      %v4635 = vunpack.c.h.b16 %v4591
      %v4636 = vunpack.c.l.b16 %v4592
      %v4637 = vunpack.c.h.b16 %v4592
      %v4638 = vunpack.c.l.b16 %v4593
      %v4639 = vunpack.c.h.b16 %v4593
      %v4640 = vunpack.c.l.b16 %v4594
      %v4641 = vunpack.c.h.b16 %v4594
      %v4642 = vunpack.c.l.b16 %v4595
      %v4643 = vunpack.c.h.b16 %v4595
      %v4644 = vpack.c.b16 %v4620, %v4612
      %v4645 = vpack.c.b16 %v4621, %v4613
      %v4646 = vpack.c.b16 %v4622, %v4614
      %v4647 = vpack.c.b16 %v4623, %v4615
      %v4648 = vpack.c.b16 %v4624, %v4616
      %v4649 = vpack.c.b16 %v4625, %v4617
      %v4650 = vpack.c.b16 %v4626, %v4618
      %v4651 = vpack.c.b16 %v4627, %v4619
      %v4652 = vpack.c.b16 %v4636, %v4628
      %v4653 = vpack.c.b16 %v4637, %v4629
      %v4654 = vpack.c.b16 %v4638, %v4630
      %v4655 = vpack.c.b16 %v4639, %v4631
      %v4656 = vpack.c.b16 %v4640, %v4632
      %v4657 = vpack.c.b16 %v4641, %v4633
      %v4658 = vpack.c.b16 %v4642, %v4634
      %v4659 = vpack.c.b16 %v4643, %v4635
      %v4669 = vand.u32 %v4652, %v311
      %v4672 = vand.u32 %v4653, %v311
      %v4675 = vand.u32 %v4654, %v311
      %v4678 = vand.u32 %v4655, %v311
      %v4681 = vand.u32 %v4656, %v311
      %v4684 = vand.u32 %v4657, %v311
      %v4687 = vand.u32 %v4658, %v311
      %v4690 = vand.u32 %v4659, %v311
      %4692 = vmatprep.subr.bf16.mxu0 %v4645
      %4693 = vmatpush1.bf16.msra.mxu0 %v4644
      %4694 = vmatprep.subr.bf16.mxu0 %v4672
      %4695 = vmatpush1.bf16.msra.mxu0 %v4669
      %4696 = vmatprep.subr.bf16.mxu0 0
      %4697 = vmatpush1.bf16.msra.mxu0 0
      %4698 = vmatprep.subr.bf16.mxu0 0
      %4699 = vmatpush1.bf16.msra.mxu0 0
      %4700 = vmatprep.subr.bf16.mxu0 0
      %4701 = vmatpush1.bf16.msra.mxu0 0
      %4702 = vmatprep.subr.bf16.mxu0 0
      %4703 = vmatpush1.bf16.msra.mxu0 0
      %4704 = vmatprep.subr.bf16.mxu0 0
      %4705 = vmatpush1.bf16.msra.mxu0 0
      %4706 = vmatprep.subr.bf16.mxu0 0
      %4707 = vmatpush1.bf16.msra.mxu0 0
      %4708 = vmatprep.subr.bf16.mxu0 0
      %4709 = vmatpush1.bf16.msra.mxu0 0
      %4710 = vmatprep.subr.bf16.mxu0 0
      %4711 = vmatpush1.bf16.msra.mxu0 0
      %4712 = vmatprep.subr.bf16.mxu0 0
      %4713 = vmatpush1.bf16.msra.mxu0 0
      %4714 = vmatprep.subr.bf16.mxu0 0
      %4715 = vmatpush1.bf16.msra.mxu0 0
      %4716 = vmatprep.subr.bf16.mxu0 0
      %4717 = vmatpush1.bf16.msra.mxu0 0
      %4718 = vmatprep.subr.bf16.mxu0 0
      %4719 = vmatpush1.bf16.msra.mxu0 0
      %4720 = vmatprep.subr.bf16.mxu0 0
      %4721 = vmatpush1.bf16.msra.mxu0 0
      %4722 = vmatprep.subr.bf16.mxu0 0
      %4723 = vmatpush1.bf16.msra.mxu0 0
      %4724 = vmatprep.mubr.bf16.mxu0 0
      %4725 = vmatmul.mubr.bf16.gmra.mrb[0].mxu0 %v303
      %v4726 = vpop.f32.mrb[0].mxu0
      %v4727 = vadd.f32 0.0, %v4726
      %v4728 = vpop.f32.mrb[0].mxu0
      %v4729 = vadd.f32 0.0, %v4728
      %v4730 = vpop.f32.mrb[0].mxu0
      %v4731 = vadd.f32 0.0, %v4730
      %v4732 = vpop.f32.mrb[0].mxu0
      %v4733 = vadd.f32 0.0, %v4732
      %4734 = vmatprep.mubr.bf16.mxu0 0
      %4735 = vmatmul.mubr.bf16.gmra.mrb[0].mxu0 %v306
      %v4736 = vpop.f32.mrb[0].mxu0
      %v4737 = vadd.f32 0.0, %v4736
      %v4738 = vpop.f32.mrb[0].mxu0
      %v4739 = vadd.f32 0.0, %v4738
      %v4740 = vpop.f32.mrb[0].mxu0
      %v4741 = vadd.f32 0.0, %v4740
      %v4742 = vpop.f32.mrb[0].mxu0
      %v4743 = vadd.f32 0.0, %v4742
      %4744 = vdwg.mxu0
      %4745 = vmatprep.subr.bf16.mxu0 %v4647
      %4746 = vmatpush1.bf16.msra.mxu0 %v4646
      %4747 = vmatprep.subr.bf16.mxu0 %v4678
      %4748 = vmatpush1.bf16.msra.mxu0 %v4675
      %4749 = vmatprep.subr.bf16.mxu0 0
      %4750 = vmatpush1.bf16.msra.mxu0 0
      %4751 = vmatprep.subr.bf16.mxu0 0
      %4752 = vmatpush1.bf16.msra.mxu0 0
      %4753 = vmatprep.subr.bf16.mxu0 0
      %4754 = vmatpush1.bf16.msra.mxu0 0
      %4755 = vmatprep.subr.bf16.mxu0 0
      %4756 = vmatpush1.bf16.msra.mxu0 0
      %4757 = vmatprep.subr.bf16.mxu0 0
      %4758 = vmatpush1.bf16.msra.mxu0 0
      %4759 = vmatprep.subr.bf16.mxu0 0
      %4760 = vmatpush1.bf16.msra.mxu0 0
      %4761 = vmatprep.subr.bf16.mxu0 0
      %4762 = vmatpush1.bf16.msra.mxu0 0
      %4763 = vmatprep.subr.bf16.mxu0 0
      %4764 = vmatpush1.bf16.msra.mxu0 0
      %4765 = vmatprep.subr.bf16.mxu0 0
      %4766 = vmatpush1.bf16.msra.mxu0 0
      %4767 = vmatprep.subr.bf16.mxu0 0
      %4768 = vmatpush1.bf16.msra.mxu0 0
      %4769 = vmatprep.subr.bf16.mxu0 0
      %4770 = vmatpush1.bf16.msra.mxu0 0
      %4771 = vmatprep.subr.bf16.mxu0 0
      %4772 = vmatpush1.bf16.msra.mxu0 0
      %4773 = vmatprep.subr.bf16.mxu0 0
      %4774 = vmatpush1.bf16.msra.mxu0 0
      %4775 = vmatprep.subr.bf16.mxu0 0
      %4776 = vmatpush1.bf16.msra.mxu0 0
      %4777 = vmatprep.mubr.bf16.mxu0 0
      %4778 = vmatmul.mubr.bf16.gmra.mrb[0].mxu0 %v303
      %v4779 = vpop.f32.mrb[0].mxu0
      %v4780 = vadd.f32 0.0, %v4779
      %v4781 = vpop.f32.mrb[0].mxu0
      %v4782 = vadd.f32 0.0, %v4781
      %v4783 = vpop.f32.mrb[0].mxu0
      %v4784 = vadd.f32 0.0, %v4783
      %v4785 = vpop.f32.mrb[0].mxu0
      %v4786 = vadd.f32 0.0, %v4785
      %4787 = vmatprep.mubr.bf16.mxu0 0
      %4788 = vmatmul.mubr.bf16.gmra.mrb[0].mxu0 %v306
      %v4789 = vpop.f32.mrb[0].mxu0
      %v4790 = vadd.f32 0.0, %v4789
      %v4791 = vpop.f32.mrb[0].mxu0
      %v4792 = vadd.f32 0.0, %v4791
      %v4793 = vpop.f32.mrb[0].mxu0
      %v4794 = vadd.f32 0.0, %v4793
      %v4795 = vpop.f32.mrb[0].mxu0
      %v4796 = vadd.f32 0.0, %v4795
      %4797 = vdwg.mxu0
      %4798 = vmatprep.subr.bf16.mxu0 %v4649
      %4799 = vmatpush1.bf16.msra.mxu0 %v4648
      %4800 = vmatprep.subr.bf16.mxu0 %v4684
      %4801 = vmatpush1.bf16.msra.mxu0 %v4681
      %4802 = vmatprep.subr.bf16.mxu0 0
      %4803 = vmatpush1.bf16.msra.mxu0 0
      %4804 = vmatprep.subr.bf16.mxu0 0
      %4805 = vmatpush1.bf16.msra.mxu0 0
      %4806 = vmatprep.subr.bf16.mxu0 0
      %4807 = vmatpush1.bf16.msra.mxu0 0
      %4808 = vmatprep.subr.bf16.mxu0 0
      %4809 = vmatpush1.bf16.msra.mxu0 0
      %4810 = vmatprep.subr.bf16.mxu0 0
      %4811 = vmatpush1.bf16.msra.mxu0 0
      %4812 = vmatprep.subr.bf16.mxu0 0
      %4813 = vmatpush1.bf16.msra.mxu0 0
      %4814 = vmatprep.subr.bf16.mxu0 0
      %4815 = vmatpush1.bf16.msra.mxu0 0
      %4816 = vmatprep.subr.bf16.mxu0 0
      %4817 = vmatpush1.bf16.msra.mxu0 0
      %4818 = vmatprep.subr.bf16.mxu0 0
      %4819 = vmatpush1.bf16.msra.mxu0 0
      %4820 = vmatprep.subr.bf16.mxu0 0
      %4821 = vmatpush1.bf16.msra.mxu0 0
      %4822 = vmatprep.subr.bf16.mxu0 0
      %4823 = vmatpush1.bf16.msra.mxu0 0
      %4824 = vmatprep.subr.bf16.mxu0 0
      %4825 = vmatpush1.bf16.msra.mxu0 0
      %4826 = vmatprep.subr.bf16.mxu0 0
      %4827 = vmatpush1.bf16.msra.mxu0 0
      %4828 = vmatprep.subr.bf16.mxu0 0
      %4829 = vmatpush1.bf16.msra.mxu0 0
      %4830 = vmatprep.mubr.bf16.mxu0 0
      %4831 = vmatmul.mubr.bf16.gmra.mrb[0].mxu0 %v303
      %v4832 = vpop.f32.mrb[0].mxu0
      %v4833 = vadd.f32 0.0, %v4832
      %v4834 = vpop.f32.mrb[0].mxu0
      %v4835 = vadd.f32 0.0, %v4834
      %v4836 = vpop.f32.mrb[0].mxu0
      %v4837 = vadd.f32 0.0, %v4836
      %v4838 = vpop.f32.mrb[0].mxu0
      %v4839 = vadd.f32 0.0, %v4838
      %4840 = vmatprep.mubr.bf16.mxu0 0
      %4841 = vmatmul.mubr.bf16.gmra.mrb[0].mxu0 %v306
      %v4842 = vpop.f32.mrb[0].mxu0
      %v4843 = vadd.f32 0.0, %v4842
      %v4844 = vpop.f32.mrb[0].mxu0
      %v4845 = vadd.f32 0.0, %v4844
      %v4846 = vpop.f32.mrb[0].mxu0
      %v4847 = vadd.f32 0.0, %v4846
      %v4848 = vpop.f32.mrb[0].mxu0
      %v4849 = vadd.f32 0.0, %v4848
      %4850 = vdwg.mxu0
      %4851 = vmatprep.subr.bf16.mxu0 %v4651
      %4852 = vmatpush1.bf16.msra.mxu0 %v4650
      %4853 = vmatprep.subr.bf16.mxu0 %v4690
      %4854 = vmatpush1.bf16.msra.mxu0 %v4687
      %4855 = vmatprep.subr.bf16.mxu0 0
      %4856 = vmatpush1.bf16.msra.mxu0 0
      %4857 = vmatprep.subr.bf16.mxu0 0
      %4858 = vmatpush1.bf16.msra.mxu0 0
      %4859 = vmatprep.subr.bf16.mxu0 0
      %4860 = vmatpush1.bf16.msra.mxu0 0
      %4861 = vmatprep.subr.bf16.mxu0 0
      %4862 = vmatpush1.bf16.msra.mxu0 0
      %4863 = vmatprep.subr.bf16.mxu0 0
      %4864 = vmatpush1.bf16.msra.mxu0 0
      %4865 = vmatprep.subr.bf16.mxu0 0
      %4866 = vmatpush1.bf16.msra.mxu0 0
      %4867 = vmatprep.subr.bf16.mxu0 0
      %4868 = vmatpush1.bf16.msra.mxu0 0
      %4869 = vmatprep.subr.bf16.mxu0 0
      %4870 = vmatpush1.bf16.msra.mxu0 0
      %4871 = vmatprep.subr.bf16.mxu0 0
      %4872 = vmatpush1.bf16.msra.mxu0 0
      %4873 = vmatprep.subr.bf16.mxu0 0
      %4874 = vmatpush1.bf16.msra.mxu0 0
      %4875 = vmatprep.subr.bf16.mxu0 0
      %4876 = vmatpush1.bf16.msra.mxu0 0
      %4877 = vmatprep.subr.bf16.mxu0 0
      %4878 = vmatpush1.bf16.msra.mxu0 0
      %4879 = vmatprep.subr.bf16.mxu0 0
      %4880 = vmatpush1.bf16.msra.mxu0 0
      %4881 = vmatprep.subr.bf16.mxu0 0
      %4882 = vmatpush1.bf16.msra.mxu0 0
      %4883 = vmatprep.mubr.bf16.mxu0 0
      %4884 = vmatmul.mubr.bf16.gmra.mrb[0].mxu0 %v303
      %v4885 = vpop.f32.mrb[0].mxu0
      %v4886 = vadd.f32 0.0, %v4885
      %v4887 = vpop.f32.mrb[0].mxu0
      %v4888 = vadd.f32 0.0, %v4887
      %v4889 = vpop.f32.mrb[0].mxu0
      %v4890 = vadd.f32 0.0, %v4889
      %v4891 = vpop.f32.mrb[0].mxu0
      %v4892 = vadd.f32 0.0, %v4891
      %4893 = vmatprep.mubr.bf16.mxu0 0
      %4894 = vmatmul.mubr.bf16.gmra.mrb[0].mxu0 %v306
      %v4895 = vpop.f32.mrb[0].mxu0
      %v4896 = vadd.f32 0.0, %v4895
      %v4897 = vpop.f32.mrb[0].mxu0
      %v4898 = vadd.f32 0.0, %v4897
      %v4899 = vpop.f32.mrb[0].mxu0
      %v4900 = vadd.f32 0.0, %v4899
      %v4901 = vpop.f32.mrb[0].mxu0
      %v4902 = vadd.f32 0.0, %v4901
      %4903 = vdwg.mxu0
      %v4904 = vmax.f32 %v4727, 0.0
      %v4905 = vmax.f32 %v4729, 0.0
      %v4906 = vmax.f32 %v4780, 0.0
      %v4907 = vmax.f32 %v4782, 0.0
      %v4908 = vmax.f32 %v4833, 0.0
      %v4909 = vmax.f32 %v4835, 0.0
      %v4910 = vmax.f32 %v4886, 0.0
      %v4911 = vmax.f32 %v4888, 0.0
      %v4912 = vmax.f32 %v4731, 0.0
      %v4913 = vmax.f32 %v4733, 0.0
      %v4914 = vmax.f32 %v4784, 0.0
      %v4915 = vmax.f32 %v4786, 0.0
      %v4916 = vmax.f32 %v4837, 0.0
      %v4917 = vmax.f32 %v4839, 0.0
      %v4918 = vmax.f32 %v4890, 0.0
      %v4919 = vmax.f32 %v4892, 0.0
      %v4920 = vmax.f32 %v4737, 0.0
      %v4921 = vmax.f32 %v4739, 0.0
      %v4922 = vmax.f32 %v4790, 0.0
      %v4923 = vmax.f32 %v4792, 0.0
      %v4924 = vmax.f32 %v4843, 0.0
      %v4925 = vmax.f32 %v4845, 0.0
      %v4926 = vmax.f32 %v4896, 0.0
      %v4927 = vmax.f32 %v4898, 0.0
      %v4928 = vmax.f32 %v4741, 0.0
      %v4929 = vmax.f32 %v4743, 0.0
      %v4930 = vmax.f32 %v4794, 0.0
      %v4931 = vmax.f32 %v4796, 0.0
      %v4932 = vmax.f32 %v4847, 0.0
      %v4933 = vmax.f32 %v4849, 0.0
      %v4934 = vmax.f32 %v4900, 0.0
      %v4935 = vmax.f32 %v4902, 0.0
      %v4936 = vadd.f32 %v4904, %v4905
      %v4937 = vadd.f32 %v4936, %v4906
      %v4938 = vadd.f32 %v4937, %v4907
      %v4939 = vadd.f32 %v4938, %v4908
      %v4940 = vadd.f32 %v4939, %v4909
      %v4941 = vadd.f32 %v4940, %v4910
      %v4942 = vadd.f32 %v4941, %v4911
      %4943 = vadd.xlane.f32.xlu0 %v4942
      %v4944 = vpop.xlane.xlu0 %4943
      %v4945 = vadd.f32 %v4912, %v4913
      %v4946 = vadd.f32 %v4945, %v4914
      %v4947 = vadd.f32 %v4946, %v4915
      %v4948 = vadd.f32 %v4947, %v4916
      %v4949 = vadd.f32 %v4948, %v4917
      %v4950 = vadd.f32 %v4949, %v4918
      %v4951 = vadd.f32 %v4950, %v4919
      %4952 = vadd.xlane.f32.xlu0 %v4951
      %v4953 = vpop.xlane.xlu0 %4952
      %v4954 = vadd.f32 %v4920, %v4921
      %v4955 = vadd.f32 %v4954, %v4922
      %v4956 = vadd.f32 %v4955, %v4923
      %v4957 = vadd.f32 %v4956, %v4924
      %v4958 = vadd.f32 %v4957, %v4925
      %v4959 = vadd.f32 %v4958, %v4926
      %v4960 = vadd.f32 %v4959, %v4927
      %4961 = vadd.xlane.f32.xlu0 %v4960
      %v4962 = vpop.xlane.xlu0 %4961
      %v4963 = vadd.f32 %v4928, %v4929
      %v4964 = vadd.f32 %v4963, %v4930
      %v4965 = vadd.f32 %v4964, %v4931
      %v4966 = vadd.f32 %v4965, %v4932
      %v4967 = vadd.f32 %v4966, %v4933
      %v4968 = vadd.f32 %v4967, %v4934
      %v4969 = vadd.f32 %v4968, %v4935
      %4970 = vadd.xlane.f32.xlu0 %v4969
      %v4971 = vpop.xlane.xlu0 %4970
      %v4972 = vadd.f32 %v4576, %v4944
      %v4973 = vadd.f32 %v4577, %v4953
      %v4974 = vadd.f32 %v4578, %v4962
      %v4975 = vadd.f32 %v4579, %v4971
      %v4976 = vld [vmem:[%s192 + $0x180] sm:$0xff]
      %v4977 = vld [vmem:[%s192 + $0x188] sm:$0xff]
      %v4978 = vld [vmem:[%s192 + $0x190] sm:$0xff]
      %v4979 = vld [vmem:[%s192 + $0x198] sm:$0xff]
      %v4980 = vld [vmem:[%s192 + $0x440] sm:$0xff]
      %v4981 = vld [vmem:[%s192 + $0x448] sm:$0xff]
      %v4982 = vld [vmem:[%s192 + $0x450] sm:$0xff]
      %v4983 = vld [vmem:[%s192 + $0x458] sm:$0xff]
      %v4984 = vld [vmem:[%s192 + $0x700] sm:$0xff]
      %v4985 = vld [vmem:[%s192 + $0x708] sm:$0xff]
      %v4986 = vld [vmem:[%s192 + $0x710] sm:$0xff]
      %v4987 = vld [vmem:[%s192 + $0x718] sm:$0xff]
      %v4988 = vld [vmem:[%s192 + $0x9c0] sm:$0x33]
      %v4989 = vld [vmem:[%s192 + $0x9c8] sm:$0x33]
      %v4990 = vld [vmem:[%s192 + $0x9d0] sm:$0x33]
      %v4991 = vld [vmem:[%s192 + $0x9d8] sm:$0x33]
      %v5008 = vunpack.c.l.b16 %v4976
      %v5009 = vunpack.c.h.b16 %v4976
      %v5010 = vunpack.c.l.b16 %v4977
      %v5011 = vunpack.c.h.b16 %v4977
      %v5012 = vunpack.c.l.b16 %v4978
      %v5013 = vunpack.c.h.b16 %v4978
      %v5014 = vunpack.c.l.b16 %v4979
      %v5015 = vunpack.c.h.b16 %v4979
      %v5016 = vunpack.c.l.b16 %v4980
      %v5017 = vunpack.c.h.b16 %v4980
      %v5018 = vunpack.c.l.b16 %v4981
      %v5019 = vunpack.c.h.b16 %v4981
      %v5020 = vunpack.c.l.b16 %v4982
      %v5021 = vunpack.c.h.b16 %v4982
      %v5022 = vunpack.c.l.b16 %v4983
      %v5023 = vunpack.c.h.b16 %v4983
      %v5024 = vunpack.c.l.b16 %v4984
      %v5025 = vunpack.c.h.b16 %v4984
      %v5026 = vunpack.c.l.b16 %v4985
      %v5027 = vunpack.c.h.b16 %v4985
      %v5028 = vunpack.c.l.b16 %v4986
      %v5029 = vunpack.c.h.b16 %v4986
      %v5030 = vunpack.c.l.b16 %v4987
      %v5031 = vunpack.c.h.b16 %v4987
      %v5032 = vunpack.c.l.b16 %v4988
      %v5033 = vunpack.c.h.b16 %v4988
      %v5034 = vunpack.c.l.b16 %v4989
      %v5035 = vunpack.c.h.b16 %v4989
      %v5036 = vunpack.c.l.b16 %v4990
      %v5037 = vunpack.c.h.b16 %v4990
      %v5038 = vunpack.c.l.b16 %v4991
      %v5039 = vunpack.c.h.b16 %v4991
      %v5040 = vpack.c.b16 %v5016, %v5008
      %v5041 = vpack.c.b16 %v5017, %v5009
      %v5042 = vpack.c.b16 %v5018, %v5010
      %v5043 = vpack.c.b16 %v5019, %v5011
      %v5044 = vpack.c.b16 %v5020, %v5012
      %v5045 = vpack.c.b16 %v5021, %v5013
      %v5046 = vpack.c.b16 %v5022, %v5014
      %v5047 = vpack.c.b16 %v5023, %v5015
      %v5048 = vpack.c.b16 %v5032, %v5024
      %v5049 = vpack.c.b16 %v5033, %v5025
      %v5050 = vpack.c.b16 %v5034, %v5026
      %v5051 = vpack.c.b16 %v5035, %v5027
      %v5052 = vpack.c.b16 %v5036, %v5028
      %v5053 = vpack.c.b16 %v5037, %v5029
      %v5054 = vpack.c.b16 %v5038, %v5030
      %v5055 = vpack.c.b16 %v5039, %v5031
      %v5065 = vand.u32 %v5048, %v311
      %v5068 = vand.u32 %v5049, %v311
      %v5071 = vand.u32 %v5050, %v311
      %v5074 = vand.u32 %v5051, %v311
      %v5077 = vand.u32 %v5052, %v311
      %v5080 = vand.u32 %v5053, %v311
      %v5083 = vand.u32 %v5054, %v311
      %v5086 = vand.u32 %v5055, %v311
      %5088 = vmatprep.subr.bf16.mxu0 %v5041
      %5089 = vmatpush1.bf16.msra.mxu0 %v5040
      %5090 = vmatprep.subr.bf16.mxu0 %v5068
      %5091 = vmatpush1.bf16.msra.mxu0 %v5065
      %5092 = vmatprep.subr.bf16.mxu0 0
      %5093 = vmatpush1.bf16.msra.mxu0 0
      %5094 = vmatprep.subr.bf16.mxu0 0
      %5095 = vmatpush1.bf16.msra.mxu0 0
      %5096 = vmatprep.subr.bf16.mxu0 0
      %5097 = vmatpush1.bf16.msra.mxu0 0
      %5098 = vmatprep.subr.bf16.mxu0 0
      %5099 = vmatpush1.bf16.msra.mxu0 0
      %5100 = vmatprep.subr.bf16.mxu0 0
      %5101 = vmatpush1.bf16.msra.mxu0 0
      %5102 = vmatprep.subr.bf16.mxu0 0
      %5103 = vmatpush1.bf16.msra.mxu0 0
      %5104 = vmatprep.subr.bf16.mxu0 0
      %5105 = vmatpush1.bf16.msra.mxu0 0
      %5106 = vmatprep.subr.bf16.mxu0 0
      %5107 = vmatpush1.bf16.msra.mxu0 0
      %5108 = vmatprep.subr.bf16.mxu0 0
      %5109 = vmatpush1.bf16.msra.mxu0 0
      %5110 = vmatprep.subr.bf16.mxu0 0
      %5111 = vmatpush1.bf16.msra.mxu0 0
      %5112 = vmatprep.subr.bf16.mxu0 0
      %5113 = vmatpush1.bf16.msra.mxu0 0
      %5114 = vmatprep.subr.bf16.mxu0 0
      %5115 = vmatpush1.bf16.msra.mxu0 0
      %5116 = vmatprep.subr.bf16.mxu0 0
      %5117 = vmatpush1.bf16.msra.mxu0 0
      %5118 = vmatprep.subr.bf16.mxu0 0
      %5119 = vmatpush1.bf16.msra.mxu0 0
      %5120 = vmatprep.mubr.bf16.mxu0 0
      %5121 = vmatmul.mubr.bf16.gmra.mrb[0].mxu0 %v303
      %v5122 = vpop.f32.mrb[0].mxu0
      %v5123 = vadd.f32 0.0, %v5122
      %v5124 = vpop.f32.mrb[0].mxu0
      %v5125 = vadd.f32 0.0, %v5124
      %v5126 = vpop.f32.mrb[0].mxu0
      %v5127 = vadd.f32 0.0, %v5126
      %v5128 = vpop.f32.mrb[0].mxu0
      %v5129 = vadd.f32 0.0, %v5128
      %5130 = vmatprep.mubr.bf16.mxu0 0
      %5131 = vmatmul.mubr.bf16.gmra.mrb[0].mxu0 %v306
      %v5132 = vpop.f32.mrb[0].mxu0
      %v5133 = vadd.f32 0.0, %v5132
      %v5134 = vpop.f32.mrb[0].mxu0
      %v5135 = vadd.f32 0.0, %v5134
      %v5136 = vpop.f32.mrb[0].mxu0
      %v5137 = vadd.f32 0.0, %v5136
      %v5138 = vpop.f32.mrb[0].mxu0
      %v5139 = vadd.f32 0.0, %v5138
      %5140 = vdwg.mxu0
      %5141 = vmatprep.subr.bf16.mxu0 %v5043
      %5142 = vmatpush1.bf16.msra.mxu0 %v5042
      %5143 = vmatprep.subr.bf16.mxu0 %v5074
      %5144 = vmatpush1.bf16.msra.mxu0 %v5071
      %5145 = vmatprep.subr.bf16.mxu0 0
      %5146 = vmatpush1.bf16.msra.mxu0 0
      %5147 = vmatprep.subr.bf16.mxu0 0
      %5148 = vmatpush1.bf16.msra.mxu0 0
      %5149 = vmatprep.subr.bf16.mxu0 0
      %5150 = vmatpush1.bf16.msra.mxu0 0
      %5151 = vmatprep.subr.bf16.mxu0 0
      %5152 = vmatpush1.bf16.msra.mxu0 0
      %5153 = vmatprep.subr.bf16.mxu0 0
      %5154 = vmatpush1.bf16.msra.mxu0 0
      %5155 = vmatprep.subr.bf16.mxu0 0
      %5156 = vmatpush1.bf16.msra.mxu0 0
      %5157 = vmatprep.subr.bf16.mxu0 0
      %5158 = vmatpush1.bf16.msra.mxu0 0
      %5159 = vmatprep.subr.bf16.mxu0 0
      %5160 = vmatpush1.bf16.msra.mxu0 0
      %5161 = vmatprep.subr.bf16.mxu0 0
      %5162 = vmatpush1.bf16.msra.mxu0 0
      %5163 = vmatprep.subr.bf16.mxu0 0
      %5164 = vmatpush1.bf16.msra.mxu0 0
      %5165 = vmatprep.subr.bf16.mxu0 0
      %5166 = vmatpush1.bf16.msra.mxu0 0
      %5167 = vmatprep.subr.bf16.mxu0 0
      %5168 = vmatpush1.bf16.msra.mxu0 0
      %5169 = vmatprep.subr.bf16.mxu0 0
      %5170 = vmatpush1.bf16.msra.mxu0 0
      %5171 = vmatprep.subr.bf16.mxu0 0
      %5172 = vmatpush1.bf16.msra.mxu0 0
      %5173 = vmatprep.mubr.bf16.mxu0 0
      %5174 = vmatmul.mubr.bf16.gmra.mrb[0].mxu0 %v303
      %v5175 = vpop.f32.mrb[0].mxu0
      %v5176 = vadd.f32 0.0, %v5175
      %v5177 = vpop.f32.mrb[0].mxu0
      %v5178 = vadd.f32 0.0, %v5177
      %v5179 = vpop.f32.mrb[0].mxu0
      %v5180 = vadd.f32 0.0, %v5179
      %v5181 = vpop.f32.mrb[0].mxu0
      %v5182 = vadd.f32 0.0, %v5181
      %5183 = vmatprep.mubr.bf16.mxu0 0
      %5184 = vmatmul.mubr.bf16.gmra.mrb[0].mxu0 %v306
      %v5185 = vpop.f32.mrb[0].mxu0
      %v5186 = vadd.f32 0.0, %v5185
      %v5187 = vpop.f32.mrb[0].mxu0
      %v5188 = vadd.f32 0.0, %v5187
      %v5189 = vpop.f32.mrb[0].mxu0
      %v5190 = vadd.f32 0.0, %v5189
      %v5191 = vpop.f32.mrb[0].mxu0
      %v5192 = vadd.f32 0.0, %v5191
      %5193 = vdwg.mxu0
      %5194 = vmatprep.subr.bf16.mxu0 %v5045
      %5195 = vmatpush1.bf16.msra.mxu0 %v5044
      %5196 = vmatprep.subr.bf16.mxu0 %v5080
      %5197 = vmatpush1.bf16.msra.mxu0 %v5077
      %5198 = vmatprep.subr.bf16.mxu0 0
      %5199 = vmatpush1.bf16.msra.mxu0 0
      %5200 = vmatprep.subr.bf16.mxu0 0
      %5201 = vmatpush1.bf16.msra.mxu0 0
      %5202 = vmatprep.subr.bf16.mxu0 0
      %5203 = vmatpush1.bf16.msra.mxu0 0
      %5204 = vmatprep.subr.bf16.mxu0 0
      %5205 = vmatpush1.bf16.msra.mxu0 0
      %5206 = vmatprep.subr.bf16.mxu0 0
      %5207 = vmatpush1.bf16.msra.mxu0 0
      %5208 = vmatprep.subr.bf16.mxu0 0
      %5209 = vmatpush1.bf16.msra.mxu0 0
      %5210 = vmatprep.subr.bf16.mxu0 0
      %5211 = vmatpush1.bf16.msra.mxu0 0
      %5212 = vmatprep.subr.bf16.mxu0 0
      %5213 = vmatpush1.bf16.msra.mxu0 0
      %5214 = vmatprep.subr.bf16.mxu0 0
      %5215 = vmatpush1.bf16.msra.mxu0 0
      %5216 = vmatprep.subr.bf16.mxu0 0
      %5217 = vmatpush1.bf16.msra.mxu0 0
      %5218 = vmatprep.subr.bf16.mxu0 0
      %5219 = vmatpush1.bf16.msra.mxu0 0
      %5220 = vmatprep.subr.bf16.mxu0 0
      %5221 = vmatpush1.bf16.msra.mxu0 0
      %5222 = vmatprep.subr.bf16.mxu0 0
      %5223 = vmatpush1.bf16.msra.mxu0 0
      %5224 = vmatprep.subr.bf16.mxu0 0
      %5225 = vmatpush1.bf16.msra.mxu0 0
      %5226 = vmatprep.mubr.bf16.mxu0 0
      %5227 = vmatmul.mubr.bf16.gmra.mrb[0].mxu0 %v303
      %v5228 = vpop.f32.mrb[0].mxu0
      %v5229 = vadd.f32 0.0, %v5228
      %v5230 = vpop.f32.mrb[0].mxu0
      %v5231 = vadd.f32 0.0, %v5230
      %v5232 = vpop.f32.mrb[0].mxu0
      %v5233 = vadd.f32 0.0, %v5232
      %v5234 = vpop.f32.mrb[0].mxu0
      %v5235 = vadd.f32 0.0, %v5234
      %5236 = vmatprep.mubr.bf16.mxu0 0
      %5237 = vmatmul.mubr.bf16.gmra.mrb[0].mxu0 %v306
      %v5238 = vpop.f32.mrb[0].mxu0
      %v5239 = vadd.f32 0.0, %v5238
      %v5240 = vpop.f32.mrb[0].mxu0
      %v5241 = vadd.f32 0.0, %v5240
      %v5242 = vpop.f32.mrb[0].mxu0
      %v5243 = vadd.f32 0.0, %v5242
      %v5244 = vpop.f32.mrb[0].mxu0
      %v5245 = vadd.f32 0.0, %v5244
      %5246 = vdwg.mxu0
      %5247 = vmatprep.subr.bf16.mxu0 %v5047
      %5248 = vmatpush1.bf16.msra.mxu0 %v5046
      %5249 = vmatprep.subr.bf16.mxu0 %v5086
      %5250 = vmatpush1.bf16.msra.mxu0 %v5083
      %5251 = vmatprep.subr.bf16.mxu0 0
      %5252 = vmatpush1.bf16.msra.mxu0 0
      %5253 = vmatprep.subr.bf16.mxu0 0
      %5254 = vmatpush1.bf16.msra.mxu0 0
      %5255 = vmatprep.subr.bf16.mxu0 0
      %5256 = vmatpush1.bf16.msra.mxu0 0
      %5257 = vmatprep.subr.bf16.mxu0 0
      %5258 = vmatpush1.bf16.msra.mxu0 0
      %5259 = vmatprep.subr.bf16.mxu0 0
      %5260 = vmatpush1.bf16.msra.mxu0 0
      %5261 = vmatprep.subr.bf16.mxu0 0
      %5262 = vmatpush1.bf16.msra.mxu0 0
      %5263 = vmatprep.subr.bf16.mxu0 0
      %5264 = vmatpush1.bf16.msra.mxu0 0
      %5265 = vmatprep.subr.bf16.mxu0 0
      %5266 = vmatpush1.bf16.msra.mxu0 0
      %5267 = vmatprep.subr.bf16.mxu0 0
      %5268 = vmatpush1.bf16.msra.mxu0 0
      %5269 = vmatprep.subr.bf16.mxu0 0
      %5270 = vmatpush1.bf16.msra.mxu0 0
      %5271 = vmatprep.subr.bf16.mxu0 0
      %5272 = vmatpush1.bf16.msra.mxu0 0
      %5273 = vmatprep.subr.bf16.mxu0 0
      %5274 = vmatpush1.bf16.msra.mxu0 0
      %5275 = vmatprep.subr.bf16.mxu0 0
      %5276 = vmatpush1.bf16.msra.mxu0 0
      %5277 = vmatprep.subr.bf16.mxu0 0
      %5278 = vmatpush1.bf16.msra.mxu0 0
      %5279 = vmatprep.mubr.bf16.mxu0 0
      %5280 = vmatmul.mubr.bf16.gmra.mrb[0].mxu0 %v303
      %v5281 = vpop.f32.mrb[0].mxu0
      %v5282 = vadd.f32 0.0, %v5281
      %v5283 = vpop.f32.mrb[0].mxu0
      %v5284 = vadd.f32 0.0, %v5283
      %v5285 = vpop.f32.mrb[0].mxu0
      %v5286 = vadd.f32 0.0, %v5285
      %v5287 = vpop.f32.mrb[0].mxu0
      %v5288 = vadd.f32 0.0, %v5287
      %5289 = vmatprep.mubr.bf16.mxu0 0
      %5290 = vmatmul.mubr.bf16.gmra.mrb[0].mxu0 %v306
      %v5291 = vpop.f32.mrb[0].mxu0
      %v5292 = vadd.f32 0.0, %v5291
      %v5293 = vpop.f32.mrb[0].mxu0
      %v5294 = vadd.f32 0.0, %v5293
      %v5295 = vpop.f32.mrb[0].mxu0
      %v5296 = vadd.f32 0.0, %v5295
      %v5297 = vpop.f32.mrb[0].mxu0
      %v5298 = vadd.f32 0.0, %v5297
      %5299 = vdwg.mxu0
      %v5300 = vmax.f32 %v5123, 0.0
      %v5301 = vmax.f32 %v5125, 0.0
      %v5302 = vmax.f32 %v5176, 0.0
      %v5303 = vmax.f32 %v5178, 0.0
      %v5304 = vmax.f32 %v5229, 0.0
      %v5305 = vmax.f32 %v5231, 0.0
      %v5306 = vmax.f32 %v5282, 0.0
      %v5307 = vmax.f32 %v5284, 0.0
      %v5308 = vmax.f32 %v5127, 0.0
      %v5309 = vmax.f32 %v5129, 0.0
      %v5310 = vmax.f32 %v5180, 0.0
      %v5311 = vmax.f32 %v5182, 0.0
      %v5312 = vmax.f32 %v5233, 0.0
      %v5313 = vmax.f32 %v5235, 0.0
      %v5314 = vmax.f32 %v5286, 0.0
      %v5315 = vmax.f32 %v5288, 0.0
      %v5316 = vmax.f32 %v5133, 0.0
      %v5317 = vmax.f32 %v5135, 0.0
      %v5318 = vmax.f32 %v5186, 0.0
      %v5319 = vmax.f32 %v5188, 0.0
      %v5320 = vmax.f32 %v5239, 0.0
      %v5321 = vmax.f32 %v5241, 0.0
      %v5322 = vmax.f32 %v5292, 0.0
      %v5323 = vmax.f32 %v5294, 0.0
      %v5324 = vmax.f32 %v5137, 0.0
      %v5325 = vmax.f32 %v5139, 0.0
      %v5326 = vmax.f32 %v5190, 0.0
      %v5327 = vmax.f32 %v5192, 0.0
      %v5328 = vmax.f32 %v5243, 0.0
      %v5329 = vmax.f32 %v5245, 0.0
      %v5330 = vmax.f32 %v5296, 0.0
      %v5331 = vmax.f32 %v5298, 0.0
      %v5332 = vadd.f32 %v5300, %v5301
      %v5333 = vadd.f32 %v5332, %v5302
      %v5334 = vadd.f32 %v5333, %v5303
      %v5335 = vadd.f32 %v5334, %v5304
      %v5336 = vadd.f32 %v5335, %v5305
      %v5337 = vadd.f32 %v5336, %v5306
      %v5338 = vadd.f32 %v5337, %v5307
      %5339 = vadd.xlane.f32.xlu0 %v5338
      %v5340 = vpop.xlane.xlu0 %5339
      %v5341 = vadd.f32 %v5308, %v5309
      %v5342 = vadd.f32 %v5341, %v5310
      %v5343 = vadd.f32 %v5342, %v5311
      %v5344 = vadd.f32 %v5343, %v5312
      %v5345 = vadd.f32 %v5344, %v5313
      %v5346 = vadd.f32 %v5345, %v5314
      %v5347 = vadd.f32 %v5346, %v5315
      %5348 = vadd.xlane.f32.xlu0 %v5347
      %v5349 = vpop.xlane.xlu0 %5348
      %v5350 = vadd.f32 %v5316, %v5317
      %v5351 = vadd.f32 %v5350, %v5318
      %v5352 = vadd.f32 %v5351, %v5319
      %v5353 = vadd.f32 %v5352, %v5320
      %v5354 = vadd.f32 %v5353, %v5321
      %v5355 = vadd.f32 %v5354, %v5322
      %v5356 = vadd.f32 %v5355, %v5323
      %5357 = vadd.xlane.f32.xlu0 %v5356
      %v5358 = vpop.xlane.xlu0 %5357
      %v5359 = vadd.f32 %v5324, %v5325
      %v5360 = vadd.f32 %v5359, %v5326
      %v5361 = vadd.f32 %v5360, %v5327
      %v5362 = vadd.f32 %v5361, %v5328
      %v5363 = vadd.f32 %v5362, %v5329
      %v5364 = vadd.f32 %v5363, %v5330
      %v5365 = vadd.f32 %v5364, %v5331
      %5366 = vadd.xlane.f32.xlu0 %v5365
      %v5367 = vpop.xlane.xlu0 %5366
      %v5368 = vadd.f32 %v4972, %v5340
      %v5369 = vadd.f32 %v4973, %v5349
      %v5370 = vadd.f32 %v4974, %v5358
      %v5371 = vadd.f32 %v4975, %v5367
      %v5372 = vld [vmem:[%s192 + $0x1a0] sm:$0xff]
      %v5373 = vld [vmem:[%s192 + $0x1a8] sm:$0xff]
      %v5374 = vld [vmem:[%s192 + $0x1b0] sm:$0xff]
      %v5375 = vld [vmem:[%s192 + $0x1b8] sm:$0xff]
      %v5376 = vld [vmem:[%s192 + $0x460] sm:$0xff]
      %v5377 = vld [vmem:[%s192 + $0x468] sm:$0xff]
      %v5378 = vld [vmem:[%s192 + $0x470] sm:$0xff]
      %v5379 = vld [vmem:[%s192 + $0x478] sm:$0xff]
      %v5380 = vld [vmem:[%s192 + $0x720] sm:$0xff]
      %v5381 = vld [vmem:[%s192 + $0x728] sm:$0xff]
      %v5382 = vld [vmem:[%s192 + $0x730] sm:$0xff]
      %v5383 = vld [vmem:[%s192 + $0x738] sm:$0xff]
      %v5384 = vld [vmem:[%s192 + $0x9e0] sm:$0x33]
      %v5385 = vld [vmem:[%s192 + $0x9e8] sm:$0x33]
      %v5386 = vld [vmem:[%s192 + $0x9f0] sm:$0x33]
      %v5387 = vld [vmem:[%s192 + $0x9f8] sm:$0x33]
      %v5404 = vunpack.c.l.b16 %v5372
      %v5405 = vunpack.c.h.b16 %v5372
      %v5406 = vunpack.c.l.b16 %v5373
      %v5407 = vunpack.c.h.b16 %v5373
      %v5408 = vunpack.c.l.b16 %v5374
      %v5409 = vunpack.c.h.b16 %v5374
      %v5410 = vunpack.c.l.b16 %v5375
      %v5411 = vunpack.c.h.b16 %v5375
      %v5412 = vunpack.c.l.b16 %v5376
      %v5413 = vunpack.c.h.b16 %v5376
      %v5414 = vunpack.c.l.b16 %v5377
      %v5415 = vunpack.c.h.b16 %v5377
      %v5416 = vunpack.c.l.b16 %v5378
      %v5417 = vunpack.c.h.b16 %v5378
      %v5418 = vunpack.c.l.b16 %v5379
      %v5419 = vunpack.c.h.b16 %v5379
      %v5420 = vunpack.c.l.b16 %v5380
      %v5421 = vunpack.c.h.b16 %v5380
      %v5422 = vunpack.c.l.b16 %v5381
      %v5423 = vunpack.c.h.b16 %v5381
      %v5424 = vunpack.c.l.b16 %v5382
      %v5425 = vunpack.c.h.b16 %v5382
      %v5426 = vunpack.c.l.b16 %v5383
      %v5427 = vunpack.c.h.b16 %v5383
      %v5428 = vunpack.c.l.b16 %v5384
      %v5429 = vunpack.c.h.b16 %v5384
      %v5430 = vunpack.c.l.b16 %v5385
      %v5431 = vunpack.c.h.b16 %v5385
      %v5432 = vunpack.c.l.b16 %v5386
      %v5433 = vunpack.c.h.b16 %v5386
      %v5434 = vunpack.c.l.b16 %v5387
      %v5435 = vunpack.c.h.b16 %v5387
      %v5436 = vpack.c.b16 %v5412, %v5404
      %v5437 = vpack.c.b16 %v5413, %v5405
      %v5438 = vpack.c.b16 %v5414, %v5406
      %v5439 = vpack.c.b16 %v5415, %v5407
      %v5440 = vpack.c.b16 %v5416, %v5408
      %v5441 = vpack.c.b16 %v5417, %v5409
      %v5442 = vpack.c.b16 %v5418, %v5410
      %v5443 = vpack.c.b16 %v5419, %v5411
      %v5444 = vpack.c.b16 %v5428, %v5420
      %v5445 = vpack.c.b16 %v5429, %v5421
      %v5446 = vpack.c.b16 %v5430, %v5422
      %v5447 = vpack.c.b16 %v5431, %v5423
      %v5448 = vpack.c.b16 %v5432, %v5424
      %v5449 = vpack.c.b16 %v5433, %v5425
      %v5450 = vpack.c.b16 %v5434, %v5426
      %v5451 = vpack.c.b16 %v5435, %v5427
      %v5461 = vand.u32 %v5444, %v311
      %v5464 = vand.u32 %v5445, %v311
      %v5467 = vand.u32 %v5446, %v311
      %v5470 = vand.u32 %v5447, %v311
      %v5473 = vand.u32 %v5448, %v311
      %v5476 = vand.u32 %v5449, %v311
      %v5479 = vand.u32 %v5450, %v311
      %v5482 = vand.u32 %v5451, %v311
      %5484 = vmatprep.subr.bf16.mxu0 %v5437
      %5485 = vmatpush1.bf16.msra.mxu0 %v5436
      %5486 = vmatprep.subr.bf16.mxu0 %v5464
      %5487 = vmatpush1.bf16.msra.mxu0 %v5461
      %5488 = vmatprep.subr.bf16.mxu0 0
      %5489 = vmatpush1.bf16.msra.mxu0 0
      %5490 = vmatprep.subr.bf16.mxu0 0
      %5491 = vmatpush1.bf16.msra.mxu0 0
      %5492 = vmatprep.subr.bf16.mxu0 0
      %5493 = vmatpush1.bf16.msra.mxu0 0
      %5494 = vmatprep.subr.bf16.mxu0 0
      %5495 = vmatpush1.bf16.msra.mxu0 0
      %5496 = vmatprep.subr.bf16.mxu0 0
      %5497 = vmatpush1.bf16.msra.mxu0 0
      %5498 = vmatprep.subr.bf16.mxu0 0
      %5499 = vmatpush1.bf16.msra.mxu0 0
      %5500 = vmatprep.subr.bf16.mxu0 0
      %5501 = vmatpush1.bf16.msra.mxu0 0
      %5502 = vmatprep.subr.bf16.mxu0 0
      %5503 = vmatpush1.bf16.msra.mxu0 0
      %5504 = vmatprep.subr.bf16.mxu0 0
      %5505 = vmatpush1.bf16.msra.mxu0 0
      %5506 = vmatprep.subr.bf16.mxu0 0
      %5507 = vmatpush1.bf16.msra.mxu0 0
      %5508 = vmatprep.subr.bf16.mxu0 0
      %5509 = vmatpush1.bf16.msra.mxu0 0
      %5510 = vmatprep.subr.bf16.mxu0 0
      %5511 = vmatpush1.bf16.msra.mxu0 0
      %5512 = vmatprep.subr.bf16.mxu0 0
      %5513 = vmatpush1.bf16.msra.mxu0 0
      %5514 = vmatprep.subr.bf16.mxu0 0
      %5515 = vmatpush1.bf16.msra.mxu0 0
      %5516 = vmatprep.mubr.bf16.mxu0 0
      %5517 = vmatmul.mubr.bf16.gmra.mrb[0].mxu0 %v303
      %v5518 = vpop.f32.mrb[0].mxu0
      %v5519 = vadd.f32 0.0, %v5518
      %v5520 = vpop.f32.mrb[0].mxu0
      %v5521 = vadd.f32 0.0, %v5520
      %v5522 = vpop.f32.mrb[0].mxu0
      %v5523 = vadd.f32 0.0, %v5522
      %v5524 = vpop.f32.mrb[0].mxu0
      %v5525 = vadd.f32 0.0, %v5524
      %5526 = vmatprep.mubr.bf16.mxu0 0
      %5527 = vmatmul.mubr.bf16.gmra.mrb[0].mxu0 %v306
      %v5528 = vpop.f32.mrb[0].mxu0
      %v5529 = vadd.f32 0.0, %v5528
      %v5530 = vpop.f32.mrb[0].mxu0
      %v5531 = vadd.f32 0.0, %v5530
      %v5532 = vpop.f32.mrb[0].mxu0
      %v5533 = vadd.f32 0.0, %v5532
      %v5534 = vpop.f32.mrb[0].mxu0
      %v5535 = vadd.f32 0.0, %v5534
      %5536 = vdwg.mxu0
      %5537 = vmatprep.subr.bf16.mxu0 %v5439
      %5538 = vmatpush1.bf16.msra.mxu0 %v5438
      %5539 = vmatprep.subr.bf16.mxu0 %v5470
      %5540 = vmatpush1.bf16.msra.mxu0 %v5467
      %5541 = vmatprep.subr.bf16.mxu0 0
      %5542 = vmatpush1.bf16.msra.mxu0 0
      %5543 = vmatprep.subr.bf16.mxu0 0
      %5544 = vmatpush1.bf16.msra.mxu0 0
      %5545 = vmatprep.subr.bf16.mxu0 0
      %5546 = vmatpush1.bf16.msra.mxu0 0
      %5547 = vmatprep.subr.bf16.mxu0 0
      %5548 = vmatpush1.bf16.msra.mxu0 0
      %5549 = vmatprep.subr.bf16.mxu0 0
      %5550 = vmatpush1.bf16.msra.mxu0 0
      %5551 = vmatprep.subr.bf16.mxu0 0
      %5552 = vmatpush1.bf16.msra.mxu0 0
      %5553 = vmatprep.subr.bf16.mxu0 0
      %5554 = vmatpush1.bf16.msra.mxu0 0
      %5555 = vmatprep.subr.bf16.mxu0 0
      %5556 = vmatpush1.bf16.msra.mxu0 0
      %5557 = vmatprep.subr.bf16.mxu0 0
      %5558 = vmatpush1.bf16.msra.mxu0 0
      %5559 = vmatprep.subr.bf16.mxu0 0
      %5560 = vmatpush1.bf16.msra.mxu0 0
      %5561 = vmatprep.subr.bf16.mxu0 0
      %5562 = vmatpush1.bf16.msra.mxu0 0
      %5563 = vmatprep.subr.bf16.mxu0 0
      %5564 = vmatpush1.bf16.msra.mxu0 0
      %5565 = vmatprep.subr.bf16.mxu0 0
      %5566 = vmatpush1.bf16.msra.mxu0 0
      %5567 = vmatprep.subr.bf16.mxu0 0
      %5568 = vmatpush1.bf16.msra.mxu0 0
      %5569 = vmatprep.mubr.bf16.mxu0 0
      %5570 = vmatmul.mubr.bf16.gmra.mrb[0].mxu0 %v303
      %v5571 = vpop.f32.mrb[0].mxu0
      %v5572 = vadd.f32 0.0, %v5571
      %v5573 = vpop.f32.mrb[0].mxu0
      %v5574 = vadd.f32 0.0, %v5573
      %v5575 = vpop.f32.mrb[0].mxu0
      %v5576 = vadd.f32 0.0, %v5575
      %v5577 = vpop.f32.mrb[0].mxu0
      %v5578 = vadd.f32 0.0, %v5577
      %5579 = vmatprep.mubr.bf16.mxu0 0
      %5580 = vmatmul.mubr.bf16.gmra.mrb[0].mxu0 %v306
      %v5581 = vpop.f32.mrb[0].mxu0
      %v5582 = vadd.f32 0.0, %v5581
      %v5583 = vpop.f32.mrb[0].mxu0
      %v5584 = vadd.f32 0.0, %v5583
      %v5585 = vpop.f32.mrb[0].mxu0
      %v5586 = vadd.f32 0.0, %v5585
      %v5587 = vpop.f32.mrb[0].mxu0
      %v5588 = vadd.f32 0.0, %v5587
      %5589 = vdwg.mxu0
      %5590 = vmatprep.subr.bf16.mxu0 %v5441
      %5591 = vmatpush1.bf16.msra.mxu0 %v5440
      %5592 = vmatprep.subr.bf16.mxu0 %v5476
      %5593 = vmatpush1.bf16.msra.mxu0 %v5473
      %5594 = vmatprep.subr.bf16.mxu0 0
      %5595 = vmatpush1.bf16.msra.mxu0 0
      %5596 = vmatprep.subr.bf16.mxu0 0
      %5597 = vmatpush1.bf16.msra.mxu0 0
      %5598 = vmatprep.subr.bf16.mxu0 0
      %5599 = vmatpush1.bf16.msra.mxu0 0
      %5600 = vmatprep.subr.bf16.mxu0 0
      %5601 = vmatpush1.bf16.msra.mxu0 0
      %5602 = vmatprep.subr.bf16.mxu0 0
      %5603 = vmatpush1.bf16.msra.mxu0 0
      %5604 = vmatprep.subr.bf16.mxu0 0
      %5605 = vmatpush1.bf16.msra.mxu0 0
      %5606 = vmatprep.subr.bf16.mxu0 0
      %5607 = vmatpush1.bf16.msra.mxu0 0
      %5608 = vmatprep.subr.bf16.mxu0 0
      %5609 = vmatpush1.bf16.msra.mxu0 0
      %5610 = vmatprep.subr.bf16.mxu0 0
      %5611 = vmatpush1.bf16.msra.mxu0 0
      %5612 = vmatprep.subr.bf16.mxu0 0
      %5613 = vmatpush1.bf16.msra.mxu0 0
      %5614 = vmatprep.subr.bf16.mxu0 0
      %5615 = vmatpush1.bf16.msra.mxu0 0
      %5616 = vmatprep.subr.bf16.mxu0 0
      %5617 = vmatpush1.bf16.msra.mxu0 0
      %5618 = vmatprep.subr.bf16.mxu0 0
      %5619 = vmatpush1.bf16.msra.mxu0 0
      %5620 = vmatprep.subr.bf16.mxu0 0
      %5621 = vmatpush1.bf16.msra.mxu0 0
      %5622 = vmatprep.mubr.bf16.mxu0 0
      %5623 = vmatmul.mubr.bf16.gmra.mrb[0].mxu0 %v303
      %v5624 = vpop.f32.mrb[0].mxu0
      %v5625 = vadd.f32 0.0, %v5624
      %v5626 = vpop.f32.mrb[0].mxu0
      %v5627 = vadd.f32 0.0, %v5626
      %v5628 = vpop.f32.mrb[0].mxu0
      %v5629 = vadd.f32 0.0, %v5628
      %v5630 = vpop.f32.mrb[0].mxu0
      %v5631 = vadd.f32 0.0, %v5630
      %5632 = vmatprep.mubr.bf16.mxu0 0
      %5633 = vmatmul.mubr.bf16.gmra.mrb[0].mxu0 %v306
      %v5634 = vpop.f32.mrb[0].mxu0
      %v5635 = vadd.f32 0.0, %v5634
      %v5636 = vpop.f32.mrb[0].mxu0
      %v5637 = vadd.f32 0.0, %v5636
      %v5638 = vpop.f32.mrb[0].mxu0
      %v5639 = vadd.f32 0.0, %v5638
      %v5640 = vpop.f32.mrb[0].mxu0
      %v5641 = vadd.f32 0.0, %v5640
      %5642 = vdwg.mxu0
      %5643 = vmatprep.subr.bf16.mxu0 %v5443
      %5644 = vmatpush1.bf16.msra.mxu0 %v5442
      %5645 = vmatprep.subr.bf16.mxu0 %v5482
      %5646 = vmatpush1.bf16.msra.mxu0 %v5479
      %5647 = vmatprep.subr.bf16.mxu0 0
      %5648 = vmatpush1.bf16.msra.mxu0 0
      %5649 = vmatprep.subr.bf16.mxu0 0
      %5650 = vmatpush1.bf16.msra.mxu0 0
      %5651 = vmatprep.subr.bf16.mxu0 0
      %5652 = vmatpush1.bf16.msra.mxu0 0
      %5653 = vmatprep.subr.bf16.mxu0 0
      %5654 = vmatpush1.bf16.msra.mxu0 0
      %5655 = vmatprep.subr.bf16.mxu0 0
      %5656 = vmatpush1.bf16.msra.mxu0 0
      %5657 = vmatprep.subr.bf16.mxu0 0
      %5658 = vmatpush1.bf16.msra.mxu0 0
      %5659 = vmatprep.subr.bf16.mxu0 0
      %5660 = vmatpush1.bf16.msra.mxu0 0
      %5661 = vmatprep.subr.bf16.mxu0 0
      %5662 = vmatpush1.bf16.msra.mxu0 0
      %5663 = vmatprep.subr.bf16.mxu0 0
      %5664 = vmatpush1.bf16.msra.mxu0 0
      %5665 = vmatprep.subr.bf16.mxu0 0
      %5666 = vmatpush1.bf16.msra.mxu0 0
      %5667 = vmatprep.subr.bf16.mxu0 0
      %5668 = vmatpush1.bf16.msra.mxu0 0
      %5669 = vmatprep.subr.bf16.mxu0 0
      %5670 = vmatpush1.bf16.msra.mxu0 0
      %5671 = vmatprep.subr.bf16.mxu0 0
      %5672 = vmatpush1.bf16.msra.mxu0 0
      %5673 = vmatprep.subr.bf16.mxu0 0
      %5674 = vmatpush1.bf16.msra.mxu0 0
      %5675 = vmatprep.mubr.bf16.mxu0 0
      %5676 = vmatmul.mubr.bf16.gmra.mrb[0].mxu0 %v303
      %v5677 = vpop.f32.mrb[0].mxu0
      %v5678 = vadd.f32 0.0, %v5677
      %v5679 = vpop.f32.mrb[0].mxu0
      %v5680 = vadd.f32 0.0, %v5679
      %v5681 = vpop.f32.mrb[0].mxu0
      %v5682 = vadd.f32 0.0, %v5681
      %v5683 = vpop.f32.mrb[0].mxu0
      %v5684 = vadd.f32 0.0, %v5683
      %5685 = vmatprep.mubr.bf16.mxu0 0
      %5686 = vmatmul.mubr.bf16.gmra.mrb[0].mxu0 %v306
      %v5687 = vpop.f32.mrb[0].mxu0
      %v5688 = vadd.f32 0.0, %v5687
      %v5689 = vpop.f32.mrb[0].mxu0
      %v5690 = vadd.f32 0.0, %v5689
      %v5691 = vpop.f32.mrb[0].mxu0
      %v5692 = vadd.f32 0.0, %v5691
      %v5693 = vpop.f32.mrb[0].mxu0
      %v5694 = vadd.f32 0.0, %v5693
      %5695 = vdwg.mxu0
      %v5696 = vmax.f32 %v5519, 0.0
      %v5697 = vmax.f32 %v5521, 0.0
      %v5698 = vmax.f32 %v5572, 0.0
      %v5699 = vmax.f32 %v5574, 0.0
      %v5700 = vmax.f32 %v5625, 0.0
      %v5701 = vmax.f32 %v5627, 0.0
      %v5702 = vmax.f32 %v5678, 0.0
      %v5703 = vmax.f32 %v5680, 0.0
      %v5704 = vmax.f32 %v5523, 0.0
      %v5705 = vmax.f32 %v5525, 0.0
      %v5706 = vmax.f32 %v5576, 0.0
      %v5707 = vmax.f32 %v5578, 0.0
      %v5708 = vmax.f32 %v5629, 0.0
      %v5709 = vmax.f32 %v5631, 0.0
      %v5710 = vmax.f32 %v5682, 0.0
      %v5711 = vmax.f32 %v5684, 0.0
      %v5712 = vmax.f32 %v5529, 0.0
      %v5713 = vmax.f32 %v5531, 0.0
      %v5714 = vmax.f32 %v5582, 0.0
      %v5715 = vmax.f32 %v5584, 0.0
      %v5716 = vmax.f32 %v5635, 0.0
      %v5717 = vmax.f32 %v5637, 0.0
      %v5718 = vmax.f32 %v5688, 0.0
      %v5719 = vmax.f32 %v5690, 0.0
      %v5720 = vmax.f32 %v5533, 0.0
      %v5721 = vmax.f32 %v5535, 0.0
      %v5722 = vmax.f32 %v5586, 0.0
      %v5723 = vmax.f32 %v5588, 0.0
      %v5724 = vmax.f32 %v5639, 0.0
      %v5725 = vmax.f32 %v5641, 0.0
      %v5726 = vmax.f32 %v5692, 0.0
      %v5727 = vmax.f32 %v5694, 0.0
      %v5728 = vadd.f32 %v5696, %v5697
      %v5729 = vadd.f32 %v5728, %v5698
      %v5730 = vadd.f32 %v5729, %v5699
      %v5731 = vadd.f32 %v5730, %v5700
      %v5732 = vadd.f32 %v5731, %v5701
      %v5733 = vadd.f32 %v5732, %v5702
      %v5734 = vadd.f32 %v5733, %v5703
      %5735 = vadd.xlane.f32.xlu0 %v5734
      %v5736 = vpop.xlane.xlu0 %5735
      %v5737 = vadd.f32 %v5704, %v5705
      %v5738 = vadd.f32 %v5737, %v5706
      %v5739 = vadd.f32 %v5738, %v5707
      %v5740 = vadd.f32 %v5739, %v5708
      %v5741 = vadd.f32 %v5740, %v5709
      %v5742 = vadd.f32 %v5741, %v5710
      %v5743 = vadd.f32 %v5742, %v5711
      %5744 = vadd.xlane.f32.xlu0 %v5743
      %v5745 = vpop.xlane.xlu0 %5744
      %v5746 = vadd.f32 %v5712, %v5713
      %v5747 = vadd.f32 %v5746, %v5714
      %v5748 = vadd.f32 %v5747, %v5715
      %v5749 = vadd.f32 %v5748, %v5716
      %v5750 = vadd.f32 %v5749, %v5717
      %v5751 = vadd.f32 %v5750, %v5718
      %v5752 = vadd.f32 %v5751, %v5719
      %5753 = vadd.xlane.f32.xlu0 %v5752
      %v5754 = vpop.xlane.xlu0 %5753
      %v5755 = vadd.f32 %v5720, %v5721
      %v5756 = vadd.f32 %v5755, %v5722
      %v5757 = vadd.f32 %v5756, %v5723
      %v5758 = vadd.f32 %v5757, %v5724
      %v5759 = vadd.f32 %v5758, %v5725
      %v5760 = vadd.f32 %v5759, %v5726
      %v5761 = vadd.f32 %v5760, %v5727
      %5762 = vadd.xlane.f32.xlu0 %v5761
      %v5763 = vpop.xlane.xlu0 %5762
      %v5764 = vadd.f32 %v5368, %v5736
      %v5765 = vadd.f32 %v5369, %v5745
      %v5766 = vadd.f32 %v5370, %v5754
      %v5767 = vadd.f32 %v5371, %v5763
      %v5768 = vld [vmem:[%s192 + $0x1c0] sm:$0xff]
      %v5769 = vld [vmem:[%s192 + $0x1c8] sm:$0xff]
      %v5770 = vld [vmem:[%s192 + $0x1d0] sm:$0xff]
      %v5771 = vld [vmem:[%s192 + $0x1d8] sm:$0xff]
      %v5772 = vld [vmem:[%s192 + $0x480] sm:$0xff]
      %v5773 = vld [vmem:[%s192 + $0x488] sm:$0xff]
      %v5774 = vld [vmem:[%s192 + $0x490] sm:$0xff]
      %v5775 = vld [vmem:[%s192 + $0x498] sm:$0xff]
      %v5776 = vld [vmem:[%s192 + $0x740] sm:$0xff]
      %v5777 = vld [vmem:[%s192 + $0x748] sm:$0xff]
      %v5778 = vld [vmem:[%s192 + $0x750] sm:$0xff]
      %v5779 = vld [vmem:[%s192 + $0x758] sm:$0xff]
      %v5780 = vld [vmem:[%s192 + $0xa00] sm:$0x33]
      %v5781 = vld [vmem:[%s192 + $0xa08] sm:$0x33]
      %v5782 = vld [vmem:[%s192 + $0xa10] sm:$0x33]
      %v5783 = vld [vmem:[%s192 + $0xa18] sm:$0x33]
      %v5800 = vunpack.c.l.b16 %v5768
      %v5801 = vunpack.c.h.b16 %v5768
      %v5802 = vunpack.c.l.b16 %v5769
      %v5803 = vunpack.c.h.b16 %v5769
      %v5804 = vunpack.c.l.b16 %v5770
      %v5805 = vunpack.c.h.b16 %v5770
      %v5806 = vunpack.c.l.b16 %v5771
      %v5807 = vunpack.c.h.b16 %v5771
      %v5808 = vunpack.c.l.b16 %v5772
      %v5809 = vunpack.c.h.b16 %v5772
      %v5810 = vunpack.c.l.b16 %v5773
      %v5811 = vunpack.c.h.b16 %v5773
      %v5812 = vunpack.c.l.b16 %v5774
      %v5813 = vunpack.c.h.b16 %v5774
      %v5814 = vunpack.c.l.b16 %v5775
      %v5815 = vunpack.c.h.b16 %v5775
      %v5816 = vunpack.c.l.b16 %v5776
      %v5817 = vunpack.c.h.b16 %v5776
      %v5818 = vunpack.c.l.b16 %v5777
      %v5819 = vunpack.c.h.b16 %v5777
      %v5820 = vunpack.c.l.b16 %v5778
      %v5821 = vunpack.c.h.b16 %v5778
      %v5822 = vunpack.c.l.b16 %v5779
      %v5823 = vunpack.c.h.b16 %v5779
      %v5824 = vunpack.c.l.b16 %v5780
      %v5825 = vunpack.c.h.b16 %v5780
      %v5826 = vunpack.c.l.b16 %v5781
      %v5827 = vunpack.c.h.b16 %v5781
      %v5828 = vunpack.c.l.b16 %v5782
      %v5829 = vunpack.c.h.b16 %v5782
      %v5830 = vunpack.c.l.b16 %v5783
      %v5831 = vunpack.c.h.b16 %v5783
      %v5832 = vpack.c.b16 %v5808, %v5800
      %v5833 = vpack.c.b16 %v5809, %v5801
      %v5834 = vpack.c.b16 %v5810, %v5802
      %v5835 = vpack.c.b16 %v5811, %v5803
      %v5836 = vpack.c.b16 %v5812, %v5804
      %v5837 = vpack.c.b16 %v5813, %v5805
      %v5838 = vpack.c.b16 %v5814, %v5806
      %v5839 = vpack.c.b16 %v5815, %v5807
      %v5840 = vpack.c.b16 %v5824, %v5816
      %v5841 = vpack.c.b16 %v5825, %v5817
      %v5842 = vpack.c.b16 %v5826, %v5818
      %v5843 = vpack.c.b16 %v5827, %v5819
      %v5844 = vpack.c.b16 %v5828, %v5820
      %v5845 = vpack.c.b16 %v5829, %v5821
      %v5846 = vpack.c.b16 %v5830, %v5822
      %v5847 = vpack.c.b16 %v5831, %v5823
      %v5857 = vand.u32 %v5840, %v311
      %v5860 = vand.u32 %v5841, %v311
      %v5863 = vand.u32 %v5842, %v311
      %v5866 = vand.u32 %v5843, %v311
      %v5869 = vand.u32 %v5844, %v311
      %v5872 = vand.u32 %v5845, %v311
      %v5875 = vand.u32 %v5846, %v311
      %v5878 = vand.u32 %v5847, %v311
      %5880 = vmatprep.subr.bf16.mxu0 %v5833
      %5881 = vmatpush1.bf16.msra.mxu0 %v5832
      %5882 = vmatprep.subr.bf16.mxu0 %v5860
      %5883 = vmatpush1.bf16.msra.mxu0 %v5857
      %5884 = vmatprep.subr.bf16.mxu0 0
      %5885 = vmatpush1.bf16.msra.mxu0 0
      %5886 = vmatprep.subr.bf16.mxu0 0
      %5887 = vmatpush1.bf16.msra.mxu0 0
      %5888 = vmatprep.subr.bf16.mxu0 0
      %5889 = vmatpush1.bf16.msra.mxu0 0
      %5890 = vmatprep.subr.bf16.mxu0 0
      %5891 = vmatpush1.bf16.msra.mxu0 0
      %5892 = vmatprep.subr.bf16.mxu0 0
      %5893 = vmatpush1.bf16.msra.mxu0 0
      %5894 = vmatprep.subr.bf16.mxu0 0
      %5895 = vmatpush1.bf16.msra.mxu0 0
      %5896 = vmatprep.subr.bf16.mxu0 0
      %5897 = vmatpush1.bf16.msra.mxu0 0
      %5898 = vmatprep.subr.bf16.mxu0 0
      %5899 = vmatpush1.bf16.msra.mxu0 0
      %5900 = vmatprep.subr.bf16.mxu0 0
      %5901 = vmatpush1.bf16.msra.mxu0 0
      %5902 = vmatprep.subr.bf16.mxu0 0
      %5903 = vmatpush1.bf16.msra.mxu0 0
      %5904 = vmatprep.subr.bf16.mxu0 0
      %5905 = vmatpush1.bf16.msra.mxu0 0
      %5906 = vmatprep.subr.bf16.mxu0 0
      %5907 = vmatpush1.bf16.msra.mxu0 0
      %5908 = vmatprep.subr.bf16.mxu0 0
      %5909 = vmatpush1.bf16.msra.mxu0 0
      %5910 = vmatprep.subr.bf16.mxu0 0
      %5911 = vmatpush1.bf16.msra.mxu0 0
      %5912 = vmatprep.mubr.bf16.mxu0 0
      %5913 = vmatmul.mubr.bf16.gmra.mrb[0].mxu0 %v303
      %v5914 = vpop.f32.mrb[0].mxu0
      %v5915 = vadd.f32 0.0, %v5914
      %v5916 = vpop.f32.mrb[0].mxu0
      %v5917 = vadd.f32 0.0, %v5916
      %v5918 = vpop.f32.mrb[0].mxu0
      %v5919 = vadd.f32 0.0, %v5918
      %v5920 = vpop.f32.mrb[0].mxu0
      %v5921 = vadd.f32 0.0, %v5920
      %5922 = vmatprep.mubr.bf16.mxu0 0
      %5923 = vmatmul.mubr.bf16.gmra.mrb[0].mxu0 %v306
      %v5924 = vpop.f32.mrb[0].mxu0
      %v5925 = vadd.f32 0.0, %v5924
      %v5926 = vpop.f32.mrb[0].mxu0
      %v5927 = vadd.f32 0.0, %v5926
      %v5928 = vpop.f32.mrb[0].mxu0
      %v5929 = vadd.f32 0.0, %v5928
      %v5930 = vpop.f32.mrb[0].mxu0
      %v5931 = vadd.f32 0.0, %v5930
      %5932 = vdwg.mxu0
      %5933 = vmatprep.subr.bf16.mxu0 %v5835
      %5934 = vmatpush1.bf16.msra.mxu0 %v5834
      %5935 = vmatprep.subr.bf16.mxu0 %v5866
      %5936 = vmatpush1.bf16.msra.mxu0 %v5863
      %5937 = vmatprep.subr.bf16.mxu0 0
      %5938 = vmatpush1.bf16.msra.mxu0 0
      %5939 = vmatprep.subr.bf16.mxu0 0
      %5940 = vmatpush1.bf16.msra.mxu0 0
      %5941 = vmatprep.subr.bf16.mxu0 0
      %5942 = vmatpush1.bf16.msra.mxu0 0
      %5943 = vmatprep.subr.bf16.mxu0 0
      %5944 = vmatpush1.bf16.msra.mxu0 0
      %5945 = vmatprep.subr.bf16.mxu0 0
      %5946 = vmatpush1.bf16.msra.mxu0 0
      %5947 = vmatprep.subr.bf16.mxu0 0
      %5948 = vmatpush1.bf16.msra.mxu0 0
      %5949 = vmatprep.subr.bf16.mxu0 0
      %5950 = vmatpush1.bf16.msra.mxu0 0
      %5951 = vmatprep.subr.bf16.mxu0 0
      %5952 = vmatpush1.bf16.msra.mxu0 0
      %5953 = vmatprep.subr.bf16.mxu0 0
      %5954 = vmatpush1.bf16.msra.mxu0 0
      %5955 = vmatprep.subr.bf16.mxu0 0
      %5956 = vmatpush1.bf16.msra.mxu0 0
      %5957 = vmatprep.subr.bf16.mxu0 0
      %5958 = vmatpush1.bf16.msra.mxu0 0
      %5959 = vmatprep.subr.bf16.mxu0 0
      %5960 = vmatpush1.bf16.msra.mxu0 0
      %5961 = vmatprep.subr.bf16.mxu0 0
      %5962 = vmatpush1.bf16.msra.mxu0 0
      %5963 = vmatprep.subr.bf16.mxu0 0
      %5964 = vmatpush1.bf16.msra.mxu0 0
      %5965 = vmatprep.mubr.bf16.mxu0 0
      %5966 = vmatmul.mubr.bf16.gmra.mrb[0].mxu0 %v303
      %v5967 = vpop.f32.mrb[0].mxu0
      %v5968 = vadd.f32 0.0, %v5967
      %v5969 = vpop.f32.mrb[0].mxu0
      %v5970 = vadd.f32 0.0, %v5969
      %v5971 = vpop.f32.mrb[0].mxu0
      %v5972 = vadd.f32 0.0, %v5971
      %v5973 = vpop.f32.mrb[0].mxu0
      %v5974 = vadd.f32 0.0, %v5973
      %5975 = vmatprep.mubr.bf16.mxu0 0
      %5976 = vmatmul.mubr.bf16.gmra.mrb[0].mxu0 %v306
      %v5977 = vpop.f32.mrb[0].mxu0
      %v5978 = vadd.f32 0.0, %v5977
      %v5979 = vpop.f32.mrb[0].mxu0
      %v5980 = vadd.f32 0.0, %v5979
      %v5981 = vpop.f32.mrb[0].mxu0
      %v5982 = vadd.f32 0.0, %v5981
      %v5983 = vpop.f32.mrb[0].mxu0
      %v5984 = vadd.f32 0.0, %v5983
      %5985 = vdwg.mxu0
      %5986 = vmatprep.subr.bf16.mxu0 %v5837
      %5987 = vmatpush1.bf16.msra.mxu0 %v5836
      %5988 = vmatprep.subr.bf16.mxu0 %v5872
      %5989 = vmatpush1.bf16.msra.mxu0 %v5869
      %5990 = vmatprep.subr.bf16.mxu0 0
      %5991 = vmatpush1.bf16.msra.mxu0 0
      %5992 = vmatprep.subr.bf16.mxu0 0
      %5993 = vmatpush1.bf16.msra.mxu0 0
      %5994 = vmatprep.subr.bf16.mxu0 0
      %5995 = vmatpush1.bf16.msra.mxu0 0
      %5996 = vmatprep.subr.bf16.mxu0 0
      %5997 = vmatpush1.bf16.msra.mxu0 0
      %5998 = vmatprep.subr.bf16.mxu0 0
      %5999 = vmatpush1.bf16.msra.mxu0 0
      %6000 = vmatprep.subr.bf16.mxu0 0
      %6001 = vmatpush1.bf16.msra.mxu0 0
      %6002 = vmatprep.subr.bf16.mxu0 0
      %6003 = vmatpush1.bf16.msra.mxu0 0
      %6004 = vmatprep.subr.bf16.mxu0 0
      %6005 = vmatpush1.bf16.msra.mxu0 0
      %6006 = vmatprep.subr.bf16.mxu0 0
      %6007 = vmatpush1.bf16.msra.mxu0 0
      %6008 = vmatprep.subr.bf16.mxu0 0
      %6009 = vmatpush1.bf16.msra.mxu0 0
      %6010 = vmatprep.subr.bf16.mxu0 0
      %6011 = vmatpush1.bf16.msra.mxu0 0
      %6012 = vmatprep.subr.bf16.mxu0 0
      %6013 = vmatpush1.bf16.msra.mxu0 0
      %6014 = vmatprep.subr.bf16.mxu0 0
      %6015 = vmatpush1.bf16.msra.mxu0 0
      %6016 = vmatprep.subr.bf16.mxu0 0
      %6017 = vmatpush1.bf16.msra.mxu0 0
      %6018 = vmatprep.mubr.bf16.mxu0 0
      %6019 = vmatmul.mubr.bf16.gmra.mrb[0].mxu0 %v303
      %v6020 = vpop.f32.mrb[0].mxu0
      %v6021 = vadd.f32 0.0, %v6020
      %v6022 = vpop.f32.mrb[0].mxu0
      %v6023 = vadd.f32 0.0, %v6022
      %v6024 = vpop.f32.mrb[0].mxu0
      %v6025 = vadd.f32 0.0, %v6024
      %v6026 = vpop.f32.mrb[0].mxu0
      %v6027 = vadd.f32 0.0, %v6026
      %6028 = vmatprep.mubr.bf16.mxu0 0
      %6029 = vmatmul.mubr.bf16.gmra.mrb[0].mxu0 %v306
      %v6030 = vpop.f32.mrb[0].mxu0
      %v6031 = vadd.f32 0.0, %v6030
      %v6032 = vpop.f32.mrb[0].mxu0
      %v6033 = vadd.f32 0.0, %v6032
      %v6034 = vpop.f32.mrb[0].mxu0
      %v6035 = vadd.f32 0.0, %v6034
      %v6036 = vpop.f32.mrb[0].mxu0
      %v6037 = vadd.f32 0.0, %v6036
      %6038 = vdwg.mxu0
      %6039 = vmatprep.subr.bf16.mxu0 %v5839
      %6040 = vmatpush1.bf16.msra.mxu0 %v5838
      %6041 = vmatprep.subr.bf16.mxu0 %v5878
      %6042 = vmatpush1.bf16.msra.mxu0 %v5875
      %6043 = vmatprep.subr.bf16.mxu0 0
      %6044 = vmatpush1.bf16.msra.mxu0 0
      %6045 = vmatprep.subr.bf16.mxu0 0
      %6046 = vmatpush1.bf16.msra.mxu0 0
      %6047 = vmatprep.subr.bf16.mxu0 0
      %6048 = vmatpush1.bf16.msra.mxu0 0
      %6049 = vmatprep.subr.bf16.mxu0 0
      %6050 = vmatpush1.bf16.msra.mxu0 0
      %6051 = vmatprep.subr.bf16.mxu0 0
      %6052 = vmatpush1.bf16.msra.mxu0 0
      %6053 = vmatprep.subr.bf16.mxu0 0
      %6054 = vmatpush1.bf16.msra.mxu0 0
      %6055 = vmatprep.subr.bf16.mxu0 0
      %6056 = vmatpush1.bf16.msra.mxu0 0
      %6057 = vmatprep.subr.bf16.mxu0 0
      %6058 = vmatpush1.bf16.msra.mxu0 0
      %6059 = vmatprep.subr.bf16.mxu0 0
      %6060 = vmatpush1.bf16.msra.mxu0 0
      %6061 = vmatprep.subr.bf16.mxu0 0
      %6062 = vmatpush1.bf16.msra.mxu0 0
      %6063 = vmatprep.subr.bf16.mxu0 0
      %6064 = vmatpush1.bf16.msra.mxu0 0
      %6065 = vmatprep.subr.bf16.mxu0 0
      %6066 = vmatpush1.bf16.msra.mxu0 0
      %6067 = vmatprep.subr.bf16.mxu0 0
      %6068 = vmatpush1.bf16.msra.mxu0 0
      %6069 = vmatprep.subr.bf16.mxu0 0
      %6070 = vmatpush1.bf16.msra.mxu0 0
      %6071 = vmatprep.mubr.bf16.mxu0 0
      %6072 = vmatmul.mubr.bf16.gmra.mrb[0].mxu0 %v303
      %v6073 = vpop.f32.mrb[0].mxu0
      %v6074 = vadd.f32 0.0, %v6073
      %v6075 = vpop.f32.mrb[0].mxu0
      %v6076 = vadd.f32 0.0, %v6075
      %v6077 = vpop.f32.mrb[0].mxu0
      %v6078 = vadd.f32 0.0, %v6077
      %v6079 = vpop.f32.mrb[0].mxu0
      %v6080 = vadd.f32 0.0, %v6079
      %6081 = vmatprep.mubr.bf16.mxu0 0
      %6082 = vmatmul.mubr.bf16.gmra.mrb[0].mxu0 %v306
      %v6083 = vpop.f32.mrb[0].mxu0
      %v6084 = vadd.f32 0.0, %v6083
      %v6085 = vpop.f32.mrb[0].mxu0
      %v6086 = vadd.f32 0.0, %v6085
      %v6087 = vpop.f32.mrb[0].mxu0
      %v6088 = vadd.f32 0.0, %v6087
      %v6089 = vpop.f32.mrb[0].mxu0
      %v6090 = vadd.f32 0.0, %v6089
      %6091 = vdwg.mxu0
      %v6092 = vmax.f32 %v5915, 0.0
      %v6093 = vmax.f32 %v5917, 0.0
      %v6094 = vmax.f32 %v5968, 0.0
      %v6095 = vmax.f32 %v5970, 0.0
      %v6096 = vmax.f32 %v6021, 0.0
      %v6097 = vmax.f32 %v6023, 0.0
      %v6098 = vmax.f32 %v6074, 0.0
      %v6099 = vmax.f32 %v6076, 0.0
      %v6100 = vmax.f32 %v5919, 0.0
      %v6101 = vmax.f32 %v5921, 0.0
      %v6102 = vmax.f32 %v5972, 0.0
      %v6103 = vmax.f32 %v5974, 0.0
      %v6104 = vmax.f32 %v6025, 0.0
      %v6105 = vmax.f32 %v6027, 0.0
      %v6106 = vmax.f32 %v6078, 0.0
      %v6107 = vmax.f32 %v6080, 0.0
      %v6108 = vmax.f32 %v5925, 0.0
      %v6109 = vmax.f32 %v5927, 0.0
      %v6110 = vmax.f32 %v5978, 0.0
      %v6111 = vmax.f32 %v5980, 0.0
      %v6112 = vmax.f32 %v6031, 0.0
      %v6113 = vmax.f32 %v6033, 0.0
      %v6114 = vmax.f32 %v6084, 0.0
      %v6115 = vmax.f32 %v6086, 0.0
      %v6116 = vmax.f32 %v5929, 0.0
      %v6117 = vmax.f32 %v5931, 0.0
      %v6118 = vmax.f32 %v5982, 0.0
      %v6119 = vmax.f32 %v5984, 0.0
      %v6120 = vmax.f32 %v6035, 0.0
      %v6121 = vmax.f32 %v6037, 0.0
      %v6122 = vmax.f32 %v6088, 0.0
      %v6123 = vmax.f32 %v6090, 0.0
      %v6124 = vadd.f32 %v6092, %v6093
      %v6125 = vadd.f32 %v6124, %v6094
      %v6126 = vadd.f32 %v6125, %v6095
      %v6127 = vadd.f32 %v6126, %v6096
      %v6128 = vadd.f32 %v6127, %v6097
      %v6129 = vadd.f32 %v6128, %v6098
      %v6130 = vadd.f32 %v6129, %v6099
      %6131 = vadd.xlane.f32.xlu0 %v6130
      %v6132 = vpop.xlane.xlu0 %6131
      %v6133 = vadd.f32 %v6100, %v6101
      %v6134 = vadd.f32 %v6133, %v6102
      %v6135 = vadd.f32 %v6134, %v6103
      %v6136 = vadd.f32 %v6135, %v6104
      %v6137 = vadd.f32 %v6136, %v6105
      %v6138 = vadd.f32 %v6137, %v6106
      %v6139 = vadd.f32 %v6138, %v6107
      %6140 = vadd.xlane.f32.xlu0 %v6139
      %v6141 = vpop.xlane.xlu0 %6140
      %v6142 = vadd.f32 %v6108, %v6109
      %v6143 = vadd.f32 %v6142, %v6110
      %v6144 = vadd.f32 %v6143, %v6111
      %v6145 = vadd.f32 %v6144, %v6112
      %v6146 = vadd.f32 %v6145, %v6113
      %v6147 = vadd.f32 %v6146, %v6114
      %v6148 = vadd.f32 %v6147, %v6115
      %6149 = vadd.xlane.f32.xlu0 %v6148
      %v6150 = vpop.xlane.xlu0 %6149
      %v6151 = vadd.f32 %v6116, %v6117
      %v6152 = vadd.f32 %v6151, %v6118
      %v6153 = vadd.f32 %v6152, %v6119
      %v6154 = vadd.f32 %v6153, %v6120
      %v6155 = vadd.f32 %v6154, %v6121
      %v6156 = vadd.f32 %v6155, %v6122
      %v6157 = vadd.f32 %v6156, %v6123
      %6158 = vadd.xlane.f32.xlu0 %v6157
      %v6159 = vpop.xlane.xlu0 %6158
      %v6160 = vadd.f32 %v5764, %v6132
      %v6161 = vadd.f32 %v5765, %v6141
      %v6162 = vadd.f32 %v5766, %v6150
      %v6163 = vadd.f32 %v5767, %v6159
      %v6164 = vld [vmem:[%s192 + $0x1e0] sm:$0xff]
      %v6165 = vld [vmem:[%s192 + $0x1e8] sm:$0xff]
      %v6166 = vld [vmem:[%s192 + $0x1f0] sm:$0xff]
      %v6167 = vld [vmem:[%s192 + $0x1f8] sm:$0xff]
      %v6168 = vld [vmem:[%s192 + $0x4a0] sm:$0xff]
      %v6169 = vld [vmem:[%s192 + $0x4a8] sm:$0xff]
      %v6170 = vld [vmem:[%s192 + $0x4b0] sm:$0xff]
      %v6171 = vld [vmem:[%s192 + $0x4b8] sm:$0xff]
      %v6172 = vld [vmem:[%s192 + $0x760] sm:$0xff]
      %v6173 = vld [vmem:[%s192 + $0x768] sm:$0xff]
      %v6174 = vld [vmem:[%s192 + $0x770] sm:$0xff]
      %v6175 = vld [vmem:[%s192 + $0x778] sm:$0xff]
      %v6176 = vld [vmem:[%s192 + $0xa20] sm:$0x33]
      %v6177 = vld [vmem:[%s192 + $0xa28] sm:$0x33]
      %v6178 = vld [vmem:[%s192 + $0xa30] sm:$0x33]
      %v6179 = vld [vmem:[%s192 + $0xa38] sm:$0x33]
      %v6196 = vunpack.c.l.b16 %v6164
      %v6197 = vunpack.c.h.b16 %v6164
      %v6198 = vunpack.c.l.b16 %v6165
      %v6199 = vunpack.c.h.b16 %v6165
      %v6200 = vunpack.c.l.b16 %v6166
      %v6201 = vunpack.c.h.b16 %v6166
      %v6202 = vunpack.c.l.b16 %v6167
      %v6203 = vunpack.c.h.b16 %v6167
      %v6204 = vunpack.c.l.b16 %v6168
      %v6205 = vunpack.c.h.b16 %v6168
      %v6206 = vunpack.c.l.b16 %v6169
      %v6207 = vunpack.c.h.b16 %v6169
      %v6208 = vunpack.c.l.b16 %v6170
      %v6209 = vunpack.c.h.b16 %v6170
      %v6210 = vunpack.c.l.b16 %v6171
      %v6211 = vunpack.c.h.b16 %v6171
      %v6212 = vunpack.c.l.b16 %v6172
      %v6213 = vunpack.c.h.b16 %v6172
      %v6214 = vunpack.c.l.b16 %v6173
      %v6215 = vunpack.c.h.b16 %v6173
      %v6216 = vunpack.c.l.b16 %v6174
      %v6217 = vunpack.c.h.b16 %v6174
      %v6218 = vunpack.c.l.b16 %v6175
      %v6219 = vunpack.c.h.b16 %v6175
      %v6220 = vunpack.c.l.b16 %v6176
      %v6221 = vunpack.c.h.b16 %v6176
      %v6222 = vunpack.c.l.b16 %v6177
      %v6223 = vunpack.c.h.b16 %v6177
      %v6224 = vunpack.c.l.b16 %v6178
      %v6225 = vunpack.c.h.b16 %v6178
      %v6226 = vunpack.c.l.b16 %v6179
      %v6227 = vunpack.c.h.b16 %v6179
      %v6228 = vpack.c.b16 %v6204, %v6196
      %v6229 = vpack.c.b16 %v6205, %v6197
      %v6230 = vpack.c.b16 %v6206, %v6198
      %v6231 = vpack.c.b16 %v6207, %v6199
      %v6232 = vpack.c.b16 %v6208, %v6200
      %v6233 = vpack.c.b16 %v6209, %v6201
      %v6234 = vpack.c.b16 %v6210, %v6202
      %v6235 = vpack.c.b16 %v6211, %v6203
      %v6236 = vpack.c.b16 %v6220, %v6212
      %v6237 = vpack.c.b16 %v6221, %v6213
      %v6238 = vpack.c.b16 %v6222, %v6214
      %v6239 = vpack.c.b16 %v6223, %v6215
      %v6240 = vpack.c.b16 %v6224, %v6216
      %v6241 = vpack.c.b16 %v6225, %v6217
      %v6242 = vpack.c.b16 %v6226, %v6218
      %v6243 = vpack.c.b16 %v6227, %v6219
      %v6253 = vand.u32 %v6236, %v311
      %v6256 = vand.u32 %v6237, %v311
      %v6259 = vand.u32 %v6238, %v311
      %v6262 = vand.u32 %v6239, %v311
      %v6265 = vand.u32 %v6240, %v311
      %v6268 = vand.u32 %v6241, %v311
      %v6271 = vand.u32 %v6242, %v311
      %v6274 = vand.u32 %v6243, %v311
      %6276 = vmatprep.subr.bf16.mxu0 %v6229
      %6277 = vmatpush1.bf16.msra.mxu0 %v6228
      %6278 = vmatprep.subr.bf16.mxu0 %v6256
      %6279 = vmatpush1.bf16.msra.mxu0 %v6253
      %6280 = vmatprep.subr.bf16.mxu0 0
      %6281 = vmatpush1.bf16.msra.mxu0 0
      %6282 = vmatprep.subr.bf16.mxu0 0
      %6283 = vmatpush1.bf16.msra.mxu0 0
      %6284 = vmatprep.subr.bf16.mxu0 0
      %6285 = vmatpush1.bf16.msra.mxu0 0
      %6286 = vmatprep.subr.bf16.mxu0 0
      %6287 = vmatpush1.bf16.msra.mxu0 0
      %6288 = vmatprep.subr.bf16.mxu0 0
      %6289 = vmatpush1.bf16.msra.mxu0 0
      %6290 = vmatprep.subr.bf16.mxu0 0
      %6291 = vmatpush1.bf16.msra.mxu0 0
      %6292 = vmatprep.subr.bf16.mxu0 0
      %6293 = vmatpush1.bf16.msra.mxu0 0
      %6294 = vmatprep.subr.bf16.mxu0 0
      %6295 = vmatpush1.bf16.msra.mxu0 0
      %6296 = vmatprep.subr.bf16.mxu0 0
      %6297 = vmatpush1.bf16.msra.mxu0 0
      %6298 = vmatprep.subr.bf16.mxu0 0
      %6299 = vmatpush1.bf16.msra.mxu0 0
      %6300 = vmatprep.subr.bf16.mxu0 0
      %6301 = vmatpush1.bf16.msra.mxu0 0
      %6302 = vmatprep.subr.bf16.mxu0 0
      %6303 = vmatpush1.bf16.msra.mxu0 0
      %6304 = vmatprep.subr.bf16.mxu0 0
      %6305 = vmatpush1.bf16.msra.mxu0 0
      %6306 = vmatprep.subr.bf16.mxu0 0
      %6307 = vmatpush1.bf16.msra.mxu0 0
      %6308 = vmatprep.mubr.bf16.mxu0 0
      %6309 = vmatmul.mubr.bf16.gmra.mrb[0].mxu0 %v303
      %v6310 = vpop.f32.mrb[0].mxu0
      %v6311 = vadd.f32 0.0, %v6310
      %v6312 = vpop.f32.mrb[0].mxu0
      %v6313 = vadd.f32 0.0, %v6312
      %v6314 = vpop.f32.mrb[0].mxu0
      %v6315 = vadd.f32 0.0, %v6314
      %v6316 = vpop.f32.mrb[0].mxu0
      %v6317 = vadd.f32 0.0, %v6316
      %6318 = vmatprep.mubr.bf16.mxu0 0
      %6319 = vmatmul.mubr.bf16.gmra.mrb[0].mxu0 %v306
      %v6320 = vpop.f32.mrb[0].mxu0
      %v6321 = vadd.f32 0.0, %v6320
      %v6322 = vpop.f32.mrb[0].mxu0
      %v6323 = vadd.f32 0.0, %v6322
      %v6324 = vpop.f32.mrb[0].mxu0
      %v6325 = vadd.f32 0.0, %v6324
      %v6326 = vpop.f32.mrb[0].mxu0
      %v6327 = vadd.f32 0.0, %v6326
      %6328 = vdwg.mxu0
      %6329 = vmatprep.subr.bf16.mxu0 %v6231
      %6330 = vmatpush1.bf16.msra.mxu0 %v6230
      %6331 = vmatprep.subr.bf16.mxu0 %v6262
      %6332 = vmatpush1.bf16.msra.mxu0 %v6259
      %6333 = vmatprep.subr.bf16.mxu0 0
      %6334 = vmatpush1.bf16.msra.mxu0 0
      %6335 = vmatprep.subr.bf16.mxu0 0
      %6336 = vmatpush1.bf16.msra.mxu0 0
      %6337 = vmatprep.subr.bf16.mxu0 0
      %6338 = vmatpush1.bf16.msra.mxu0 0
      %6339 = vmatprep.subr.bf16.mxu0 0
      %6340 = vmatpush1.bf16.msra.mxu0 0
      %6341 = vmatprep.subr.bf16.mxu0 0
      %6342 = vmatpush1.bf16.msra.mxu0 0
      %6343 = vmatprep.subr.bf16.mxu0 0
      %6344 = vmatpush1.bf16.msra.mxu0 0
      %6345 = vmatprep.subr.bf16.mxu0 0
      %6346 = vmatpush1.bf16.msra.mxu0 0
      %6347 = vmatprep.subr.bf16.mxu0 0
      %6348 = vmatpush1.bf16.msra.mxu0 0
      %6349 = vmatprep.subr.bf16.mxu0 0
      %6350 = vmatpush1.bf16.msra.mxu0 0
      %6351 = vmatprep.subr.bf16.mxu0 0
      %6352 = vmatpush1.bf16.msra.mxu0 0
      %6353 = vmatprep.subr.bf16.mxu0 0
      %6354 = vmatpush1.bf16.msra.mxu0 0
      %6355 = vmatprep.subr.bf16.mxu0 0
      %6356 = vmatpush1.bf16.msra.mxu0 0
      %6357 = vmatprep.subr.bf16.mxu0 0
      %6358 = vmatpush1.bf16.msra.mxu0 0
      %6359 = vmatprep.subr.bf16.mxu0 0
      %6360 = vmatpush1.bf16.msra.mxu0 0
      %6361 = vmatprep.mubr.bf16.mxu0 0
      %6362 = vmatmul.mubr.bf16.gmra.mrb[0].mxu0 %v303
      %v6363 = vpop.f32.mrb[0].mxu0
      %v6364 = vadd.f32 0.0, %v6363
      %v6365 = vpop.f32.mrb[0].mxu0
      %v6366 = vadd.f32 0.0, %v6365
      %v6367 = vpop.f32.mrb[0].mxu0
      %v6368 = vadd.f32 0.0, %v6367
      %v6369 = vpop.f32.mrb[0].mxu0
      %v6370 = vadd.f32 0.0, %v6369
      %6371 = vmatprep.mubr.bf16.mxu0 0
      %6372 = vmatmul.mubr.bf16.gmra.mrb[0].mxu0 %v306
      %v6373 = vpop.f32.mrb[0].mxu0
      %v6374 = vadd.f32 0.0, %v6373
      %v6375 = vpop.f32.mrb[0].mxu0
      %v6376 = vadd.f32 0.0, %v6375
      %v6377 = vpop.f32.mrb[0].mxu0
      %v6378 = vadd.f32 0.0, %v6377
      %v6379 = vpop.f32.mrb[0].mxu0
      %v6380 = vadd.f32 0.0, %v6379
      %6381 = vdwg.mxu0
      %6382 = vmatprep.subr.bf16.mxu0 %v6233
      %6383 = vmatpush1.bf16.msra.mxu0 %v6232
      %6384 = vmatprep.subr.bf16.mxu0 %v6268
      %6385 = vmatpush1.bf16.msra.mxu0 %v6265
      %6386 = vmatprep.subr.bf16.mxu0 0
      %6387 = vmatpush1.bf16.msra.mxu0 0
      %6388 = vmatprep.subr.bf16.mxu0 0
      %6389 = vmatpush1.bf16.msra.mxu0 0
      %6390 = vmatprep.subr.bf16.mxu0 0
      %6391 = vmatpush1.bf16.msra.mxu0 0
      %6392 = vmatprep.subr.bf16.mxu0 0
      %6393 = vmatpush1.bf16.msra.mxu0 0
      %6394 = vmatprep.subr.bf16.mxu0 0
      %6395 = vmatpush1.bf16.msra.mxu0 0
      %6396 = vmatprep.subr.bf16.mxu0 0
      %6397 = vmatpush1.bf16.msra.mxu0 0
      %6398 = vmatprep.subr.bf16.mxu0 0
      %6399 = vmatpush1.bf16.msra.mxu0 0
      %6400 = vmatprep.subr.bf16.mxu0 0
      %6401 = vmatpush1.bf16.msra.mxu0 0
      %6402 = vmatprep.subr.bf16.mxu0 0
      %6403 = vmatpush1.bf16.msra.mxu0 0
      %6404 = vmatprep.subr.bf16.mxu0 0
      %6405 = vmatpush1.bf16.msra.mxu0 0
      %6406 = vmatprep.subr.bf16.mxu0 0
      %6407 = vmatpush1.bf16.msra.mxu0 0
      %6408 = vmatprep.subr.bf16.mxu0 0
      %6409 = vmatpush1.bf16.msra.mxu0 0
      %6410 = vmatprep.subr.bf16.mxu0 0
      %6411 = vmatpush1.bf16.msra.mxu0 0
      %6412 = vmatprep.subr.bf16.mxu0 0
      %6413 = vmatpush1.bf16.msra.mxu0 0
      %6414 = vmatprep.mubr.bf16.mxu0 0
      %6415 = vmatmul.mubr.bf16.gmra.mrb[0].mxu0 %v303
      %v6416 = vpop.f32.mrb[0].mxu0
      %v6417 = vadd.f32 0.0, %v6416
      %v6418 = vpop.f32.mrb[0].mxu0
      %v6419 = vadd.f32 0.0, %v6418
      %v6420 = vpop.f32.mrb[0].mxu0
      %v6421 = vadd.f32 0.0, %v6420
      %v6422 = vpop.f32.mrb[0].mxu0
      %v6423 = vadd.f32 0.0, %v6422
      %6424 = vmatprep.mubr.bf16.mxu0 0
      %6425 = vmatmul.mubr.bf16.gmra.mrb[0].mxu0 %v306
      %v6426 = vpop.f32.mrb[0].mxu0
      %v6427 = vadd.f32 0.0, %v6426
      %v6428 = vpop.f32.mrb[0].mxu0
      %v6429 = vadd.f32 0.0, %v6428
      %v6430 = vpop.f32.mrb[0].mxu0
      %v6431 = vadd.f32 0.0, %v6430
      %v6432 = vpop.f32.mrb[0].mxu0
      %v6433 = vadd.f32 0.0, %v6432
      %6434 = vdwg.mxu0
      %6435 = vmatprep.subr.bf16.mxu0 %v6235
      %6436 = vmatpush1.bf16.msra.mxu0 %v6234
      %6437 = vmatprep.subr.bf16.mxu0 %v6274
      %6438 = vmatpush1.bf16.msra.mxu0 %v6271
      %6439 = vmatprep.subr.bf16.mxu0 0
      %6440 = vmatpush1.bf16.msra.mxu0 0
      %6441 = vmatprep.subr.bf16.mxu0 0
      %6442 = vmatpush1.bf16.msra.mxu0 0
      %6443 = vmatprep.subr.bf16.mxu0 0
      %6444 = vmatpush1.bf16.msra.mxu0 0
      %6445 = vmatprep.subr.bf16.mxu0 0
      %6446 = vmatpush1.bf16.msra.mxu0 0
      %6447 = vmatprep.subr.bf16.mxu0 0
      %6448 = vmatpush1.bf16.msra.mxu0 0
      %6449 = vmatprep.subr.bf16.mxu0 0
      %6450 = vmatpush1.bf16.msra.mxu0 0
      %6451 = vmatprep.subr.bf16.mxu0 0
      %6452 = vmatpush1.bf16.msra.mxu0 0
      %6453 = vmatprep.subr.bf16.mxu0 0
      %6454 = vmatpush1.bf16.msra.mxu0 0
      %6455 = vmatprep.subr.bf16.mxu0 0
      %6456 = vmatpush1.bf16.msra.mxu0 0
      %6457 = vmatprep.subr.bf16.mxu0 0
      %6458 = vmatpush1.bf16.msra.mxu0 0
      %6459 = vmatprep.subr.bf16.mxu0 0
      %6460 = vmatpush1.bf16.msra.mxu0 0
      %6461 = vmatprep.subr.bf16.mxu0 0
      %6462 = vmatpush1.bf16.msra.mxu0 0
      %6463 = vmatprep.subr.bf16.mxu0 0
      %6464 = vmatpush1.bf16.msra.mxu0 0
      %6465 = vmatprep.subr.bf16.mxu0 0
      %6466 = vmatpush1.bf16.msra.mxu0 0
      %6467 = vmatprep.mubr.bf16.mxu0 0
      %6468 = vmatmul.mubr.bf16.gmra.mrb[0].mxu0 %v303
      %v6469 = vpop.f32.mrb[0].mxu0
      %v6470 = vadd.f32 0.0, %v6469
      %v6471 = vpop.f32.mrb[0].mxu0
      %v6472 = vadd.f32 0.0, %v6471
      %v6473 = vpop.f32.mrb[0].mxu0
      %v6474 = vadd.f32 0.0, %v6473
      %v6475 = vpop.f32.mrb[0].mxu0
      %v6476 = vadd.f32 0.0, %v6475
      %6477 = vmatprep.mubr.bf16.mxu0 0
      %6478 = vmatmul.mubr.bf16.gmra.mrb[0].mxu0 %v306
      %v6479 = vpop.f32.mrb[0].mxu0
      %v6480 = vadd.f32 0.0, %v6479
      %v6481 = vpop.f32.mrb[0].mxu0
      %v6482 = vadd.f32 0.0, %v6481
      %v6483 = vpop.f32.mrb[0].mxu0
      %v6484 = vadd.f32 0.0, %v6483
      %v6485 = vpop.f32.mrb[0].mxu0
      %v6486 = vadd.f32 0.0, %v6485
      %6487 = vdwg.mxu0
      %v6488 = vmax.f32 %v6311, 0.0
      %v6489 = vmax.f32 %v6313, 0.0
      %v6490 = vmax.f32 %v6364, 0.0
      %v6491 = vmax.f32 %v6366, 0.0
      %v6492 = vmax.f32 %v6417, 0.0
      %v6493 = vmax.f32 %v6419, 0.0
      %v6494 = vmax.f32 %v6470, 0.0
      %v6495 = vmax.f32 %v6472, 0.0
      %v6496 = vmax.f32 %v6315, 0.0
      %v6497 = vmax.f32 %v6317, 0.0
      %v6498 = vmax.f32 %v6368, 0.0
      %v6499 = vmax.f32 %v6370, 0.0
      %v6500 = vmax.f32 %v6421, 0.0
      %v6501 = vmax.f32 %v6423, 0.0
      %v6502 = vmax.f32 %v6474, 0.0
      %v6503 = vmax.f32 %v6476, 0.0
      %v6504 = vmax.f32 %v6321, 0.0
      %v6505 = vmax.f32 %v6323, 0.0
      %v6506 = vmax.f32 %v6374, 0.0
      %v6507 = vmax.f32 %v6376, 0.0
      %v6508 = vmax.f32 %v6427, 0.0
      %v6509 = vmax.f32 %v6429, 0.0
      %v6510 = vmax.f32 %v6480, 0.0
      %v6511 = vmax.f32 %v6482, 0.0
      %v6512 = vmax.f32 %v6325, 0.0
      %v6513 = vmax.f32 %v6327, 0.0
      %v6514 = vmax.f32 %v6378, 0.0
      %v6515 = vmax.f32 %v6380, 0.0
      %v6516 = vmax.f32 %v6431, 0.0
      %v6517 = vmax.f32 %v6433, 0.0
      %v6518 = vmax.f32 %v6484, 0.0
      %v6519 = vmax.f32 %v6486, 0.0
      %v6520 = vadd.f32 %v6488, %v6489
      %v6521 = vadd.f32 %v6520, %v6490
      %v6522 = vadd.f32 %v6521, %v6491
      %v6523 = vadd.f32 %v6522, %v6492
      %v6524 = vadd.f32 %v6523, %v6493
      %v6525 = vadd.f32 %v6524, %v6494
      %v6526 = vadd.f32 %v6525, %v6495
      %6527 = vadd.xlane.f32.xlu0 %v6526
      %v6528 = vpop.xlane.xlu0 %6527
      %v6529 = vadd.f32 %v6496, %v6497
      %v6530 = vadd.f32 %v6529, %v6498
      %v6531 = vadd.f32 %v6530, %v6499
      %v6532 = vadd.f32 %v6531, %v6500
      %v6533 = vadd.f32 %v6532, %v6501
      %v6534 = vadd.f32 %v6533, %v6502
      %v6535 = vadd.f32 %v6534, %v6503
      %6536 = vadd.xlane.f32.xlu0 %v6535
      %v6537 = vpop.xlane.xlu0 %6536
      %v6538 = vadd.f32 %v6504, %v6505
      %v6539 = vadd.f32 %v6538, %v6506
      %v6540 = vadd.f32 %v6539, %v6507
      %v6541 = vadd.f32 %v6540, %v6508
      %v6542 = vadd.f32 %v6541, %v6509
      %v6543 = vadd.f32 %v6542, %v6510
      %v6544 = vadd.f32 %v6543, %v6511
      %6545 = vadd.xlane.f32.xlu0 %v6544
      %v6546 = vpop.xlane.xlu0 %6545
      %v6547 = vadd.f32 %v6512, %v6513
      %v6548 = vadd.f32 %v6547, %v6514
      %v6549 = vadd.f32 %v6548, %v6515
      %v6550 = vadd.f32 %v6549, %v6516
      %v6551 = vadd.f32 %v6550, %v6517
      %v6552 = vadd.f32 %v6551, %v6518
      %v6553 = vadd.f32 %v6552, %v6519
      %6554 = vadd.xlane.f32.xlu0 %v6553
      %v6555 = vpop.xlane.xlu0 %6554
      %v6556 = vadd.f32 %v6160, %v6528
      %v6557 = vadd.f32 %v6161, %v6537
      %v6558 = vadd.f32 %v6162, %v6546
      %v6559 = vadd.f32 %v6163, %v6555
      %v6560 = vld [vmem:[%s192 + $0x200] sm:$0xff]
      %v6561 = vld [vmem:[%s192 + $0x208] sm:$0xff]
      %v6562 = vld [vmem:[%s192 + $0x210] sm:$0xff]
      %v6563 = vld [vmem:[%s192 + $0x218] sm:$0xff]
      %v6564 = vld [vmem:[%s192 + $0x4c0] sm:$0xff]
      %v6565 = vld [vmem:[%s192 + $0x4c8] sm:$0xff]
      %v6566 = vld [vmem:[%s192 + $0x4d0] sm:$0xff]
      %v6567 = vld [vmem:[%s192 + $0x4d8] sm:$0xff]
      %v6568 = vld [vmem:[%s192 + $0x780] sm:$0xff]
      %v6569 = vld [vmem:[%s192 + $0x788] sm:$0xff]
      %v6570 = vld [vmem:[%s192 + $0x790] sm:$0xff]
      %v6571 = vld [vmem:[%s192 + $0x798] sm:$0xff]
      %v6572 = vld [vmem:[%s192 + $0xa40] sm:$0x33]
      %v6573 = vld [vmem:[%s192 + $0xa48] sm:$0x33]
      %v6574 = vld [vmem:[%s192 + $0xa50] sm:$0x33]
      %v6575 = vld [vmem:[%s192 + $0xa58] sm:$0x33]
      %v6592 = vunpack.c.l.b16 %v6560
      %v6593 = vunpack.c.h.b16 %v6560
      %v6594 = vunpack.c.l.b16 %v6561
      %v6595 = vunpack.c.h.b16 %v6561
      %v6596 = vunpack.c.l.b16 %v6562
      %v6597 = vunpack.c.h.b16 %v6562
      %v6598 = vunpack.c.l.b16 %v6563
      %v6599 = vunpack.c.h.b16 %v6563
      %v6600 = vunpack.c.l.b16 %v6564
      %v6601 = vunpack.c.h.b16 %v6564
      %v6602 = vunpack.c.l.b16 %v6565
      %v6603 = vunpack.c.h.b16 %v6565
      %v6604 = vunpack.c.l.b16 %v6566
      %v6605 = vunpack.c.h.b16 %v6566
      %v6606 = vunpack.c.l.b16 %v6567
      %v6607 = vunpack.c.h.b16 %v6567
      %v6608 = vunpack.c.l.b16 %v6568
      %v6609 = vunpack.c.h.b16 %v6568
      %v6610 = vunpack.c.l.b16 %v6569
      %v6611 = vunpack.c.h.b16 %v6569
      %v6612 = vunpack.c.l.b16 %v6570
      %v6613 = vunpack.c.h.b16 %v6570
      %v6614 = vunpack.c.l.b16 %v6571
      %v6615 = vunpack.c.h.b16 %v6571
      %v6616 = vunpack.c.l.b16 %v6572
      %v6617 = vunpack.c.h.b16 %v6572
      %v6618 = vunpack.c.l.b16 %v6573
      %v6619 = vunpack.c.h.b16 %v6573
      %v6620 = vunpack.c.l.b16 %v6574
      %v6621 = vunpack.c.h.b16 %v6574
      %v6622 = vunpack.c.l.b16 %v6575
      %v6623 = vunpack.c.h.b16 %v6575
      %v6624 = vpack.c.b16 %v6600, %v6592
      %v6625 = vpack.c.b16 %v6601, %v6593
      %v6626 = vpack.c.b16 %v6602, %v6594
      %v6627 = vpack.c.b16 %v6603, %v6595
      %v6628 = vpack.c.b16 %v6604, %v6596
      %v6629 = vpack.c.b16 %v6605, %v6597
      %v6630 = vpack.c.b16 %v6606, %v6598
      %v6631 = vpack.c.b16 %v6607, %v6599
      %v6632 = vpack.c.b16 %v6616, %v6608
      %v6633 = vpack.c.b16 %v6617, %v6609
      %v6634 = vpack.c.b16 %v6618, %v6610
      %v6635 = vpack.c.b16 %v6619, %v6611
      %v6636 = vpack.c.b16 %v6620, %v6612
      %v6637 = vpack.c.b16 %v6621, %v6613
      %v6638 = vpack.c.b16 %v6622, %v6614
      %v6639 = vpack.c.b16 %v6623, %v6615
      %v6649 = vand.u32 %v6632, %v311
      %v6652 = vand.u32 %v6633, %v311
      %v6655 = vand.u32 %v6634, %v311
      %v6658 = vand.u32 %v6635, %v311
      %v6661 = vand.u32 %v6636, %v311
      %v6664 = vand.u32 %v6637, %v311
      %v6667 = vand.u32 %v6638, %v311
      %v6670 = vand.u32 %v6639, %v311
      %6672 = vmatprep.subr.bf16.mxu0 %v6625
      %6673 = vmatpush1.bf16.msra.mxu0 %v6624
      %6674 = vmatprep.subr.bf16.mxu0 %v6652
      %6675 = vmatpush1.bf16.msra.mxu0 %v6649
      %6676 = vmatprep.subr.bf16.mxu0 0
      %6677 = vmatpush1.bf16.msra.mxu0 0
      %6678 = vmatprep.subr.bf16.mxu0 0
      %6679 = vmatpush1.bf16.msra.mxu0 0
      %6680 = vmatprep.subr.bf16.mxu0 0
      %6681 = vmatpush1.bf16.msra.mxu0 0
      %6682 = vmatprep.subr.bf16.mxu0 0
      %6683 = vmatpush1.bf16.msra.mxu0 0
      %6684 = vmatprep.subr.bf16.mxu0 0
      %6685 = vmatpush1.bf16.msra.mxu0 0
      %6686 = vmatprep.subr.bf16.mxu0 0
      %6687 = vmatpush1.bf16.msra.mxu0 0
      %6688 = vmatprep.subr.bf16.mxu0 0
      %6689 = vmatpush1.bf16.msra.mxu0 0
      %6690 = vmatprep.subr.bf16.mxu0 0
      %6691 = vmatpush1.bf16.msra.mxu0 0
      %6692 = vmatprep.subr.bf16.mxu0 0
      %6693 = vmatpush1.bf16.msra.mxu0 0
      %6694 = vmatprep.subr.bf16.mxu0 0
      %6695 = vmatpush1.bf16.msra.mxu0 0
      %6696 = vmatprep.subr.bf16.mxu0 0
      %6697 = vmatpush1.bf16.msra.mxu0 0
      %6698 = vmatprep.subr.bf16.mxu0 0
      %6699 = vmatpush1.bf16.msra.mxu0 0
      %6700 = vmatprep.subr.bf16.mxu0 0
      %6701 = vmatpush1.bf16.msra.mxu0 0
      %6702 = vmatprep.subr.bf16.mxu0 0
      %6703 = vmatpush1.bf16.msra.mxu0 0
      %6704 = vmatprep.mubr.bf16.mxu0 0
      %6705 = vmatmul.mubr.bf16.gmra.mrb[0].mxu0 %v303
      %v6706 = vpop.f32.mrb[0].mxu0
      %v6707 = vadd.f32 0.0, %v6706
      %v6708 = vpop.f32.mrb[0].mxu0
      %v6709 = vadd.f32 0.0, %v6708
      %v6710 = vpop.f32.mrb[0].mxu0
      %v6711 = vadd.f32 0.0, %v6710
      %v6712 = vpop.f32.mrb[0].mxu0
      %v6713 = vadd.f32 0.0, %v6712
      %6714 = vmatprep.mubr.bf16.mxu0 0
      %6715 = vmatmul.mubr.bf16.gmra.mrb[0].mxu0 %v306
      %v6716 = vpop.f32.mrb[0].mxu0
      %v6717 = vadd.f32 0.0, %v6716
      %v6718 = vpop.f32.mrb[0].mxu0
      %v6719 = vadd.f32 0.0, %v6718
      %v6720 = vpop.f32.mrb[0].mxu0
      %v6721 = vadd.f32 0.0, %v6720
      %v6722 = vpop.f32.mrb[0].mxu0
      %v6723 = vadd.f32 0.0, %v6722
      %6724 = vdwg.mxu0
      %6725 = vmatprep.subr.bf16.mxu0 %v6627
      %6726 = vmatpush1.bf16.msra.mxu0 %v6626
      %6727 = vmatprep.subr.bf16.mxu0 %v6658
      %6728 = vmatpush1.bf16.msra.mxu0 %v6655
      %6729 = vmatprep.subr.bf16.mxu0 0
      %6730 = vmatpush1.bf16.msra.mxu0 0
      %6731 = vmatprep.subr.bf16.mxu0 0
      %6732 = vmatpush1.bf16.msra.mxu0 0
      %6733 = vmatprep.subr.bf16.mxu0 0
      %6734 = vmatpush1.bf16.msra.mxu0 0
      %6735 = vmatprep.subr.bf16.mxu0 0
      %6736 = vmatpush1.bf16.msra.mxu0 0
      %6737 = vmatprep.subr.bf16.mxu0 0
      %6738 = vmatpush1.bf16.msra.mxu0 0
      %6739 = vmatprep.subr.bf16.mxu0 0
      %6740 = vmatpush1.bf16.msra.mxu0 0
      %6741 = vmatprep.subr.bf16.mxu0 0
      %6742 = vmatpush1.bf16.msra.mxu0 0
      %6743 = vmatprep.subr.bf16.mxu0 0
      %6744 = vmatpush1.bf16.msra.mxu0 0
      %6745 = vmatprep.subr.bf16.mxu0 0
      %6746 = vmatpush1.bf16.msra.mxu0 0
      %6747 = vmatprep.subr.bf16.mxu0 0
      %6748 = vmatpush1.bf16.msra.mxu0 0
      %6749 = vmatprep.subr.bf16.mxu0 0
      %6750 = vmatpush1.bf16.msra.mxu0 0
      %6751 = vmatprep.subr.bf16.mxu0 0
      %6752 = vmatpush1.bf16.msra.mxu0 0
      %6753 = vmatprep.subr.bf16.mxu0 0
      %6754 = vmatpush1.bf16.msra.mxu0 0
      %6755 = vmatprep.subr.bf16.mxu0 0
      %6756 = vmatpush1.bf16.msra.mxu0 0
      %6757 = vmatprep.mubr.bf16.mxu0 0
      %6758 = vmatmul.mubr.bf16.gmra.mrb[0].mxu0 %v303
      %v6759 = vpop.f32.mrb[0].mxu0
      %v6760 = vadd.f32 0.0, %v6759
      %v6761 = vpop.f32.mrb[0].mxu0
      %v6762 = vadd.f32 0.0, %v6761
      %v6763 = vpop.f32.mrb[0].mxu0
      %v6764 = vadd.f32 0.0, %v6763
      %v6765 = vpop.f32.mrb[0].mxu0
      %v6766 = vadd.f32 0.0, %v6765
      %6767 = vmatprep.mubr.bf16.mxu0 0
      %6768 = vmatmul.mubr.bf16.gmra.mrb[0].mxu0 %v306
      %v6769 = vpop.f32.mrb[0].mxu0
      %v6770 = vadd.f32 0.0, %v6769
      %v6771 = vpop.f32.mrb[0].mxu0
      %v6772 = vadd.f32 0.0, %v6771
      %v6773 = vpop.f32.mrb[0].mxu0
      %v6774 = vadd.f32 0.0, %v6773
      %v6775 = vpop.f32.mrb[0].mxu0
      %v6776 = vadd.f32 0.0, %v6775
      %6777 = vdwg.mxu0
      %6778 = vmatprep.subr.bf16.mxu0 %v6629
      %6779 = vmatpush1.bf16.msra.mxu0 %v6628
      %6780 = vmatprep.subr.bf16.mxu0 %v6664
      %6781 = vmatpush1.bf16.msra.mxu0 %v6661
      %6782 = vmatprep.subr.bf16.mxu0 0
      %6783 = vmatpush1.bf16.msra.mxu0 0
      %6784 = vmatprep.subr.bf16.mxu0 0
      %6785 = vmatpush1.bf16.msra.mxu0 0
      %6786 = vmatprep.subr.bf16.mxu0 0
      %6787 = vmatpush1.bf16.msra.mxu0 0
      %6788 = vmatprep.subr.bf16.mxu0 0
      %6789 = vmatpush1.bf16.msra.mxu0 0
      %6790 = vmatprep.subr.bf16.mxu0 0
      %6791 = vmatpush1.bf16.msra.mxu0 0
      %6792 = vmatprep.subr.bf16.mxu0 0
      %6793 = vmatpush1.bf16.msra.mxu0 0
      %6794 = vmatprep.subr.bf16.mxu0 0
      %6795 = vmatpush1.bf16.msra.mxu0 0
      %6796 = vmatprep.subr.bf16.mxu0 0
      %6797 = vmatpush1.bf16.msra.mxu0 0
      %6798 = vmatprep.subr.bf16.mxu0 0
      %6799 = vmatpush1.bf16.msra.mxu0 0
      %6800 = vmatprep.subr.bf16.mxu0 0
      %6801 = vmatpush1.bf16.msra.mxu0 0
      %6802 = vmatprep.subr.bf16.mxu0 0
      %6803 = vmatpush1.bf16.msra.mxu0 0
      %6804 = vmatprep.subr.bf16.mxu0 0
      %6805 = vmatpush1.bf16.msra.mxu0 0
      %6806 = vmatprep.subr.bf16.mxu0 0
      %6807 = vmatpush1.bf16.msra.mxu0 0
      %6808 = vmatprep.subr.bf16.mxu0 0
      %6809 = vmatpush1.bf16.msra.mxu0 0
      %6810 = vmatprep.mubr.bf16.mxu0 0
      %6811 = vmatmul.mubr.bf16.gmra.mrb[0].mxu0 %v303
      %v6812 = vpop.f32.mrb[0].mxu0
      %v6813 = vadd.f32 0.0, %v6812
      %v6814 = vpop.f32.mrb[0].mxu0
      %v6815 = vadd.f32 0.0, %v6814
      %v6816 = vpop.f32.mrb[0].mxu0
      %v6817 = vadd.f32 0.0, %v6816
      %v6818 = vpop.f32.mrb[0].mxu0
      %v6819 = vadd.f32 0.0, %v6818
      %6820 = vmatprep.mubr.bf16.mxu0 0
      %6821 = vmatmul.mubr.bf16.gmra.mrb[0].mxu0 %v306
      %v6822 = vpop.f32.mrb[0].mxu0
      %v6823 = vadd.f32 0.0, %v6822
      %v6824 = vpop.f32.mrb[0].mxu0
      %v6825 = vadd.f32 0.0, %v6824
      %v6826 = vpop.f32.mrb[0].mxu0
      %v6827 = vadd.f32 0.0, %v6826
      %v6828 = vpop.f32.mrb[0].mxu0
      %v6829 = vadd.f32 0.0, %v6828
      %6830 = vdwg.mxu0
      %6831 = vmatprep.subr.bf16.mxu0 %v6631
      %6832 = vmatpush1.bf16.msra.mxu0 %v6630
      %6833 = vmatprep.subr.bf16.mxu0 %v6670
      %6834 = vmatpush1.bf16.msra.mxu0 %v6667
      %6835 = vmatprep.subr.bf16.mxu0 0
      %6836 = vmatpush1.bf16.msra.mxu0 0
      %6837 = vmatprep.subr.bf16.mxu0 0
      %6838 = vmatpush1.bf16.msra.mxu0 0
      %6839 = vmatprep.subr.bf16.mxu0 0
      %6840 = vmatpush1.bf16.msra.mxu0 0
      %6841 = vmatprep.subr.bf16.mxu0 0
      %6842 = vmatpush1.bf16.msra.mxu0 0
      %6843 = vmatprep.subr.bf16.mxu0 0
      %6844 = vmatpush1.bf16.msra.mxu0 0
      %6845 = vmatprep.subr.bf16.mxu0 0
      %6846 = vmatpush1.bf16.msra.mxu0 0
      %6847 = vmatprep.subr.bf16.mxu0 0
      %6848 = vmatpush1.bf16.msra.mxu0 0
      %6849 = vmatprep.subr.bf16.mxu0 0
      %6850 = vmatpush1.bf16.msra.mxu0 0
      %6851 = vmatprep.subr.bf16.mxu0 0
      %6852 = vmatpush1.bf16.msra.mxu0 0
      %6853 = vmatprep.subr.bf16.mxu0 0
      %6854 = vmatpush1.bf16.msra.mxu0 0
      %6855 = vmatprep.subr.bf16.mxu0 0
      %6856 = vmatpush1.bf16.msra.mxu0 0
      %6857 = vmatprep.subr.bf16.mxu0 0
      %6858 = vmatpush1.bf16.msra.mxu0 0
      %6859 = vmatprep.subr.bf16.mxu0 0
      %6860 = vmatpush1.bf16.msra.mxu0 0
      %6861 = vmatprep.subr.bf16.mxu0 0
      %6862 = vmatpush1.bf16.msra.mxu0 0
      %6863 = vmatprep.mubr.bf16.mxu0 0
      %6864 = vmatmul.mubr.bf16.gmra.mrb[0].mxu0 %v303
      %v6865 = vpop.f32.mrb[0].mxu0
      %v6866 = vadd.f32 0.0, %v6865
      %v6867 = vpop.f32.mrb[0].mxu0
      %v6868 = vadd.f32 0.0, %v6867
      %v6869 = vpop.f32.mrb[0].mxu0
      %v6870 = vadd.f32 0.0, %v6869
      %v6871 = vpop.f32.mrb[0].mxu0
      %v6872 = vadd.f32 0.0, %v6871
      %6873 = vmatprep.mubr.bf16.mxu0 0
      %6874 = vmatmul.mubr.bf16.gmra.mrb[0].mxu0 %v306
      %v6875 = vpop.f32.mrb[0].mxu0
      %v6876 = vadd.f32 0.0, %v6875
      %v6877 = vpop.f32.mrb[0].mxu0
      %v6878 = vadd.f32 0.0, %v6877
      %v6879 = vpop.f32.mrb[0].mxu0
      %v6880 = vadd.f32 0.0, %v6879
      %v6881 = vpop.f32.mrb[0].mxu0
      %v6882 = vadd.f32 0.0, %v6881
      %6883 = vdwg.mxu0
      %v6884 = vmax.f32 %v6707, 0.0
      %v6885 = vmax.f32 %v6709, 0.0
      %v6886 = vmax.f32 %v6760, 0.0
      %v6887 = vmax.f32 %v6762, 0.0
      %v6888 = vmax.f32 %v6813, 0.0
      %v6889 = vmax.f32 %v6815, 0.0
      %v6890 = vmax.f32 %v6866, 0.0
      %v6891 = vmax.f32 %v6868, 0.0
      %v6892 = vmax.f32 %v6711, 0.0
      %v6893 = vmax.f32 %v6713, 0.0
      %v6894 = vmax.f32 %v6764, 0.0
      %v6895 = vmax.f32 %v6766, 0.0
      %v6896 = vmax.f32 %v6817, 0.0
      %v6897 = vmax.f32 %v6819, 0.0
      %v6898 = vmax.f32 %v6870, 0.0
      %v6899 = vmax.f32 %v6872, 0.0
      %v6900 = vmax.f32 %v6717, 0.0
      %v6901 = vmax.f32 %v6719, 0.0
      %v6902 = vmax.f32 %v6770, 0.0
      %v6903 = vmax.f32 %v6772, 0.0
      %v6904 = vmax.f32 %v6823, 0.0
      %v6905 = vmax.f32 %v6825, 0.0
      %v6906 = vmax.f32 %v6876, 0.0
      %v6907 = vmax.f32 %v6878, 0.0
      %v6908 = vmax.f32 %v6721, 0.0
      %v6909 = vmax.f32 %v6723, 0.0
      %v6910 = vmax.f32 %v6774, 0.0
      %v6911 = vmax.f32 %v6776, 0.0
      %v6912 = vmax.f32 %v6827, 0.0
      %v6913 = vmax.f32 %v6829, 0.0
      %v6914 = vmax.f32 %v6880, 0.0
      %v6915 = vmax.f32 %v6882, 0.0
      %v6916 = vadd.f32 %v6884, %v6885
      %v6917 = vadd.f32 %v6916, %v6886
      %v6918 = vadd.f32 %v6917, %v6887
      %v6919 = vadd.f32 %v6918, %v6888
      %v6920 = vadd.f32 %v6919, %v6889
      %v6921 = vadd.f32 %v6920, %v6890
      %v6922 = vadd.f32 %v6921, %v6891
      %6923 = vadd.xlane.f32.xlu0 %v6922
      %v6924 = vpop.xlane.xlu0 %6923
      %v6925 = vadd.f32 %v6892, %v6893
      %v6926 = vadd.f32 %v6925, %v6894
      %v6927 = vadd.f32 %v6926, %v6895
      %v6928 = vadd.f32 %v6927, %v6896
      %v6929 = vadd.f32 %v6928, %v6897
      %v6930 = vadd.f32 %v6929, %v6898
      %v6931 = vadd.f32 %v6930, %v6899
      %6932 = vadd.xlane.f32.xlu0 %v6931
      %v6933 = vpop.xlane.xlu0 %6932
      %v6934 = vadd.f32 %v6900, %v6901
      %v6935 = vadd.f32 %v6934, %v6902
      %v6936 = vadd.f32 %v6935, %v6903
      %v6937 = vadd.f32 %v6936, %v6904
      %v6938 = vadd.f32 %v6937, %v6905
      %v6939 = vadd.f32 %v6938, %v6906
      %v6940 = vadd.f32 %v6939, %v6907
      %6941 = vadd.xlane.f32.xlu0 %v6940
      %v6942 = vpop.xlane.xlu0 %6941
      %v6943 = vadd.f32 %v6908, %v6909
      %v6944 = vadd.f32 %v6943, %v6910
      %v6945 = vadd.f32 %v6944, %v6911
      %v6946 = vadd.f32 %v6945, %v6912
      %v6947 = vadd.f32 %v6946, %v6913
      %v6948 = vadd.f32 %v6947, %v6914
      %v6949 = vadd.f32 %v6948, %v6915
      %6950 = vadd.xlane.f32.xlu0 %v6949
      %v6951 = vpop.xlane.xlu0 %6950
      %v6952 = vadd.f32 %v6556, %v6924
      %v6953 = vadd.f32 %v6557, %v6933
      %v6954 = vadd.f32 %v6558, %v6942
      %v6955 = vadd.f32 %v6559, %v6951
      %v6956 = vld [vmem:[%s192 + $0x220] sm:$0xff]
      %v6957 = vld [vmem:[%s192 + $0x228] sm:$0xff]
      %v6958 = vld [vmem:[%s192 + $0x230] sm:$0xff]
      %v6959 = vld [vmem:[%s192 + $0x238] sm:$0xff]
      %v6960 = vld [vmem:[%s192 + $0x4e0] sm:$0xff]
      %v6961 = vld [vmem:[%s192 + $0x4e8] sm:$0xff]
      %v6962 = vld [vmem:[%s192 + $0x4f0] sm:$0xff]
      %v6963 = vld [vmem:[%s192 + $0x4f8] sm:$0xff]
      %v6964 = vld [vmem:[%s192 + $0x7a0] sm:$0xff]
      %v6965 = vld [vmem:[%s192 + $0x7a8] sm:$0xff]
      %v6966 = vld [vmem:[%s192 + $0x7b0] sm:$0xff]
      %v6967 = vld [vmem:[%s192 + $0x7b8] sm:$0xff]
      %v6968 = vld [vmem:[%s192 + $0xa60] sm:$0x33]
      %v6969 = vld [vmem:[%s192 + $0xa68] sm:$0x33]
      %v6970 = vld [vmem:[%s192 + $0xa70] sm:$0x33]
      %v6971 = vld [vmem:[%s192 + $0xa78] sm:$0x33]
      %v6988 = vunpack.c.l.b16 %v6956
      %v6989 = vunpack.c.h.b16 %v6956
      %v6990 = vunpack.c.l.b16 %v6957
      %v6991 = vunpack.c.h.b16 %v6957
      %v6992 = vunpack.c.l.b16 %v6958
      %v6993 = vunpack.c.h.b16 %v6958
      %v6994 = vunpack.c.l.b16 %v6959
      %v6995 = vunpack.c.h.b16 %v6959
      %v6996 = vunpack.c.l.b16 %v6960
      %v6997 = vunpack.c.h.b16 %v6960
      %v6998 = vunpack.c.l.b16 %v6961
      %v6999 = vunpack.c.h.b16 %v6961
      %v7000 = vunpack.c.l.b16 %v6962
      %v7001 = vunpack.c.h.b16 %v6962
      %v7002 = vunpack.c.l.b16 %v6963
      %v7003 = vunpack.c.h.b16 %v6963
      %v7004 = vunpack.c.l.b16 %v6964
      %v7005 = vunpack.c.h.b16 %v6964
      %v7006 = vunpack.c.l.b16 %v6965
      %v7007 = vunpack.c.h.b16 %v6965
      %v7008 = vunpack.c.l.b16 %v6966
      %v7009 = vunpack.c.h.b16 %v6966
      %v7010 = vunpack.c.l.b16 %v6967
      %v7011 = vunpack.c.h.b16 %v6967
      %v7012 = vunpack.c.l.b16 %v6968
      %v7013 = vunpack.c.h.b16 %v6968
      %v7014 = vunpack.c.l.b16 %v6969
      %v7015 = vunpack.c.h.b16 %v6969
      %v7016 = vunpack.c.l.b16 %v6970
      %v7017 = vunpack.c.h.b16 %v6970
      %v7018 = vunpack.c.l.b16 %v6971
      %v7019 = vunpack.c.h.b16 %v6971
      %v7020 = vpack.c.b16 %v6996, %v6988
      %v7021 = vpack.c.b16 %v6997, %v6989
      %v7022 = vpack.c.b16 %v6998, %v6990
      %v7023 = vpack.c.b16 %v6999, %v6991
      %v7024 = vpack.c.b16 %v7000, %v6992
      %v7025 = vpack.c.b16 %v7001, %v6993
      %v7026 = vpack.c.b16 %v7002, %v6994
      %v7027 = vpack.c.b16 %v7003, %v6995
      %v7028 = vpack.c.b16 %v7012, %v7004
      %v7029 = vpack.c.b16 %v7013, %v7005
      %v7030 = vpack.c.b16 %v7014, %v7006
      %v7031 = vpack.c.b16 %v7015, %v7007
      %v7032 = vpack.c.b16 %v7016, %v7008
      %v7033 = vpack.c.b16 %v7017, %v7009
      %v7034 = vpack.c.b16 %v7018, %v7010
      %v7035 = vpack.c.b16 %v7019, %v7011
      %v7045 = vand.u32 %v7028, %v311
      %v7048 = vand.u32 %v7029, %v311
      %v7051 = vand.u32 %v7030, %v311
      %v7054 = vand.u32 %v7031, %v311
      %v7057 = vand.u32 %v7032, %v311
      %v7060 = vand.u32 %v7033, %v311
      %v7063 = vand.u32 %v7034, %v311
      %v7066 = vand.u32 %v7035, %v311
      %7068 = vmatprep.subr.bf16.mxu0 %v7021
      %7069 = vmatpush1.bf16.msra.mxu0 %v7020
      %7070 = vmatprep.subr.bf16.mxu0 %v7048
      %7071 = vmatpush1.bf16.msra.mxu0 %v7045
      %7072 = vmatprep.subr.bf16.mxu0 0
      %7073 = vmatpush1.bf16.msra.mxu0 0
      %7074 = vmatprep.subr.bf16.mxu0 0
      %7075 = vmatpush1.bf16.msra.mxu0 0
      %7076 = vmatprep.subr.bf16.mxu0 0
      %7077 = vmatpush1.bf16.msra.mxu0 0
      %7078 = vmatprep.subr.bf16.mxu0 0
      %7079 = vmatpush1.bf16.msra.mxu0 0
      %7080 = vmatprep.subr.bf16.mxu0 0
      %7081 = vmatpush1.bf16.msra.mxu0 0
      %7082 = vmatprep.subr.bf16.mxu0 0
      %7083 = vmatpush1.bf16.msra.mxu0 0
      %7084 = vmatprep.subr.bf16.mxu0 0
      %7085 = vmatpush1.bf16.msra.mxu0 0
      %7086 = vmatprep.subr.bf16.mxu0 0
      %7087 = vmatpush1.bf16.msra.mxu0 0
      %7088 = vmatprep.subr.bf16.mxu0 0
      %7089 = vmatpush1.bf16.msra.mxu0 0
      %7090 = vmatprep.subr.bf16.mxu0 0
      %7091 = vmatpush1.bf16.msra.mxu0 0
      %7092 = vmatprep.subr.bf16.mxu0 0
      %7093 = vmatpush1.bf16.msra.mxu0 0
      %7094 = vmatprep.subr.bf16.mxu0 0
      %7095 = vmatpush1.bf16.msra.mxu0 0
      %7096 = vmatprep.subr.bf16.mxu0 0
      %7097 = vmatpush1.bf16.msra.mxu0 0
      %7098 = vmatprep.subr.bf16.mxu0 0
      %7099 = vmatpush1.bf16.msra.mxu0 0
      %7100 = vmatprep.mubr.bf16.mxu0 0
      %7101 = vmatmul.mubr.bf16.gmra.mrb[0].mxu0 %v303
      %v7102 = vpop.f32.mrb[0].mxu0
      %v7103 = vadd.f32 0.0, %v7102
      %v7104 = vpop.f32.mrb[0].mxu0
      %v7105 = vadd.f32 0.0, %v7104
      %v7106 = vpop.f32.mrb[0].mxu0
      %v7107 = vadd.f32 0.0, %v7106
      %v7108 = vpop.f32.mrb[0].mxu0
      %v7109 = vadd.f32 0.0, %v7108
      %7110 = vmatprep.mubr.bf16.mxu0 0
      %7111 = vmatmul.mubr.bf16.gmra.mrb[0].mxu0 %v306
      %v7112 = vpop.f32.mrb[0].mxu0
      %v7113 = vadd.f32 0.0, %v7112
      %v7114 = vpop.f32.mrb[0].mxu0
      %v7115 = vadd.f32 0.0, %v7114
      %v7116 = vpop.f32.mrb[0].mxu0
      %v7117 = vadd.f32 0.0, %v7116
      %v7118 = vpop.f32.mrb[0].mxu0
      %v7119 = vadd.f32 0.0, %v7118
      %7120 = vdwg.mxu0
      %7121 = vmatprep.subr.bf16.mxu0 %v7023
      %7122 = vmatpush1.bf16.msra.mxu0 %v7022
      %7123 = vmatprep.subr.bf16.mxu0 %v7054
      %7124 = vmatpush1.bf16.msra.mxu0 %v7051
      %7125 = vmatprep.subr.bf16.mxu0 0
      %7126 = vmatpush1.bf16.msra.mxu0 0
      %7127 = vmatprep.subr.bf16.mxu0 0
      %7128 = vmatpush1.bf16.msra.mxu0 0
      %7129 = vmatprep.subr.bf16.mxu0 0
      %7130 = vmatpush1.bf16.msra.mxu0 0
      %7131 = vmatprep.subr.bf16.mxu0 0
      %7132 = vmatpush1.bf16.msra.mxu0 0
      %7133 = vmatprep.subr.bf16.mxu0 0
      %7134 = vmatpush1.bf16.msra.mxu0 0
      %7135 = vmatprep.subr.bf16.mxu0 0
      %7136 = vmatpush1.bf16.msra.mxu0 0
      %7137 = vmatprep.subr.bf16.mxu0 0
      %7138 = vmatpush1.bf16.msra.mxu0 0
      %7139 = vmatprep.subr.bf16.mxu0 0
      %7140 = vmatpush1.bf16.msra.mxu0 0
      %7141 = vmatprep.subr.bf16.mxu0 0
      %7142 = vmatpush1.bf16.msra.mxu0 0
      %7143 = vmatprep.subr.bf16.mxu0 0
      %7144 = vmatpush1.bf16.msra.mxu0 0
      %7145 = vmatprep.subr.bf16.mxu0 0
      %7146 = vmatpush1.bf16.msra.mxu0 0
      %7147 = vmatprep.subr.bf16.mxu0 0
      %7148 = vmatpush1.bf16.msra.mxu0 0
      %7149 = vmatprep.subr.bf16.mxu0 0
      %7150 = vmatpush1.bf16.msra.mxu0 0
      %7151 = vmatprep.subr.bf16.mxu0 0
      %7152 = vmatpush1.bf16.msra.mxu0 0
      %7153 = vmatprep.mubr.bf16.mxu0 0
      %7154 = vmatmul.mubr.bf16.gmra.mrb[0].mxu0 %v303
      %v7155 = vpop.f32.mrb[0].mxu0
      %v7156 = vadd.f32 0.0, %v7155
      %v7157 = vpop.f32.mrb[0].mxu0
      %v7158 = vadd.f32 0.0, %v7157
      %v7159 = vpop.f32.mrb[0].mxu0
      %v7160 = vadd.f32 0.0, %v7159
      %v7161 = vpop.f32.mrb[0].mxu0
      %v7162 = vadd.f32 0.0, %v7161
      %7163 = vmatprep.mubr.bf16.mxu0 0
      %7164 = vmatmul.mubr.bf16.gmra.mrb[0].mxu0 %v306
      %v7165 = vpop.f32.mrb[0].mxu0
      %v7166 = vadd.f32 0.0, %v7165
      %v7167 = vpop.f32.mrb[0].mxu0
      %v7168 = vadd.f32 0.0, %v7167
      %v7169 = vpop.f32.mrb[0].mxu0
      %v7170 = vadd.f32 0.0, %v7169
      %v7171 = vpop.f32.mrb[0].mxu0
      %v7172 = vadd.f32 0.0, %v7171
      %7173 = vdwg.mxu0
      %7174 = vmatprep.subr.bf16.mxu0 %v7025
      %7175 = vmatpush1.bf16.msra.mxu0 %v7024
      %7176 = vmatprep.subr.bf16.mxu0 %v7060
      %7177 = vmatpush1.bf16.msra.mxu0 %v7057
      %7178 = vmatprep.subr.bf16.mxu0 0
      %7179 = vmatpush1.bf16.msra.mxu0 0
      %7180 = vmatprep.subr.bf16.mxu0 0
      %7181 = vmatpush1.bf16.msra.mxu0 0
      %7182 = vmatprep.subr.bf16.mxu0 0
      %7183 = vmatpush1.bf16.msra.mxu0 0
      %7184 = vmatprep.subr.bf16.mxu0 0
      %7185 = vmatpush1.bf16.msra.mxu0 0
      %7186 = vmatprep.subr.bf16.mxu0 0
      %7187 = vmatpush1.bf16.msra.mxu0 0
      %7188 = vmatprep.subr.bf16.mxu0 0
      %7189 = vmatpush1.bf16.msra.mxu0 0
      %7190 = vmatprep.subr.bf16.mxu0 0
      %7191 = vmatpush1.bf16.msra.mxu0 0
      %7192 = vmatprep.subr.bf16.mxu0 0
      %7193 = vmatpush1.bf16.msra.mxu0 0
      %7194 = vmatprep.subr.bf16.mxu0 0
      %7195 = vmatpush1.bf16.msra.mxu0 0
      %7196 = vmatprep.subr.bf16.mxu0 0
      %7197 = vmatpush1.bf16.msra.mxu0 0
      %7198 = vmatprep.subr.bf16.mxu0 0
      %7199 = vmatpush1.bf16.msra.mxu0 0
      %7200 = vmatprep.subr.bf16.mxu0 0
      %7201 = vmatpush1.bf16.msra.mxu0 0
      %7202 = vmatprep.subr.bf16.mxu0 0
      %7203 = vmatpush1.bf16.msra.mxu0 0
      %7204 = vmatprep.subr.bf16.mxu0 0
      %7205 = vmatpush1.bf16.msra.mxu0 0
      %7206 = vmatprep.mubr.bf16.mxu0 0
      %7207 = vmatmul.mubr.bf16.gmra.mrb[0].mxu0 %v303
      %v7208 = vpop.f32.mrb[0].mxu0
      %v7209 = vadd.f32 0.0, %v7208
      %v7210 = vpop.f32.mrb[0].mxu0
      %v7211 = vadd.f32 0.0, %v7210
      %v7212 = vpop.f32.mrb[0].mxu0
      %v7213 = vadd.f32 0.0, %v7212
      %v7214 = vpop.f32.mrb[0].mxu0
      %v7215 = vadd.f32 0.0, %v7214
      %7216 = vmatprep.mubr.bf16.mxu0 0
      %7217 = vmatmul.mubr.bf16.gmra.mrb[0].mxu0 %v306
      %v7218 = vpop.f32.mrb[0].mxu0
      %v7219 = vadd.f32 0.0, %v7218
      %v7220 = vpop.f32.mrb[0].mxu0
      %v7221 = vadd.f32 0.0, %v7220
      %v7222 = vpop.f32.mrb[0].mxu0
      %v7223 = vadd.f32 0.0, %v7222
      %v7224 = vpop.f32.mrb[0].mxu0
      %v7225 = vadd.f32 0.0, %v7224
      %7226 = vdwg.mxu0
      %7227 = vmatprep.subr.bf16.mxu0 %v7027
      %7228 = vmatpush1.bf16.msra.mxu0 %v7026
      %7229 = vmatprep.subr.bf16.mxu0 %v7066
      %7230 = vmatpush1.bf16.msra.mxu0 %v7063
      %7231 = vmatprep.subr.bf16.mxu0 0
      %7232 = vmatpush1.bf16.msra.mxu0 0
      %7233 = vmatprep.subr.bf16.mxu0 0
      %7234 = vmatpush1.bf16.msra.mxu0 0
      %7235 = vmatprep.subr.bf16.mxu0 0
      %7236 = vmatpush1.bf16.msra.mxu0 0
      %7237 = vmatprep.subr.bf16.mxu0 0
      %7238 = vmatpush1.bf16.msra.mxu0 0
      %7239 = vmatprep.subr.bf16.mxu0 0
      %7240 = vmatpush1.bf16.msra.mxu0 0
      %7241 = vmatprep.subr.bf16.mxu0 0
      %7242 = vmatpush1.bf16.msra.mxu0 0
      %7243 = vmatprep.subr.bf16.mxu0 0
      %7244 = vmatpush1.bf16.msra.mxu0 0
      %7245 = vmatprep.subr.bf16.mxu0 0
      %7246 = vmatpush1.bf16.msra.mxu0 0
      %7247 = vmatprep.subr.bf16.mxu0 0
      %7248 = vmatpush1.bf16.msra.mxu0 0
      %7249 = vmatprep.subr.bf16.mxu0 0
      %7250 = vmatpush1.bf16.msra.mxu0 0
      %7251 = vmatprep.subr.bf16.mxu0 0
      %7252 = vmatpush1.bf16.msra.mxu0 0
      %7253 = vmatprep.subr.bf16.mxu0 0
      %7254 = vmatpush1.bf16.msra.mxu0 0
      %7255 = vmatprep.subr.bf16.mxu0 0
      %7256 = vmatpush1.bf16.msra.mxu0 0
      %7257 = vmatprep.subr.bf16.mxu0 0
      %7258 = vmatpush1.bf16.msra.mxu0 0
      %7259 = vmatprep.mubr.bf16.mxu0 0
      %7260 = vmatmul.mubr.bf16.gmra.mrb[0].mxu0 %v303
      %v7261 = vpop.f32.mrb[0].mxu0
      %v7262 = vadd.f32 0.0, %v7261
      %v7263 = vpop.f32.mrb[0].mxu0
      %v7264 = vadd.f32 0.0, %v7263
      %v7265 = vpop.f32.mrb[0].mxu0
      %v7266 = vadd.f32 0.0, %v7265
      %v7267 = vpop.f32.mrb[0].mxu0
      %v7268 = vadd.f32 0.0, %v7267
      %7269 = vmatprep.mubr.bf16.mxu0 0
      %7270 = vmatmul.mubr.bf16.gmra.mrb[0].mxu0 %v306
      %v7271 = vpop.f32.mrb[0].mxu0
      %v7272 = vadd.f32 0.0, %v7271
      %v7273 = vpop.f32.mrb[0].mxu0
      %v7274 = vadd.f32 0.0, %v7273
      %v7275 = vpop.f32.mrb[0].mxu0
      %v7276 = vadd.f32 0.0, %v7275
      %v7277 = vpop.f32.mrb[0].mxu0
      %v7278 = vadd.f32 0.0, %v7277
      %7279 = vdwg.mxu0
      %v7280 = vmax.f32 %v7103, 0.0
      %v7281 = vmax.f32 %v7105, 0.0
      %v7282 = vmax.f32 %v7156, 0.0
      %v7283 = vmax.f32 %v7158, 0.0
      %v7284 = vmax.f32 %v7209, 0.0
      %v7285 = vmax.f32 %v7211, 0.0
      %v7286 = vmax.f32 %v7262, 0.0
      %v7287 = vmax.f32 %v7264, 0.0
      %v7288 = vmax.f32 %v7107, 0.0
      %v7289 = vmax.f32 %v7109, 0.0
      %v7290 = vmax.f32 %v7160, 0.0
      %v7291 = vmax.f32 %v7162, 0.0
      %v7292 = vmax.f32 %v7213, 0.0
      %v7293 = vmax.f32 %v7215, 0.0
      %v7294 = vmax.f32 %v7266, 0.0
      %v7295 = vmax.f32 %v7268, 0.0
      %v7296 = vmax.f32 %v7113, 0.0
      %v7297 = vmax.f32 %v7115, 0.0
      %v7298 = vmax.f32 %v7166, 0.0
      %v7299 = vmax.f32 %v7168, 0.0
      %v7300 = vmax.f32 %v7219, 0.0
      %v7301 = vmax.f32 %v7221, 0.0
      %v7302 = vmax.f32 %v7272, 0.0
      %v7303 = vmax.f32 %v7274, 0.0
      %v7304 = vmax.f32 %v7117, 0.0
      %v7305 = vmax.f32 %v7119, 0.0
      %v7306 = vmax.f32 %v7170, 0.0
      %v7307 = vmax.f32 %v7172, 0.0
      %v7308 = vmax.f32 %v7223, 0.0
      %v7309 = vmax.f32 %v7225, 0.0
      %v7310 = vmax.f32 %v7276, 0.0
      %v7311 = vmax.f32 %v7278, 0.0
      %v7312 = vadd.f32 %v7280, %v7281
      %v7313 = vadd.f32 %v7312, %v7282
      %v7314 = vadd.f32 %v7313, %v7283
      %v7315 = vadd.f32 %v7314, %v7284
      %v7316 = vadd.f32 %v7315, %v7285
      %v7317 = vadd.f32 %v7316, %v7286
      %v7318 = vadd.f32 %v7317, %v7287
      %7319 = vadd.xlane.f32.xlu0 %v7318
      %v7320 = vpop.xlane.xlu0 %7319
      %v7321 = vadd.f32 %v7288, %v7289
      %v7322 = vadd.f32 %v7321, %v7290
      %v7323 = vadd.f32 %v7322, %v7291
      %v7324 = vadd.f32 %v7323, %v7292
      %v7325 = vadd.f32 %v7324, %v7293
      %v7326 = vadd.f32 %v7325, %v7294
      %v7327 = vadd.f32 %v7326, %v7295
      %7328 = vadd.xlane.f32.xlu0 %v7327
      %v7329 = vpop.xlane.xlu0 %7328
      %v7330 = vadd.f32 %v7296, %v7297
      %v7331 = vadd.f32 %v7330, %v7298
      %v7332 = vadd.f32 %v7331, %v7299
      %v7333 = vadd.f32 %v7332, %v7300
      %v7334 = vadd.f32 %v7333, %v7301
      %v7335 = vadd.f32 %v7334, %v7302
      %v7336 = vadd.f32 %v7335, %v7303
      %7337 = vadd.xlane.f32.xlu0 %v7336
      %v7338 = vpop.xlane.xlu0 %7337
      %v7339 = vadd.f32 %v7304, %v7305
      %v7340 = vadd.f32 %v7339, %v7306
      %v7341 = vadd.f32 %v7340, %v7307
      %v7342 = vadd.f32 %v7341, %v7308
      %v7343 = vadd.f32 %v7342, %v7309
      %v7344 = vadd.f32 %v7343, %v7310
      %v7345 = vadd.f32 %v7344, %v7311
      %7346 = vadd.xlane.f32.xlu0 %v7345
      %v7347 = vpop.xlane.xlu0 %7346
      %v7348 = vadd.f32 %v6952, %v7320
      %v7349 = vadd.f32 %v6953, %v7329
      %v7350 = vadd.f32 %v6954, %v7338
      %v7351 = vadd.f32 %v6955, %v7347
      %v7352 = vld [vmem:[%s192 + $0x240] sm:$0xff]
      %v7353 = vld [vmem:[%s192 + $0x248] sm:$0xff]
      %v7354 = vld [vmem:[%s192 + $0x250] sm:$0xff]
      %v7355 = vld [vmem:[%s192 + $0x258] sm:$0xff]
      %v7356 = vld [vmem:[%s192 + $0x500] sm:$0xff]
      %v7357 = vld [vmem:[%s192 + $0x508] sm:$0xff]
      %v7358 = vld [vmem:[%s192 + $0x510] sm:$0xff]
      %v7359 = vld [vmem:[%s192 + $0x518] sm:$0xff]
      %v7360 = vld [vmem:[%s192 + $0x7c0] sm:$0xff]
      %v7361 = vld [vmem:[%s192 + $0x7c8] sm:$0xff]
      %v7362 = vld [vmem:[%s192 + $0x7d0] sm:$0xff]
      %v7363 = vld [vmem:[%s192 + $0x7d8] sm:$0xff]
      %v7364 = vld [vmem:[%s192 + $0xa80] sm:$0x33]
      %v7365 = vld [vmem:[%s192 + $0xa88] sm:$0x33]
      %v7366 = vld [vmem:[%s192 + $0xa90] sm:$0x33]
      %v7367 = vld [vmem:[%s192 + $0xa98] sm:$0x33]
      %v7384 = vunpack.c.l.b16 %v7352
      %v7385 = vunpack.c.h.b16 %v7352
      %v7386 = vunpack.c.l.b16 %v7353
      %v7387 = vunpack.c.h.b16 %v7353
      %v7388 = vunpack.c.l.b16 %v7354
      %v7389 = vunpack.c.h.b16 %v7354
      %v7390 = vunpack.c.l.b16 %v7355
      %v7391 = vunpack.c.h.b16 %v7355
      %v7392 = vunpack.c.l.b16 %v7356
      %v7393 = vunpack.c.h.b16 %v7356
      %v7394 = vunpack.c.l.b16 %v7357
      %v7395 = vunpack.c.h.b16 %v7357
      %v7396 = vunpack.c.l.b16 %v7358
      %v7397 = vunpack.c.h.b16 %v7358
      %v7398 = vunpack.c.l.b16 %v7359
      %v7399 = vunpack.c.h.b16 %v7359
      %v7400 = vunpack.c.l.b16 %v7360
      %v7401 = vunpack.c.h.b16 %v7360
      %v7402 = vunpack.c.l.b16 %v7361
      %v7403 = vunpack.c.h.b16 %v7361
      %v7404 = vunpack.c.l.b16 %v7362
      %v7405 = vunpack.c.h.b16 %v7362
      %v7406 = vunpack.c.l.b16 %v7363
      %v7407 = vunpack.c.h.b16 %v7363
      %v7408 = vunpack.c.l.b16 %v7364
      %v7409 = vunpack.c.h.b16 %v7364
      %v7410 = vunpack.c.l.b16 %v7365
      %v7411 = vunpack.c.h.b16 %v7365
      %v7412 = vunpack.c.l.b16 %v7366
      %v7413 = vunpack.c.h.b16 %v7366
      %v7414 = vunpack.c.l.b16 %v7367
      %v7415 = vunpack.c.h.b16 %v7367
      %v7416 = vpack.c.b16 %v7392, %v7384
      %v7417 = vpack.c.b16 %v7393, %v7385
      %v7418 = vpack.c.b16 %v7394, %v7386
      %v7419 = vpack.c.b16 %v7395, %v7387
      %v7420 = vpack.c.b16 %v7396, %v7388
      %v7421 = vpack.c.b16 %v7397, %v7389
      %v7422 = vpack.c.b16 %v7398, %v7390
      %v7423 = vpack.c.b16 %v7399, %v7391
      %v7424 = vpack.c.b16 %v7408, %v7400
      %v7425 = vpack.c.b16 %v7409, %v7401
      %v7426 = vpack.c.b16 %v7410, %v7402
      %v7427 = vpack.c.b16 %v7411, %v7403
      %v7428 = vpack.c.b16 %v7412, %v7404
      %v7429 = vpack.c.b16 %v7413, %v7405
      %v7430 = vpack.c.b16 %v7414, %v7406
      %v7431 = vpack.c.b16 %v7415, %v7407
      %v7441 = vand.u32 %v7424, %v311
      %v7444 = vand.u32 %v7425, %v311
      %v7447 = vand.u32 %v7426, %v311
      %v7450 = vand.u32 %v7427, %v311
      %v7453 = vand.u32 %v7428, %v311
      %v7456 = vand.u32 %v7429, %v311
      %v7459 = vand.u32 %v7430, %v311
      %v7462 = vand.u32 %v7431, %v311
      %7464 = vmatprep.subr.bf16.mxu0 %v7417
      %7465 = vmatpush1.bf16.msra.mxu0 %v7416
      %7466 = vmatprep.subr.bf16.mxu0 %v7444
      %7467 = vmatpush1.bf16.msra.mxu0 %v7441
      %7468 = vmatprep.subr.bf16.mxu0 0
      %7469 = vmatpush1.bf16.msra.mxu0 0
      %7470 = vmatprep.subr.bf16.mxu0 0
      %7471 = vmatpush1.bf16.msra.mxu0 0
      %7472 = vmatprep.subr.bf16.mxu0 0
      %7473 = vmatpush1.bf16.msra.mxu0 0
      %7474 = vmatprep.subr.bf16.mxu0 0
      %7475 = vmatpush1.bf16.msra.mxu0 0
      %7476 = vmatprep.subr.bf16.mxu0 0
      %7477 = vmatpush1.bf16.msra.mxu0 0
      %7478 = vmatprep.subr.bf16.mxu0 0
      %7479 = vmatpush1.bf16.msra.mxu0 0
      %7480 = vmatprep.subr.bf16.mxu0 0
      %7481 = vmatpush1.bf16.msra.mxu0 0
      %7482 = vmatprep.subr.bf16.mxu0 0
      %7483 = vmatpush1.bf16.msra.mxu0 0
      %7484 = vmatprep.subr.bf16.mxu0 0
      %7485 = vmatpush1.bf16.msra.mxu0 0
      %7486 = vmatprep.subr.bf16.mxu0 0
      %7487 = vmatpush1.bf16.msra.mxu0 0
      %7488 = vmatprep.subr.bf16.mxu0 0
      %7489 = vmatpush1.bf16.msra.mxu0 0
      %7490 = vmatprep.subr.bf16.mxu0 0
      %7491 = vmatpush1.bf16.msra.mxu0 0
      %7492 = vmatprep.subr.bf16.mxu0 0
      %7493 = vmatpush1.bf16.msra.mxu0 0
      %7494 = vmatprep.subr.bf16.mxu0 0
      %7495 = vmatpush1.bf16.msra.mxu0 0
      %7496 = vmatprep.mubr.bf16.mxu0 0
      %7497 = vmatmul.mubr.bf16.gmra.mrb[0].mxu0 %v303
      %v7498 = vpop.f32.mrb[0].mxu0
      %v7499 = vadd.f32 0.0, %v7498
      %v7500 = vpop.f32.mrb[0].mxu0
      %v7501 = vadd.f32 0.0, %v7500
      %v7502 = vpop.f32.mrb[0].mxu0
      %v7503 = vadd.f32 0.0, %v7502
      %v7504 = vpop.f32.mrb[0].mxu0
      %v7505 = vadd.f32 0.0, %v7504
      %7506 = vmatprep.mubr.bf16.mxu0 0
      %7507 = vmatmul.mubr.bf16.gmra.mrb[0].mxu0 %v306
      %v7508 = vpop.f32.mrb[0].mxu0
      %v7509 = vadd.f32 0.0, %v7508
      %v7510 = vpop.f32.mrb[0].mxu0
      %v7511 = vadd.f32 0.0, %v7510
      %v7512 = vpop.f32.mrb[0].mxu0
      %v7513 = vadd.f32 0.0, %v7512
      %v7514 = vpop.f32.mrb[0].mxu0
      %v7515 = vadd.f32 0.0, %v7514
      %7516 = vdwg.mxu0
      %7517 = vmatprep.subr.bf16.mxu0 %v7419
      %7518 = vmatpush1.bf16.msra.mxu0 %v7418
      %7519 = vmatprep.subr.bf16.mxu0 %v7450
      %7520 = vmatpush1.bf16.msra.mxu0 %v7447
      %7521 = vmatprep.subr.bf16.mxu0 0
      %7522 = vmatpush1.bf16.msra.mxu0 0
      %7523 = vmatprep.subr.bf16.mxu0 0
      %7524 = vmatpush1.bf16.msra.mxu0 0
      %7525 = vmatprep.subr.bf16.mxu0 0
      %7526 = vmatpush1.bf16.msra.mxu0 0
      %7527 = vmatprep.subr.bf16.mxu0 0
      %7528 = vmatpush1.bf16.msra.mxu0 0
      %7529 = vmatprep.subr.bf16.mxu0 0
      %7530 = vmatpush1.bf16.msra.mxu0 0
      %7531 = vmatprep.subr.bf16.mxu0 0
      %7532 = vmatpush1.bf16.msra.mxu0 0
      %7533 = vmatprep.subr.bf16.mxu0 0
      %7534 = vmatpush1.bf16.msra.mxu0 0
      %7535 = vmatprep.subr.bf16.mxu0 0
      %7536 = vmatpush1.bf16.msra.mxu0 0
      %7537 = vmatprep.subr.bf16.mxu0 0
      %7538 = vmatpush1.bf16.msra.mxu0 0
      %7539 = vmatprep.subr.bf16.mxu0 0
      %7540 = vmatpush1.bf16.msra.mxu0 0
      %7541 = vmatprep.subr.bf16.mxu0 0
      %7542 = vmatpush1.bf16.msra.mxu0 0
      %7543 = vmatprep.subr.bf16.mxu0 0
      %7544 = vmatpush1.bf16.msra.mxu0 0
      %7545 = vmatprep.subr.bf16.mxu0 0
      %7546 = vmatpush1.bf16.msra.mxu0 0
      %7547 = vmatprep.subr.bf16.mxu0 0
      %7548 = vmatpush1.bf16.msra.mxu0 0
      %7549 = vmatprep.mubr.bf16.mxu0 0
      %7550 = vmatmul.mubr.bf16.gmra.mrb[0].mxu0 %v303
      %v7551 = vpop.f32.mrb[0].mxu0
      %v7552 = vadd.f32 0.0, %v7551
      %v7553 = vpop.f32.mrb[0].mxu0
      %v7554 = vadd.f32 0.0, %v7553
      %v7555 = vpop.f32.mrb[0].mxu0
      %v7556 = vadd.f32 0.0, %v7555
      %v7557 = vpop.f32.mrb[0].mxu0
      %v7558 = vadd.f32 0.0, %v7557
      %7559 = vmatprep.mubr.bf16.mxu0 0
      %7560 = vmatmul.mubr.bf16.gmra.mrb[0].mxu0 %v306
      %v7561 = vpop.f32.mrb[0].mxu0
      %v7562 = vadd.f32 0.0, %v7561
      %v7563 = vpop.f32.mrb[0].mxu0
      %v7564 = vadd.f32 0.0, %v7563
      %v7565 = vpop.f32.mrb[0].mxu0
      %v7566 = vadd.f32 0.0, %v7565
      %v7567 = vpop.f32.mrb[0].mxu0
      %v7568 = vadd.f32 0.0, %v7567
      %7569 = vdwg.mxu0
      %7570 = vmatprep.subr.bf16.mxu0 %v7421
      %7571 = vmatpush1.bf16.msra.mxu0 %v7420
      %7572 = vmatprep.subr.bf16.mxu0 %v7456
      %7573 = vmatpush1.bf16.msra.mxu0 %v7453
      %7574 = vmatprep.subr.bf16.mxu0 0
      %7575 = vmatpush1.bf16.msra.mxu0 0
      %7576 = vmatprep.subr.bf16.mxu0 0
      %7577 = vmatpush1.bf16.msra.mxu0 0
      %7578 = vmatprep.subr.bf16.mxu0 0
      %7579 = vmatpush1.bf16.msra.mxu0 0
      %7580 = vmatprep.subr.bf16.mxu0 0
      %7581 = vmatpush1.bf16.msra.mxu0 0
      %7582 = vmatprep.subr.bf16.mxu0 0
      %7583 = vmatpush1.bf16.msra.mxu0 0
      %7584 = vmatprep.subr.bf16.mxu0 0
      %7585 = vmatpush1.bf16.msra.mxu0 0
      %7586 = vmatprep.subr.bf16.mxu0 0
      %7587 = vmatpush1.bf16.msra.mxu0 0
      %7588 = vmatprep.subr.bf16.mxu0 0
      %7589 = vmatpush1.bf16.msra.mxu0 0
      %7590 = vmatprep.subr.bf16.mxu0 0
      %7591 = vmatpush1.bf16.msra.mxu0 0
      %7592 = vmatprep.subr.bf16.mxu0 0
      %7593 = vmatpush1.bf16.msra.mxu0 0
      %7594 = vmatprep.subr.bf16.mxu0 0
      %7595 = vmatpush1.bf16.msra.mxu0 0
      %7596 = vmatprep.subr.bf16.mxu0 0
      %7597 = vmatpush1.bf16.msra.mxu0 0
      %7598 = vmatprep.subr.bf16.mxu0 0
      %7599 = vmatpush1.bf16.msra.mxu0 0
      %7600 = vmatprep.subr.bf16.mxu0 0
      %7601 = vmatpush1.bf16.msra.mxu0 0
      %7602 = vmatprep.mubr.bf16.mxu0 0
      %7603 = vmatmul.mubr.bf16.gmra.mrb[0].mxu0 %v303
      %v7604 = vpop.f32.mrb[0].mxu0
      %v7605 = vadd.f32 0.0, %v7604
      %v7606 = vpop.f32.mrb[0].mxu0
      %v7607 = vadd.f32 0.0, %v7606
      %v7608 = vpop.f32.mrb[0].mxu0
      %v7609 = vadd.f32 0.0, %v7608
      %v7610 = vpop.f32.mrb[0].mxu0
      %v7611 = vadd.f32 0.0, %v7610
      %7612 = vmatprep.mubr.bf16.mxu0 0
      %7613 = vmatmul.mubr.bf16.gmra.mrb[0].mxu0 %v306
      %v7614 = vpop.f32.mrb[0].mxu0
      %v7615 = vadd.f32 0.0, %v7614
      %v7616 = vpop.f32.mrb[0].mxu0
      %v7617 = vadd.f32 0.0, %v7616
      %v7618 = vpop.f32.mrb[0].mxu0
      %v7619 = vadd.f32 0.0, %v7618
      %v7620 = vpop.f32.mrb[0].mxu0
      %v7621 = vadd.f32 0.0, %v7620
      %7622 = vdwg.mxu0
      %7623 = vmatprep.subr.bf16.mxu0 %v7423
      %7624 = vmatpush1.bf16.msra.mxu0 %v7422
      %7625 = vmatprep.subr.bf16.mxu0 %v7462
      %7626 = vmatpush1.bf16.msra.mxu0 %v7459
      %7627 = vmatprep.subr.bf16.mxu0 0
      %7628 = vmatpush1.bf16.msra.mxu0 0
      %7629 = vmatprep.subr.bf16.mxu0 0
      %7630 = vmatpush1.bf16.msra.mxu0 0
      %7631 = vmatprep.subr.bf16.mxu0 0
      %7632 = vmatpush1.bf16.msra.mxu0 0
      %7633 = vmatprep.subr.bf16.mxu0 0
      %7634 = vmatpush1.bf16.msra.mxu0 0
      %7635 = vmatprep.subr.bf16.mxu0 0
      %7636 = vmatpush1.bf16.msra.mxu0 0
      %7637 = vmatprep.subr.bf16.mxu0 0
      %7638 = vmatpush1.bf16.msra.mxu0 0
      %7639 = vmatprep.subr.bf16.mxu0 0
      %7640 = vmatpush1.bf16.msra.mxu0 0
      %7641 = vmatprep.subr.bf16.mxu0 0
      %7642 = vmatpush1.bf16.msra.mxu0 0
      %7643 = vmatprep.subr.bf16.mxu0 0
      %7644 = vmatpush1.bf16.msra.mxu0 0
      %7645 = vmatprep.subr.bf16.mxu0 0
      %7646 = vmatpush1.bf16.msra.mxu0 0
      %7647 = vmatprep.subr.bf16.mxu0 0
      %7648 = vmatpush1.bf16.msra.mxu0 0
      %7649 = vmatprep.subr.bf16.mxu0 0
      %7650 = vmatpush1.bf16.msra.mxu0 0
      %7651 = vmatprep.subr.bf16.mxu0 0
      %7652 = vmatpush1.bf16.msra.mxu0 0
      %7653 = vmatprep.subr.bf16.mxu0 0
      %7654 = vmatpush1.bf16.msra.mxu0 0
      %7655 = vmatprep.mubr.bf16.mxu0 0
      %7656 = vmatmul.mubr.bf16.gmra.mrb[0].mxu0 %v303
      %v7657 = vpop.f32.mrb[0].mxu0
      %v7658 = vadd.f32 0.0, %v7657
      %v7659 = vpop.f32.mrb[0].mxu0
      %v7660 = vadd.f32 0.0, %v7659
      %v7661 = vpop.f32.mrb[0].mxu0
      %v7662 = vadd.f32 0.0, %v7661
      %v7663 = vpop.f32.mrb[0].mxu0
      %v7664 = vadd.f32 0.0, %v7663
      %7665 = vmatprep.mubr.bf16.mxu0 0
      %7666 = vmatmul.mubr.bf16.gmra.mrb[0].mxu0 %v306
      %v7667 = vpop.f32.mrb[0].mxu0
      %v7668 = vadd.f32 0.0, %v7667
      %v7669 = vpop.f32.mrb[0].mxu0
      %v7670 = vadd.f32 0.0, %v7669
      %v7671 = vpop.f32.mrb[0].mxu0
      %v7672 = vadd.f32 0.0, %v7671
      %v7673 = vpop.f32.mrb[0].mxu0
      %v7674 = vadd.f32 0.0, %v7673
      %7675 = vdwg.mxu0
      %v7676 = vmax.f32 %v7499, 0.0
      %v7677 = vmax.f32 %v7501, 0.0
      %v7678 = vmax.f32 %v7552, 0.0
      %v7679 = vmax.f32 %v7554, 0.0
      %v7680 = vmax.f32 %v7605, 0.0
      %v7681 = vmax.f32 %v7607, 0.0
      %v7682 = vmax.f32 %v7658, 0.0
      %v7683 = vmax.f32 %v7660, 0.0
      %v7684 = vmax.f32 %v7503, 0.0
      %v7685 = vmax.f32 %v7505, 0.0
      %v7686 = vmax.f32 %v7556, 0.0
      %v7687 = vmax.f32 %v7558, 0.0
      %v7688 = vmax.f32 %v7609, 0.0
      %v7689 = vmax.f32 %v7611, 0.0
      %v7690 = vmax.f32 %v7662, 0.0
      %v7691 = vmax.f32 %v7664, 0.0
      %v7692 = vmax.f32 %v7509, 0.0
      %v7693 = vmax.f32 %v7511, 0.0
      %v7694 = vmax.f32 %v7562, 0.0
      %v7695 = vmax.f32 %v7564, 0.0
      %v7696 = vmax.f32 %v7615, 0.0
      %v7697 = vmax.f32 %v7617, 0.0
      %v7698 = vmax.f32 %v7668, 0.0
      %v7699 = vmax.f32 %v7670, 0.0
      %v7700 = vmax.f32 %v7513, 0.0
      %v7701 = vmax.f32 %v7515, 0.0
      %v7702 = vmax.f32 %v7566, 0.0
      %v7703 = vmax.f32 %v7568, 0.0
      %v7704 = vmax.f32 %v7619, 0.0
      %v7705 = vmax.f32 %v7621, 0.0
      %v7706 = vmax.f32 %v7672, 0.0
      %v7707 = vmax.f32 %v7674, 0.0
      %v7708 = vadd.f32 %v7676, %v7677
      %v7709 = vadd.f32 %v7708, %v7678
      %v7710 = vadd.f32 %v7709, %v7679
      %v7711 = vadd.f32 %v7710, %v7680
      %v7712 = vadd.f32 %v7711, %v7681
      %v7713 = vadd.f32 %v7712, %v7682
      %v7714 = vadd.f32 %v7713, %v7683
      %7715 = vadd.xlane.f32.xlu0 %v7714
      %v7716 = vpop.xlane.xlu0 %7715
      %v7717 = vadd.f32 %v7684, %v7685
      %v7718 = vadd.f32 %v7717, %v7686
      %v7719 = vadd.f32 %v7718, %v7687
      %v7720 = vadd.f32 %v7719, %v7688
      %v7721 = vadd.f32 %v7720, %v7689
      %v7722 = vadd.f32 %v7721, %v7690
      %v7723 = vadd.f32 %v7722, %v7691
      %7724 = vadd.xlane.f32.xlu0 %v7723
      %v7725 = vpop.xlane.xlu0 %7724
      %v7726 = vadd.f32 %v7692, %v7693
      %v7727 = vadd.f32 %v7726, %v7694
      %v7728 = vadd.f32 %v7727, %v7695
      %v7729 = vadd.f32 %v7728, %v7696
      %v7730 = vadd.f32 %v7729, %v7697
      %v7731 = vadd.f32 %v7730, %v7698
      %v7732 = vadd.f32 %v7731, %v7699
      %7733 = vadd.xlane.f32.xlu0 %v7732
      %v7734 = vpop.xlane.xlu0 %7733
      %v7735 = vadd.f32 %v7700, %v7701
      %v7736 = vadd.f32 %v7735, %v7702
      %v7737 = vadd.f32 %v7736, %v7703
      %v7738 = vadd.f32 %v7737, %v7704
      %v7739 = vadd.f32 %v7738, %v7705
      %v7740 = vadd.f32 %v7739, %v7706
      %v7741 = vadd.f32 %v7740, %v7707
      %7742 = vadd.xlane.f32.xlu0 %v7741
      %v7743 = vpop.xlane.xlu0 %7742
      %v7744 = vadd.f32 %v7348, %v7716
      %v7745 = vadd.f32 %v7349, %v7725
      %v7746 = vadd.f32 %v7350, %v7734
      %v7747 = vadd.f32 %v7351, %v7743
      %v7748 = vld [vmem:[%s192 + $0x260] sm:$0xff]
      %v7749 = vld [vmem:[%s192 + $0x268] sm:$0xff]
      %v7750 = vld [vmem:[%s192 + $0x270] sm:$0xff]
      %v7751 = vld [vmem:[%s192 + $0x278] sm:$0xff]
      %v7752 = vld [vmem:[%s192 + $0x520] sm:$0xff]
      %v7753 = vld [vmem:[%s192 + $0x528] sm:$0xff]
      %v7754 = vld [vmem:[%s192 + $0x530] sm:$0xff]
      %v7755 = vld [vmem:[%s192 + $0x538] sm:$0xff]
      %v7756 = vld [vmem:[%s192 + $0x7e0] sm:$0xff]
      %v7757 = vld [vmem:[%s192 + $0x7e8] sm:$0xff]
      %v7758 = vld [vmem:[%s192 + $0x7f0] sm:$0xff]
      %v7759 = vld [vmem:[%s192 + $0x7f8] sm:$0xff]
      %v7760 = vld [vmem:[%s192 + $0xaa0] sm:$0x33]
      %v7761 = vld [vmem:[%s192 + $0xaa8] sm:$0x33]
      %v7762 = vld [vmem:[%s192 + $0xab0] sm:$0x33]
      %v7763 = vld [vmem:[%s192 + $0xab8] sm:$0x33]
      %v7780 = vunpack.c.l.b16 %v7748
      %v7781 = vunpack.c.h.b16 %v7748
      %v7782 = vunpack.c.l.b16 %v7749
      %v7783 = vunpack.c.h.b16 %v7749
      %v7784 = vunpack.c.l.b16 %v7750
      %v7785 = vunpack.c.h.b16 %v7750
      %v7786 = vunpack.c.l.b16 %v7751
      %v7787 = vunpack.c.h.b16 %v7751
      %v7788 = vunpack.c.l.b16 %v7752
      %v7789 = vunpack.c.h.b16 %v7752
      %v7790 = vunpack.c.l.b16 %v7753
      %v7791 = vunpack.c.h.b16 %v7753
      %v7792 = vunpack.c.l.b16 %v7754
      %v7793 = vunpack.c.h.b16 %v7754
      %v7794 = vunpack.c.l.b16 %v7755
      %v7795 = vunpack.c.h.b16 %v7755
      %v7796 = vunpack.c.l.b16 %v7756
      %v7797 = vunpack.c.h.b16 %v7756
      %v7798 = vunpack.c.l.b16 %v7757
      %v7799 = vunpack.c.h.b16 %v7757
      %v7800 = vunpack.c.l.b16 %v7758
      %v7801 = vunpack.c.h.b16 %v7758
      %v7802 = vunpack.c.l.b16 %v7759
      %v7803 = vunpack.c.h.b16 %v7759
      %v7804 = vunpack.c.l.b16 %v7760
      %v7805 = vunpack.c.h.b16 %v7760
      %v7806 = vunpack.c.l.b16 %v7761
      %v7807 = vunpack.c.h.b16 %v7761
      %v7808 = vunpack.c.l.b16 %v7762
      %v7809 = vunpack.c.h.b16 %v7762
      %v7810 = vunpack.c.l.b16 %v7763
      %v7811 = vunpack.c.h.b16 %v7763
      %v7812 = vpack.c.b16 %v7788, %v7780
      %v7813 = vpack.c.b16 %v7789, %v7781
      %v7814 = vpack.c.b16 %v7790, %v7782
      %v7815 = vpack.c.b16 %v7791, %v7783
      %v7816 = vpack.c.b16 %v7792, %v7784
      %v7817 = vpack.c.b16 %v7793, %v7785
      %v7818 = vpack.c.b16 %v7794, %v7786
      %v7819 = vpack.c.b16 %v7795, %v7787
      %v7820 = vpack.c.b16 %v7804, %v7796
      %v7821 = vpack.c.b16 %v7805, %v7797
      %v7822 = vpack.c.b16 %v7806, %v7798
      %v7823 = vpack.c.b16 %v7807, %v7799
      %v7824 = vpack.c.b16 %v7808, %v7800
      %v7825 = vpack.c.b16 %v7809, %v7801
      %v7826 = vpack.c.b16 %v7810, %v7802
      %v7827 = vpack.c.b16 %v7811, %v7803
      %v7837 = vand.u32 %v7820, %v311
      %v7840 = vand.u32 %v7821, %v311
      %v7843 = vand.u32 %v7822, %v311
      %v7846 = vand.u32 %v7823, %v311
      %v7849 = vand.u32 %v7824, %v311
      %v7852 = vand.u32 %v7825, %v311
      %v7855 = vand.u32 %v7826, %v311
      %v7858 = vand.u32 %v7827, %v311
      %7860 = vmatprep.subr.bf16.mxu0 %v7813
      %7861 = vmatpush1.bf16.msra.mxu0 %v7812
      %7862 = vmatprep.subr.bf16.mxu0 %v7840
      %7863 = vmatpush1.bf16.msra.mxu0 %v7837
      %7864 = vmatprep.subr.bf16.mxu0 0
      %7865 = vmatpush1.bf16.msra.mxu0 0
      %7866 = vmatprep.subr.bf16.mxu0 0
      %7867 = vmatpush1.bf16.msra.mxu0 0
      %7868 = vmatprep.subr.bf16.mxu0 0
      %7869 = vmatpush1.bf16.msra.mxu0 0
      %7870 = vmatprep.subr.bf16.mxu0 0
      %7871 = vmatpush1.bf16.msra.mxu0 0
      %7872 = vmatprep.subr.bf16.mxu0 0
      %7873 = vmatpush1.bf16.msra.mxu0 0
      %7874 = vmatprep.subr.bf16.mxu0 0
      %7875 = vmatpush1.bf16.msra.mxu0 0
      %7876 = vmatprep.subr.bf16.mxu0 0
      %7877 = vmatpush1.bf16.msra.mxu0 0
      %7878 = vmatprep.subr.bf16.mxu0 0
      %7879 = vmatpush1.bf16.msra.mxu0 0
      %7880 = vmatprep.subr.bf16.mxu0 0
      %7881 = vmatpush1.bf16.msra.mxu0 0
      %7882 = vmatprep.subr.bf16.mxu0 0
      %7883 = vmatpush1.bf16.msra.mxu0 0
      %7884 = vmatprep.subr.bf16.mxu0 0
      %7885 = vmatpush1.bf16.msra.mxu0 0
      %7886 = vmatprep.subr.bf16.mxu0 0
      %7887 = vmatpush1.bf16.msra.mxu0 0
      %7888 = vmatprep.subr.bf16.mxu0 0
      %7889 = vmatpush1.bf16.msra.mxu0 0
      %7890 = vmatprep.subr.bf16.mxu0 0
      %7891 = vmatpush1.bf16.msra.mxu0 0
      %7892 = vmatprep.mubr.bf16.mxu0 0
      %7893 = vmatmul.mubr.bf16.gmra.mrb[0].mxu0 %v303
      %v7894 = vpop.f32.mrb[0].mxu0
      %v7895 = vadd.f32 0.0, %v7894
      %v7896 = vpop.f32.mrb[0].mxu0
      %v7897 = vadd.f32 0.0, %v7896
      %v7898 = vpop.f32.mrb[0].mxu0
      %v7899 = vadd.f32 0.0, %v7898
      %v7900 = vpop.f32.mrb[0].mxu0
      %v7901 = vadd.f32 0.0, %v7900
      %7902 = vmatprep.mubr.bf16.mxu0 0
      %7903 = vmatmul.mubr.bf16.gmra.mrb[0].mxu0 %v306
      %v7904 = vpop.f32.mrb[0].mxu0
      %v7905 = vadd.f32 0.0, %v7904
      %v7906 = vpop.f32.mrb[0].mxu0
      %v7907 = vadd.f32 0.0, %v7906
      %v7908 = vpop.f32.mrb[0].mxu0
      %v7909 = vadd.f32 0.0, %v7908
      %v7910 = vpop.f32.mrb[0].mxu0
      %v7911 = vadd.f32 0.0, %v7910
      %7912 = vdwg.mxu0
      %7913 = vmatprep.subr.bf16.mxu0 %v7815
      %7914 = vmatpush1.bf16.msra.mxu0 %v7814
      %7915 = vmatprep.subr.bf16.mxu0 %v7846
      %7916 = vmatpush1.bf16.msra.mxu0 %v7843
      %7917 = vmatprep.subr.bf16.mxu0 0
      %7918 = vmatpush1.bf16.msra.mxu0 0
      %7919 = vmatprep.subr.bf16.mxu0 0
      %7920 = vmatpush1.bf16.msra.mxu0 0
      %7921 = vmatprep.subr.bf16.mxu0 0
      %7922 = vmatpush1.bf16.msra.mxu0 0
      %7923 = vmatprep.subr.bf16.mxu0 0
      %7924 = vmatpush1.bf16.msra.mxu0 0
      %7925 = vmatprep.subr.bf16.mxu0 0
      %7926 = vmatpush1.bf16.msra.mxu0 0
      %7927 = vmatprep.subr.bf16.mxu0 0
      %7928 = vmatpush1.bf16.msra.mxu0 0
      %7929 = vmatprep.subr.bf16.mxu0 0
      %7930 = vmatpush1.bf16.msra.mxu0 0
      %7931 = vmatprep.subr.bf16.mxu0 0
      %7932 = vmatpush1.bf16.msra.mxu0 0
      %7933 = vmatprep.subr.bf16.mxu0 0
      %7934 = vmatpush1.bf16.msra.mxu0 0
      %7935 = vmatprep.subr.bf16.mxu0 0
      %7936 = vmatpush1.bf16.msra.mxu0 0
      %7937 = vmatprep.subr.bf16.mxu0 0
      %7938 = vmatpush1.bf16.msra.mxu0 0
      %7939 = vmatprep.subr.bf16.mxu0 0
      %7940 = vmatpush1.bf16.msra.mxu0 0
      %7941 = vmatprep.subr.bf16.mxu0 0
      %7942 = vmatpush1.bf16.msra.mxu0 0
      %7943 = vmatprep.subr.bf16.mxu0 0
      %7944 = vmatpush1.bf16.msra.mxu0 0
      %7945 = vmatprep.mubr.bf16.mxu0 0
      %7946 = vmatmul.mubr.bf16.gmra.mrb[0].mxu0 %v303
      %v7947 = vpop.f32.mrb[0].mxu0
      %v7948 = vadd.f32 0.0, %v7947
      %v7949 = vpop.f32.mrb[0].mxu0
      %v7950 = vadd.f32 0.0, %v7949
      %v7951 = vpop.f32.mrb[0].mxu0
      %v7952 = vadd.f32 0.0, %v7951
      %v7953 = vpop.f32.mrb[0].mxu0
      %v7954 = vadd.f32 0.0, %v7953
      %7955 = vmatprep.mubr.bf16.mxu0 0
      %7956 = vmatmul.mubr.bf16.gmra.mrb[0].mxu0 %v306
      %v7957 = vpop.f32.mrb[0].mxu0
      %v7958 = vadd.f32 0.0, %v7957
      %v7959 = vpop.f32.mrb[0].mxu0
      %v7960 = vadd.f32 0.0, %v7959
      %v7961 = vpop.f32.mrb[0].mxu0
      %v7962 = vadd.f32 0.0, %v7961
      %v7963 = vpop.f32.mrb[0].mxu0
      %v7964 = vadd.f32 0.0, %v7963
      %7965 = vdwg.mxu0
      %7966 = vmatprep.subr.bf16.mxu0 %v7817
      %7967 = vmatpush1.bf16.msra.mxu0 %v7816
      %7968 = vmatprep.subr.bf16.mxu0 %v7852
      %7969 = vmatpush1.bf16.msra.mxu0 %v7849
      %7970 = vmatprep.subr.bf16.mxu0 0
      %7971 = vmatpush1.bf16.msra.mxu0 0
      %7972 = vmatprep.subr.bf16.mxu0 0
      %7973 = vmatpush1.bf16.msra.mxu0 0
      %7974 = vmatprep.subr.bf16.mxu0 0
      %7975 = vmatpush1.bf16.msra.mxu0 0
      %7976 = vmatprep.subr.bf16.mxu0 0
      %7977 = vmatpush1.bf16.msra.mxu0 0
      %7978 = vmatprep.subr.bf16.mxu0 0
      %7979 = vmatpush1.bf16.msra.mxu0 0
      %7980 = vmatprep.subr.bf16.mxu0 0
      %7981 = vmatpush1.bf16.msra.mxu0 0
      %7982 = vmatprep.subr.bf16.mxu0 0
      %7983 = vmatpush1.bf16.msra.mxu0 0
      %7984 = vmatprep.subr.bf16.mxu0 0
      %7985 = vmatpush1.bf16.msra.mxu0 0
      %7986 = vmatprep.subr.bf16.mxu0 0
      %7987 = vmatpush1.bf16.msra.mxu0 0
      %7988 = vmatprep.subr.bf16.mxu0 0
      %7989 = vmatpush1.bf16.msra.mxu0 0
      %7990 = vmatprep.subr.bf16.mxu0 0
      %7991 = vmatpush1.bf16.msra.mxu0 0
      %7992 = vmatprep.subr.bf16.mxu0 0
      %7993 = vmatpush1.bf16.msra.mxu0 0
      %7994 = vmatprep.subr.bf16.mxu0 0
      %7995 = vmatpush1.bf16.msra.mxu0 0
      %7996 = vmatprep.subr.bf16.mxu0 0
      %7997 = vmatpush1.bf16.msra.mxu0 0
      %7998 = vmatprep.mubr.bf16.mxu0 0
      %7999 = vmatmul.mubr.bf16.gmra.mrb[0].mxu0 %v303
      %v8000 = vpop.f32.mrb[0].mxu0
      %v8001 = vadd.f32 0.0, %v8000
      %v8002 = vpop.f32.mrb[0].mxu0
      %v8003 = vadd.f32 0.0, %v8002
      %v8004 = vpop.f32.mrb[0].mxu0
      %v8005 = vadd.f32 0.0, %v8004
      %v8006 = vpop.f32.mrb[0].mxu0
      %v8007 = vadd.f32 0.0, %v8006
      %8008 = vmatprep.mubr.bf16.mxu0 0
      %8009 = vmatmul.mubr.bf16.gmra.mrb[0].mxu0 %v306
      %v8010 = vpop.f32.mrb[0].mxu0
      %v8011 = vadd.f32 0.0, %v8010
      %v8012 = vpop.f32.mrb[0].mxu0
      %v8013 = vadd.f32 0.0, %v8012
      %v8014 = vpop.f32.mrb[0].mxu0
      %v8015 = vadd.f32 0.0, %v8014
      %v8016 = vpop.f32.mrb[0].mxu0
      %v8017 = vadd.f32 0.0, %v8016
      %8018 = vdwg.mxu0
      %8019 = vmatprep.subr.bf16.mxu0 %v7819
      %8020 = vmatpush1.bf16.msra.mxu0 %v7818
      %8021 = vmatprep.subr.bf16.mxu0 %v7858
      %8022 = vmatpush1.bf16.msra.mxu0 %v7855
      %8023 = vmatprep.subr.bf16.mxu0 0
      %8024 = vmatpush1.bf16.msra.mxu0 0
      %8025 = vmatprep.subr.bf16.mxu0 0
      %8026 = vmatpush1.bf16.msra.mxu0 0
      %8027 = vmatprep.subr.bf16.mxu0 0
      %8028 = vmatpush1.bf16.msra.mxu0 0
      %8029 = vmatprep.subr.bf16.mxu0 0
      %8030 = vmatpush1.bf16.msra.mxu0 0
      %8031 = vmatprep.subr.bf16.mxu0 0
      %8032 = vmatpush1.bf16.msra.mxu0 0
      %8033 = vmatprep.subr.bf16.mxu0 0
      %8034 = vmatpush1.bf16.msra.mxu0 0
      %8035 = vmatprep.subr.bf16.mxu0 0
      %8036 = vmatpush1.bf16.msra.mxu0 0
      %8037 = vmatprep.subr.bf16.mxu0 0
      %8038 = vmatpush1.bf16.msra.mxu0 0
      %8039 = vmatprep.subr.bf16.mxu0 0
      %8040 = vmatpush1.bf16.msra.mxu0 0
      %8041 = vmatprep.subr.bf16.mxu0 0
      %8042 = vmatpush1.bf16.msra.mxu0 0
      %8043 = vmatprep.subr.bf16.mxu0 0
      %8044 = vmatpush1.bf16.msra.mxu0 0
      %8045 = vmatprep.subr.bf16.mxu0 0
      %8046 = vmatpush1.bf16.msra.mxu0 0
      %8047 = vmatprep.subr.bf16.mxu0 0
      %8048 = vmatpush1.bf16.msra.mxu0 0
      %8049 = vmatprep.subr.bf16.mxu0 0
      %8050 = vmatpush1.bf16.msra.mxu0 0
      %8051 = vmatprep.mubr.bf16.mxu0 0
      %8052 = vmatmul.mubr.bf16.gmra.mrb[0].mxu0 %v303
      %v8053 = vpop.f32.mrb[0].mxu0
      %v8054 = vadd.f32 0.0, %v8053
      %v8055 = vpop.f32.mrb[0].mxu0
      %v8056 = vadd.f32 0.0, %v8055
      %v8057 = vpop.f32.mrb[0].mxu0
      %v8058 = vadd.f32 0.0, %v8057
      %v8059 = vpop.f32.mrb[0].mxu0
      %v8060 = vadd.f32 0.0, %v8059
      %8061 = vmatprep.mubr.bf16.mxu0 0
      %8062 = vmatmul.mubr.bf16.gmra.mrb[0].mxu0 %v306
      %v8063 = vpop.f32.mrb[0].mxu0
      %v8064 = vadd.f32 0.0, %v8063
      %v8065 = vpop.f32.mrb[0].mxu0
      %v8066 = vadd.f32 0.0, %v8065
      %v8067 = vpop.f32.mrb[0].mxu0
      %v8068 = vadd.f32 0.0, %v8067
      %v8069 = vpop.f32.mrb[0].mxu0
      %v8070 = vadd.f32 0.0, %v8069
      %8071 = vdwg.mxu0
      %v8072 = vmax.f32 %v7895, 0.0
      %v8073 = vmax.f32 %v7897, 0.0
      %v8074 = vmax.f32 %v7948, 0.0
      %v8075 = vmax.f32 %v7950, 0.0
      %v8076 = vmax.f32 %v8001, 0.0
      %v8077 = vmax.f32 %v8003, 0.0
      %v8078 = vmax.f32 %v8054, 0.0
      %v8079 = vmax.f32 %v8056, 0.0
      %v8080 = vmax.f32 %v7899, 0.0
      %v8081 = vmax.f32 %v7901, 0.0
      %v8082 = vmax.f32 %v7952, 0.0
      %v8083 = vmax.f32 %v7954, 0.0
      %v8084 = vmax.f32 %v8005, 0.0
      %v8085 = vmax.f32 %v8007, 0.0
      %v8086 = vmax.f32 %v8058, 0.0
      %v8087 = vmax.f32 %v8060, 0.0
      %v8088 = vmax.f32 %v7905, 0.0
      %v8089 = vmax.f32 %v7907, 0.0
      %v8090 = vmax.f32 %v7958, 0.0
      %v8091 = vmax.f32 %v7960, 0.0
      %v8092 = vmax.f32 %v8011, 0.0
      %v8093 = vmax.f32 %v8013, 0.0
      %v8094 = vmax.f32 %v8064, 0.0
      %v8095 = vmax.f32 %v8066, 0.0
      %v8096 = vmax.f32 %v7909, 0.0
      %v8097 = vmax.f32 %v7911, 0.0
      %v8098 = vmax.f32 %v7962, 0.0
      %v8099 = vmax.f32 %v7964, 0.0
      %v8100 = vmax.f32 %v8015, 0.0
      %v8101 = vmax.f32 %v8017, 0.0
      %v8102 = vmax.f32 %v8068, 0.0
      %v8103 = vmax.f32 %v8070, 0.0
      %v8104 = vadd.f32 %v8072, %v8073
      %v8105 = vadd.f32 %v8104, %v8074
      %v8106 = vadd.f32 %v8105, %v8075
      %v8107 = vadd.f32 %v8106, %v8076
      %v8108 = vadd.f32 %v8107, %v8077
      %v8109 = vadd.f32 %v8108, %v8078
      %v8110 = vadd.f32 %v8109, %v8079
      %8111 = vadd.xlane.f32.xlu0 %v8110
      %v8112 = vpop.xlane.xlu0 %8111
      %v8113 = vadd.f32 %v8080, %v8081
      %v8114 = vadd.f32 %v8113, %v8082
      %v8115 = vadd.f32 %v8114, %v8083
      %v8116 = vadd.f32 %v8115, %v8084
      %v8117 = vadd.f32 %v8116, %v8085
      %v8118 = vadd.f32 %v8117, %v8086
      %v8119 = vadd.f32 %v8118, %v8087
      %8120 = vadd.xlane.f32.xlu0 %v8119
      %v8121 = vpop.xlane.xlu0 %8120
      %v8122 = vadd.f32 %v8088, %v8089
      %v8123 = vadd.f32 %v8122, %v8090
      %v8124 = vadd.f32 %v8123, %v8091
      %v8125 = vadd.f32 %v8124, %v8092
      %v8126 = vadd.f32 %v8125, %v8093
      %v8127 = vadd.f32 %v8126, %v8094
      %v8128 = vadd.f32 %v8127, %v8095
      %8129 = vadd.xlane.f32.xlu0 %v8128
      %v8130 = vpop.xlane.xlu0 %8129
      %v8131 = vadd.f32 %v8096, %v8097
      %v8132 = vadd.f32 %v8131, %v8098
      %v8133 = vadd.f32 %v8132, %v8099
      %v8134 = vadd.f32 %v8133, %v8100
      %v8135 = vadd.f32 %v8134, %v8101
      %v8136 = vadd.f32 %v8135, %v8102
      %v8137 = vadd.f32 %v8136, %v8103
      %8138 = vadd.xlane.f32.xlu0 %v8137
      %v8139 = vpop.xlane.xlu0 %8138
      %v8140 = vadd.f32 %v7744, %v8112
      %v8141 = vadd.f32 %v7745, %v8121
      %v8142 = vadd.f32 %v7746, %v8130
      %v8143 = vadd.f32 %v7747, %v8139
      %v8144 = vld [vmem:[%s192 + $0x280] sm:$0xff]
      %v8145 = vld [vmem:[%s192 + $0x288] sm:$0xff]
      %v8146 = vld [vmem:[%s192 + $0x290] sm:$0xff]
      %v8147 = vld [vmem:[%s192 + $0x298] sm:$0xff]
      %v8148 = vld [vmem:[%s192 + $0x540] sm:$0xff]
      %v8149 = vld [vmem:[%s192 + $0x548] sm:$0xff]
      %v8150 = vld [vmem:[%s192 + $0x550] sm:$0xff]
      %v8151 = vld [vmem:[%s192 + $0x558] sm:$0xff]
      %v8152 = vld [vmem:[%s192 + $0x800] sm:$0xff]
      %v8153 = vld [vmem:[%s192 + $0x808] sm:$0xff]
      %v8154 = vld [vmem:[%s192 + $0x810] sm:$0xff]
      %v8155 = vld [vmem:[%s192 + $0x818] sm:$0xff]
      %v8156 = vld [vmem:[%s192 + $0xac0] sm:$0x33]
      %v8157 = vld [vmem:[%s192 + $0xac8] sm:$0x33]
      %v8158 = vld [vmem:[%s192 + $0xad0] sm:$0x33]
      %v8159 = vld [vmem:[%s192 + $0xad8] sm:$0x33]
      %v8176 = vunpack.c.l.b16 %v8144
      %v8177 = vunpack.c.h.b16 %v8144
      %v8178 = vunpack.c.l.b16 %v8145
      %v8179 = vunpack.c.h.b16 %v8145
      %v8180 = vunpack.c.l.b16 %v8146
      %v8181 = vunpack.c.h.b16 %v8146
      %v8182 = vunpack.c.l.b16 %v8147
      %v8183 = vunpack.c.h.b16 %v8147
      %v8184 = vunpack.c.l.b16 %v8148
      %v8185 = vunpack.c.h.b16 %v8148
      %v8186 = vunpack.c.l.b16 %v8149
      %v8187 = vunpack.c.h.b16 %v8149
      %v8188 = vunpack.c.l.b16 %v8150
      %v8189 = vunpack.c.h.b16 %v8150
      %v8190 = vunpack.c.l.b16 %v8151
      %v8191 = vunpack.c.h.b16 %v8151
      %v8192 = vunpack.c.l.b16 %v8152
      %v8193 = vunpack.c.h.b16 %v8152
      %v8194 = vunpack.c.l.b16 %v8153
      %v8195 = vunpack.c.h.b16 %v8153
      %v8196 = vunpack.c.l.b16 %v8154
      %v8197 = vunpack.c.h.b16 %v8154
      %v8198 = vunpack.c.l.b16 %v8155
      %v8199 = vunpack.c.h.b16 %v8155
      %v8200 = vunpack.c.l.b16 %v8156
      %v8201 = vunpack.c.h.b16 %v8156
      %v8202 = vunpack.c.l.b16 %v8157
      %v8203 = vunpack.c.h.b16 %v8157
      %v8204 = vunpack.c.l.b16 %v8158
      %v8205 = vunpack.c.h.b16 %v8158
      %v8206 = vunpack.c.l.b16 %v8159
      %v8207 = vunpack.c.h.b16 %v8159
      %v8208 = vpack.c.b16 %v8184, %v8176
      %v8209 = vpack.c.b16 %v8185, %v8177
      %v8210 = vpack.c.b16 %v8186, %v8178
      %v8211 = vpack.c.b16 %v8187, %v8179
      %v8212 = vpack.c.b16 %v8188, %v8180
      %v8213 = vpack.c.b16 %v8189, %v8181
      %v8214 = vpack.c.b16 %v8190, %v8182
      %v8215 = vpack.c.b16 %v8191, %v8183
      %v8216 = vpack.c.b16 %v8200, %v8192
      %v8217 = vpack.c.b16 %v8201, %v8193
      %v8218 = vpack.c.b16 %v8202, %v8194
      %v8219 = vpack.c.b16 %v8203, %v8195
      %v8220 = vpack.c.b16 %v8204, %v8196
      %v8221 = vpack.c.b16 %v8205, %v8197
      %v8222 = vpack.c.b16 %v8206, %v8198
      %v8223 = vpack.c.b16 %v8207, %v8199
      %v8233 = vand.u32 %v8216, %v311
      %v8236 = vand.u32 %v8217, %v311
      %v8239 = vand.u32 %v8218, %v311
      %v8242 = vand.u32 %v8219, %v311
      %v8245 = vand.u32 %v8220, %v311
      %v8248 = vand.u32 %v8221, %v311
      %v8251 = vand.u32 %v8222, %v311
      %v8254 = vand.u32 %v8223, %v311
      %8256 = vmatprep.subr.bf16.mxu0 %v8209
      %8257 = vmatpush1.bf16.msra.mxu0 %v8208
      %8258 = vmatprep.subr.bf16.mxu0 %v8236
      %8259 = vmatpush1.bf16.msra.mxu0 %v8233
      %8260 = vmatprep.subr.bf16.mxu0 0
      %8261 = vmatpush1.bf16.msra.mxu0 0
      %8262 = vmatprep.subr.bf16.mxu0 0
      %8263 = vmatpush1.bf16.msra.mxu0 0
      %8264 = vmatprep.subr.bf16.mxu0 0
      %8265 = vmatpush1.bf16.msra.mxu0 0
      %8266 = vmatprep.subr.bf16.mxu0 0
      %8267 = vmatpush1.bf16.msra.mxu0 0
      %8268 = vmatprep.subr.bf16.mxu0 0
      %8269 = vmatpush1.bf16.msra.mxu0 0
      %8270 = vmatprep.subr.bf16.mxu0 0
      %8271 = vmatpush1.bf16.msra.mxu0 0
      %8272 = vmatprep.subr.bf16.mxu0 0
      %8273 = vmatpush1.bf16.msra.mxu0 0
      %8274 = vmatprep.subr.bf16.mxu0 0
      %8275 = vmatpush1.bf16.msra.mxu0 0
      %8276 = vmatprep.subr.bf16.mxu0 0
      %8277 = vmatpush1.bf16.msra.mxu0 0
      %8278 = vmatprep.subr.bf16.mxu0 0
      %8279 = vmatpush1.bf16.msra.mxu0 0
      %8280 = vmatprep.subr.bf16.mxu0 0
      %8281 = vmatpush1.bf16.msra.mxu0 0
      %8282 = vmatprep.subr.bf16.mxu0 0
      %8283 = vmatpush1.bf16.msra.mxu0 0
      %8284 = vmatprep.subr.bf16.mxu0 0
      %8285 = vmatpush1.bf16.msra.mxu0 0
      %8286 = vmatprep.subr.bf16.mxu0 0
      %8287 = vmatpush1.bf16.msra.mxu0 0
      %8288 = vmatprep.mubr.bf16.mxu0 0
      %8289 = vmatmul.mubr.bf16.gmra.mrb[0].mxu0 %v303
      %v8290 = vpop.f32.mrb[0].mxu0
      %v8291 = vadd.f32 0.0, %v8290
      %v8292 = vpop.f32.mrb[0].mxu0
      %v8293 = vadd.f32 0.0, %v8292
      %v8294 = vpop.f32.mrb[0].mxu0
      %v8295 = vadd.f32 0.0, %v8294
      %v8296 = vpop.f32.mrb[0].mxu0
      %v8297 = vadd.f32 0.0, %v8296
      %8298 = vmatprep.mubr.bf16.mxu0 0
      %8299 = vmatmul.mubr.bf16.gmra.mrb[0].mxu0 %v306
      %v8300 = vpop.f32.mrb[0].mxu0
      %v8301 = vadd.f32 0.0, %v8300
      %v8302 = vpop.f32.mrb[0].mxu0
      %v8303 = vadd.f32 0.0, %v8302
      %v8304 = vpop.f32.mrb[0].mxu0
      %v8305 = vadd.f32 0.0, %v8304
      %v8306 = vpop.f32.mrb[0].mxu0
      %v8307 = vadd.f32 0.0, %v8306
      %8308 = vdwg.mxu0
      %8309 = vmatprep.subr.bf16.mxu0 %v8211
      %8310 = vmatpush1.bf16.msra.mxu0 %v8210
      %8311 = vmatprep.subr.bf16.mxu0 %v8242
      %8312 = vmatpush1.bf16.msra.mxu0 %v8239
      %8313 = vmatprep.subr.bf16.mxu0 0
      %8314 = vmatpush1.bf16.msra.mxu0 0
      %8315 = vmatprep.subr.bf16.mxu0 0
      %8316 = vmatpush1.bf16.msra.mxu0 0
      %8317 = vmatprep.subr.bf16.mxu0 0
      %8318 = vmatpush1.bf16.msra.mxu0 0
      %8319 = vmatprep.subr.bf16.mxu0 0
      %8320 = vmatpush1.bf16.msra.mxu0 0
      %8321 = vmatprep.subr.bf16.mxu0 0
      %8322 = vmatpush1.bf16.msra.mxu0 0
      %8323 = vmatprep.subr.bf16.mxu0 0
      %8324 = vmatpush1.bf16.msra.mxu0 0
      %8325 = vmatprep.subr.bf16.mxu0 0
      %8326 = vmatpush1.bf16.msra.mxu0 0
      %8327 = vmatprep.subr.bf16.mxu0 0
      %8328 = vmatpush1.bf16.msra.mxu0 0
      %8329 = vmatprep.subr.bf16.mxu0 0
      %8330 = vmatpush1.bf16.msra.mxu0 0
      %8331 = vmatprep.subr.bf16.mxu0 0
      %8332 = vmatpush1.bf16.msra.mxu0 0
      %8333 = vmatprep.subr.bf16.mxu0 0
      %8334 = vmatpush1.bf16.msra.mxu0 0
      %8335 = vmatprep.subr.bf16.mxu0 0
      %8336 = vmatpush1.bf16.msra.mxu0 0
      %8337 = vmatprep.subr.bf16.mxu0 0
      %8338 = vmatpush1.bf16.msra.mxu0 0
      %8339 = vmatprep.subr.bf16.mxu0 0
      %8340 = vmatpush1.bf16.msra.mxu0 0
      %8341 = vmatprep.mubr.bf16.mxu0 0
      %8342 = vmatmul.mubr.bf16.gmra.mrb[0].mxu0 %v303
      %v8343 = vpop.f32.mrb[0].mxu0
      %v8344 = vadd.f32 0.0, %v8343
      %v8345 = vpop.f32.mrb[0].mxu0
      %v8346 = vadd.f32 0.0, %v8345
      %v8347 = vpop.f32.mrb[0].mxu0
      %v8348 = vadd.f32 0.0, %v8347
      %v8349 = vpop.f32.mrb[0].mxu0
      %v8350 = vadd.f32 0.0, %v8349
      %8351 = vmatprep.mubr.bf16.mxu0 0
      %8352 = vmatmul.mubr.bf16.gmra.mrb[0].mxu0 %v306
      %v8353 = vpop.f32.mrb[0].mxu0
      %v8354 = vadd.f32 0.0, %v8353
      %v8355 = vpop.f32.mrb[0].mxu0
      %v8356 = vadd.f32 0.0, %v8355
      %v8357 = vpop.f32.mrb[0].mxu0
      %v8358 = vadd.f32 0.0, %v8357
      %v8359 = vpop.f32.mrb[0].mxu0
      %v8360 = vadd.f32 0.0, %v8359
      %8361 = vdwg.mxu0
      %8362 = vmatprep.subr.bf16.mxu0 %v8213
      %8363 = vmatpush1.bf16.msra.mxu0 %v8212
      %8364 = vmatprep.subr.bf16.mxu0 %v8248
      %8365 = vmatpush1.bf16.msra.mxu0 %v8245
      %8366 = vmatprep.subr.bf16.mxu0 0
      %8367 = vmatpush1.bf16.msra.mxu0 0
      %8368 = vmatprep.subr.bf16.mxu0 0
      %8369 = vmatpush1.bf16.msra.mxu0 0
      %8370 = vmatprep.subr.bf16.mxu0 0
      %8371 = vmatpush1.bf16.msra.mxu0 0
      %8372 = vmatprep.subr.bf16.mxu0 0
      %8373 = vmatpush1.bf16.msra.mxu0 0
      %8374 = vmatprep.subr.bf16.mxu0 0
      %8375 = vmatpush1.bf16.msra.mxu0 0
      %8376 = vmatprep.subr.bf16.mxu0 0
      %8377 = vmatpush1.bf16.msra.mxu0 0
      %8378 = vmatprep.subr.bf16.mxu0 0
      %8379 = vmatpush1.bf16.msra.mxu0 0
      %8380 = vmatprep.subr.bf16.mxu0 0
      %8381 = vmatpush1.bf16.msra.mxu0 0
      %8382 = vmatprep.subr.bf16.mxu0 0
      %8383 = vmatpush1.bf16.msra.mxu0 0
      %8384 = vmatprep.subr.bf16.mxu0 0
      %8385 = vmatpush1.bf16.msra.mxu0 0
      %8386 = vmatprep.subr.bf16.mxu0 0
      %8387 = vmatpush1.bf16.msra.mxu0 0
      %8388 = vmatprep.subr.bf16.mxu0 0
      %8389 = vmatpush1.bf16.msra.mxu0 0
      %8390 = vmatprep.subr.bf16.mxu0 0
      %8391 = vmatpush1.bf16.msra.mxu0 0
      %8392 = vmatprep.subr.bf16.mxu0 0
      %8393 = vmatpush1.bf16.msra.mxu0 0
      %8394 = vmatprep.mubr.bf16.mxu0 0
      %8395 = vmatmul.mubr.bf16.gmra.mrb[0].mxu0 %v303
      %v8396 = vpop.f32.mrb[0].mxu0
      %v8397 = vadd.f32 0.0, %v8396
      %v8398 = vpop.f32.mrb[0].mxu0
      %v8399 = vadd.f32 0.0, %v8398
      %v8400 = vpop.f32.mrb[0].mxu0
      %v8401 = vadd.f32 0.0, %v8400
      %v8402 = vpop.f32.mrb[0].mxu0
      %v8403 = vadd.f32 0.0, %v8402
      %8404 = vmatprep.mubr.bf16.mxu0 0
      %8405 = vmatmul.mubr.bf16.gmra.mrb[0].mxu0 %v306
      %v8406 = vpop.f32.mrb[0].mxu0
      %v8407 = vadd.f32 0.0, %v8406
      %v8408 = vpop.f32.mrb[0].mxu0
      %v8409 = vadd.f32 0.0, %v8408
      %v8410 = vpop.f32.mrb[0].mxu0
      %v8411 = vadd.f32 0.0, %v8410
      %v8412 = vpop.f32.mrb[0].mxu0
      %v8413 = vadd.f32 0.0, %v8412
      %8414 = vdwg.mxu0
      %8415 = vmatprep.subr.bf16.mxu0 %v8215
      %8416 = vmatpush1.bf16.msra.mxu0 %v8214
      %8417 = vmatprep.subr.bf16.mxu0 %v8254
      %8418 = vmatpush1.bf16.msra.mxu0 %v8251
      %8419 = vmatprep.subr.bf16.mxu0 0
      %8420 = vmatpush1.bf16.msra.mxu0 0
      %8421 = vmatprep.subr.bf16.mxu0 0
      %8422 = vmatpush1.bf16.msra.mxu0 0
      %8423 = vmatprep.subr.bf16.mxu0 0
      %8424 = vmatpush1.bf16.msra.mxu0 0
      %8425 = vmatprep.subr.bf16.mxu0 0
      %8426 = vmatpush1.bf16.msra.mxu0 0
      %8427 = vmatprep.subr.bf16.mxu0 0
      %8428 = vmatpush1.bf16.msra.mxu0 0
      %8429 = vmatprep.subr.bf16.mxu0 0
      %8430 = vmatpush1.bf16.msra.mxu0 0
      %8431 = vmatprep.subr.bf16.mxu0 0
      %8432 = vmatpush1.bf16.msra.mxu0 0
      %8433 = vmatprep.subr.bf16.mxu0 0
      %8434 = vmatpush1.bf16.msra.mxu0 0
      %8435 = vmatprep.subr.bf16.mxu0 0
      %8436 = vmatpush1.bf16.msra.mxu0 0
      %8437 = vmatprep.subr.bf16.mxu0 0
      %8438 = vmatpush1.bf16.msra.mxu0 0
      %8439 = vmatprep.subr.bf16.mxu0 0
      %8440 = vmatpush1.bf16.msra.mxu0 0
      %8441 = vmatprep.subr.bf16.mxu0 0
      %8442 = vmatpush1.bf16.msra.mxu0 0
      %8443 = vmatprep.subr.bf16.mxu0 0
      %8444 = vmatpush1.bf16.msra.mxu0 0
      %8445 = vmatprep.subr.bf16.mxu0 0
      %8446 = vmatpush1.bf16.msra.mxu0 0
      %8447 = vmatprep.mubr.bf16.mxu0 0
      %8448 = vmatmul.mubr.bf16.gmra.mrb[0].mxu0 %v303
      %v8449 = vpop.f32.mrb[0].mxu0
      %v8450 = vadd.f32 0.0, %v8449
      %v8451 = vpop.f32.mrb[0].mxu0
      %v8452 = vadd.f32 0.0, %v8451
      %v8453 = vpop.f32.mrb[0].mxu0
      %v8454 = vadd.f32 0.0, %v8453
      %v8455 = vpop.f32.mrb[0].mxu0
      %v8456 = vadd.f32 0.0, %v8455
      %8457 = vmatprep.mubr.bf16.mxu0 0
      %8458 = vmatmul.mubr.bf16.gmra.mrb[0].mxu0 %v306
      %v8459 = vpop.f32.mrb[0].mxu0
      %v8460 = vadd.f32 0.0, %v8459
      %v8461 = vpop.f32.mrb[0].mxu0
      %v8462 = vadd.f32 0.0, %v8461
      %v8463 = vpop.f32.mrb[0].mxu0
      %v8464 = vadd.f32 0.0, %v8463
      %v8465 = vpop.f32.mrb[0].mxu0
      %v8466 = vadd.f32 0.0, %v8465
      %8467 = vdwg.mxu0
      %v8468 = vmax.f32 %v8291, 0.0
      %v8469 = vmax.f32 %v8293, 0.0
      %v8470 = vmax.f32 %v8344, 0.0
      %v8471 = vmax.f32 %v8346, 0.0
      %v8472 = vmax.f32 %v8397, 0.0
      %v8473 = vmax.f32 %v8399, 0.0
      %v8474 = vmax.f32 %v8450, 0.0
      %v8475 = vmax.f32 %v8452, 0.0
      %v8476 = vmax.f32 %v8295, 0.0
      %v8477 = vmax.f32 %v8297, 0.0
      %v8478 = vmax.f32 %v8348, 0.0
      %v8479 = vmax.f32 %v8350, 0.0
      %v8480 = vmax.f32 %v8401, 0.0
      %v8481 = vmax.f32 %v8403, 0.0
      %v8482 = vmax.f32 %v8454, 0.0
      %v8483 = vmax.f32 %v8456, 0.0
      %v8484 = vmax.f32 %v8301, 0.0
      %v8485 = vmax.f32 %v8303, 0.0
      %v8486 = vmax.f32 %v8354, 0.0
      %v8487 = vmax.f32 %v8356, 0.0
      %v8488 = vmax.f32 %v8407, 0.0
      %v8489 = vmax.f32 %v8409, 0.0
      %v8490 = vmax.f32 %v8460, 0.0
      %v8491 = vmax.f32 %v8462, 0.0
      %v8492 = vmax.f32 %v8305, 0.0
      %v8493 = vmax.f32 %v8307, 0.0
      %v8494 = vmax.f32 %v8358, 0.0
      %v8495 = vmax.f32 %v8360, 0.0
      %v8496 = vmax.f32 %v8411, 0.0
      %v8497 = vmax.f32 %v8413, 0.0
      %v8498 = vmax.f32 %v8464, 0.0
      %v8499 = vmax.f32 %v8466, 0.0
      %v8500 = vadd.f32 %v8468, %v8469
      %v8501 = vadd.f32 %v8500, %v8470
      %v8502 = vadd.f32 %v8501, %v8471
      %v8503 = vadd.f32 %v8502, %v8472
      %v8504 = vadd.f32 %v8503, %v8473
      %v8505 = vadd.f32 %v8504, %v8474
      %v8506 = vadd.f32 %v8505, %v8475
      %8507 = vadd.xlane.f32.xlu0 %v8506
      %v8508 = vpop.xlane.xlu0 %8507
      %v8509 = vadd.f32 %v8476, %v8477
      %v8510 = vadd.f32 %v8509, %v8478
      %v8511 = vadd.f32 %v8510, %v8479
      %v8512 = vadd.f32 %v8511, %v8480
      %v8513 = vadd.f32 %v8512, %v8481
      %v8514 = vadd.f32 %v8513, %v8482
      %v8515 = vadd.f32 %v8514, %v8483
      %8516 = vadd.xlane.f32.xlu0 %v8515
      %v8517 = vpop.xlane.xlu0 %8516
      %v8518 = vadd.f32 %v8484, %v8485
      %v8519 = vadd.f32 %v8518, %v8486
      %v8520 = vadd.f32 %v8519, %v8487
      %v8521 = vadd.f32 %v8520, %v8488
      %v8522 = vadd.f32 %v8521, %v8489
      %v8523 = vadd.f32 %v8522, %v8490
      %v8524 = vadd.f32 %v8523, %v8491
      %8525 = vadd.xlane.f32.xlu0 %v8524
      %v8526 = vpop.xlane.xlu0 %8525
      %v8527 = vadd.f32 %v8492, %v8493
      %v8528 = vadd.f32 %v8527, %v8494
      %v8529 = vadd.f32 %v8528, %v8495
      %v8530 = vadd.f32 %v8529, %v8496
      %v8531 = vadd.f32 %v8530, %v8497
      %v8532 = vadd.f32 %v8531, %v8498
      %v8533 = vadd.f32 %v8532, %v8499
      %8534 = vadd.xlane.f32.xlu0 %v8533
      %v8535 = vpop.xlane.xlu0 %8534
      %v8536 = vadd.f32 %v8140, %v8508
      %v8537 = vadd.f32 %v8141, %v8517
      %v8538 = vadd.f32 %v8142, %v8526
      %v8539 = vadd.f32 %v8143, %v8535
      %v8540 = vld [vmem:[%s192 + $0x2a0] sm:$0xff]
      %v8541 = vld [vmem:[%s192 + $0x2a8] sm:$0xff]
      %v8542 = vld [vmem:[%s192 + $0x2b0] sm:$0xff]
      %v8543 = vld [vmem:[%s192 + $0x2b8] sm:$0xff]
      %v8544 = vld [vmem:[%s192 + $0x560] sm:$0xff]
      %v8545 = vld [vmem:[%s192 + $0x568] sm:$0xff]
      %v8546 = vld [vmem:[%s192 + $0x570] sm:$0xff]
      %v8547 = vld [vmem:[%s192 + $0x578] sm:$0xff]
      %v8548 = vld [vmem:[%s192 + $0x820] sm:$0xff]
      %v8549 = vld [vmem:[%s192 + $0x828] sm:$0xff]
      %v8550 = vld [vmem:[%s192 + $0x830] sm:$0xff]
      %v8551 = vld [vmem:[%s192 + $0x838] sm:$0xff]
      %v8552 = vld [vmem:[%s192 + $0xae0] sm:$0x33]
      %v8553 = vld [vmem:[%s192 + $0xae8] sm:$0x33]
      %v8554 = vld [vmem:[%s192 + $0xaf0] sm:$0x33]
      %v8555 = vld [vmem:[%s192 + $0xaf8] sm:$0x33]
      %v8572 = vunpack.c.l.b16 %v8540
      %v8573 = vunpack.c.h.b16 %v8540
      %v8574 = vunpack.c.l.b16 %v8541
      %v8575 = vunpack.c.h.b16 %v8541
      %v8576 = vunpack.c.l.b16 %v8542
      %v8577 = vunpack.c.h.b16 %v8542
      %v8578 = vunpack.c.l.b16 %v8543
      %v8579 = vunpack.c.h.b16 %v8543
      %v8580 = vunpack.c.l.b16 %v8544
      %v8581 = vunpack.c.h.b16 %v8544
      %v8582 = vunpack.c.l.b16 %v8545
      %v8583 = vunpack.c.h.b16 %v8545
      %v8584 = vunpack.c.l.b16 %v8546
      %v8585 = vunpack.c.h.b16 %v8546
      %v8586 = vunpack.c.l.b16 %v8547
      %v8587 = vunpack.c.h.b16 %v8547
      %v8588 = vunpack.c.l.b16 %v8548
      %v8589 = vunpack.c.h.b16 %v8548
      %v8590 = vunpack.c.l.b16 %v8549
      %v8591 = vunpack.c.h.b16 %v8549
      %v8592 = vunpack.c.l.b16 %v8550
      %v8593 = vunpack.c.h.b16 %v8550
      %v8594 = vunpack.c.l.b16 %v8551
      %v8595 = vunpack.c.h.b16 %v8551
      %v8596 = vunpack.c.l.b16 %v8552
      %v8597 = vunpack.c.h.b16 %v8552
      %v8598 = vunpack.c.l.b16 %v8553
      %v8599 = vunpack.c.h.b16 %v8553
      %v8600 = vunpack.c.l.b16 %v8554
      %v8601 = vunpack.c.h.b16 %v8554
      %v8602 = vunpack.c.l.b16 %v8555
      %v8603 = vunpack.c.h.b16 %v8555
      %v8604 = vpack.c.b16 %v8580, %v8572
      %v8605 = vpack.c.b16 %v8581, %v8573
      %v8606 = vpack.c.b16 %v8582, %v8574
      %v8607 = vpack.c.b16 %v8583, %v8575
      %v8608 = vpack.c.b16 %v8584, %v8576
      %v8609 = vpack.c.b16 %v8585, %v8577
      %v8610 = vpack.c.b16 %v8586, %v8578
      %v8611 = vpack.c.b16 %v8587, %v8579
      %v8612 = vpack.c.b16 %v8596, %v8588
      %v8613 = vpack.c.b16 %v8597, %v8589
      %v8614 = vpack.c.b16 %v8598, %v8590
      %v8615 = vpack.c.b16 %v8599, %v8591
      %v8616 = vpack.c.b16 %v8600, %v8592
      %v8617 = vpack.c.b16 %v8601, %v8593
      %v8618 = vpack.c.b16 %v8602, %v8594
      %v8619 = vpack.c.b16 %v8603, %v8595
      %v8629 = vand.u32 %v8612, %v311
      %v8632 = vand.u32 %v8613, %v311
      %v8635 = vand.u32 %v8614, %v311
      %v8638 = vand.u32 %v8615, %v311
      %v8641 = vand.u32 %v8616, %v311
      %v8644 = vand.u32 %v8617, %v311
      %v8647 = vand.u32 %v8618, %v311
      %v8650 = vand.u32 %v8619, %v311
      %8652 = vmatprep.subr.bf16.mxu0 %v8605
      %8653 = vmatpush1.bf16.msra.mxu0 %v8604
      %8654 = vmatprep.subr.bf16.mxu0 %v8632
      %8655 = vmatpush1.bf16.msra.mxu0 %v8629
      %8656 = vmatprep.subr.bf16.mxu0 0
      %8657 = vmatpush1.bf16.msra.mxu0 0
      %8658 = vmatprep.subr.bf16.mxu0 0
      %8659 = vmatpush1.bf16.msra.mxu0 0
      %8660 = vmatprep.subr.bf16.mxu0 0
      %8661 = vmatpush1.bf16.msra.mxu0 0
      %8662 = vmatprep.subr.bf16.mxu0 0
      %8663 = vmatpush1.bf16.msra.mxu0 0
      %8664 = vmatprep.subr.bf16.mxu0 0
      %8665 = vmatpush1.bf16.msra.mxu0 0
      %8666 = vmatprep.subr.bf16.mxu0 0
      %8667 = vmatpush1.bf16.msra.mxu0 0
      %8668 = vmatprep.subr.bf16.mxu0 0
      %8669 = vmatpush1.bf16.msra.mxu0 0
      %8670 = vmatprep.subr.bf16.mxu0 0
      %8671 = vmatpush1.bf16.msra.mxu0 0
      %8672 = vmatprep.subr.bf16.mxu0 0
      %8673 = vmatpush1.bf16.msra.mxu0 0
      %8674 = vmatprep.subr.bf16.mxu0 0
      %8675 = vmatpush1.bf16.msra.mxu0 0
      %8676 = vmatprep.subr.bf16.mxu0 0
      %8677 = vmatpush1.bf16.msra.mxu0 0
      %8678 = vmatprep.subr.bf16.mxu0 0
      %8679 = vmatpush1.bf16.msra.mxu0 0
      %8680 = vmatprep.subr.bf16.mxu0 0
      %8681 = vmatpush1.bf16.msra.mxu0 0
      %8682 = vmatprep.subr.bf16.mxu0 0
      %8683 = vmatpush1.bf16.msra.mxu0 0
      %8684 = vmatprep.mubr.bf16.mxu0 0
      %8685 = vmatmul.mubr.bf16.gmra.mrb[0].mxu0 %v303
      %v8686 = vpop.f32.mrb[0].mxu0
      %v8687 = vadd.f32 0.0, %v8686
      %v8688 = vpop.f32.mrb[0].mxu0
      %v8689 = vadd.f32 0.0, %v8688
      %v8690 = vpop.f32.mrb[0].mxu0
      %v8691 = vadd.f32 0.0, %v8690
      %v8692 = vpop.f32.mrb[0].mxu0
      %v8693 = vadd.f32 0.0, %v8692
      %8694 = vmatprep.mubr.bf16.mxu0 0
      %8695 = vmatmul.mubr.bf16.gmra.mrb[0].mxu0 %v306
      %v8696 = vpop.f32.mrb[0].mxu0
      %v8697 = vadd.f32 0.0, %v8696
      %v8698 = vpop.f32.mrb[0].mxu0
      %v8699 = vadd.f32 0.0, %v8698
      %v8700 = vpop.f32.mrb[0].mxu0
      %v8701 = vadd.f32 0.0, %v8700
      %v8702 = vpop.f32.mrb[0].mxu0
      %v8703 = vadd.f32 0.0, %v8702
      %8704 = vdwg.mxu0
      %8705 = vmatprep.subr.bf16.mxu0 %v8607
      %8706 = vmatpush1.bf16.msra.mxu0 %v8606
      %8707 = vmatprep.subr.bf16.mxu0 %v8638
      %8708 = vmatpush1.bf16.msra.mxu0 %v8635
      %8709 = vmatprep.subr.bf16.mxu0 0
      %8710 = vmatpush1.bf16.msra.mxu0 0
      %8711 = vmatprep.subr.bf16.mxu0 0
      %8712 = vmatpush1.bf16.msra.mxu0 0
      %8713 = vmatprep.subr.bf16.mxu0 0
      %8714 = vmatpush1.bf16.msra.mxu0 0
      %8715 = vmatprep.subr.bf16.mxu0 0
      %8716 = vmatpush1.bf16.msra.mxu0 0
      %8717 = vmatprep.subr.bf16.mxu0 0
      %8718 = vmatpush1.bf16.msra.mxu0 0
      %8719 = vmatprep.subr.bf16.mxu0 0
      %8720 = vmatpush1.bf16.msra.mxu0 0
      %8721 = vmatprep.subr.bf16.mxu0 0
      %8722 = vmatpush1.bf16.msra.mxu0 0
      %8723 = vmatprep.subr.bf16.mxu0 0
      %8724 = vmatpush1.bf16.msra.mxu0 0
      %8725 = vmatprep.subr.bf16.mxu0 0
      %8726 = vmatpush1.bf16.msra.mxu0 0
      %8727 = vmatprep.subr.bf16.mxu0 0
      %8728 = vmatpush1.bf16.msra.mxu0 0
      %8729 = vmatprep.subr.bf16.mxu0 0
      %8730 = vmatpush1.bf16.msra.mxu0 0
      %8731 = vmatprep.subr.bf16.mxu0 0
      %8732 = vmatpush1.bf16.msra.mxu0 0
      %8733 = vmatprep.subr.bf16.mxu0 0
      %8734 = vmatpush1.bf16.msra.mxu0 0
      %8735 = vmatprep.subr.bf16.mxu0 0
      %8736 = vmatpush1.bf16.msra.mxu0 0
      %8737 = vmatprep.mubr.bf16.mxu0 0
      %8738 = vmatmul.mubr.bf16.gmra.mrb[0].mxu0 %v303
      %v8739 = vpop.f32.mrb[0].mxu0
      %v8740 = vadd.f32 0.0, %v8739
      %v8741 = vpop.f32.mrb[0].mxu0
      %v8742 = vadd.f32 0.0, %v8741
      %v8743 = vpop.f32.mrb[0].mxu0
      %v8744 = vadd.f32 0.0, %v8743
      %v8745 = vpop.f32.mrb[0].mxu0
      %v8746 = vadd.f32 0.0, %v8745
      %8747 = vmatprep.mubr.bf16.mxu0 0
      %8748 = vmatmul.mubr.bf16.gmra.mrb[0].mxu0 %v306
      %v8749 = vpop.f32.mrb[0].mxu0
      %v8750 = vadd.f32 0.0, %v8749
      %v8751 = vpop.f32.mrb[0].mxu0
      %v8752 = vadd.f32 0.0, %v8751
      %v8753 = vpop.f32.mrb[0].mxu0
      %v8754 = vadd.f32 0.0, %v8753
      %v8755 = vpop.f32.mrb[0].mxu0
      %v8756 = vadd.f32 0.0, %v8755
      %8757 = vdwg.mxu0
      %8758 = vmatprep.subr.bf16.mxu0 %v8609
      %8759 = vmatpush1.bf16.msra.mxu0 %v8608
      %8760 = vmatprep.subr.bf16.mxu0 %v8644
      %8761 = vmatpush1.bf16.msra.mxu0 %v8641
      %8762 = vmatprep.subr.bf16.mxu0 0
      %8763 = vmatpush1.bf16.msra.mxu0 0
      %8764 = vmatprep.subr.bf16.mxu0 0
      %8765 = vmatpush1.bf16.msra.mxu0 0
      %8766 = vmatprep.subr.bf16.mxu0 0
      %8767 = vmatpush1.bf16.msra.mxu0 0
      %8768 = vmatprep.subr.bf16.mxu0 0
      %8769 = vmatpush1.bf16.msra.mxu0 0
      %8770 = vmatprep.subr.bf16.mxu0 0
      %8771 = vmatpush1.bf16.msra.mxu0 0
      %8772 = vmatprep.subr.bf16.mxu0 0
      %8773 = vmatpush1.bf16.msra.mxu0 0
      %8774 = vmatprep.subr.bf16.mxu0 0
      %8775 = vmatpush1.bf16.msra.mxu0 0
      %8776 = vmatprep.subr.bf16.mxu0 0
      %8777 = vmatpush1.bf16.msra.mxu0 0
      %8778 = vmatprep.subr.bf16.mxu0 0
      %8779 = vmatpush1.bf16.msra.mxu0 0
      %8780 = vmatprep.subr.bf16.mxu0 0
      %8781 = vmatpush1.bf16.msra.mxu0 0
      %8782 = vmatprep.subr.bf16.mxu0 0
      %8783 = vmatpush1.bf16.msra.mxu0 0
      %8784 = vmatprep.subr.bf16.mxu0 0
      %8785 = vmatpush1.bf16.msra.mxu0 0
      %8786 = vmatprep.subr.bf16.mxu0 0
      %8787 = vmatpush1.bf16.msra.mxu0 0
      %8788 = vmatprep.subr.bf16.mxu0 0
      %8789 = vmatpush1.bf16.msra.mxu0 0
      %8790 = vmatprep.mubr.bf16.mxu0 0
      %8791 = vmatmul.mubr.bf16.gmra.mrb[0].mxu0 %v303
      %v8792 = vpop.f32.mrb[0].mxu0
      %v8793 = vadd.f32 0.0, %v8792
      %v8794 = vpop.f32.mrb[0].mxu0
      %v8795 = vadd.f32 0.0, %v8794
      %v8796 = vpop.f32.mrb[0].mxu0
      %v8797 = vadd.f32 0.0, %v8796
      %v8798 = vpop.f32.mrb[0].mxu0
      %v8799 = vadd.f32 0.0, %v8798
      %8800 = vmatprep.mubr.bf16.mxu0 0
      %8801 = vmatmul.mubr.bf16.gmra.mrb[0].mxu0 %v306
      %v8802 = vpop.f32.mrb[0].mxu0
      %v8803 = vadd.f32 0.0, %v8802
      %v8804 = vpop.f32.mrb[0].mxu0
      %v8805 = vadd.f32 0.0, %v8804
      %v8806 = vpop.f32.mrb[0].mxu0
      %v8807 = vadd.f32 0.0, %v8806
      %v8808 = vpop.f32.mrb[0].mxu0
      %v8809 = vadd.f32 0.0, %v8808
      %8810 = vdwg.mxu0
      %8811 = vmatprep.subr.bf16.mxu0 %v8611
      %8812 = vmatpush1.bf16.msra.mxu0 %v8610
      %8813 = vmatprep.subr.bf16.mxu0 %v8650
      %8814 = vmatpush1.bf16.msra.mxu0 %v8647
      %8815 = vmatprep.subr.bf16.mxu0 0
      %8816 = vmatpush1.bf16.msra.mxu0 0
      %8817 = vmatprep.subr.bf16.mxu0 0
      %8818 = vmatpush1.bf16.msra.mxu0 0
      %8819 = vmatprep.subr.bf16.mxu0 0
      %8820 = vmatpush1.bf16.msra.mxu0 0
      %8821 = vmatprep.subr.bf16.mxu0 0
      %8822 = vmatpush1.bf16.msra.mxu0 0
      %8823 = vmatprep.subr.bf16.mxu0 0
      %8824 = vmatpush1.bf16.msra.mxu0 0
      %8825 = vmatprep.subr.bf16.mxu0 0
      %8826 = vmatpush1.bf16.msra.mxu0 0
      %8827 = vmatprep.subr.bf16.mxu0 0
      %8828 = vmatpush1.bf16.msra.mxu0 0
      %8829 = vmatprep.subr.bf16.mxu0 0
      %8830 = vmatpush1.bf16.msra.mxu0 0
      %8831 = vmatprep.subr.bf16.mxu0 0
      %8832 = vmatpush1.bf16.msra.mxu0 0
      %8833 = vmatprep.subr.bf16.mxu0 0
      %8834 = vmatpush1.bf16.msra.mxu0 0
      %8835 = vmatprep.subr.bf16.mxu0 0
      %8836 = vmatpush1.bf16.msra.mxu0 0
      %8837 = vmatprep.subr.bf16.mxu0 0
      %8838 = vmatpush1.bf16.msra.mxu0 0
      %8839 = vmatprep.subr.bf16.mxu0 0
      %8840 = vmatpush1.bf16.msra.mxu0 0
      %8841 = vmatprep.subr.bf16.mxu0 0
      %8842 = vmatpush1.bf16.msra.mxu0 0
      %8843 = vmatprep.mubr.bf16.mxu0 0
      %8844 = vmatmul.mubr.bf16.gmra.mrb[0].mxu0 %v303
      %v8845 = vpop.f32.mrb[0].mxu0
      %v8846 = vadd.f32 0.0, %v8845
      %v8847 = vpop.f32.mrb[0].mxu0
      %v8848 = vadd.f32 0.0, %v8847
      %v8849 = vpop.f32.mrb[0].mxu0
      %v8850 = vadd.f32 0.0, %v8849
      %v8851 = vpop.f32.mrb[0].mxu0
      %v8852 = vadd.f32 0.0, %v8851
      %8853 = vmatprep.mubr.bf16.mxu0 0
      %8854 = vmatmul.mubr.bf16.gmra.mrb[0].mxu0 %v306
      %v8855 = vpop.f32.mrb[0].mxu0
      %v8856 = vadd.f32 0.0, %v8855
      %v8857 = vpop.f32.mrb[0].mxu0
      %v8858 = vadd.f32 0.0, %v8857
      %v8859 = vpop.f32.mrb[0].mxu0
      %v8860 = vadd.f32 0.0, %v8859
      %v8861 = vpop.f32.mrb[0].mxu0
      %v8862 = vadd.f32 0.0, %v8861
      %8863 = vdwg.mxu0
      %v8864 = vmax.f32 %v8687, 0.0
      %v8865 = vmax.f32 %v8689, 0.0
      %v8866 = vmax.f32 %v8740, 0.0
      %v8867 = vmax.f32 %v8742, 0.0
      %v8868 = vmax.f32 %v8793, 0.0
      %v8869 = vmax.f32 %v8795, 0.0
      %v8870 = vmax.f32 %v8846, 0.0
      %v8871 = vmax.f32 %v8848, 0.0
      %v8872 = vmax.f32 %v8691, 0.0
      %v8873 = vmax.f32 %v8693, 0.0
      %v8874 = vmax.f32 %v8744, 0.0
      %v8875 = vmax.f32 %v8746, 0.0
      %v8876 = vmax.f32 %v8797, 0.0
      %v8877 = vmax.f32 %v8799, 0.0
      %v8878 = vmax.f32 %v8850, 0.0
      %v8879 = vmax.f32 %v8852, 0.0
      %v8880 = vmax.f32 %v8697, 0.0
      %v8881 = vmax.f32 %v8699, 0.0
      %v8882 = vmax.f32 %v8750, 0.0
      %v8883 = vmax.f32 %v8752, 0.0
      %v8884 = vmax.f32 %v8803, 0.0
      %v8885 = vmax.f32 %v8805, 0.0
      %v8886 = vmax.f32 %v8856, 0.0
      %v8887 = vmax.f32 %v8858, 0.0
      %v8888 = vmax.f32 %v8701, 0.0
      %v8889 = vmax.f32 %v8703, 0.0
      %v8890 = vmax.f32 %v8754, 0.0
      %v8891 = vmax.f32 %v8756, 0.0
      %v8892 = vmax.f32 %v8807, 0.0
      %v8893 = vmax.f32 %v8809, 0.0
      %v8894 = vmax.f32 %v8860, 0.0
      %v8895 = vmax.f32 %v8862, 0.0
      %v8896 = vadd.f32 %v8864, %v8865
      %v8897 = vadd.f32 %v8896, %v8866
      %v8898 = vadd.f32 %v8897, %v8867
      %v8899 = vadd.f32 %v8898, %v8868
      %v8900 = vadd.f32 %v8899, %v8869
      %v8901 = vadd.f32 %v8900, %v8870
      %v8902 = vadd.f32 %v8901, %v8871
      %8903 = vadd.xlane.f32.xlu0 %v8902
      %v8904 = vpop.xlane.xlu0 %8903
      %v8905 = vadd.f32 %v8872, %v8873
      %v8906 = vadd.f32 %v8905, %v8874
      %v8907 = vadd.f32 %v8906, %v8875
      %v8908 = vadd.f32 %v8907, %v8876
      %v8909 = vadd.f32 %v8908, %v8877
      %v8910 = vadd.f32 %v8909, %v8878
      %v8911 = vadd.f32 %v8910, %v8879
      %8912 = vadd.xlane.f32.xlu0 %v8911
      %v8913 = vpop.xlane.xlu0 %8912
      %v8914 = vadd.f32 %v8880, %v8881
      %v8915 = vadd.f32 %v8914, %v8882
      %v8916 = vadd.f32 %v8915, %v8883
      %v8917 = vadd.f32 %v8916, %v8884
      %v8918 = vadd.f32 %v8917, %v8885
      %v8919 = vadd.f32 %v8918, %v8886
      %v8920 = vadd.f32 %v8919, %v8887
      %8921 = vadd.xlane.f32.xlu0 %v8920
      %v8922 = vpop.xlane.xlu0 %8921
      %v8923 = vadd.f32 %v8888, %v8889
      %v8924 = vadd.f32 %v8923, %v8890
      %v8925 = vadd.f32 %v8924, %v8891
      %v8926 = vadd.f32 %v8925, %v8892
      %v8927 = vadd.f32 %v8926, %v8893
      %v8928 = vadd.f32 %v8927, %v8894
      %v8929 = vadd.f32 %v8928, %v8895
      %8930 = vadd.xlane.f32.xlu0 %v8929
      %v8931 = vpop.xlane.xlu0 %8930
      %v8932 = vadd.f32 %v8536, %v8904
      %v8933 = vadd.f32 %v8537, %v8913
      %v8934 = vadd.f32 %v8538, %v8922
      %v8935 = vadd.f32 %v8539, %v8931
      %v8936 = vmul.f32 %v8932, 4.5043016e-05
      %v8937 = vmul.f32 %v8933, 4.5043016e-05
      %v8938 = vmul.f32 %v8934, 4.5043016e-05
      %v8939 = vmul.f32 %v8935, 4.5043016e-05
      %v8940 = vld [vmem:[%s2] sm:$0xff]
      %v8941 = vld [vmem:[%s2 + $0x8] sm:$0xff]
      %v8942 = vld [vmem:[%s3] sm:$0xff]
      %v8943 = vld [vmem:[%s3 + $0x8] sm:$0xff]
      %vm8944 = vcmask 261120
      %v8946 = vsel %vm8944, %v8940, 0
      %v8949 = vsel %vm8944, %v8941, 0
      %8951 = vmatprep.subr.mxu0 0.0
      %8952 = vmatpush1.msra.mxu0 %v8936
      %8953 = vmatprep.subr.mxu0 0.0
      %8954 = vmatpush1.msra.mxu0 %v8937
      %8955 = vmatprep.subr.mxu0 0.0
      %8956 = vmatpush1.msra.mxu0 %v8938
      %8957 = vmatprep.subr.mxu0 0.0
      %8958 = vmatpush1.msra.mxu0 %v8939
      %8959 = vmatprep.subr.mxu0 0.0
      %8960 = vmatpush1.msra.mxu0 0.0
      %8961 = vmatprep.subr.mxu0 0.0
      %8962 = vmatpush1.msra.mxu0 0.0
      %8963 = vmatprep.subr.mxu0 0.0
      %8964 = vmatpush1.msra.mxu0 0.0
      %8965 = vmatprep.subr.mxu0 0.0
      %8966 = vmatpush1.msra.mxu0 0.0
      %8967 = vmatprep.subr.mxu0 0.0
      %8968 = vmatpush1.msra.mxu0 0.0
      %8969 = vmatprep.subr.mxu0 0.0
      %8970 = vmatpush1.msra.mxu0 0.0
      %8971 = vmatprep.subr.mxu0 0.0
      %8972 = vmatpush1.msra.mxu0 0.0
      %8973 = vmatprep.subr.mxu0 0.0
      %8974 = vmatpush1.msra.mxu0 0.0
      %8975 = vmatprep.subr.mxu0 0.0
      %8976 = vmatpush1.msra.mxu0 0.0
      %8977 = vmatprep.subr.mxu0 0.0
      %8978 = vmatpush1.msra.mxu0 0.0
      %8979 = vmatprep.subr.mxu0 0.0
      %8980 = vmatpush1.msra.mxu0 0.0
      %8981 = vmatprep.subr.mxu0 0.0
      %8982 = vmatpush1.msra.mxu0 0.0
      %8983 = vmatprep.subr.mxu0 0.0
      %8984 = vmatpush1.msra.mxu0 0.0
      %8985 = vmatprep.subr.mxu0 0.0
      %8986 = vmatpush1.msra.mxu0 0.0
      %8987 = vmatprep.subr.mxu0 0.0
      %8988 = vmatpush1.msra.mxu0 0.0
      %8989 = vmatprep.subr.mxu0 0.0
      %8990 = vmatpush1.msra.mxu0 0.0
      %8991 = vmatprep.subr.mxu0 0.0
      %8992 = vmatpush1.msra.mxu0 0.0
      %8993 = vmatprep.subr.mxu0 0.0
      %8994 = vmatpush1.msra.mxu0 0.0
      %8995 = vmatprep.subr.mxu0 0.0
      %8996 = vmatpush1.msra.mxu0 0.0
      %8997 = vmatprep.subr.mxu0 0.0
      %8998 = vmatpush1.msra.mxu0 0.0
      %8999 = vmatprep.subr.mxu0 0.0
      %9000 = vmatpush1.msra.mxu0 0.0
      %9001 = vmatprep.subr.mxu0 0.0
      %9002 = vmatpush1.msra.mxu0 0.0
      %9003 = vmatprep.subr.mxu0 0.0
      %9004 = vmatpush1.msra.mxu0 0.0
      %9005 = vmatprep.subr.mxu0 0.0
      %9006 = vmatpush1.msra.mxu0 0.0
      %9007 = vmatprep.subr.mxu0 0.0
      %9008 = vmatpush1.msra.mxu0 0.0
      %9009 = vmatprep.subr.mxu0 0.0
      %9010 = vmatpush1.msra.mxu0 0.0
      %9011 = vmatprep.subr.mxu0 0.0
      %9012 = vmatpush1.msra.mxu0 0.0
      %9013 = vmatprep.subr.mxu0 0.0
      %9014 = vmatpush1.msra.mxu0 0.0
      %9015 = vmatprep.mubr.f32.mxu0 0.0
      %9016 = vmatmul.mubr.f32.gmra.mrb[0].mxu0 %v8946
      %v9017 = vpop.f32.mrb[0].mxu0
      %v9018 = vadd.f32 %v8942, %v9017
      %v9019 = vpop.f32.mrb[0].mxu0
      %9020 = vmatprep.mubr.f32.mxu0 0.0
      %9021 = vmatmul.mubr.f32.gmra.mrb[0].mxu0 %v8949
      %v9022 = vpop.f32.mrb[0].mxu0
      %v9023 = vadd.f32 %v8943, %v9022
      %v9024 = vpop.f32.mrb[0].mxu0
      %9025 = vdwg.mxu0
      %vm9026 = vcmask 7168
      %9027 = vst.msk [vmem:[%s197] sm:$0xff] %vm9026, %v9018
      %9028 = vst.msk [vmem:[%s197 + $0x8] sm:$0xff] %vm9026, %v9023
      %p9029 = scmp.lt.s32.totalorder %s15, 17
      %s9030 = scalar_select %p9029, %s15, 17
      %s9031 = smul.addr %s9030, 2
      %s9032 = smul.addr %s9031, 8
      %s9033 = scalar_lea.vmem %s4, %s9032
      // Predicated region
      $region37: #{enneaception_forward.1} parent=35 // pred_check
        %p9034 = pneg %p122
      $region38: #{enneaception_forward.1} parent=35 // pred_check_branch
        %9036 = sbr.rel (%p9034) target = $region40
      $region39: #{enneaception_forward.1} parent=35 // pred_region
        _
      $region40: #{enneaception_forward.1} parent=35 // pred_fallthru
        _
    $region36: #{enneaception_forward.1} parent=5 // pred_fallthru
      _
    %p9037 = scmp.le.s32.totalorder 2, %s10
    // Predicated region
    $region41: #{enneaception_forward.1} parent=5 // pred_check
      %p9038 = pneg %p9037
    $region42: #{enneaception_forward.1} parent=5 // pred_check_branch
      %9040 = sbr.rel (%p9038) target = $region44
    $region43: #{enneaception_forward.1} parent=5 // pred_region
      %s9041 = ssub.s32 %s10, 2
      // Predicated region
      $region45: #{enneaception_forward.1} parent=43 // pred_check
        %p9042 = pneg %p128
      $region46: #{enneaception_forward.1} parent=43 // pred_check_branch
        %9044 = sbr.rel (%p9042) target = $region48
      $region47: #{enneaception_forward.1} parent=43 // pred_region
        %p9045 = scmp.lt.s32.totalorder %s16, 17
        %s9046 = scalar_select %p9045, %s16, 17
        %s9047 = smul.addr %s9046, 2
        %s9048 = smul.addr %s9047, 8
        %s9049 = scalar_lea.vmem %s4, %s9048
      $region48: #{enneaception_forward.1} parent=43 // pred_fallthru
        _
    $region44: #{enneaception_forward.1} parent=5 // pred_fallthru
      _
  $region6: #{enneaception_forward.1} parent=0 // loop_footer
    %s14 = sadd.s32 1, %s10
  $region7: #{enneaception_forward.1} parent=0 // loop_footer_branch
    %9 = sbr.rel target = $region3
  $region8: #{enneaception_forward.1} parent=0 // loop_exit
    _

// kernel: squeeze.1
$region0: #{squeeze.1}
  %s0 = inlined_call_operand.vmem [shape: bf16[18,16], index: 0, kind: input, shape index: {}]
  %s1 = inlined_call_operand.vmem [shape: bf16[9,2,16], index: 1, kind: output, shape index: {}]
  $region1: #{squeeze.1} parent=0
    #allocation0 [shape = 'u8[36864]{0}', space=vmem, size = 0x9000, scoped, tag = 'scoped mem for output reshape']
    #allocation1 [shape = 'u8[12288]{0}', space=vmem, size = 0x3000, scoped, tag = 'scoped mem for input reshape']
    %s3 = smul.u32 4, 2
    %s4 = sshllo.u32 0, %s3
    %s5 = smul.addr 4, 2
    %s6 = scalar_lea.vmem %s0, %s5
    %s7 = sshrl.u32 %s4, 1
    %s8 = sor.u32 %s4, %s7
    %s9 = sand.u32 %s8, 85
    %s10 = sshrl.u32 %s9, 1
    %s11 = sor.u32 %s9, %s10
    %s12 = sand.u32 51, %s11
    %s13 = sshrl.u32 %s12, 2
    %s14 = sor.u32 %s12, %s13
    %s15 = sand.u32 15, %s14
    %v16 = vld [vmem:[%s6] sm:%s15]
    %v17 = vunpack.c.l.bf16 %v16
    %v18 = vunpack.c.h.bf16 %v16
    %s19 = scalar_lea.vmem [#allocation1], 16
    %20 = vst [vmem:[%s19] sm:%s4] %v17
    %s21 = scalar_lea.vmem %s0, 4
    %s22 = sshrl.u32 %s4, 1
    %s23 = sor.u32 %s4, %s22
    %s24 = sand.u32 %s23, 85
    %s25 = sshrl.u32 %s24, 1
    %s26 = sor.u32 %s24, %s25
    %s27 = sand.u32 51, %s26
    %s28 = sshrl.u32 %s27, 2
    %s29 = sor.u32 %s27, %s28
    %s30 = sand.u32 15, %s29
    %v31 = vld [vmem:[%s21] sm:%s30]
    %v32 = vunpack.c.l.bf16 %v31
    %v33 = vunpack.c.h.bf16 %v31
    %s34 = scalar_lea.vmem [#allocation1], 8
    %35 = vst [vmem:[%s34] sm:%s4] %v32
    %s36 = sshrl.u32 %s4, 1
    %s37 = sor.u32 %s4, %s36
    %s38 = sand.u32 %s37, 85
    %s39 = sshrl.u32 %s38, 1
    %s40 = sor.u32 %s38, %s39
    %s41 = sand.u32 51, %s40
    %s42 = sshrl.u32 %s41, 2
    %s43 = sor.u32 %s41, %s42
    %s44 = sand.u32 15, %s43
    %v45 = vld [vmem:[%s0] sm:%s44]
    %v46 = vunpack.c.l.bf16 %v45
    %v47 = vunpack.c.h.bf16 %v45
    %48 = vst [vmem:[#allocation1] sm:%s4] %v46
    %v49 = vld [vmem:[#allocation1] sm:$0xff]
    %vm50 = vcmask 130048
    %51 = vst.msk [vmem:[#allocation0] sm:$0x3] %vm50, %v49
    %s52 = scalar_lea.vmem [#allocation0], 6
    %53 = vst.msk [vmem:[%s52] sm:$0xc] %vm50, %v49
    %s54 = scalar_lea.vmem [#allocation0], 12
    %55 = vst.msk [vmem:[%s54] sm:$0x30] %vm50, %v49
    %s56 = scalar_lea.vmem [#allocation0], 18
    %57 = vst.msk [vmem:[%s56] sm:$0xc0] %vm50, %v49
    %s58 = scalar_lea.vmem [#allocation1], 8
    %v59 = vld [vmem:[%s58] sm:$0xff]
    %vm60 = vcmask 130048
    %s61 = scalar_lea.vmem [#allocation0], 32
    %62 = vst.msk [vmem:[%s61] sm:$0x3] %vm60, %v59
    %s63 = scalar_lea.vmem [#allocation0], 38
    %64 = vst.msk [vmem:[%s63] sm:$0xc] %vm60, %v59
    %s65 = scalar_lea.vmem [#allocation0], 44
    %66 = vst.msk [vmem:[%s65] sm:$0x30] %vm60, %v59
    %s67 = scalar_lea.vmem [#allocation0], 50
    %68 = vst.msk [vmem:[%s67] sm:$0xc0] %vm60, %v59
    %s69 = scalar_lea.vmem [#allocation1], 16
    %v70 = vld [vmem:[%s69] sm:$0x3]
    %vm71 = vcmask 130048
    %s72 = scalar_lea.vmem [#allocation0], 64
    %73 = vst.msk [vmem:[%s72] sm:$0x3] %vm71, %v70
    %s75 = smul.u32 1, 2
    %s76 = sshllo.u32 0, %s75
    %s77 = sshrl.u32 %s75, 1
    %v78 = vld [vmem:[#allocation0] sm:%s76]
    %v79 = vpack.c.bf16 0.0, %v78
    %s80 = sshllo.u32 0, %s77
    %81 = vst [vmem:[%s1] sm:%s80] %v79
    %s82 = scalar_lea.vmem [#allocation0], 8
    %v83 = vld [vmem:[%s82] sm:%s76]
    %v84 = vpack.c.bf16 0.0, %v83
    %s85 = sshllo.u32 0, %s77
    %s86 = scalar_lea.vmem %s1, 1
    %87 = vst [vmem:[%s86] sm:%s85] %v84
    %s88 = scalar_lea.vmem [#allocation0], 16
    %v89 = vld [vmem:[%s88] sm:%s76]
    %v90 = vpack.c.bf16 0.0, %v89
    %s91 = sshllo.u32 0, %s77
    %s92 = smul.addr 1, 2
    %s93 = scalar_lea.vmem %s1, %s92
    %94 = vst [vmem:[%s93] sm:%s91] %v90
    %s95 = scalar_lea.vmem [#allocation0], 24
    %v96 = vld [vmem:[%s95] sm:%s76]
    %v97 = vpack.c.bf16 0.0, %v96
    %s98 = sshllo.u32 0, %s77
    %s99 = smul.addr 1, 3
    %s100 = scalar_lea.vmem %s1, %s99
    %101 = vst [vmem:[%s100] sm:%s98] %v97
    %s102 = scalar_lea.vmem [#allocation0], 32
    %v103 = vld [vmem:[%s102] sm:%s76]
    %v104 = vpack.c.bf16 0.0, %v103
    %s105 = sshllo.u32 0, %s77
    %s106 = smul.addr 1, 4
    %s107 = scalar_lea.vmem %s1, %s106
    %108 = vst [vmem:[%s107] sm:%s105] %v104
    %s109 = scalar_lea.vmem [#allocation0], 40
    %v110 = vld [vmem:[%s109] sm:%s76]
    %v111 = vpack.c.bf16 0.0, %v110
    %s112 = sshllo.u32 0, %s77
    %s113 = smul.addr 1, 5
    %s114 = scalar_lea.vmem %s1, %s113
    %115 = vst [vmem:[%s114] sm:%s112] %v111
    %s116 = scalar_lea.vmem [#allocation0], 48
    %v117 = vld [vmem:[%s116] sm:%s76]
    %v118 = vpack.c.bf16 0.0, %v117
    %s119 = sshllo.u32 0, %s77
    %s120 = smul.addr 1, 6
    %s121 = scalar_lea.vmem %s1, %s120
    %122 = vst [vmem:[%s121] sm:%s119] %v118
    %s123 = scalar_lea.vmem [#allocation0], 56
    %v124 = vld [vmem:[%s123] sm:%s76]
    %v125 = vpack.c.bf16 0.0, %v124
    %s126 = sshllo.u32 0, %s77
    %s127 = smul.addr 1, 7
    %s128 = scalar_lea.vmem %s1, %s127
    %129 = vst [vmem:[%s128] sm:%s126] %v125
    %s130 = scalar_lea.vmem [#allocation0], 64
    %v131 = vld [vmem:[%s130] sm:%s76]
    %v132 = vpack.c.bf16 0.0, %v131
    %s133 = sshllo.u32 0, %s77
    %s134 = smul.addr 1, 8
    %s135 = scalar_lea.vmem %s1, %s134
    %136 = vst [vmem:[%s135] sm:%s133] %v132

</llo_original>
